<compile_context>
chip_gen: v6e
topology: v6e:2x2x1
jax: 0.10.0
libtpu: 0.0.40
codegen_flags: <defaults>
</compile_context>

<pallas_src>
import functools

import jax
import jax.numpy as jnp
from jax.experimental import pallas as pl
from jax.experimental.pallas import tpu as pltpu


_VMEM_LIMIT_BYTES = 48 * 1024 * 1024     # safe scoped-VMEM limit on v5e/v6e/v7x
_VMEM_BUDGET_BYTES = 40 * 1024 * 1024    # target working set (headroom under limit)


def _round_up(x, m):
    return (x + m - 1) // m * m


def _pad_gate_blocks(p, H, Hp):
    """Pad a PyTorch-layout LSTM parameter [4H, ...] to [4*Hp, ...],
    zero-padding each of the i/f/g/o gate blocks independently."""
    p4 = p.reshape((4, H) + p.shape[1:])
    pad = [(0, 0), (0, Hp - H)] + [(0, 0)] * (p4.ndim - 2)
    return jnp.pad(p4, pad).reshape((4 * Hp,) + p.shape[1:])


def _lstm_recurrence_kernel(gx_ref, lens_ref, bias_ref, w_hh_ref, y_ref,
                            h_scr, c_scr, *, t_blk, bp, hp, unroll):
    """One grid step = t_blk serial timesteps.
      gx_ref:   (t_blk, Bp, 4*Hp) bf16   hoisted input projection (no bias)
      lens_ref: (Bp, 1) int32
      bias_ref: (1, 4*Hp) float32        b_ih + b_hh, per-gate zero-padded
      w_hh_ref: (Hp, 4*Hp) bf16          W_hh^T
      y_ref:    (t_blk, Bp, Hp) bf16
      h_scr:    (Bp, Hp) bf16 carry;  c_scr: (Bp, Hp) f32 carry."""
    tb = pl.program_id(0)

    @pl.when(tb == 0)
    def _():
        h_scr[...] = jnp.zeros_like(h_scr)
        c_scr[...] = jnp.zeros_like(c_scr)

    t0 = tb * t_blk
    lens = lens_ref[...]                                      # (Bp, 1) int32
    # Loop-invariant broadcast hoisted out of the unrolled time loop
    # (JAX does not CSE broadcast_in_dim inside the unrolled body).
    bias_b = jnp.broadcast_to(bias_ref[...], (bp, 4 * hp))    # (Bp, 4Hp) f32

    # TODO(synk): for tiny Bp, hold W_hh resident in the MXU across the t_blk
    # steps via pltpu.matmul_push_rhs/matmul_acc_lhs/matmul_pop (needs per-gate
    # RHS tiles when 4*Hp exceeds the MXU width) instead of re-streaming it.
    def step(i, carry):
        # Serial part only: recurrent projection + in-kernel f32 bias add.
        gates = (gx_ref[i].astype(jnp.float32) + bias_b) + jnp.dot(
            h_scr[...], w_hh_ref[...], preferred_element_type=jnp.float32)

        # PyTorch LSTM gate order: i, f, g, o (hp % 128 == 0 -> lane-aligned).
        i_g = jax.nn.sigmoid(gates[:, 0 * hp:1 * hp])
        f_g = jax.nn.sigmoid(gates[:, 1 * hp:2 * hp])
        g_g = jnp.tanh(gates[:, 2 * hp:3 * hp])
        o_g = jax.nn.sigmoid(gates[:, 3 * hp:4 * hp])

        c_new = f_g * c_scr[...] + i_g * g_g
        h_new = o_g * jnp.tanh(c_new)
        h_new_b = h_new.astype(jnp.bfloat16)

        # One full-shape mask reused by all three selects (no per-select
        # re-broadcast inside the unrolled loop).
        mask = jnp.broadcast_to((t0 + i) < lens, (bp, hp))
        c_scr[...] = jnp.where(mask, c_new, c_scr[...])
        h_scr[...] = jnp.where(mask, h_new_b, h_scr[...])
        # packed/padded semantics: zeros past each sequence's length
        y_ref[i] = jnp.where(mask, h_new_b, jnp.zeros_like(h_new_b))
        return carry

    jax.lax.fori_loop(0, t_blk, step, 0, unroll=unroll)


def _choose_time_block(t_blk, T, Bp, Hp):
    """Largest block <= t_blk whose double-buffered working set fits VMEM budget."""
    tb = max(1, min(t_blk, T))

    def vmem_bytes(tb_):
        gx = 2 * tb_ * Bp * 4 * Hp * 2          # bf16 gates_x, double-buffered
        y = 2 * tb_ * Bp * Hp * 2               # bf16 y, double-buffered
        w = 2 * Hp * 4 * Hp * 2                 # W_hh^T (conservative: 2 bufs)
        scr = Bp * Hp * (2 + 4)                 # h (bf16) + c (f32) carries
        misc = 2 * (4 * Hp * 4) + 2 * (8 * 128 * 4)
        return gx + y + w + scr + misc

    while tb > 1 and vmem_bytes(tb) > _VMEM_BUDGET_BYTES:
        tb = max(1, tb // 2)
    return tb


def dynamic_lstm_pallas(x_btc, seq_lens, w_ih, w_hh, b_ih, b_hh, *, t_blk=32):
    """x_btc: [B, T, I], seq_lens: [B] int.
    w_ih: [4H, I], w_hh: [4H, H], b_ih/b_hh: [4H] (PyTorch parameter shapes).
    Returns y: [B, T, H] (caller may truncate the time axis to max(seq_lens))."""
    B, T, I = x_btc.shape
    H4, H = w_hh.shape
    assert H4 == 4 * H and w_ih.shape == (4 * H, I)

    Hp = _round_up(H, 128)        # lane-dense hidden size
    Bp = _round_up(B, 8)          # full-sublane batch
    Tb = _choose_time_block(t_blk, T, Bp, Hp)
    Tp = _round_up(T, Tb)

    # --- Per-gate zero-padding of parameters (keeps i/f/g/o layout intact) ---
    w_ih_p = _pad_gate_blocks(w_ih.astype(jnp.float32), H, Hp).astype(jnp.bfloat16)  # [4Hp, I]
    bias_p = _pad_gate_blocks((b_ih + b_hh).astype(jnp.float32), H, Hp)              # [4Hp]
    bias_2d = bias_p.reshape(1, 4 * Hp)                                              # f32
    w_hh_p = _pad_gate_blocks(w_hh.astype(jnp.float32), H, Hp)                       # [4Hp, H]
    w_hh_p = jnp.pad(w_hh_p, ((0, 0), (0, Hp - H)))                                  # [4Hp, Hp]
    w_hh_t = jnp.transpose(w_hh_p).astype(jnp.bfloat16)                              # [Hp, 4Hp]

    # --- Pad x BEFORE the hoisted projection so one big bf16 MXU matmul writes
    # the final padded time-major gates_x directly (no pad/bias pass over it).
    x_p = jnp.pad(x_btc, ((0, Bp - B), (0, Tp - T), (0, 0))).astype(jnp.bfloat16)
    gates_x = jnp.einsum('bti,gi->tbg', x_p, w_ih_p,
                         preferred_element_type=jnp.float32
                         ).astype(jnp.bfloat16)                                      # [Tp,Bp,4Hp]

    # Padded batch rows get length 0 -> masked to zero, dropped afterwards.
    lens = jnp.pad(seq_lens.astype(jnp.int32), (0, Bp - B)).reshape(Bp, 1)

    # Full unroll for small live state; partial unroll bounds vreg pressure.
    unroll = True if (Bp * 4 * Hp) <= 16384 else 4

    kernel = functools.partial(_lstm_recurrence_kernel,
                               t_blk=Tb, bp=Bp, hp=Hp, unroll=unroll)

    def build_and_call(single_buffer_invariants):
        inv = ({'pipeline_mode': pl.Buffered(1)}
               if (single_buffer_invariants and hasattr(pl, 'Buffered')) else {})
        grid_spec = pltpu.PrefetchScalarGridSpec(
            num_scalar_prefetch=0,
            grid=(Tp // Tb,),
            in_specs=[
                pl.BlockSpec((Tb, Bp, 4 * Hp), lambda t: (t, 0, 0)),        # gates_x bf16
                pl.BlockSpec((Bp, 1), lambda t: (0, 0), **inv),             # seq_lens
                pl.BlockSpec((1, 4 * Hp), lambda t: (0, 0), **inv),         # bias f32
                pl.BlockSpec((Hp, 4 * Hp), lambda t: (0, 0), **inv),        # W_hh^T bf16
            ],
            out_specs=pl.BlockSpec((Tb, Bp, Hp), lambda t: (t, 0, 0)),
            scratch_shapes=[
                pltpu.VMEM((Bp, Hp), jnp.bfloat16),                         # h carry
                pltpu.VMEM((Bp, Hp), jnp.float32),                          # c carry
            ],
        )
        return pl.pallas_call(
            kernel,
            out_shape=jax.ShapeDtypeStruct((Tp, Bp, Hp), jnp.bfloat16),
            grid_spec=grid_spec,
            compiler_params=pltpu.CompilerParams(
                dimension_semantics=("arbitrary",),           # serial time axis
                vmem_limit_bytes=_VMEM_LIMIT_BYTES),
        )(gates_x, lens, bias_2d, w_hh_t)

    try:
        # Single-buffer the loop-invariant operands (weights/bias/lens): saves
        # Hp*4Hp*2 bytes of VMEM that goes straight into a larger Tb on v7x.
        y_tbh = build_and_call(True)
    except Exception:
        # Fallback for jax versions without BlockSpec pipeline_mode/Buffered(1).
        y_tbh = build_and_call(False)

    # Single layout hop, now on bf16 data: time-major lane-dense kernel output ->
    # batch-first, drop batch/time/hidden padding, restore input dtype.
    return jnp.transpose(y_tbh, (1, 0, 2))[:B, :T, :H].astype(x_btc.dtype)


def _reference_dynamic_lstm(x_btc, seq_lens, w_ih, w_hh, b_ih, b_hh):
    """Pure-JAX f32 reference (same math as torch pack/pad semantics)."""
    B, T, I = x_btc.shape
    H = w_hh.shape[1]
    w_ih_t, w_hh_t = w_ih.T, w_hh.T
    bias = (b_ih + b_hh)[None, :]
    lens = seq_lens.reshape(B, 1)

    def step(carry, inp):
        h, c = carry
        t, x_t = inp
        gates = x_t @ w_ih_t + h @ w_hh_t + bias
        i_g = jax.nn.sigmoid(gates[:, 0 * H:1 * H])
        f_g = jax.nn.sigmoid(gates[:, 1 * H:2 * H])
        g_g = jnp.tanh(gates[:, 2 * H:3 * H])
        o_g = jax.nn.sigmoid(gates[:, 3 * H:4 * H])
        c_new = f_g * c + i_g * g_g
        h_new = o_g * jnp.tanh(c_new)
        mask = t < lens
        c = jnp.where(mask, c_new, c)
        h = jnp.where(mask, h_new, h)
        y = jnp.where(mask, h_new, 0.0)
        return (h, c), y

    h0 = jnp.zeros((B, H), jnp.float32)
    c0 = jnp.zeros((B, H), jnp.float32)
    x_tbc = jnp.transpose(x_btc, (1, 0, 2))
    _, y_tbh = jax.lax.scan(step, (h0, c0), (jnp.arange(T), x_tbc))
    return jnp.transpose(y_tbh, (1, 0, 2))


if __name__ == "__main__":
    # Small shapes consistent with the module's forward:
    #   x: [batch, max_step, input_size], seq_lens: [batch]
    B, T, I, H = 4, 8, 16, 32

    key = jax.random.PRNGKey(0)
    kx, k1, k2, k3, k4 = jax.random.split(key, 5)

    x = jax.random.normal(kx, (B, T, I), dtype=jnp.float32)
    seq_lens = jnp.array([8, 5, 3, 6], dtype=jnp.int32)

    # Deterministic LSTM parameters (PyTorch-style uniform(-1/sqrt(H), 1/sqrt(H))).
    s = 1.0 / jnp.sqrt(jnp.float32(H))
    w_ih = jax.random.uniform(k1, (4 * H, I), jnp.float32, -s, s)
    w_hh = jax.random.uniform(k2, (4 * H, H), jnp.float32, -s, s)
    b_ih = jax.random.uniform(k3, (4 * H,), jnp.float32, -s, s)
    b_hh = jax.random.uniform(k4, (4 * H,), jnp.float32, -s, s)

    y_full = dynamic_lstm_pallas(x, seq_lens, w_ih, w_hh, b_ih, b_hh)
    y_full = jax.block_until_ready(y_full)

    # pad_packed_sequence truncates the time axis to max(seq_lens).
    max_len = int(jnp.max(seq_lens))
    y = y_full[:, :max_len, :]

    y_ref = _reference_dynamic_lstm(x, seq_lens, w_ih, w_hh, b_ih, b_hh)[:, :max_len, :]
    assert y.shape == (B, max_len, H)
    # bf16 gates_x / h carry / y storage (f32 accumulation and c carry) ->
    # loosened tolerance vs the f32 reference.
    max_diff = float(jnp.max(jnp.abs(y - y_ref)))
    assert jnp.allclose(y, y_ref, atol=5e-2, rtol=5e-2), f"max abs diff {max_diff}"

    print("KERNEL_OK")
</pallas_src>

<mosaic_0001>
module attributes {stable_mosaic.version = 11 : i64} {
  func.func @_lstm_recurrence_kernel(%arg0: i32, %arg1: memref<8x8x512xbf16, #tpu.memory_space<vmem>>, %arg2: memref<8x1xi32, #tpu.memory_space<vmem>>, %arg3: memref<1x512xf32, #tpu.memory_space<vmem>>, %arg4: memref<128x512xbf16, #tpu.memory_space<vmem>>, %arg5: memref<8x8x128xbf16, #tpu.memory_space<vmem>>, %arg6: memref<8x128xbf16, #tpu.memory_space<vmem>>, %arg7: memref<8x128xf32, #tpu.memory_space<vmem>>) attributes {dimension_semantics = [#tpu.dimension_semantics<arbitrary>], iteration_bounds = array<i64: 1>, scalar_prefetch = 0 : i64, scratch_operands = 2 : i64, tpu.core_type = #tpu.core_type<tc>, window_params = [{transform_indices = @transform_0, window_bounds = array<i64: 8, 8, 512>}, {pipeline_mode = #tpu.pipeline_mode<synchronous>, transform_indices = @transform_1, window_bounds = array<i64: 8, 1>}, {pipeline_mode = #tpu.pipeline_mode<synchronous>, transform_indices = @transform_2, window_bounds = array<i64: 1, 512>}, {pipeline_mode = #tpu.pipeline_mode<synchronous>, transform_indices = @transform_3, window_bounds = array<i64: 128, 512>}, {transform_indices = @transform_4, window_bounds = array<i64: 8, 8, 128>}]} {
    %c0_i32 = arith.constant 0 : i32
    %0 = arith.cmpi eq, %arg0, %c0_i32 : i32
    %1 = arith.extui %0 : i1 to i32
    %c0_i32_0 = arith.constant 0 : i32
    %2 = arith.cmpi ne, %1, %c0_i32_0 : i32
    scf.if %2 {
      %cst_189 = arith.constant 0.000000e+00 : bf16
      %432 = vector.broadcast %cst_189 : bf16 to vector<8x128xbf16>
      %c0_190 = arith.constant 0 : index
      %c0_191 = arith.constant 0 : index
      %433 = vector.load %arg6[%c0_190, %c0_191] : memref<8x128xbf16, #tpu.memory_space<vmem>>, vector<8x128xbf16>
      tpu.vector_store %arg6[%c0_190, %c0_191], %432 {strides = array<i32>} : memref<8x128xbf16, #tpu.memory_space<vmem>>, vector<8x128xbf16>,
      %cst_192 = arith.constant 0.000000e+00 : f32
      %434 = vector.broadcast %cst_192 : f32 to vector<8x128xf32>
      %c0_193 = arith.constant 0 : index
      %c0_194 = arith.constant 0 : index
      %435 = vector.load %arg7[%c0_193, %c0_194] : memref<8x128xf32, #tpu.memory_space<vmem>>, vector<8x128xf32>
      tpu.vector_store %arg7[%c0_193, %c0_194], %434 {strides = array<i32>} : memref<8x128xf32, #tpu.memory_space<vmem>>, vector<8x128xf32>,
    } else {
    }
    %c8_i32 = arith.constant 8 : i32
    %3 = arith.muli %arg0, %c8_i32 : i32
    %c0 = arith.constant 0 : index
    %c0_1 = arith.constant 0 : index
    %4 = vector.load %arg2[%c0, %c0_1] : memref<8x1xi32, #tpu.memory_space<vmem>>, vector<8x1xi32>
    %c0_2 = arith.constant 0 : index
    %c0_3 = arith.constant 0 : index
    %5 = vector.load %arg3[%c0_2, %c0_3] : memref<1x512xf32, #tpu.memory_space<vmem>>, vector<1x512xf32>
    %6 = vector.shape_cast %5 : vector<1x512xf32> to vector<1x512xf32>
    %7 = vector.broadcast %6 : vector<1x512xf32> to vector<8x512xf32>
    %c0_i32_4 = arith.constant 0 : i32
    %8 = arith.index_cast %c0_i32_4 : i32 to index
    %c0_5 = arith.constant 0 : index
    %c0_6 = arith.constant 0 : index
    %9 = vector.load %arg1[%8, %c0_5, %c0_6] : memref<8x8x512xbf16, #tpu.memory_space<vmem>>, vector<1x8x512xbf16>
    %10 = vector.shape_cast %9 : vector<1x8x512xbf16> to vector<8x512xbf16>
    %11 = arith.extf %10 : vector<8x512xbf16> to vector<8x512xf32>
    %12 = arith.addf %11, %7 : vector<8x512xf32>
    %c0_7 = arith.constant 0 : index
    %c0_8 = arith.constant 0 : index
    %13 = vector.load %arg6[%c0_7, %c0_8] : memref<8x128xbf16, #tpu.memory_space<vmem>>, vector<8x128xbf16>
    %c0_9 = arith.constant 0 : index
    %c0_10 = arith.constant 0 : index
    %14 = vector.load %arg4[%c0_9, %c0_10] : memref<128x512xbf16, #tpu.memory_space<vmem>>, vector<128x512xbf16>
    %cst = arith.constant dense<0.000000e+00> : vector<8x512xf32>
    %15 = tpu.matmul %13, %14, %cst {dimension_numbers = #tpu.dot_dimension_numbers<[1], [0], [0], [1], [0, 0, 1, 1], [], []>} : vector<8x128xbf16>, vector<128x512xbf16>, vector<8x512xf32> -> vector<8x512xf32>
    %16 = arith.addf %12, %15 : vector<8x512xf32>
    %17 = vector.extract_strided_slice %16 {offsets = [0, 0], sizes = [8, 128], strides = [1, 1]} : vector<8x512xf32> to vector<8x128xf32>
    %18 = arith.negf %17 : vector<8x128xf32>
    %19 = math.exp %18 : vector<8x128xf32>
    %cst_11 = arith.constant 1.000000e+00 : f32
    %20 = vector.broadcast %cst_11 : f32 to vector<8x128xf32>
    %21 = arith.addf %20, %19 : vector<8x128xf32>
    %22 = arith.divf %20, %21 : vector<8x128xf32>
    %23 = vector.extract_strided_slice %16 {offsets = [0, 128], sizes = [8, 128], strides = [1, 1]} : vector<8x512xf32> to vector<8x128xf32>
    %24 = arith.negf %23 : vector<8x128xf32>
    %25 = math.exp %24 : vector<8x128xf32>
    %cst_12 = arith.constant 1.000000e+00 : f32
    %26 = vector.broadcast %cst_12 : f32 to vector<8x128xf32>
    %27 = arith.addf %26, %25 : vector<8x128xf32>
    %28 = arith.divf %26, %27 : vector<8x128xf32>
    %29 = vector.extract_strided_slice %16 {offsets = [0, 256], sizes = [8, 128], strides = [1, 1]} : vector<8x512xf32> to vector<8x128xf32>
    %30 = math.tanh %29 : vector<8x128xf32>
    %31 = vector.extract_strided_slice %16 {offsets = [0, 384], sizes = [8, 128], strides = [1, 1]} : vector<8x512xf32> to vector<8x128xf32>
    %32 = arith.negf %31 : vector<8x128xf32>
    %33 = math.exp %32 : vector<8x128xf32>
    %cst_13 = arith.constant 1.000000e+00 : f32
    %34 = vector.broadcast %cst_13 : f32 to vector<8x128xf32>
    %35 = arith.addf %34, %33 : vector<8x128xf32>
    %36 = arith.divf %34, %35 : vector<8x128xf32>
    %c0_14 = arith.constant 0 : index
    %c0_15 = arith.constant 0 : index
    %37 = vector.load %arg7[%c0_14, %c0_15] : memref<8x128xf32, #tpu.memory_space<vmem>>, vector<8x128xf32>
    %38 = arith.mulf %28, %37 : vector<8x128xf32>
    %39 = arith.mulf %22, %30 : vector<8x128xf32>
    %40 = arith.addf %38, %39 : vector<8x128xf32>
    %41 = math.tanh %40 : vector<8x128xf32>
    %42 = arith.mulf %36, %41 : vector<8x128xf32>
    %43 = arith.truncf %42 : vector<8x128xf32> to vector<8x128xbf16>
    %44 = arith.addi %3, %c0_i32_4 : i32
    %45 = vector.broadcast %44 : i32 to vector<8x1xi32>
    %46 = arith.cmpi slt, %45, %4 : vector<8x1xi32>
    %47 = vector.shape_cast %46 : vector<8x1xi1> to vector<8x1xi1>
    %48 = vector.broadcast %47 : vector<8x1xi1> to vector<8x128xi1>
    %c0_16 = arith.constant 0 : index
    %c0_17 = arith.constant 0 : index
    %49 = vector.load %arg7[%c0_16, %c0_17] : memref<8x128xf32, #tpu.memory_space<vmem>>, vector<8x128xf32>
    %50 = arith.select %48, %40, %49 : vector<8x128xi1>, vector<8x128xf32>
    %c0_18 = arith.constant 0 : index
    %c0_19 = arith.constant 0 : index
    %51 = vector.load %arg7[%c0_18, %c0_19] : memref<8x128xf32, #tpu.memory_space<vmem>>, vector<8x128xf32>
    tpu.vector_store %arg7[%c0_18, %c0_19], %50 {strides = array<i32>} : memref<8x128xf32, #tpu.memory_space<vmem>>, vector<8x128xf32>,
    %c0_20 = arith.constant 0 : index
    %c0_21 = arith.constant 0 : index
    %52 = vector.load %arg6[%c0_20, %c0_21] : memref<8x128xbf16, #tpu.memory_space<vmem>>, vector<8x128xbf16>
    %53 = arith.select %48, %43, %52 : vector<8x128xi1>, vector<8x128xbf16>
    %c0_22 = arith.constant 0 : index
    %c0_23 = arith.constant 0 : index
    %54 = vector.load %arg6[%c0_22, %c0_23] : memref<8x128xbf16, #tpu.memory_space<vmem>>, vector<8x128xbf16>
    tpu.vector_store %arg6[%c0_22, %c0_23], %53 {strides = array<i32>} : memref<8x128xbf16, #tpu.memory_space<vmem>>, vector<8x128xbf16>,
    %cst_24 = arith.constant 0.000000e+00 : bf16
    %55 = vector.broadcast %cst_24 : bf16 to vector<8x128xbf16>
    %56 = arith.select %48, %43, %55 : vector<8x128xi1>, vector<8x128xbf16>
    %57 = arith.index_cast %c0_i32_4 : i32 to index
    %c0_25 = arith.constant 0 : index
    %c0_26 = arith.constant 0 : index
    %58 = vector.load %arg5[%57, %c0_25, %c0_26] : memref<8x8x128xbf16, #tpu.memory_space<vmem>>, vector<1x8x128xbf16>
    %59 = vector.shape_cast %58 : vector<1x8x128xbf16> to vector<8x128xbf16>
    %60 = vector.shape_cast %56 : vector<8x128xbf16> to vector<1x8x128xbf16>
    tpu.vector_store %arg5[%57, %c0_25, %c0_26], %60 {strides = array<i32>} : memref<8x8x128xbf16, #tpu.memory_space<vmem>>, vector<1x8x128xbf16>,
    %c1_i32 = arith.constant 1 : i32
    %61 = arith.index_cast %c1_i32 : i32 to index
    %c0_27 = arith.constant 0 : index
    %c0_28 = arith.constant 0 : index
    %62 = vector.load %arg1[%61, %c0_27, %c0_28] : memref<8x8x512xbf16, #tpu.memory_space<vmem>>, vector<1x8x512xbf16>
    %63 = vector.shape_cast %62 : vector<1x8x512xbf16> to vector<8x512xbf16>
    %64 = arith.extf %63 : vector<8x512xbf16> to vector<8x512xf32>
    %65 = arith.addf %64, %7 : vector<8x512xf32>
    %c0_29 = arith.constant 0 : index
    %c0_30 = arith.constant 0 : index
    %66 = vector.load %arg6[%c0_29, %c0_30] : memref<8x128xbf16, #tpu.memory_space<vmem>>, vector<8x128xbf16>
    %c0_31 = arith.constant 0 : index
    %c0_32 = arith.constant 0 : index
    %67 = vector.load %arg4[%c0_31, %c0_32] : memref<128x512xbf16, #tpu.memory_space<vmem>>, vector<128x512xbf16>
    %cst_33 = arith.constant dense<0.000000e+00> : vector<8x512xf32>
    %68 = tpu.matmul %66, %67, %cst_33 {dimension_numbers = #tpu.dot_dimension_numbers<[1], [0], [0], [1], [0, 0, 1, 1], [], []>} : vector<8x128xbf16>, vector<128x512xbf16>, vector<8x512xf32> -> vector<8x512xf32>
    %69 = arith.addf %65, %68 : vector<8x512xf32>
    %70 = vector.extract_strided_slice %69 {offsets = [0, 0], sizes = [8, 128], strides = [1, 1]} : vector<8x512xf32> to vector<8x128xf32>
    %71 = arith.negf %70 : vector<8x128xf32>
    %72 = math.exp %71 : vector<8x128xf32>
    %cst_34 = arith.constant 1.000000e+00 : f32
    %73 = vector.broadcast %cst_34 : f32 to vector<8x128xf32>
    %74 = arith.addf %73, %72 : vector<8x128xf32>
    %75 = arith.divf %73, %74 : vector<8x128xf32>
    %76 = vector.extract_strided_slice %69 {offsets = [0, 128], sizes = [8, 128], strides = [1, 1]} : vector<8x512xf32> to vector<8x128xf32>
    %77 = arith.negf %76 : vector<8x128xf32>
    %78 = math.exp %77 : vector<8x128xf32>
    %cst_35 = arith.constant 1.000000e+00 : f32
    %79 = vector.broadcast %cst_35 : f32 to vector<8x128xf32>
    %80 = arith.addf %79, %78 : vector<8x128xf32>
    %81 = arith.divf %79, %80 : vector<8x128xf32>
    %82 = vector.extract_strided_slice %69 {offsets = [0, 256], sizes = [8, 128], strides = [1, 1]} : vector<8x512xf32> to vector<8x128xf32>
    %83 = math.tanh %82 : vector<8x128xf32>
    %84 = vector.extract_strided_slice %69 {offsets = [0, 384], sizes = [8, 128], strides = [1, 1]} : vector<8x512xf32> to vector<8x128xf32>
    %85 = arith.negf %84 : vector<8x128xf32>
    %86 = math.exp %85 : vector<8x128xf32>
    %cst_36 = arith.constant 1.000000e+00 : f32
    %87 = vector.broadcast %cst_36 : f32 to vector<8x128xf32>
    %88 = arith.addf %87, %86 : vector<8x128xf32>
    %89 = arith.divf %87, %88 : vector<8x128xf32>
    %c0_37 = arith.constant 0 : index
    %c0_38 = arith.constant 0 : index
    %90 = vector.load %arg7[%c0_37, %c0_38] : memref<8x128xf32, #tpu.memory_space<vmem>>, vector<8x128xf32>
    %91 = arith.mulf %81, %90 : vector<8x128xf32>
    %92 = arith.mulf %75, %83 : vector<8x128xf32>
    %93 = arith.addf %91, %92 : vector<8x128xf32>
    %94 = math.tanh %93 : vector<8x128xf32>
    %95 = arith.mulf %89, %94 : vector<8x128xf32>
    %96 = arith.truncf %95 : vector<8x128xf32> to vector<8x128xbf16>
    %97 = arith.addi %3, %c1_i32 : i32
    %98 = vector.broadcast %97 : i32 to vector<8x1xi32>
    %99 = arith.cmpi slt, %98, %4 : vector<8x1xi32>
    %100 = vector.shape_cast %99 : vector<8x1xi1> to vector<8x1xi1>
    %101 = vector.broadcast %100 : vector<8x1xi1> to vector<8x128xi1>
    %c0_39 = arith.constant 0 : index
    %c0_40 = arith.constant 0 : index
    %102 = vector.load %arg7[%c0_39, %c0_40] : memref<8x128xf32, #tpu.memory_space<vmem>>, vector<8x128xf32>
    %103 = arith.select %101, %93, %102 : vector<8x128xi1>, vector<8x128xf32>
    %c0_41 = arith.constant 0 : index
    %c0_42 = arith.constant 0 : index
    %104 = vector.load %arg7[%c0_41, %c0_42] : memref<8x128xf32, #tpu.memory_space<vmem>>, vector<8x128xf32>
    tpu.vector_store %arg7[%c0_41, %c0_42], %103 {strides = array<i32>} : memref<8x128xf32, #tpu.memory_space<vmem>>, vector<8x128xf32>,
    %c0_43 = arith.constant 0 : index
    %c0_44 = arith.constant 0 : index
    %105 = vector.load %arg6[%c0_43, %c0_44] : memref<8x128xbf16, #tpu.memory_space<vmem>>, vector<8x128xbf16>
    %106 = arith.select %101, %96, %105 : vector<8x128xi1>, vector<8x128xbf16>
    %c0_45 = arith.constant 0 : index
    %c0_46 = arith.constant 0 : index
    %107 = vector.load %arg6[%c0_45, %c0_46] : memref<8x128xbf16, #tpu.memory_space<vmem>>, vector<8x128xbf16>
    tpu.vector_store %arg6[%c0_45, %c0_46], %106 {strides = array<i32>} : memref<8x128xbf16, #tpu.memory_space<vmem>>, vector<8x128xbf16>,
    %cst_47 = arith.constant 0.000000e+00 : bf16
    %108 = vector.broadcast %cst_47 : bf16 to vector<8x128xbf16>
    %109 = arith.select %101, %96, %108 : vector<8x128xi1>, vector<8x128xbf16>
    %110 = arith.index_cast %c1_i32 : i32 to index
    %c0_48 = arith.constant 0 : index
    %c0_49 = arith.constant 0 : index
    %111 = vector.load %arg5[%110, %c0_48, %c0_49] : memref<8x8x128xbf16, #tpu.memory_space<vmem>>, vector<1x8x128xbf16>
    %112 = vector.shape_cast %111 : vector<1x8x128xbf16> to vector<8x128xbf16>
    %113 = vector.shape_cast %109 : vector<8x128xbf16> to vector<1x8x128xbf16>
    tpu.vector_store %arg5[%110, %c0_48, %c0_49], %113 {strides = array<i32>} : memref<8x8x128xbf16, #tpu.memory_space<vmem>>, vector<1x8x128xbf16>,
    %c2_i32 = arith.constant 2 : i32
    %114 = arith.index_cast %c2_i32 : i32 to index
    %c0_50 = arith.constant 0 : index
    %c0_51 = arith.constant 0 : index
    %115 = vector.load %arg1[%114, %c0_50, %c0_51] : memref<8x8x512xbf16, #tpu.memory_space<vmem>>, vector<1x8x512xbf16>
    %116 = vector.shape_cast %115 : vector<1x8x512xbf16> to vector<8x512xbf16>
    %117 = arith.extf %116 : vector<8x512xbf16> to vector<8x512xf32>
    %118 = arith.addf %117, %7 : vector<8x512xf32>
    %c0_52 = arith.constant 0 : index
    %c0_53 = arith.constant 0 : index
    %119 = vector.load %arg6[%c0_52, %c0_53] : memref<8x128xbf16, #tpu.memory_space<vmem>>, vector<8x128xbf16>
    %c0_54 = arith.constant 0 : index
    %c0_55 = arith.constant 0 : index
    %120 = vector.load %arg4[%c0_54, %c0_55] : memref<128x512xbf16, #tpu.memory_space<vmem>>, vector<128x512xbf16>
    %cst_56 = arith.constant dense<0.000000e+00> : vector<8x512xf32>
    %121 = tpu.matmul %119, %120, %cst_56 {dimension_numbers = #tpu.dot_dimension_numbers<[1], [0], [0], [1], [0, 0, 1, 1], [], []>} : vector<8x128xbf16>, vector<128x512xbf16>, vector<8x512xf32> -> vector<8x512xf32>
    %122 = arith.addf %118, %121 : vector<8x512xf32>
    %123 = vector.extract_strided_slice %122 {offsets = [0, 0], sizes = [8, 128], strides = [1, 1]} : vector<8x512xf32> to vector<8x128xf32>
    %124 = arith.negf %123 : vector<8x128xf32>
    %125 = math.exp %124 : vector<8x128xf32>
    %cst_57 = arith.constant 1.000000e+00 : f32
    %126 = vector.broadcast %cst_57 : f32 to vector<8x128xf32>
    %127 = arith.addf %126, %125 : vector<8x128xf32>
    %128 = arith.divf %126, %127 : vector<8x128xf32>
    %129 = vector.extract_strided_slice %122 {offsets = [0, 128], sizes = [8, 128], strides = [1, 1]} : vector<8x512xf32> to vector<8x128xf32>
    %130 = arith.negf %129 : vector<8x128xf32>
    %131 = math.exp %130 : vector<8x128xf32>
    %cst_58 = arith.constant 1.000000e+00 : f32
    %132 = vector.broadcast %cst_58 : f32 to vector<8x128xf32>
    %133 = arith.addf %132, %131 : vector<8x128xf32>
    %134 = arith.divf %132, %133 : vector<8x128xf32>
    %135 = vector.extract_strided_slice %122 {offsets = [0, 256], sizes = [8, 128], strides = [1, 1]} : vector<8x512xf32> to vector<8x128xf32>
    %136 = math.tanh %135 : vector<8x128xf32>
    %137 = vector.extract_strided_slice %122 {offsets = [0, 384], sizes = [8, 128], strides = [1, 1]} : vector<8x512xf32> to vector<8x128xf32>
    %138 = arith.negf %137 : vector<8x128xf32>
    %139 = math.exp %138 : vector<8x128xf32>
    %cst_59 = arith.constant 1.000000e+00 : f32
    %140 = vector.broadcast %cst_59 : f32 to vector<8x128xf32>
    %141 = arith.addf %140, %139 : vector<8x128xf32>
    %142 = arith.divf %140, %141 : vector<8x128xf32>
    %c0_60 = arith.constant 0 : index
    %c0_61 = arith.constant 0 : index
    %143 = vector.load %arg7[%c0_60, %c0_61] : memref<8x128xf32, #tpu.memory_space<vmem>>, vector<8x128xf32>
    %144 = arith.mulf %134, %143 : vector<8x128xf32>
    %145 = arith.mulf %128, %136 : vector<8x128xf32>
    %146 = arith.addf %144, %145 : vector<8x128xf32>
    %147 = math.tanh %146 : vector<8x128xf32>
    %148 = arith.mulf %142, %147 : vector<8x128xf32>
    %149 = arith.truncf %148 : vector<8x128xf32> to vector<8x128xbf16>
    %150 = arith.addi %3, %c2_i32 : i32
    %151 = vector.broadcast %150 : i32 to vector<8x1xi32>
    %152 = arith.cmpi slt, %151, %4 : vector<8x1xi32>
    %153 = vector.shape_cast %152 : vector<8x1xi1> to vector<8x1xi1>
    %154 = vector.broadcast %153 : vector<8x1xi1> to vector<8x128xi1>
    %c0_62 = arith.constant 0 : index
    %c0_63 = arith.constant 0 : index
    %155 = vector.load %arg7[%c0_62, %c0_63] : memref<8x128xf32, #tpu.memory_space<vmem>>, vector<8x128xf32>
    %156 = arith.select %154, %146, %155 : vector<8x128xi1>, vector<8x128xf32>
    %c0_64 = arith.constant 0 : index
    %c0_65 = arith.constant 0 : index
    %157 = vector.load %arg7[%c0_64, %c0_65] : memref<8x128xf32, #tpu.memory_space<vmem>>, vector<8x128xf32>
    tpu.vector_store %arg7[%c0_64, %c0_65], %156 {strides = array<i32>} : memref<8x128xf32, #tpu.memory_space<vmem>>, vector<8x128xf32>,
    %c0_66 = arith.constant 0 : index
    %c0_67 = arith.constant 0 : index
    %158 = vector.load %arg6[%c0_66, %c0_67] : memref<8x128xbf16, #tpu.memory_space<vmem>>, vector<8x128xbf16>
    %159 = arith.select %154, %149, %158 : vector<8x128xi1>, vector<8x128xbf16>
    %c0_68 = arith.constant 0 : index
    %c0_69 = arith.constant 0 : index
    %160 = vector.load %arg6[%c0_68, %c0_69] : memref<8x128xbf16, #tpu.memory_space<vmem>>, vector<8x128xbf16>
    tpu.vector_store %arg6[%c0_68, %c0_69], %159 {strides = array<i32>} : memref<8x128xbf16, #tpu.memory_space<vmem>>, vector<8x128xbf16>,
    %cst_70 = arith.constant 0.000000e+00 : bf16
    %161 = vector.broadcast %cst_70 : bf16 to vector<8x128xbf16>
    %162 = arith.select %154, %149, %161 : vector<8x128xi1>, vector<8x128xbf16>
    %163 = arith.index_cast %c2_i32 : i32 to index
    %c0_71 = arith.constant 0 : index
    %c0_72 = arith.constant 0 : index
    %164 = vector.load %arg5[%163, %c0_71, %c0_72] : memref<8x8x128xbf16, #tpu.memory_space<vmem>>, vector<1x8x128xbf16>
    %165 = vector.shape_cast %164 : vector<1x8x128xbf16> to vector<8x128xbf16>
    %166 = vector.shape_cast %162 : vector<8x128xbf16> to vector<1x8x128xbf16>
    tpu.vector_store %arg5[%163, %c0_71, %c0_72], %166 {strides = array<i32>} : memref<8x8x128xbf16, #tpu.memory_space<vmem>>, vector<1x8x128xbf16>,
    %c3_i32 = arith.constant 3 : i32
    %167 = arith.index_cast %c3_i32 : i32 to index
    %c0_73 = arith.constant 0 : index
    %c0_74 = arith.constant 0 : index
    %168 = vector.load %arg1[%167, %c0_73, %c0_74] : memref<8x8x512xbf16, #tpu.memory_space<vmem>>, vector<1x8x512xbf16>
    %169 = vector.shape_cast %168 : vector<1x8x512xbf16> to vector<8x512xbf16>
    %170 = arith.extf %169 : vector<8x512xbf16> to vector<8x512xf32>
    %171 = arith.addf %170, %7 : vector<8x512xf32>
    %c0_75 = arith.constant 0 : index
    %c0_76 = arith.constant 0 : index
    %172 = vector.load %arg6[%c0_75, %c0_76] : memref<8x128xbf16, #tpu.memory_space<vmem>>, vector<8x128xbf16>
    %c0_77 = arith.constant 0 : index
    %c0_78 = arith.constant 0 : index
    %173 = vector.load %arg4[%c0_77, %c0_78] : memref<128x512xbf16, #tpu.memory_space<vmem>>, vector<128x512xbf16>
    %cst_79 = arith.constant dense<0.000000e+00> : vector<8x512xf32>
    %174 = tpu.matmul %172, %173, %cst_79 {dimension_numbers = #tpu.dot_dimension_numbers<[1], [0], [0], [1], [0, 0, 1, 1], [], []>} : vector<8x128xbf16>, vector<128x512xbf16>, vector<8x512xf32> -> vector<8x512xf32>
    %175 = arith.addf %171, %174 : vector<8x512xf32>
    %176 = vector.extract_strided_slice %175 {offsets = [0, 0], sizes = [8, 128], strides = [1, 1]} : vector<8x512xf32> to vector<8x128xf32>
    %177 = arith.negf %176 : vector<8x128xf32>
    %178 = math.exp %177 : vector<8x128xf32>
    %cst_80 = arith.constant 1.000000e+00 : f32
    %179 = vector.broadcast %cst_80 : f32 to vector<8x128xf32>
    %180 = arith.addf %179, %178 : vector<8x128xf32>
    %181 = arith.divf %179, %180 : vector<8x128xf32>
    %182 = vector.extract_strided_slice %175 {offsets = [0, 128], sizes = [8, 128], strides = [1, 1]} : vector<8x512xf32> to vector<8x128xf32>
    %183 = arith.negf %182 : vector<8x128xf32>
    %184 = math.exp %183 : vector<8x128xf32>
    %cst_81 = arith.constant 1.000000e+00 : f32
    %185 = vector.broadcast %cst_81 : f32 to vector<8x128xf32>
    %186 = arith.addf %185, %184 : vector<8x128xf32>
    %187 = arith.divf %185, %186 : vector<8x128xf32>
    %188 = vector.extract_strided_slice %175 {offsets = [0, 256], sizes = [8, 128], strides = [1, 1]} : vector<8x512xf32> to vector<8x128xf32>
    %189 = math.tanh %188 : vector<8x128xf32>
    %190 = vector.extract_strided_slice %175 {offsets = [0, 384], sizes = [8, 128], strides = [1, 1]} : vector<8x512xf32> to vector<8x128xf32>
    %191 = arith.negf %190 : vector<8x128xf32>
    %192 = math.exp %191 : vector<8x128xf32>
    %cst_82 = arith.constant 1.000000e+00 : f32
    %193 = vector.broadcast %cst_82 : f32 to vector<8x128xf32>
    %194 = arith.addf %193, %192 : vector<8x128xf32>
    %195 = arith.divf %193, %194 : vector<8x128xf32>
    %c0_83 = arith.constant 0 : index
    %c0_84 = arith.constant 0 : index
    %196 = vector.load %arg7[%c0_83, %c0_84] : memref<8x128xf32, #tpu.memory_space<vmem>>, vector<8x128xf32>
    %197 = arith.mulf %187, %196 : vector<8x128xf32>
    %198 = arith.mulf %181, %189 : vector<8x128xf32>
    %199 = arith.addf %197, %198 : vector<8x128xf32>
    %200 = math.tanh %199 : vector<8x128xf32>
    %201 = arith.mulf %195, %200 : vector<8x128xf32>
    %202 = arith.truncf %201 : vector<8x128xf32> to vector<8x128xbf16>
    %203 = arith.addi %3, %c3_i32 : i32
    %204 = vector.broadcast %203 : i32 to vector<8x1xi32>
    %205 = arith.cmpi slt, %204, %4 : vector<8x1xi32>
    %206 = vector.shape_cast %205 : vector<8x1xi1> to vector<8x1xi1>
    %207 = vector.broadcast %206 : vector<8x1xi1> to vector<8x128xi1>
    %c0_85 = arith.constant 0 : index
    %c0_86 = arith.constant 0 : index
    %208 = vector.load %arg7[%c0_85, %c0_86] : memref<8x128xf32, #tpu.memory_space<vmem>>, vector<8x128xf32>
    %209 = arith.select %207, %199, %208 : vector<8x128xi1>, vector<8x128xf32>
    %c0_87 = arith.constant 0 : index
    %c0_88 = arith.constant 0 : index
    %210 = vector.load %arg7[%c0_87, %c0_88] : memref<8x128xf32, #tpu.memory_space<vmem>>, vector<8x128xf32>
    tpu.vector_store %arg7[%c0_87, %c0_88], %209 {strides = array<i32>} : memref<8x128xf32, #tpu.memory_space<vmem>>, vector<8x128xf32>,
    %c0_89 = arith.constant 0 : index
    %c0_90 = arith.constant 0 : index
    %211 = vector.load %arg6[%c0_89, %c0_90] : memref<8x128xbf16, #tpu.memory_space<vmem>>, vector<8x128xbf16>
    %212 = arith.select %207, %202, %211 : vector<8x128xi1>, vector<8x128xbf16>
    %c0_91 = arith.constant 0 : index
    %c0_92 = arith.constant 0 : index
    %213 = vector.load %arg6[%c0_91, %c0_92] : memref<8x128xbf16, #tpu.memory_space<vmem>>, vector<8x128xbf16>
    tpu.vector_store %arg6[%c0_91, %c0_92], %212 {strides = array<i32>} : memref<8x128xbf16, #tpu.memory_space<vmem>>, vector<8x128xbf16>,
    %cst_93 = arith.constant 0.000000e+00 : bf16
    %214 = vector.broadcast %cst_93 : bf16 to vector<8x128xbf16>
    %215 = arith.select %207, %202, %214 : vector<8x128xi1>, vector<8x128xbf16>
    %216 = arith.index_cast %c3_i32 : i32 to index
    %c0_94 = arith.constant 0 : index
    %c0_95 = arith.constant 0 : index
    %217 = vector.load %arg5[%216, %c0_94, %c0_95] : memref<8x8x128xbf16, #tpu.memory_space<vmem>>, vector<1x8x128xbf16>
    %218 = vector.shape_cast %217 : vector<1x8x128xbf16> to vector<8x128xbf16>
    %219 = vector.shape_cast %215 : vector<8x128xbf16> to vector<1x8x128xbf16>
    tpu.vector_store %arg5[%216, %c0_94, %c0_95], %219 {strides = array<i32>} : memref<8x8x128xbf16, #tpu.memory_space<vmem>>, vector<1x8x128xbf16>,
    %c4_i32 = arith.constant 4 : i32
    %220 = arith.index_cast %c4_i32 : i32 to index
    %c0_96 = arith.constant 0 : index
    %c0_97 = arith.constant 0 : index
    %221 = vector.load %arg1[%220, %c0_96, %c0_97] : memref<8x8x512xbf16, #tpu.memory_space<vmem>>, vector<1x8x512xbf16>
    %222 = vector.shape_cast %221 : vector<1x8x512xbf16> to vector<8x512xbf16>
    %223 = arith.extf %222 : vector<8x512xbf16> to vector<8x512xf32>
    %224 = arith.addf %223, %7 : vector<8x512xf32>
    %c0_98 = arith.constant 0 : index
    %c0_99 = arith.constant 0 : index
    %225 = vector.load %arg6[%c0_98, %c0_99] : memref<8x128xbf16, #tpu.memory_space<vmem>>, vector<8x128xbf16>
    %c0_100 = arith.constant 0 : index
    %c0_101 = arith.constant 0 : index
    %226 = vector.load %arg4[%c0_100, %c0_101] : memref<128x512xbf16, #tpu.memory_space<vmem>>, vector<128x512xbf16>
    %cst_102 = arith.constant dense<0.000000e+00> : vector<8x512xf32>
    %227 = tpu.matmul %225, %226, %cst_102 {dimension_numbers = #tpu.dot_dimension_numbers<[1], [0], [0], [1], [0, 0, 1, 1], [], []>} : vector<8x128xbf16>, vector<128x512xbf16>, vector<8x512xf32> -> vector<8x512xf32>
    %228 = arith.addf %224, %227 : vector<8x512xf32>
    %229 = vector.extract_strided_slice %228 {offsets = [0, 0], sizes = [8, 128], strides = [1, 1]} : vector<8x512xf32> to vector<8x128xf32>
    %230 = arith.negf %229 : vector<8x128xf32>
    %231 = math.exp %230 : vector<8x128xf32>
    %cst_103 = arith.constant 1.000000e+00 : f32
    %232 = vector.broadcast %cst_103 : f32 to vector<8x128xf32>
    %233 = arith.addf %232, %231 : vector<8x128xf32>
    %234 = arith.divf %232, %233 : vector<8x128xf32>
    %235 = vector.extract_strided_slice %228 {offsets = [0, 128], sizes = [8, 128], strides = [1, 1]} : vector<8x512xf32> to vector<8x128xf32>
    %236 = arith.negf %235 : vector<8x128xf32>
    %237 = math.exp %236 : vector<8x128xf32>
    %cst_104 = arith.constant 1.000000e+00 : f32
    %238 = vector.broadcast %cst_104 : f32 to vector<8x128xf32>
    %239 = arith.addf %238, %237 : vector<8x128xf32>
    %240 = arith.divf %238, %239 : vector<8x128xf32>
    %241 = vector.extract_strided_slice %228 {offsets = [0, 256], sizes = [8, 128], strides = [1, 1]} : vector<8x512xf32> to vector<8x128xf32>
    %242 = math.tanh %241 : vector<8x128xf32>
    %243 = vector.extract_strided_slice %228 {offsets = [0, 384], sizes = [8, 128], strides = [1, 1]} : vector<8x512xf32> to vector<8x128xf32>
    %244 = arith.negf %243 : vector<8x128xf32>
    %245 = math.exp %244 : vector<8x128xf32>
    %cst_105 = arith.constant 1.000000e+00 : f32
    %246 = vector.broadcast %cst_105 : f32 to vector<8x128xf32>
    %247 = arith.addf %246, %245 : vector<8x128xf32>
    %248 = arith.divf %246, %247 : vector<8x128xf32>
    %c0_106 = arith.constant 0 : index
    %c0_107 = arith.constant 0 : index
    %249 = vector.load %arg7[%c0_106, %c0_107] : memref<8x128xf32, #tpu.memory_space<vmem>>, vector<8x128xf32>
    %250 = arith.mulf %240, %249 : vector<8x128xf32>
    %251 = arith.mulf %234, %242 : vector<8x128xf32>
    %252 = arith.addf %250, %251 : vector<8x128xf32>
    %253 = math.tanh %252 : vector<8x128xf32>
    %254 = arith.mulf %248, %253 : vector<8x128xf32>
    %255 = arith.truncf %254 : vector<8x128xf32> to vector<8x128xbf16>
    %256 = arith.addi %3, %c4_i32 : i32
    %257 = vector.broadcast %256 : i32 to vector<8x1xi32>
    %258 = arith.cmpi slt, %257, %4 : vector<8x1xi32>
    %259 = vector.shape_cast %258 : vector<8x1xi1> to vector<8x1xi1>
    %260 = vector.broadcast %259 : vector<8x1xi1> to vector<8x128xi1>
    %c0_108 = arith.constant 0 : index
    %c0_109 = arith.constant 0 : index
    %261 = vector.load %arg7[%c0_108, %c0_109] : memref<8x128xf32, #tpu.memory_space<vmem>>, vector<8x128xf32>
    %262 = arith.select %260, %252, %261 : vector<8x128xi1>, vector<8x128xf32>
    %c0_110 = arith.constant 0 : index
    %c0_111 = arith.constant 0 : index
    %263 = vector.load %arg7[%c0_110, %c0_111] : memref<8x128xf32, #tpu.memory_space<vmem>>, vector<8x128xf32>
    tpu.vector_store %arg7[%c0_110, %c0_111], %262 {strides = array<i32>} : memref<8x128xf32, #tpu.memory_space<vmem>>, vector<8x128xf32>,
    %c0_112 = arith.constant 0 : index
    %c0_113 = arith.constant 0 : index
    %264 = vector.load %arg6[%c0_112, %c0_113] : memref<8x128xbf16, #tpu.memory_space<vmem>>, vector<8x128xbf16>
    %265 = arith.select %260, %255, %264 : vector<8x128xi1>, vector<8x128xbf16>
    %c0_114 = arith.constant 0 : index
    %c0_115 = arith.constant 0 : index
    %266 = vector.load %arg6[%c0_114, %c0_115] : memref<8x128xbf16, #tpu.memory_space<vmem>>, vector<8x128xbf16>
    tpu.vector_store %arg6[%c0_114, %c0_115], %265 {strides = array<i32>} : memref<8x128xbf16, #tpu.memory_space<vmem>>, vector<8x128xbf16>,
    %cst_116 = arith.constant 0.000000e+00 : bf16
    %267 = vector.broadcast %cst_116 : bf16 to vector<8x128xbf16>
    %268 = arith.select %260, %255, %267 : vector<8x128xi1>, vector<8x128xbf16>
    %269 = arith.index_cast %c4_i32 : i32 to index
    %c0_117 = arith.constant 0 : index
    %c0_118 = arith.constant 0 : index
    %270 = vector.load %arg5[%269, %c0_117, %c0_118] : memref<8x8x128xbf16, #tpu.memory_space<vmem>>, vector<1x8x128xbf16>
    %271 = vector.shape_cast %270 : vector<1x8x128xbf16> to vector<8x128xbf16>
    %272 = vector.shape_cast %268 : vector<8x128xbf16> to vector<1x8x128xbf16>
    tpu.vector_store %arg5[%269, %c0_117, %c0_118], %272 {strides = array<i32>} : memref<8x8x128xbf16, #tpu.memory_space<vmem>>, vector<1x8x128xbf16>,
    %c5_i32 = arith.constant 5 : i32
    %273 = arith.index_cast %c5_i32 : i32 to index
    %c0_119 = arith.constant 0 : index
    %c0_120 = arith.constant 0 : index
    %274 = vector.load %arg1[%273, %c0_119, %c0_120] : memref<8x8x512xbf16, #tpu.memory_space<vmem>>, vector<1x8x512xbf16>
    %275 = vector.shape_cast %274 : vector<1x8x512xbf16> to vector<8x512xbf16>
    %276 = arith.extf %275 : vector<8x512xbf16> to vector<8x512xf32>
    %277 = arith.addf %276, %7 : vector<8x512xf32>
    %c0_121 = arith.constant 0 : index
    %c0_122 = arith.constant 0 : index
    %278 = vector.load %arg6[%c0_121, %c0_122] : memref<8x128xbf16, #tpu.memory_space<vmem>>, vector<8x128xbf16>
    %c0_123 = arith.constant 0 : index
    %c0_124 = arith.constant 0 : index
    %279 = vector.load %arg4[%c0_123, %c0_124] : memref<128x512xbf16, #tpu.memory_space<vmem>>, vector<128x512xbf16>
    %cst_125 = arith.constant dense<0.000000e+00> : vector<8x512xf32>
    %280 = tpu.matmul %278, %279, %cst_125 {dimension_numbers = #tpu.dot_dimension_numbers<[1], [0], [0], [1], [0, 0, 1, 1], [], []>} : vector<8x128xbf16>, vector<128x512xbf16>, vector<8x512xf32> -> vector<8x512xf32>
    %281 = arith.addf %277, %280 : vector<8x512xf32>
    %282 = vector.extract_strided_slice %281 {offsets = [0, 0], sizes = [8, 128], strides = [1, 1]} : vector<8x512xf32> to vector<8x128xf32>
    %283 = arith.negf %282 : vector<8x128xf32>
    %284 = math.exp %283 : vector<8x128xf32>
    %cst_126 = arith.constant 1.000000e+00 : f32
    %285 = vector.broadcast %cst_126 : f32 to vector<8x128xf32>
    %286 = arith.addf %285, %284 : vector<8x128xf32>
    %287 = arith.divf %285, %286 : vector<8x128xf32>
    %288 = vector.extract_strided_slice %281 {offsets = [0, 128], sizes = [8, 128], strides = [1, 1]} : vector<8x512xf32> to vector<8x128xf32>
    %289 = arith.negf %288 : vector<8x128xf32>
    %290 = math.exp %289 : vector<8x128xf32>
    %cst_127 = arith.constant 1.000000e+00 : f32
    %291 = vector.broadcast %cst_127 : f32 to vector<8x128xf32>
    %292 = arith.addf %291, %290 : vector<8x128xf32>
    %293 = arith.divf %291, %292 : vector<8x128xf32>
    %294 = vector.extract_strided_slice %281 {offsets = [0, 256], sizes = [8, 128], strides = [1, 1]} : vector<8x512xf32> to vector<8x128xf32>
    %295 = math.tanh %294 : vector<8x128xf32>
    %296 = vector.extract_strided_slice %281 {offsets = [0, 384], sizes = [8, 128], strides = [1, 1]} : vector<8x512xf32> to vector<8x128xf32>
    %297 = arith.negf %296 : vector<8x128xf32>
    %298 = math.exp %297 : vector<8x128xf32>
    %cst_128 = arith.constant 1.000000e+00 : f32
    %299 = vector.broadcast %cst_128 : f32 to vector<8x128xf32>
    %300 = arith.addf %299, %298 : vector<8x128xf32>
    %301 = arith.divf %299, %300 : vector<8x128xf32>
    %c0_129 = arith.constant 0 : index
    %c0_130 = arith.constant 0 : index
    %302 = vector.load %arg7[%c0_129, %c0_130] : memref<8x128xf32, #tpu.memory_space<vmem>>, vector<8x128xf32>
    %303 = arith.mulf %293, %302 : vector<8x128xf32>
    %304 = arith.mulf %287, %295 : vector<8x128xf32>
    %305 = arith.addf %303, %304 : vector<8x128xf32>
    %306 = math.tanh %305 : vector<8x128xf32>
    %307 = arith.mulf %301, %306 : vector<8x128xf32>
    %308 = arith.truncf %307 : vector<8x128xf32> to vector<8x128xbf16>
    %309 = arith.addi %3, %c5_i32 : i32
    %310 = vector.broadcast %309 : i32 to vector<8x1xi32>
    %311 = arith.cmpi slt, %310, %4 : vector<8x1xi32>
    %312 = vector.shape_cast %311 : vector<8x1xi1> to vector<8x1xi1>
    %313 = vector.broadcast %312 : vector<8x1xi1> to vector<8x128xi1>
    %c0_131 = arith.constant 0 : index
    %c0_132 = arith.constant 0 : index
    %314 = vector.load %arg7[%c0_131, %c0_132] : memref<8x128xf32, #tpu.memory_space<vmem>>, vector<8x128xf32>
    %315 = arith.select %313, %305, %314 : vector<8x128xi1>, vector<8x128xf32>
    %c0_133 = arith.constant 0 : index
    %c0_134 = arith.constant 0 : index
    %316 = vector.load %arg7[%c0_133, %c0_134] : memref<8x128xf32, #tpu.memory_space<vmem>>, vector<8x128xf32>
    tpu.vector_store %arg7[%c0_133, %c0_134], %315 {strides = array<i32>} : memref<8x128xf32, #tpu.memory_space<vmem>>, vector<8x128xf32>,
    %c0_135 = arith.constant 0 : index
    %c0_136 = arith.constant 0 : index
    %317 = vector.load %arg6[%c0_135, %c0_136] : memref<8x128xbf16, #tpu.memory_space<vmem>>, vector<8x128xbf16>
    %318 = arith.select %313, %308, %317 : vector<8x128xi1>, vector<8x128xbf16>
    %c0_137 = arith.constant 0 : index
    %c0_138 = arith.constant 0 : index
    %319 = vector.load %arg6[%c0_137, %c0_138] : memref<8x128xbf16, #tpu.memory_space<vmem>>, vector<8x128xbf16>
    tpu.vector_store %arg6[%c0_137, %c0_138], %318 {strides = array<i32>} : memref<8x128xbf16, #tpu.memory_space<vmem>>, vector<8x128xbf16>,
    %cst_139 = arith.constant 0.000000e+00 : bf16
    %320 = vector.broadcast %cst_139 : bf16 to vector<8x128xbf16>
    %321 = arith.select %313, %308, %320 : vector<8x128xi1>, vector<8x128xbf16>
    %322 = arith.index_cast %c5_i32 : i32 to index
    %c0_140 = arith.constant 0 : index
    %c0_141 = arith.constant 0 : index
    %323 = vector.load %arg5[%322, %c0_140, %c0_141] : memref<8x8x128xbf16, #tpu.memory_space<vmem>>, vector<1x8x128xbf16>
    %324 = vector.shape_cast %323 : vector<1x8x128xbf16> to vector<8x128xbf16>
    %325 = vector.shape_cast %321 : vector<8x128xbf16> to vector<1x8x128xbf16>
    tpu.vector_store %arg5[%322, %c0_140, %c0_141], %325 {strides = array<i32>} : memref<8x8x128xbf16, #tpu.memory_space<vmem>>, vector<1x8x128xbf16>,
    %c6_i32 = arith.constant 6 : i32
    %326 = arith.index_cast %c6_i32 : i32 to index
    %c0_142 = arith.constant 0 : index
    %c0_143 = arith.constant 0 : index
    %327 = vector.load %arg1[%326, %c0_142, %c0_143] : memref<8x8x512xbf16, #tpu.memory_space<vmem>>, vector<1x8x512xbf16>
    %328 = vector.shape_cast %327 : vector<1x8x512xbf16> to vector<8x512xbf16>
    %329 = arith.extf %328 : vector<8x512xbf16> to vector<8x512xf32>
    %330 = arith.addf %329, %7 : vector<8x512xf32>
    %c0_144 = arith.constant 0 : index
    %c0_145 = arith.constant 0 : index
    %331 = vector.load %arg6[%c0_144, %c0_145] : memref<8x128xbf16, #tpu.memory_space<vmem>>, vector<8x128xbf16>
    %c0_146 = arith.constant 0 : index
    %c0_147 = arith.constant 0 : index
    %332 = vector.load %arg4[%c0_146, %c0_147] : memref<128x512xbf16, #tpu.memory_space<vmem>>, vector<128x512xbf16>
    %cst_148 = arith.constant dense<0.000000e+00> : vector<8x512xf32>
    %333 = tpu.matmul %331, %332, %cst_148 {dimension_numbers = #tpu.dot_dimension_numbers<[1], [0], [0], [1], [0, 0, 1, 1], [], []>} : vector<8x128xbf16>, vector<128x512xbf16>, vector<8x512xf32> -> vector<8x512xf32>
    %334 = arith.addf %330, %333 : vector<8x512xf32>
    %335 = vector.extract_strided_slice %334 {offsets = [0, 0], sizes = [8, 128], strides = [1, 1]} : vector<8x512xf32> to vector<8x128xf32>
    %336 = arith.negf %335 : vector<8x128xf32>
    %337 = math.exp %336 : vector<8x128xf32>
    %cst_149 = arith.constant 1.000000e+00 : f32
    %338 = vector.broadcast %cst_149 : f32 to vector<8x128xf32>
    %339 = arith.addf %338, %337 : vector<8x128xf32>
    %340 = arith.divf %338, %339 : vector<8x128xf32>
    %341 = vector.extract_strided_slice %334 {offsets = [0, 128], sizes = [8, 128], strides = [1, 1]} : vector<8x512xf32> to vector<8x128xf32>
    %342 = arith.negf %341 : vector<8x128xf32>
    %343 = math.exp %342 : vector<8x128xf32>
    %cst_150 = arith.constant 1.000000e+00 : f32
    %344 = vector.broadcast %cst_150 : f32 to vector<8x128xf32>
    %345 = arith.addf %344, %343 : vector<8x128xf32>
    %346 = arith.divf %344, %345 : vector<8x128xf32>
    %347 = vector.extract_strided_slice %334 {offsets = [0, 256], sizes = [8, 128], strides = [1, 1]} : vector<8x512xf32> to vector<8x128xf32>
    %348 = math.tanh %347 : vector<8x128xf32>
    %349 = vector.extract_strided_slice %334 {offsets = [0, 384], sizes = [8, 128], strides = [1, 1]} : vector<8x512xf32> to vector<8x128xf32>
    %350 = arith.negf %349 : vector<8x128xf32>
    %351 = math.exp %350 : vector<8x128xf32>
    %cst_151 = arith.constant 1.000000e+00 : f32
    %352 = vector.broadcast %cst_151 : f32 to vector<8x128xf32>
    %353 = arith.addf %352, %351 : vector<8x128xf32>
    %354 = arith.divf %352, %353 : vector<8x128xf32>
    %c0_152 = arith.constant 0 : index
    %c0_153 = arith.constant 0 : index
    %355 = vector.load %arg7[%c0_152, %c0_153] : memref<8x128xf32, #tpu.memory_space<vmem>>, vector<8x128xf32>
    %356 = arith.mulf %346, %355 : vector<8x128xf32>
    %357 = arith.mulf %340, %348 : vector<8x128xf32>
    %358 = arith.addf %356, %357 : vector<8x128xf32>
    %359 = math.tanh %358 : vector<8x128xf32>
    %360 = arith.mulf %354, %359 : vector<8x128xf32>
    %361 = arith.truncf %360 : vector<8x128xf32> to vector<8x128xbf16>
    %362 = arith.addi %3, %c6_i32 : i32
    %363 = vector.broadcast %362 : i32 to vector<8x1xi32>
    %364 = arith.cmpi slt, %363, %4 : vector<8x1xi32>
    %365 = vector.shape_cast %364 : vector<8x1xi1> to vector<8x1xi1>
    %366 = vector.broadcast %365 : vector<8x1xi1> to vector<8x128xi1>
    %c0_154 = arith.constant 0 : index
    %c0_155 = arith.constant 0 : index
    %367 = vector.load %arg7[%c0_154, %c0_155] : memref<8x128xf32, #tpu.memory_space<vmem>>, vector<8x128xf32>
    %368 = arith.select %366, %358, %367 : vector<8x128xi1>, vector<8x128xf32>
    %c0_156 = arith.constant 0 : index
    %c0_157 = arith.constant 0 : index
    %369 = vector.load %arg7[%c0_156, %c0_157] : memref<8x128xf32, #tpu.memory_space<vmem>>, vector<8x128xf32>
    tpu.vector_store %arg7[%c0_156, %c0_157], %368 {strides = array<i32>} : memref<8x128xf32, #tpu.memory_space<vmem>>, vector<8x128xf32>,
    %c0_158 = arith.constant 0 : index
    %c0_159 = arith.constant 0 : index
    %370 = vector.load %arg6[%c0_158, %c0_159] : memref<8x128xbf16, #tpu.memory_space<vmem>>, vector<8x128xbf16>
    %371 = arith.select %366, %361, %370 : vector<8x128xi1>, vector<8x128xbf16>
    %c0_160 = arith.constant 0 : index
    %c0_161 = arith.constant 0 : index
    %372 = vector.load %arg6[%c0_160, %c0_161] : memref<8x128xbf16, #tpu.memory_space<vmem>>, vector<8x128xbf16>
    tpu.vector_store %arg6[%c0_160, %c0_161], %371 {strides = array<i32>} : memref<8x128xbf16, #tpu.memory_space<vmem>>, vector<8x128xbf16>,
    %cst_162 = arith.constant 0.000000e+00 : bf16
    %373 = vector.broadcast %cst_162 : bf16 to vector<8x128xbf16>
    %374 = arith.select %366, %361, %373 : vector<8x128xi1>, vector<8x128xbf16>
    %375 = arith.index_cast %c6_i32 : i32 to index
    %c0_163 = arith.constant 0 : index
    %c0_164 = arith.constant 0 : index
    %376 = vector.load %arg5[%375, %c0_163, %c0_164] : memref<8x8x128xbf16, #tpu.memory_space<vmem>>, vector<1x8x128xbf16>
    %377 = vector.shape_cast %376 : vector<1x8x128xbf16> to vector<8x128xbf16>
    %378 = vector.shape_cast %374 : vector<8x128xbf16> to vector<1x8x128xbf16>
    tpu.vector_store %arg5[%375, %c0_163, %c0_164], %378 {strides = array<i32>} : memref<8x8x128xbf16, #tpu.memory_space<vmem>>, vector<1x8x128xbf16>,
    %c7_i32 = arith.constant 7 : i32
    %379 = arith.index_cast %c7_i32 : i32 to index
    %c0_165 = arith.constant 0 : index
    %c0_166 = arith.constant 0 : index
    %380 = vector.load %arg1[%379, %c0_165, %c0_166] : memref<8x8x512xbf16, #tpu.memory_space<vmem>>, vector<1x8x512xbf16>
    %381 = vector.shape_cast %380 : vector<1x8x512xbf16> to vector<8x512xbf16>
    %382 = arith.extf %381 : vector<8x512xbf16> to vector<8x512xf32>
    %383 = arith.addf %382, %7 : vector<8x512xf32>
    %c0_167 = arith.constant 0 : index
    %c0_168 = arith.constant 0 : index
    %384 = vector.load %arg6[%c0_167, %c0_168] : memref<8x128xbf16, #tpu.memory_space<vmem>>, vector<8x128xbf16>
    %c0_169 = arith.constant 0 : index
    %c0_170 = arith.constant 0 : index
    %385 = vector.load %arg4[%c0_169, %c0_170] : memref<128x512xbf16, #tpu.memory_space<vmem>>, vector<128x512xbf16>
    %cst_171 = arith.constant dense<0.000000e+00> : vector<8x512xf32>
    %386 = tpu.matmul %384, %385, %cst_171 {dimension_numbers = #tpu.dot_dimension_numbers<[1], [0], [0], [1], [0, 0, 1, 1], [], []>} : vector<8x128xbf16>, vector<128x512xbf16>, vector<8x512xf32> -> vector<8x512xf32>
    %387 = arith.addf %383, %386 : vector<8x512xf32>
    %388 = vector.extract_strided_slice %387 {offsets = [0, 0], sizes = [8, 128], strides = [1, 1]} : vector<8x512xf32> to vector<8x128xf32>
    %389 = arith.negf %388 : vector<8x128xf32>
    %390 = math.exp %389 : vector<8x128xf32>
    %cst_172 = arith.constant 1.000000e+00 : f32
    %391 = vector.broadcast %cst_172 : f32 to vector<8x128xf32>
    %392 = arith.addf %391, %390 : vector<8x128xf32>
    %393 = arith.divf %391, %392 : vector<8x128xf32>
    %394 = vector.extract_strided_slice %387 {offsets = [0, 128], sizes = [8, 128], strides = [1, 1]} : vector<8x512xf32> to vector<8x128xf32>
    %395 = arith.negf %394 : vector<8x128xf32>
    %396 = math.exp %395 : vector<8x128xf32>
    %cst_173 = arith.constant 1.000000e+00 : f32
    %397 = vector.broadcast %cst_173 : f32 to vector<8x128xf32>
    %398 = arith.addf %397, %396 : vector<8x128xf32>
    %399 = arith.divf %397, %398 : vector<8x128xf32>
    %400 = vector.extract_strided_slice %387 {offsets = [0, 256], sizes = [8, 128], strides = [1, 1]} : vector<8x512xf32> to vector<8x128xf32>
    %401 = math.tanh %400 : vector<8x128xf32>
    %402 = vector.extract_strided_slice %387 {offsets = [0, 384], sizes = [8, 128], strides = [1, 1]} : vector<8x512xf32> to vector<8x128xf32>
    %403 = arith.negf %402 : vector<8x128xf32>
    %404 = math.exp %403 : vector<8x128xf32>
    %cst_174 = arith.constant 1.000000e+00 : f32
    %405 = vector.broadcast %cst_174 : f32 to vector<8x128xf32>
    %406 = arith.addf %405, %404 : vector<8x128xf32>
    %407 = arith.divf %405, %406 : vector<8x128xf32>
    %c0_175 = arith.constant 0 : index
    %c0_176 = arith.constant 0 : index
    %408 = vector.load %arg7[%c0_175, %c0_176] : memref<8x128xf32, #tpu.memory_space<vmem>>, vector<8x128xf32>
    %409 = arith.mulf %399, %408 : vector<8x128xf32>
    %410 = arith.mulf %393, %401 : vector<8x128xf32>
    %411 = arith.addf %409, %410 : vector<8x128xf32>
    %412 = math.tanh %411 : vector<8x128xf32>
    %413 = arith.mulf %407, %412 : vector<8x128xf32>
    %414 = arith.truncf %413 : vector<8x128xf32> to vector<8x128xbf16>
    %415 = arith.addi %3, %c7_i32 : i32
    %416 = vector.broadcast %415 : i32 to vector<8x1xi32>
    %417 = arith.cmpi slt, %416, %4 : vector<8x1xi32>
    %418 = vector.shape_cast %417 : vector<8x1xi1> to vector<8x1xi1>
    %419 = vector.broadcast %418 : vector<8x1xi1> to vector<8x128xi1>
    %c0_177 = arith.constant 0 : index
    %c0_178 = arith.constant 0 : index
    %420 = vector.load %arg7[%c0_177, %c0_178] : memref<8x128xf32, #tpu.memory_space<vmem>>, vector<8x128xf32>
    %421 = arith.select %419, %411, %420 : vector<8x128xi1>, vector<8x128xf32>
    %c0_179 = arith.constant 0 : index
    %c0_180 = arith.constant 0 : index
    %422 = vector.load %arg7[%c0_179, %c0_180] : memref<8x128xf32, #tpu.memory_space<vmem>>, vector<8x128xf32>
    tpu.vector_store %arg7[%c0_179, %c0_180], %421 {strides = array<i32>} : memref<8x128xf32, #tpu.memory_space<vmem>>, vector<8x128xf32>,
    %c0_181 = arith.constant 0 : index
    %c0_182 = arith.constant 0 : index
    %423 = vector.load %arg6[%c0_181, %c0_182] : memref<8x128xbf16, #tpu.memory_space<vmem>>, vector<8x128xbf16>
    %424 = arith.select %419, %414, %423 : vector<8x128xi1>, vector<8x128xbf16>
    %c0_183 = arith.constant 0 : index
    %c0_184 = arith.constant 0 : index
    %425 = vector.load %arg6[%c0_183, %c0_184] : memref<8x128xbf16, #tpu.memory_space<vmem>>, vector<8x128xbf16>
    tpu.vector_store %arg6[%c0_183, %c0_184], %424 {strides = array<i32>} : memref<8x128xbf16, #tpu.memory_space<vmem>>, vector<8x128xbf16>,
    %cst_185 = arith.constant 0.000000e+00 : bf16
    %426 = vector.broadcast %cst_185 : bf16 to vector<8x128xbf16>
    %427 = arith.select %419, %414, %426 : vector<8x128xi1>, vector<8x128xbf16>
    %428 = arith.index_cast %c7_i32 : i32 to index
    %c0_186 = arith.constant 0 : index
    %c0_187 = arith.constant 0 : index
    %429 = vector.load %arg5[%428, %c0_186, %c0_187] : memref<8x8x128xbf16, #tpu.memory_space<vmem>>, vector<1x8x128xbf16>
    %430 = vector.shape_cast %429 : vector<1x8x128xbf16> to vector<8x128xbf16>
    %431 = vector.shape_cast %427 : vector<8x128xbf16> to vector<1x8x128xbf16>
    tpu.vector_store %arg5[%428, %c0_186, %c0_187], %431 {strides = array<i32>} : memref<8x8x128xbf16, #tpu.memory_space<vmem>>, vector<1x8x128xbf16>,
    %c8_i32_188 = arith.constant 8 : i32
    return
  }
  func.func @transform_0(%arg0: i32) -> (i32, i32, i32) {
    %c0_i32 = arith.constant 0 : i32
    %c0_i32_0 = arith.constant 0 : i32
    %c0_i32_1 = arith.constant 0 : i32
    return %arg0, %c0_i32, %c0_i32_0 : i32, i32, i32
  }
  func.func @transform_1(%arg0: i32) -> (i32, i32) {
    %c0_i32 = arith.constant 0 : i32
    %c0_i32_0 = arith.constant 0 : i32
    %c0_i32_1 = arith.constant 0 : i32
    return %c0_i32, %c0_i32_0 : i32, i32
  }
  func.func @transform_2(%arg0: i32) -> (i32, i32) {
    %c0_i32 = arith.constant 0 : i32
    %c0_i32_0 = arith.constant 0 : i32
    %c0_i32_1 = arith.constant 0 : i32
    return %c0_i32, %c0_i32_0 : i32, i32
  }
  func.func @transform_3(%arg0: i32) -> (i32, i32) {
    %c0_i32 = arith.constant 0 : i32
    %c0_i32_0 = arith.constant 0 : i32
    %c0_i32_1 = arith.constant 0 : i32
    return %c0_i32, %c0_i32_0 : i32, i32
  }
  func.func @transform_4(%arg0: i32) -> (i32, i32, i32) {
    %c0_i32 = arith.constant 0 : i32
    %c0_i32_0 = arith.constant 0 : i32
    %c0_i32_1 = arith.constant 0 : i32
    return %arg0, %c0_i32, %c0_i32_0 : i32, i32, i32
  }
}

module attributes {stable_mosaic.version = 11 : i64} {
  func.func @_lstm_recurrence_kernel(%arg0: i32, %arg1: memref<8x8x512xbf16, #tpu.memory_space<vmem>>, %arg2: memref<8x1xi32, #tpu.memory_space<vmem>>, %arg3: memref<1x512xf32, #tpu.memory_space<vmem>>, %arg4: memref<128x512xbf16, #tpu.memory_space<vmem>>, %arg5: memref<8x8x128xbf16, #tpu.memory_space<vmem>>, %arg6: memref<8x128xbf16, #tpu.memory_space<vmem>>, %arg7: memref<8x128xf32, #tpu.memory_space<vmem>>) attributes {dimension_semantics = [#tpu.dimension_semantics<arbitrary>], iteration_bounds = array<i64: 1>, scalar_prefetch = 0 : i64, scratch_operands = 2 : i64, tpu.core_type = #tpu.core_type<tc>, window_params = [{transform_indices = @transform_0, window_bounds = array<i64: 8, 8, 512>}, {pipeline_mode = #tpu.pipeline_mode<synchronous>, transform_indices = @transform_1, window_bounds = array<i64: 8, 1>}, {pipeline_mode = #tpu.pipeline_mode<synchronous>, transform_indices = @transform_2, window_bounds = array<i64: 1, 512>}, {pipeline_mode = #tpu.pipeline_mode<synchronous>, transform_indices = @transform_3, window_bounds = array<i64: 128, 512>}, {transform_indices = @transform_4, window_bounds = array<i64: 8, 8, 128>}]} {
    %c0_i32 = arith.constant 0 : i32
    %0 = arith.cmpi eq, %arg0, %c0_i32 : i32
    %1 = arith.extui %0 : i1 to i32
    %c0_i32_0 = arith.constant 0 : i32
    %2 = arith.cmpi ne, %1, %c0_i32_0 : i32
    scf.if %2 {
      %cst_189 = arith.constant 0.000000e+00 : bf16
      %432 = vector.broadcast %cst_189 : bf16 to vector<8x128xbf16>
      %c0_190 = arith.constant 0 : index
      %c0_191 = arith.constant 0 : index
      %433 = vector.load %arg6[%c0_190, %c0_191] : memref<8x128xbf16, #tpu.memory_space<vmem>>, vector<8x128xbf16>
      tpu.vector_store %arg6[%c0_190, %c0_191], %432 {strides = array<i32>} : memref<8x128xbf16, #tpu.memory_space<vmem>>, vector<8x128xbf16>,
      %cst_192 = arith.constant 0.000000e+00 : f32
      %434 = vector.broadcast %cst_192 : f32 to vector<8x128xf32>
      %c0_193 = arith.constant 0 : index
      %c0_194 = arith.constant 0 : index
      %435 = vector.load %arg7[%c0_193, %c0_194] : memref<8x128xf32, #tpu.memory_space<vmem>>, vector<8x128xf32>
      tpu.vector_store %arg7[%c0_193, %c0_194], %434 {strides = array<i32>} : memref<8x128xf32, #tpu.memory_space<vmem>>, vector<8x128xf32>,
    } else {
    }
    %c8_i32 = arith.constant 8 : i32
    %3 = arith.muli %arg0, %c8_i32 : i32
    %c0 = arith.constant 0 : index
    %c0_1 = arith.constant 0 : index
    %4 = vector.load %arg2[%c0, %c0_1] : memref<8x1xi32, #tpu.memory_space<vmem>>, vector<8x1xi32>
    %c0_2 = arith.constant 0 : index
    %c0_3 = arith.constant 0 : index
    %5 = vector.load %arg3[%c0_2, %c0_3] : memref<1x512xf32, #tpu.memory_space<vmem>>, vector<1x512xf32>
    %6 = vector.shape_cast %5 : vector<1x512xf32> to vector<1x512xf32>
    %7 = vector.broadcast %6 : vector<1x512xf32> to vector<8x512xf32>
    %c0_i32_4 = arith.constant 0 : i32
    %8 = arith.index_cast %c0_i32_4 : i32 to index
    %c0_5 = arith.constant 0 : index
    %c0_6 = arith.constant 0 : index
    %9 = vector.load %arg1[%8, %c0_5, %c0_6] : memref<8x8x512xbf16, #tpu.memory_space<vmem>>, vector<1x8x512xbf16>
    %10 = vector.shape_cast %9 : vector<1x8x512xbf16> to vector<8x512xbf16>
    %11 = arith.extf %10 : vector<8x512xbf16> to vector<8x512xf32>
    %12 = arith.addf %11, %7 : vector<8x512xf32>
    %c0_7 = arith.constant 0 : index
    %c0_8 = arith.constant 0 : index
    %13 = vector.load %arg6[%c0_7, %c0_8] : memref<8x128xbf16, #tpu.memory_space<vmem>>, vector<8x128xbf16>
    %c0_9 = arith.constant 0 : index
    %c0_10 = arith.constant 0 : index
    %14 = vector.load %arg4[%c0_9, %c0_10] : memref<128x512xbf16, #tpu.memory_space<vmem>>, vector<128x512xbf16>
    %cst = arith.constant dense<0.000000e+00> : vector<8x512xf32>
    %15 = tpu.matmul %13, %14, %cst {dimension_numbers = #tpu.dot_dimension_numbers<[1], [0], [0], [1], [0, 0, 1, 1], [], []>} : vector<8x128xbf16>, vector<128x512xbf16>, vector<8x512xf32> -> vector<8x512xf32>
    %16 = arith.addf %12, %15 : vector<8x512xf32>
    %17 = vector.extract_strided_slice %16 {offsets = [0, 0], sizes = [8, 128], strides = [1, 1]} : vector<8x512xf32> to vector<8x128xf32>
    %18 = arith.negf %17 : vector<8x128xf32>
    %19 = math.exp %18 : vector<8x128xf32>
    %cst_11 = arith.constant 1.000000e+00 : f32
    %20 = vector.broadcast %cst_11 : f32 to vector<8x128xf32>
    %21 = arith.addf %20, %19 : vector<8x128xf32>
    %22 = arith.divf %20, %21 : vector<8x128xf32>
    %23 = vector.extract_strided_slice %16 {offsets = [0, 128], sizes = [8, 128], strides = [1, 1]} : vector<8x512xf32> to vector<8x128xf32>
    %24 = arith.negf %23 : vector<8x128xf32>
    %25 = math.exp %24 : vector<8x128xf32>
    %cst_12 = arith.constant 1.000000e+00 : f32
    %26 = vector.broadcast %cst_12 : f32 to vector<8x128xf32>
    %27 = arith.addf %26, %25 : vector<8x128xf32>
    %28 = arith.divf %26, %27 : vector<8x128xf32>
    %29 = vector.extract_strided_slice %16 {offsets = [0, 256], sizes = [8, 128], strides = [1, 1]} : vector<8x512xf32> to vector<8x128xf32>
    %30 = math.tanh %29 : vector<8x128xf32>
    %31 = vector.extract_strided_slice %16 {offsets = [0, 384], sizes = [8, 128], strides = [1, 1]} : vector<8x512xf32> to vector<8x128xf32>
    %32 = arith.negf %31 : vector<8x128xf32>
    %33 = math.exp %32 : vector<8x128xf32>
    %cst_13 = arith.constant 1.000000e+00 : f32
    %34 = vector.broadcast %cst_13 : f32 to vector<8x128xf32>
    %35 = arith.addf %34, %33 : vector<8x128xf32>
    %36 = arith.divf %34, %35 : vector<8x128xf32>
    %c0_14 = arith.constant 0 : index
    %c0_15 = arith.constant 0 : index
    %37 = vector.load %arg7[%c0_14, %c0_15] : memref<8x128xf32, #tpu.memory_space<vmem>>, vector<8x128xf32>
    %38 = arith.mulf %28, %37 : vector<8x128xf32>
    %39 = arith.mulf %22, %30 : vector<8x128xf32>
    %40 = arith.addf %38, %39 : vector<8x128xf32>
    %41 = math.tanh %40 : vector<8x128xf32>
    %42 = arith.mulf %36, %41 : vector<8x128xf32>
    %43 = arith.truncf %42 : vector<8x128xf32> to vector<8x128xbf16>
    %44 = arith.addi %3, %c0_i32_4 : i32
    %45 = vector.broadcast %44 : i32 to vector<8x1xi32>
    %46 = arith.cmpi slt, %45, %4 : vector<8x1xi32>
    %47 = vector.shape_cast %46 : vector<8x1xi1> to vector<8x1xi1>
    %48 = vector.broadcast %47 : vector<8x1xi1> to vector<8x128xi1>
    %c0_16 = arith.constant 0 : index
    %c0_17 = arith.constant 0 : index
    %49 = vector.load %arg7[%c0_16, %c0_17] : memref<8x128xf32, #tpu.memory_space<vmem>>, vector<8x128xf32>
    %50 = arith.select %48, %40, %49 : vector<8x128xi1>, vector<8x128xf32>
    %c0_18 = arith.constant 0 : index
    %c0_19 = arith.constant 0 : index
    %51 = vector.load %arg7[%c0_18, %c0_19] : memref<8x128xf32, #tpu.memory_space<vmem>>, vector<8x128xf32>
    tpu.vector_store %arg7[%c0_18, %c0_19], %50 {strides = array<i32>} : memref<8x128xf32, #tpu.memory_space<vmem>>, vector<8x128xf32>,
    %c0_20 = arith.constant 0 : index
    %c0_21 = arith.constant 0 : index
    %52 = vector.load %arg6[%c0_20, %c0_21] : memref<8x128xbf16, #tpu.memory_space<vmem>>, vector<8x128xbf16>
    %53 = arith.select %48, %43, %52 : vector<8x128xi1>, vector<8x128xbf16>
    %c0_22 = arith.constant 0 : index
    %c0_23 = arith.constant 0 : index
    %54 = vector.load %arg6[%c0_22, %c0_23] : memref<8x128xbf16, #tpu.memory_space<vmem>>, vector<8x128xbf16>
    tpu.vector_store %arg6[%c0_22, %c0_23], %53 {strides = array<i32>} : memref<8x128xbf16, #tpu.memory_space<vmem>>, vector<8x128xbf16>,
    %cst_24 = arith.constant 0.000000e+00 : bf16
    %55 = vector.broadcast %cst_24 : bf16 to vector<8x128xbf16>
    %56 = arith.select %48, %43, %55 : vector<8x128xi1>, vector<8x128xbf16>
    %57 = arith.index_cast %c0_i32_4 : i32 to index
    %c0_25 = arith.constant 0 : index
    %c0_26 = arith.constant 0 : index
    %58 = vector.load %arg5[%57, %c0_25, %c0_26] : memref<8x8x128xbf16, #tpu.memory_space<vmem>>, vector<1x8x128xbf16>
    %59 = vector.shape_cast %58 : vector<1x8x128xbf16> to vector<8x128xbf16>
    %60 = vector.shape_cast %56 : vector<8x128xbf16> to vector<1x8x128xbf16>
    tpu.vector_store %arg5[%57, %c0_25, %c0_26], %60 {strides = array<i32>} : memref<8x8x128xbf16, #tpu.memory_space<vmem>>, vector<1x8x128xbf16>,
    %c1_i32 = arith.constant 1 : i32
    %61 = arith.index_cast %c1_i32 : i32 to index
    %c0_27 = arith.constant 0 : index
    %c0_28 = arith.constant 0 : index
    %62 = vector.load %arg1[%61, %c0_27, %c0_28] : memref<8x8x512xbf16, #tpu.memory_space<vmem>>, vector<1x8x512xbf16>
    %63 = vector.shape_cast %62 : vector<1x8x512xbf16> to vector<8x512xbf16>
    %64 = arith.extf %63 : vector<8x512xbf16> to vector<8x512xf32>
    %65 = arith.addf %64, %7 : vector<8x512xf32>
    %c0_29 = arith.constant 0 : index
    %c0_30 = arith.constant 0 : index
    %66 = vector.load %arg6[%c0_29, %c0_30] : memref<8x128xbf16, #tpu.memory_space<vmem>>, vector<8x128xbf16>
    %c0_31 = arith.constant 0 : index
    %c0_32 = arith.constant 0 : index
    %67 = vector.load %arg4[%c0_31, %c0_32] : memref<128x512xbf16, #tpu.memory_space<vmem>>, vector<128x512xbf16>
    %cst_33 = arith.constant dense<0.000000e+00> : vector<8x512xf32>
    %68 = tpu.matmul %66, %67, %cst_33 {dimension_numbers = #tpu.dot_dimension_numbers<[1], [0], [0], [1], [0, 0, 1, 1], [], []>} : vector<8x128xbf16>, vector<128x512xbf16>, vector<8x512xf32> -> vector<8x512xf32>
    %69 = arith.addf %65, %68 : vector<8x512xf32>
    %70 = vector.extract_strided_slice %69 {offsets = [0, 0], sizes = [8, 128], strides = [1, 1]} : vector<8x512xf32> to vector<8x128xf32>
    %71 = arith.negf %70 : vector<8x128xf32>
    %72 = math.exp %71 : vector<8x128xf32>
    %cst_34 = arith.constant 1.000000e+00 : f32
    %73 = vector.broadcast %cst_34 : f32 to vector<8x128xf32>
    %74 = arith.addf %73, %72 : vector<8x128xf32>
    %75 = arith.divf %73, %74 : vector<8x128xf32>
    %76 = vector.extract_strided_slice %69 {offsets = [0, 128], sizes = [8, 128], strides = [1, 1]} : vector<8x512xf32> to vector<8x128xf32>
    %77 = arith.negf %76 : vector<8x128xf32>
    %78 = math.exp %77 : vector<8x128xf32>
    %cst_35 = arith.constant 1.000000e+00 : f32
    %79 = vector.broadcast %cst_35 : f32 to vector<8x128xf32>
    %80 = arith.addf %79, %78 : vector<8x128xf32>
    %81 = arith.divf %79, %80 : vector<8x128xf32>
    %82 = vector.extract_strided_slice %69 {offsets = [0, 256], sizes = [8, 128], strides = [1, 1]} : vector<8x512xf32> to vector<8x128xf32>
    %83 = math.tanh %82 : vector<8x128xf32>
    %84 = vector.extract_strided_slice %69 {offsets = [0, 384], sizes = [8, 128], strides = [1, 1]} : vector<8x512xf32> to vector<8x128xf32>
    %85 = arith.negf %84 : vector<8x128xf32>
    %86 = math.exp %85 : vector<8x128xf32>
    %cst_36 = arith.constant 1.000000e+00 : f32
    %87 = vector.broadcast %cst_36 : f32 to vector<8x128xf32>
    %88 = arith.addf %87, %86 : vector<8x128xf32>
    %89 = arith.divf %87, %88 : vector<8x128xf32>
    %c0_37 = arith.constant 0 : index
    %c0_38 = arith.constant 0 : index
    %90 = vector.load %arg7[%c0_37, %c0_38] : memref<8x128xf32, #tpu.memory_space<vmem>>, vector<8x128xf32>
    %91 = arith.mulf %81, %90 : vector<8x128xf32>
    %92 = arith.mulf %75, %83 : vector<8x128xf32>
    %93 = arith.addf %91, %92 : vector<8x128xf32>
    %94 = math.tanh %93 : vector<8x128xf32>
    %95 = arith.mulf %89, %94 : vector<8x128xf32>
    %96 = arith.truncf %95 : vector<8x128xf32> to vector<8x128xbf16>
    %97 = arith.addi %3, %c1_i32 : i32
    %98 = vector.broadcast %97 : i32 to vector<8x1xi32>
    %99 = arith.cmpi slt, %98, %4 : vector<8x1xi32>
    %100 = vector.shape_cast %99 : vector<8x1xi1> to vector<8x1xi1>
    %101 = vector.broadcast %100 : vector<8x1xi1> to vector<8x128xi1>
    %c0_39 = arith.constant 0 : index
    %c0_40 = arith.constant 0 : index
    %102 = vector.load %arg7[%c0_39, %c0_40] : memref<8x128xf32, #tpu.memory_space<vmem>>, vector<8x128xf32>
    %103 = arith.select %101, %93, %102 : vector<8x128xi1>, vector<8x128xf32>
    %c0_41 = arith.constant 0 : index
    %c0_42 = arith.constant 0 : index
    %104 = vector.load %arg7[%c0_41, %c0_42] : memref<8x128xf32, #tpu.memory_space<vmem>>, vector<8x128xf32>
    tpu.vector_store %arg7[%c0_41, %c0_42], %103 {strides = array<i32>} : memref<8x128xf32, #tpu.memory_space<vmem>>, vector<8x128xf32>,
    %c0_43 = arith.constant 0 : index
    %c0_44 = arith.constant 0 : index
    %105 = vector.load %arg6[%c0_43, %c0_44] : memref<8x128xbf16, #tpu.memory_space<vmem>>, vector<8x128xbf16>
    %106 = arith.select %101, %96, %105 : vector<8x128xi1>, vector<8x128xbf16>
    %c0_45 = arith.constant 0 : index
    %c0_46 = arith.constant 0 : index
    %107 = vector.load %arg6[%c0_45, %c0_46] : memref<8x128xbf16, #tpu.memory_space<vmem>>, vector<8x128xbf16>
    tpu.vector_store %arg6[%c0_45, %c0_46], %106 {strides = array<i32>} : memref<8x128xbf16, #tpu.memory_space<vmem>>, vector<8x128xbf16>,
    %cst_47 = arith.constant 0.000000e+00 : bf16
    %108 = vector.broadcast %cst_47 : bf16 to vector<8x128xbf16>
    %109 = arith.select %101, %96, %108 : vector<8x128xi1>, vector<8x128xbf16>
    %110 = arith.index_cast %c1_i32 : i32 to index
    %c0_48 = arith.constant 0 : index
    %c0_49 = arith.constant 0 : index
    %111 = vector.load %arg5[%110, %c0_48, %c0_49] : memref<8x8x128xbf16, #tpu.memory_space<vmem>>, vector<1x8x128xbf16>
    %112 = vector.shape_cast %111 : vector<1x8x128xbf16> to vector<8x128xbf16>
    %113 = vector.shape_cast %109 : vector<8x128xbf16> to vector<1x8x128xbf16>
    tpu.vector_store %arg5[%110, %c0_48, %c0_49], %113 {strides = array<i32>} : memref<8x8x128xbf16, #tpu.memory_space<vmem>>, vector<1x8x128xbf16>,
    %c2_i32 = arith.constant 2 : i32
    %114 = arith.index_cast %c2_i32 : i32 to index
    %c0_50 = arith.constant 0 : index
    %c0_51 = arith.constant 0 : index
    %115 = vector.load %arg1[%114, %c0_50, %c0_51] : memref<8x8x512xbf16, #tpu.memory_space<vmem>>, vector<1x8x512xbf16>
    %116 = vector.shape_cast %115 : vector<1x8x512xbf16> to vector<8x512xbf16>
    %117 = arith.extf %116 : vector<8x512xbf16> to vector<8x512xf32>
    %118 = arith.addf %117, %7 : vector<8x512xf32>
    %c0_52 = arith.constant 0 : index
    %c0_53 = arith.constant 0 : index
    %119 = vector.load %arg6[%c0_52, %c0_53] : memref<8x128xbf16, #tpu.memory_space<vmem>>, vector<8x128xbf16>
    %c0_54 = arith.constant 0 : index
    %c0_55 = arith.constant 0 : index
    %120 = vector.load %arg4[%c0_54, %c0_55] : memref<128x512xbf16, #tpu.memory_space<vmem>>, vector<128x512xbf16>
    %cst_56 = arith.constant dense<0.000000e+00> : vector<8x512xf32>
    %121 = tpu.matmul %119, %120, %cst_56 {dimension_numbers = #tpu.dot_dimension_numbers<[1], [0], [0], [1], [0, 0, 1, 1], [], []>} : vector<8x128xbf16>, vector<128x512xbf16>, vector<8x512xf32> -> vector<8x512xf32>
    %122 = arith.addf %118, %121 : vector<8x512xf32>
    %123 = vector.extract_strided_slice %122 {offsets = [0, 0], sizes = [8, 128], strides = [1, 1]} : vector<8x512xf32> to vector<8x128xf32>
    %124 = arith.negf %123 : vector<8x128xf32>
    %125 = math.exp %124 : vector<8x128xf32>
    %cst_57 = arith.constant 1.000000e+00 : f32
    %126 = vector.broadcast %cst_57 : f32 to vector<8x128xf32>
    %127 = arith.addf %126, %125 : vector<8x128xf32>
    %128 = arith.divf %126, %127 : vector<8x128xf32>
    %129 = vector.extract_strided_slice %122 {offsets = [0, 128], sizes = [8, 128], strides = [1, 1]} : vector<8x512xf32> to vector<8x128xf32>
    %130 = arith.negf %129 : vector<8x128xf32>
    %131 = math.exp %130 : vector<8x128xf32>
    %cst_58 = arith.constant 1.000000e+00 : f32
    %132 = vector.broadcast %cst_58 : f32 to vector<8x128xf32>
    %133 = arith.addf %132, %131 : vector<8x128xf32>
    %134 = arith.divf %132, %133 : vector<8x128xf32>
    %135 = vector.extract_strided_slice %122 {offsets = [0, 256], sizes = [8, 128], strides = [1, 1]} : vector<8x512xf32> to vector<8x128xf32>
    %136 = math.tanh %135 : vector<8x128xf32>
    %137 = vector.extract_strided_slice %122 {offsets = [0, 384], sizes = [8, 128], strides = [1, 1]} : vector<8x512xf32> to vector<8x128xf32>
    %138 = arith.negf %137 : vector<8x128xf32>
    %139 = math.exp %138 : vector<8x128xf32>
    %cst_59 = arith.constant 1.000000e+00 : f32
    %140 = vector.broadcast %cst_59 : f32 to vector<8x128xf32>
    %141 = arith.addf %140, %139 : vector<8x128xf32>
    %142 = arith.divf %140, %141 : vector<8x128xf32>
    %c0_60 = arith.constant 0 : index
    %c0_61 = arith.constant 0 : index
    %143 = vector.load %arg7[%c0_60, %c0_61] : memref<8x128xf32, #tpu.memory_space<vmem>>, vector<8x128xf32>
    %144 = arith.mulf %134, %143 : vector<8x128xf32>
    %145 = arith.mulf %128, %136 : vector<8x128xf32>
    %146 = arith.addf %144, %145 : vector<8x128xf32>
    %147 = math.tanh %146 : vector<8x128xf32>
    %148 = arith.mulf %142, %147 : vector<8x128xf32>
    %149 = arith.truncf %148 : vector<8x128xf32> to vector<8x128xbf16>
    %150 = arith.addi %3, %c2_i32 : i32
    %151 = vector.broadcast %150 : i32 to vector<8x1xi32>
    %152 = arith.cmpi slt, %151, %4 : vector<8x1xi32>
    %153 = vector.shape_cast %152 : vector<8x1xi1> to vector<8x1xi1>
    %154 = vector.broadcast %153 : vector<8x1xi1> to vector<8x128xi1>
    %c0_62 = arith.constant 0 : index
    %c0_63 = arith.constant 0 : index
    %155 = vector.load %arg7[%c0_62, %c0_63] : memref<8x128xf32, #tpu.memory_space<vmem>>, vector<8x128xf32>
    %156 = arith.select %154, %146, %155 : vector<8x128xi1>, vector<8x128xf32>
    %c0_64 = arith.constant 0 : index
    %c0_65 = arith.constant 0 : index
    %157 = vector.load %arg7[%c0_64, %c0_65] : memref<8x128xf32, #tpu.memory_space<vmem>>, vector<8x128xf32>
    tpu.vector_store %arg7[%c0_64, %c0_65], %156 {strides = array<i32>} : memref<8x128xf32, #tpu.memory_space<vmem>>, vector<8x128xf32>,
    %c0_66 = arith.constant 0 : index
    %c0_67 = arith.constant 0 : index
    %158 = vector.load %arg6[%c0_66, %c0_67] : memref<8x128xbf16, #tpu.memory_space<vmem>>, vector<8x128xbf16>
    %159 = arith.select %154, %149, %158 : vector<8x128xi1>, vector<8x128xbf16>
    %c0_68 = arith.constant 0 : index
    %c0_69 = arith.constant 0 : index
    %160 = vector.load %arg6[%c0_68, %c0_69] : memref<8x128xbf16, #tpu.memory_space<vmem>>, vector<8x128xbf16>
    tpu.vector_store %arg6[%c0_68, %c0_69], %159 {strides = array<i32>} : memref<8x128xbf16, #tpu.memory_space<vmem>>, vector<8x128xbf16>,
    %cst_70 = arith.constant 0.000000e+00 : bf16
    %161 = vector.broadcast %cst_70 : bf16 to vector<8x128xbf16>
    %162 = arith.select %154, %149, %161 : vector<8x128xi1>, vector<8x128xbf16>
    %163 = arith.index_cast %c2_i32 : i32 to index
    %c0_71 = arith.constant 0 : index
    %c0_72 = arith.constant 0 : index
    %164 = vector.load %arg5[%163, %c0_71, %c0_72] : memref<8x8x128xbf16, #tpu.memory_space<vmem>>, vector<1x8x128xbf16>
    %165 = vector.shape_cast %164 : vector<1x8x128xbf16> to vector<8x128xbf16>
    %166 = vector.shape_cast %162 : vector<8x128xbf16> to vector<1x8x128xbf16>
    tpu.vector_store %arg5[%163, %c0_71, %c0_72], %166 {strides = array<i32>} : memref<8x8x128xbf16, #tpu.memory_space<vmem>>, vector<1x8x128xbf16>,
    %c3_i32 = arith.constant 3 : i32
    %167 = arith.index_cast %c3_i32 : i32 to index
    %c0_73 = arith.constant 0 : index
    %c0_74 = arith.constant 0 : index
    %168 = vector.load %arg1[%167, %c0_73, %c0_74] : memref<8x8x512xbf16, #tpu.memory_space<vmem>>, vector<1x8x512xbf16>
    %169 = vector.shape_cast %168 : vector<1x8x512xbf16> to vector<8x512xbf16>
    %170 = arith.extf %169 : vector<8x512xbf16> to vector<8x512xf32>
    %171 = arith.addf %170, %7 : vector<8x512xf32>
    %c0_75 = arith.constant 0 : index
    %c0_76 = arith.constant 0 : index
    %172 = vector.load %arg6[%c0_75, %c0_76] : memref<8x128xbf16, #tpu.memory_space<vmem>>, vector<8x128xbf16>
    %c0_77 = arith.constant 0 : index
    %c0_78 = arith.constant 0 : index
    %173 = vector.load %arg4[%c0_77, %c0_78] : memref<128x512xbf16, #tpu.memory_space<vmem>>, vector<128x512xbf16>
    %cst_79 = arith.constant dense<0.000000e+00> : vector<8x512xf32>
    %174 = tpu.matmul %172, %173, %cst_79 {dimension_numbers = #tpu.dot_dimension_numbers<[1], [0], [0], [1], [0, 0, 1, 1], [], []>} : vector<8x128xbf16>, vector<128x512xbf16>, vector<8x512xf32> -> vector<8x512xf32>
    %175 = arith.addf %171, %174 : vector<8x512xf32>
    %176 = vector.extract_strided_slice %175 {offsets = [0, 0], sizes = [8, 128], strides = [1, 1]} : vector<8x512xf32> to vector<8x128xf32>
    %177 = arith.negf %176 : vector<8x128xf32>
    %178 = math.exp %177 : vector<8x128xf32>
    %cst_80 = arith.constant 1.000000e+00 : f32
    %179 = vector.broadcast %cst_80 : f32 to vector<8x128xf32>
    %180 = arith.addf %179, %178 : vector<8x128xf32>
    %181 = arith.divf %179, %180 : vector<8x128xf32>
    %182 = vector.extract_strided_slice %175 {offsets = [0, 128], sizes = [8, 128], strides = [1, 1]} : vector<8x512xf32> to vector<8x128xf32>
    %183 = arith.negf %182 : vector<8x128xf32>
    %184 = math.exp %183 : vector<8x128xf32>
    %cst_81 = arith.constant 1.000000e+00 : f32
    %185 = vector.broadcast %cst_81 : f32 to vector<8x128xf32>
    %186 = arith.addf %185, %184 : vector<8x128xf32>
    %187 = arith.divf %185, %186 : vector<8x128xf32>
    %188 = vector.extract_strided_slice %175 {offsets = [0, 256], sizes = [8, 128], strides = [1, 1]} : vector<8x512xf32> to vector<8x128xf32>
    %189 = math.tanh %188 : vector<8x128xf32>
    %190 = vector.extract_strided_slice %175 {offsets = [0, 384], sizes = [8, 128], strides = [1, 1]} : vector<8x512xf32> to vector<8x128xf32>
    %191 = arith.negf %190 : vector<8x128xf32>
    %192 = math.exp %191 : vector<8x128xf32>
    %cst_82 = arith.constant 1.000000e+00 : f32
    %193 = vector.broadcast %cst_82 : f32 to vector<8x128xf32>
    %194 = arith.addf %193, %192 : vector<8x128xf32>
    %195 = arith.divf %193, %194 : vector<8x128xf32>
    %c0_83 = arith.constant 0 : index
    %c0_84 = arith.constant 0 : index
    %196 = vector.load %arg7[%c0_83, %c0_84] : memref<8x128xf32, #tpu.memory_space<vmem>>, vector<8x128xf32>
    %197 = arith.mulf %187, %196 : vector<8x128xf32>
    %198 = arith.mulf %181, %189 : vector<8x128xf32>
    %199 = arith.addf %197, %198 : vector<8x128xf32>
    %200 = math.tanh %199 : vector<8x128xf32>
    %201 = arith.mulf %195, %200 : vector<8x128xf32>
    %202 = arith.truncf %201 : vector<8x128xf32> to vector<8x128xbf16>
    %203 = arith.addi %3, %c3_i32 : i32
    %204 = vector.broadcast %203 : i32 to vector<8x1xi32>
    %205 = arith.cmpi slt, %204, %4 : vector<8x1xi32>
    %206 = vector.shape_cast %205 : vector<8x1xi1> to vector<8x1xi1>
    %207 = vector.broadcast %206 : vector<8x1xi1> to vector<8x128xi1>
    %c0_85 = arith.constant 0 : index
    %c0_86 = arith.constant 0 : index
    %208 = vector.load %arg7[%c0_85, %c0_86] : memref<8x128xf32, #tpu.memory_space<vmem>>, vector<8x128xf32>
    %209 = arith.select %207, %199, %208 : vector<8x128xi1>, vector<8x128xf32>
    %c0_87 = arith.constant 0 : index
    %c0_88 = arith.constant 0 : index
    %210 = vector.load %arg7[%c0_87, %c0_88] : memref<8x128xf32, #tpu.memory_space<vmem>>, vector<8x128xf32>
    tpu.vector_store %arg7[%c0_87, %c0_88], %209 {strides = array<i32>} : memref<8x128xf32, #tpu.memory_space<vmem>>, vector<8x128xf32>,
    %c0_89 = arith.constant 0 : index
    %c0_90 = arith.constant 0 : index
    %211 = vector.load %arg6[%c0_89, %c0_90] : memref<8x128xbf16, #tpu.memory_space<vmem>>, vector<8x128xbf16>
    %212 = arith.select %207, %202, %211 : vector<8x128xi1>, vector<8x128xbf16>
    %c0_91 = arith.constant 0 : index
    %c0_92 = arith.constant 0 : index
    %213 = vector.load %arg6[%c0_91, %c0_92] : memref<8x128xbf16, #tpu.memory_space<vmem>>, vector<8x128xbf16>
    tpu.vector_store %arg6[%c0_91, %c0_92], %212 {strides = array<i32>} : memref<8x128xbf16, #tpu.memory_space<vmem>>, vector<8x128xbf16>,
    %cst_93 = arith.constant 0.000000e+00 : bf16
    %214 = vector.broadcast %cst_93 : bf16 to vector<8x128xbf16>
    %215 = arith.select %207, %202, %214 : vector<8x128xi1>, vector<8x128xbf16>
    %216 = arith.index_cast %c3_i32 : i32 to index
    %c0_94 = arith.constant 0 : index
    %c0_95 = arith.constant 0 : index
    %217 = vector.load %arg5[%216, %c0_94, %c0_95] : memref<8x8x128xbf16, #tpu.memory_space<vmem>>, vector<1x8x128xbf16>
    %218 = vector.shape_cast %217 : vector<1x8x128xbf16> to vector<8x128xbf16>
    %219 = vector.shape_cast %215 : vector<8x128xbf16> to vector<1x8x128xbf16>
    tpu.vector_store %arg5[%216, %c0_94, %c0_95], %219 {strides = array<i32>} : memref<8x8x128xbf16, #tpu.memory_space<vmem>>, vector<1x8x128xbf16>,
    %c4_i32 = arith.constant 4 : i32
    %220 = arith.index_cast %c4_i32 : i32 to index
    %c0_96 = arith.constant 0 : index
    %c0_97 = arith.constant 0 : index
    %221 = vector.load %arg1[%220, %c0_96, %c0_97] : memref<8x8x512xbf16, #tpu.memory_space<vmem>>, vector<1x8x512xbf16>
    %222 = vector.shape_cast %221 : vector<1x8x512xbf16> to vector<8x512xbf16>
    %223 = arith.extf %222 : vector<8x512xbf16> to vector<8x512xf32>
    %224 = arith.addf %223, %7 : vector<8x512xf32>
    %c0_98 = arith.constant 0 : index
    %c0_99 = arith.constant 0 : index
    %225 = vector.load %arg6[%c0_98, %c0_99] : memref<8x128xbf16, #tpu.memory_space<vmem>>, vector<8x128xbf16>
    %c0_100 = arith.constant 0 : index
    %c0_101 = arith.constant 0 : index
    %226 = vector.load %arg4[%c0_100, %c0_101] : memref<128x512xbf16, #tpu.memory_space<vmem>>, vector<128x512xbf16>
    %cst_102 = arith.constant dense<0.000000e+00> : vector<8x512xf32>
    %227 = tpu.matmul %225, %226, %cst_102 {dimension_numbers = #tpu.dot_dimension_numbers<[1], [0], [0], [1], [0, 0, 1, 1], [], []>} : vector<8x128xbf16>, vector<128x512xbf16>, vector<8x512xf32> -> vector<8x512xf32>
    %228 = arith.addf %224, %227 : vector<8x512xf32>
    %229 = vector.extract_strided_slice %228 {offsets = [0, 0], sizes = [8, 128], strides = [1, 1]} : vector<8x512xf32> to vector<8x128xf32>
    %230 = arith.negf %229 : vector<8x128xf32>
    %231 = math.exp %230 : vector<8x128xf32>
    %cst_103 = arith.constant 1.000000e+00 : f32
    %232 = vector.broadcast %cst_103 : f32 to vector<8x128xf32>
    %233 = arith.addf %232, %231 : vector<8x128xf32>
    %234 = arith.divf %232, %233 : vector<8x128xf32>
    %235 = vector.extract_strided_slice %228 {offsets = [0, 128], sizes = [8, 128], strides = [1, 1]} : vector<8x512xf32> to vector<8x128xf32>
    %236 = arith.negf %235 : vector<8x128xf32>
    %237 = math.exp %236 : vector<8x128xf32>
    %cst_104 = arith.constant 1.000000e+00 : f32
    %238 = vector.broadcast %cst_104 : f32 to vector<8x128xf32>
    %239 = arith.addf %238, %237 : vector<8x128xf32>
    %240 = arith.divf %238, %239 : vector<8x128xf32>
    %241 = vector.extract_strided_slice %228 {offsets = [0, 256], sizes = [8, 128], strides = [1, 1]} : vector<8x512xf32> to vector<8x128xf32>
    %242 = math.tanh %241 : vector<8x128xf32>
    %243 = vector.extract_strided_slice %228 {offsets = [0, 384], sizes = [8, 128], strides = [1, 1]} : vector<8x512xf32> to vector<8x128xf32>
    %244 = arith.negf %243 : vector<8x128xf32>
    %245 = math.exp %244 : vector<8x128xf32>
    %cst_105 = arith.constant 1.000000e+00 : f32
    %246 = vector.broadcast %cst_105 : f32 to vector<8x128xf32>
    %247 = arith.addf %246, %245 : vector<8x128xf32>
    %248 = arith.divf %246, %247 : vector<8x128xf32>
    %c0_106 = arith.constant 0 : index
    %c0_107 = arith.constant 0 : index
    %249 = vector.load %arg7[%c0_106, %c0_107] : memref<8x128xf32, #tpu.memory_space<vmem>>, vector<8x128xf32>
    %250 = arith.mulf %240, %249 : vector<8x128xf32>
    %251 = arith.mulf %234, %242 : vector<8x128xf32>
    %252 = arith.addf %250, %251 : vector<8x128xf32>
    %253 = math.tanh %252 : vector<8x128xf32>
    %254 = arith.mulf %248, %253 : vector<8x128xf32>
    %255 = arith.truncf %254 : vector<8x128xf32> to vector<8x128xbf16>
    %256 = arith.addi %3, %c4_i32 : i32
    %257 = vector.broadcast %256 : i32 to vector<8x1xi32>
    %258 = arith.cmpi slt, %257, %4 : vector<8x1xi32>
    %259 = vector.shape_cast %258 : vector<8x1xi1> to vector<8x1xi1>
    %260 = vector.broadcast %259 : vector<8x1xi1> to vector<8x128xi1>
    %c0_108 = arith.constant 0 : index
    %c0_109 = arith.constant 0 : index
    %261 = vector.load %arg7[%c0_108, %c0_109] : memref<8x128xf32, #tpu.memory_space<vmem>>, vector<8x128xf32>
    %262 = arith.select %260, %252, %261 : vector<8x128xi1>, vector<8x128xf32>
    %c0_110 = arith.constant 0 : index
    %c0_111 = arith.constant 0 : index
    %263 = vector.load %arg7[%c0_110, %c0_111] : memref<8x128xf32, #tpu.memory_space<vmem>>, vector<8x128xf32>
    tpu.vector_store %arg7[%c0_110, %c0_111], %262 {strides = array<i32>} : memref<8x128xf32, #tpu.memory_space<vmem>>, vector<8x128xf32>,
    %c0_112 = arith.constant 0 : index
    %c0_113 = arith.constant 0 : index
    %264 = vector.load %arg6[%c0_112, %c0_113] : memref<8x128xbf16, #tpu.memory_space<vmem>>, vector<8x128xbf16>
    %265 = arith.select %260, %255, %264 : vector<8x128xi1>, vector<8x128xbf16>
    %c0_114 = arith.constant 0 : index
    %c0_115 = arith.constant 0 : index
    %266 = vector.load %arg6[%c0_114, %c0_115] : memref<8x128xbf16, #tpu.memory_space<vmem>>, vector<8x128xbf16>
    tpu.vector_store %arg6[%c0_114, %c0_115], %265 {strides = array<i32>} : memref<8x128xbf16, #tpu.memory_space<vmem>>, vector<8x128xbf16>,
    %cst_116 = arith.constant 0.000000e+00 : bf16
    %267 = vector.broadcast %cst_116 : bf16 to vector<8x128xbf16>
    %268 = arith.select %260, %255, %267 : vector<8x128xi1>, vector<8x128xbf16>
    %269 = arith.index_cast %c4_i32 : i32 to index
    %c0_117 = arith.constant 0 : index
    %c0_118 = arith.constant 0 : index
    %270 = vector.load %arg5[%269, %c0_117, %c0_118] : memref<8x8x128xbf16, #tpu.memory_space<vmem>>, vector<1x8x128xbf16>
    %271 = vector.shape_cast %270 : vector<1x8x128xbf16> to vector<8x128xbf16>
    %272 = vector.shape_cast %268 : vector<8x128xbf16> to vector<1x8x128xbf16>
    tpu.vector_store %arg5[%269, %c0_117, %c0_118], %272 {strides = array<i32>} : memref<8x8x128xbf16, #tpu.memory_space<vmem>>, vector<1x8x128xbf16>,
    %c5_i32 = arith.constant 5 : i32
    %273 = arith.index_cast %c5_i32 : i32 to index
    %c0_119 = arith.constant 0 : index
    %c0_120 = arith.constant 0 : index
    %274 = vector.load %arg1[%273, %c0_119, %c0_120] : memref<8x8x512xbf16, #tpu.memory_space<vmem>>, vector<1x8x512xbf16>
    %275 = vector.shape_cast %274 : vector<1x8x512xbf16> to vector<8x512xbf16>
    %276 = arith.extf %275 : vector<8x512xbf16> to vector<8x512xf32>
    %277 = arith.addf %276, %7 : vector<8x512xf32>
    %c0_121 = arith.constant 0 : index
    %c0_122 = arith.constant 0 : index
    %278 = vector.load %arg6[%c0_121, %c0_122] : memref<8x128xbf16, #tpu.memory_space<vmem>>, vector<8x128xbf16>
    %c0_123 = arith.constant 0 : index
    %c0_124 = arith.constant 0 : index
    %279 = vector.load %arg4[%c0_123, %c0_124] : memref<128x512xbf16, #tpu.memory_space<vmem>>, vector<128x512xbf16>
    %cst_125 = arith.constant dense<0.000000e+00> : vector<8x512xf32>
    %280 = tpu.matmul %278, %279, %cst_125 {dimension_numbers = #tpu.dot_dimension_numbers<[1], [0], [0], [1], [0, 0, 1, 1], [], []>} : vector<8x128xbf16>, vector<128x512xbf16>, vector<8x512xf32> -> vector<8x512xf32>
    %281 = arith.addf %277, %280 : vector<8x512xf32>
    %282 = vector.extract_strided_slice %281 {offsets = [0, 0], sizes = [8, 128], strides = [1, 1]} : vector<8x512xf32> to vector<8x128xf32>
    %283 = arith.negf %282 : vector<8x128xf32>
    %284 = math.exp %283 : vector<8x128xf32>
    %cst_126 = arith.constant 1.000000e+00 : f32
    %285 = vector.broadcast %cst_126 : f32 to vector<8x128xf32>
    %286 = arith.addf %285, %284 : vector<8x128xf32>
    %287 = arith.divf %285, %286 : vector<8x128xf32>
    %288 = vector.extract_strided_slice %281 {offsets = [0, 128], sizes = [8, 128], strides = [1, 1]} : vector<8x512xf32> to vector<8x128xf32>
    %289 = arith.negf %288 : vector<8x128xf32>
    %290 = math.exp %289 : vector<8x128xf32>
    %cst_127 = arith.constant 1.000000e+00 : f32
    %291 = vector.broadcast %cst_127 : f32 to vector<8x128xf32>
    %292 = arith.addf %291, %290 : vector<8x128xf32>
    %293 = arith.divf %291, %292 : vector<8x128xf32>
    %294 = vector.extract_strided_slice %281 {offsets = [0, 256], sizes = [8, 128], strides = [1, 1]} : vector<8x512xf32> to vector<8x128xf32>
    %295 = math.tanh %294 : vector<8x128xf32>
    %296 = vector.extract_strided_slice %281 {offsets = [0, 384], sizes = [8, 128], strides = [1, 1]} : vector<8x512xf32> to vector<8x128xf32>
    %297 = arith.negf %296 : vector<8x128xf32>
    %298 = math.exp %297 : vector<8x128xf32>
    %cst_128 = arith.constant 1.000000e+00 : f32
    %299 = vector.broadcast %cst_128 : f32 to vector<8x128xf32>
    %300 = arith.addf %299, %298 : vector<8x128xf32>
    %301 = arith.divf %299, %300 : vector<8x128xf32>
    %c0_129 = arith.constant 0 : index
    %c0_130 = arith.constant 0 : index
    %302 = vector.load %arg7[%c0_129, %c0_130] : memref<8x128xf32, #tpu.memory_space<vmem>>, vector<8x128xf32>
    %303 = arith.mulf %293, %302 : vector<8x128xf32>
    %304 = arith.mulf %287, %295 : vector<8x128xf32>
    %305 = arith.addf %303, %304 : vector<8x128xf32>
    %306 = math.tanh %305 : vector<8x128xf32>
    %307 = arith.mulf %301, %306 : vector<8x128xf32>
    %308 = arith.truncf %307 : vector<8x128xf32> to vector<8x128xbf16>
    %309 = arith.addi %3, %c5_i32 : i32
    %310 = vector.broadcast %309 : i32 to vector<8x1xi32>
    %311 = arith.cmpi slt, %310, %4 : vector<8x1xi32>
    %312 = vector.shape_cast %311 : vector<8x1xi1> to vector<8x1xi1>
    %313 = vector.broadcast %312 : vector<8x1xi1> to vector<8x128xi1>
    %c0_131 = arith.constant 0 : index
    %c0_132 = arith.constant 0 : index
    %314 = vector.load %arg7[%c0_131, %c0_132] : memref<8x128xf32, #tpu.memory_space<vmem>>, vector<8x128xf32>
    %315 = arith.select %313, %305, %314 : vector<8x128xi1>, vector<8x128xf32>
    %c0_133 = arith.constant 0 : index
    %c0_134 = arith.constant 0 : index
    %316 = vector.load %arg7[%c0_133, %c0_134] : memref<8x128xf32, #tpu.memory_space<vmem>>, vector<8x128xf32>
    tpu.vector_store %arg7[%c0_133, %c0_134], %315 {strides = array<i32>} : memref<8x128xf32, #tpu.memory_space<vmem>>, vector<8x128xf32>,
    %c0_135 = arith.constant 0 : index
    %c0_136 = arith.constant 0 : index
    %317 = vector.load %arg6[%c0_135, %c0_136] : memref<8x128xbf16, #tpu.memory_space<vmem>>, vector<8x128xbf16>
    %318 = arith.select %313, %308, %317 : vector<8x128xi1>, vector<8x128xbf16>
    %c0_137 = arith.constant 0 : index
    %c0_138 = arith.constant 0 : index
    %319 = vector.load %arg6[%c0_137, %c0_138] : memref<8x128xbf16, #tpu.memory_space<vmem>>, vector<8x128xbf16>
    tpu.vector_store %arg6[%c0_137, %c0_138], %318 {strides = array<i32>} : memref<8x128xbf16, #tpu.memory_space<vmem>>, vector<8x128xbf16>,
    %cst_139 = arith.constant 0.000000e+00 : bf16
    %320 = vector.broadcast %cst_139 : bf16 to vector<8x128xbf16>
    %321 = arith.select %313, %308, %320 : vector<8x128xi1>, vector<8x128xbf16>
    %322 = arith.index_cast %c5_i32 : i32 to index
    %c0_140 = arith.constant 0 : index
    %c0_141 = arith.constant 0 : index
    %323 = vector.load %arg5[%322, %c0_140, %c0_141] : memref<8x8x128xbf16, #tpu.memory_space<vmem>>, vector<1x8x128xbf16>
    %324 = vector.shape_cast %323 : vector<1x8x128xbf16> to vector<8x128xbf16>
    %325 = vector.shape_cast %321 : vector<8x128xbf16> to vector<1x8x128xbf16>
    tpu.vector_store %arg5[%322, %c0_140, %c0_141], %325 {strides = array<i32>} : memref<8x8x128xbf16, #tpu.memory_space<vmem>>, vector<1x8x128xbf16>,
    %c6_i32 = arith.constant 6 : i32
    %326 = arith.index_cast %c6_i32 : i32 to index
    %c0_142 = arith.constant 0 : index
    %c0_143 = arith.constant 0 : index
    %327 = vector.load %arg1[%326, %c0_142, %c0_143] : memref<8x8x512xbf16, #tpu.memory_space<vmem>>, vector<1x8x512xbf16>
    %328 = vector.shape_cast %327 : vector<1x8x512xbf16> to vector<8x512xbf16>
    %329 = arith.extf %328 : vector<8x512xbf16> to vector<8x512xf32>
    %330 = arith.addf %329, %7 : vector<8x512xf32>
    %c0_144 = arith.constant 0 : index
    %c0_145 = arith.constant 0 : index
    %331 = vector.load %arg6[%c0_144, %c0_145] : memref<8x128xbf16, #tpu.memory_space<vmem>>, vector<8x128xbf16>
    %c0_146 = arith.constant 0 : index
    %c0_147 = arith.constant 0 : index
    %332 = vector.load %arg4[%c0_146, %c0_147] : memref<128x512xbf16, #tpu.memory_space<vmem>>, vector<128x512xbf16>
    %cst_148 = arith.constant dense<0.000000e+00> : vector<8x512xf32>
    %333 = tpu.matmul %331, %332, %cst_148 {dimension_numbers = #tpu.dot_dimension_numbers<[1], [0], [0], [1], [0, 0, 1, 1], [], []>} : vector<8x128xbf16>, vector<128x512xbf16>, vector<8x512xf32> -> vector<8x512xf32>
    %334 = arith.addf %330, %333 : vector<8x512xf32>
    %335 = vector.extract_strided_slice %334 {offsets = [0, 0], sizes = [8, 128], strides = [1, 1]} : vector<8x512xf32> to vector<8x128xf32>
    %336 = arith.negf %335 : vector<8x128xf32>
    %337 = math.exp %336 : vector<8x128xf32>
    %cst_149 = arith.constant 1.000000e+00 : f32
    %338 = vector.broadcast %cst_149 : f32 to vector<8x128xf32>
    %339 = arith.addf %338, %337 : vector<8x128xf32>
    %340 = arith.divf %338, %339 : vector<8x128xf32>
    %341 = vector.extract_strided_slice %334 {offsets = [0, 128], sizes = [8, 128], strides = [1, 1]} : vector<8x512xf32> to vector<8x128xf32>
    %342 = arith.negf %341 : vector<8x128xf32>
    %343 = math.exp %342 : vector<8x128xf32>
    %cst_150 = arith.constant 1.000000e+00 : f32
    %344 = vector.broadcast %cst_150 : f32 to vector<8x128xf32>
    %345 = arith.addf %344, %343 : vector<8x128xf32>
    %346 = arith.divf %344, %345 : vector<8x128xf32>
    %347 = vector.extract_strided_slice %334 {offsets = [0, 256], sizes = [8, 128], strides = [1, 1]} : vector<8x512xf32> to vector<8x128xf32>
    %348 = math.tanh %347 : vector<8x128xf32>
    %349 = vector.extract_strided_slice %334 {offsets = [0, 384], sizes = [8, 128], strides = [1, 1]} : vector<8x512xf32> to vector<8x128xf32>
    %350 = arith.negf %349 : vector<8x128xf32>
    %351 = math.exp %350 : vector<8x128xf32>
    %cst_151 = arith.constant 1.000000e+00 : f32
    %352 = vector.broadcast %cst_151 : f32 to vector<8x128xf32>
    %353 = arith.addf %352, %351 : vector<8x128xf32>
    %354 = arith.divf %352, %353 : vector<8x128xf32>
    %c0_152 = arith.constant 0 : index
    %c0_153 = arith.constant 0 : index
    %355 = vector.load %arg7[%c0_152, %c0_153] : memref<8x128xf32, #tpu.memory_space<vmem>>, vector<8x128xf32>
    %356 = arith.mulf %346, %355 : vector<8x128xf32>
    %357 = arith.mulf %340, %348 : vector<8x128xf32>
    %358 = arith.addf %356, %357 : vector<8x128xf32>
    %359 = math.tanh %358 : vector<8x128xf32>
    %360 = arith.mulf %354, %359 : vector<8x128xf32>
    %361 = arith.truncf %360 : vector<8x128xf32> to vector<8x128xbf16>
    %362 = arith.addi %3, %c6_i32 : i32
    %363 = vector.broadcast %362 : i32 to vector<8x1xi32>
    %364 = arith.cmpi slt, %363, %4 : vector<8x1xi32>
    %365 = vector.shape_cast %364 : vector<8x1xi1> to vector<8x1xi1>
    %366 = vector.broadcast %365 : vector<8x1xi1> to vector<8x128xi1>
    %c0_154 = arith.constant 0 : index
    %c0_155 = arith.constant 0 : index
    %367 = vector.load %arg7[%c0_154, %c0_155] : memref<8x128xf32, #tpu.memory_space<vmem>>, vector<8x128xf32>
    %368 = arith.select %366, %358, %367 : vector<8x128xi1>, vector<8x128xf32>
    %c0_156 = arith.constant 0 : index
    %c0_157 = arith.constant 0 : index
    %369 = vector.load %arg7[%c0_156, %c0_157] : memref<8x128xf32, #tpu.memory_space<vmem>>, vector<8x128xf32>
    tpu.vector_store %arg7[%c0_156, %c0_157], %368 {strides = array<i32>} : memref<8x128xf32, #tpu.memory_space<vmem>>, vector<8x128xf32>,
    %c0_158 = arith.constant 0 : index
    %c0_159 = arith.constant 0 : index
    %370 = vector.load %arg6[%c0_158, %c0_159] : memref<8x128xbf16, #tpu.memory_space<vmem>>, vector<8x128xbf16>
    %371 = arith.select %366, %361, %370 : vector<8x128xi1>, vector<8x128xbf16>
    %c0_160 = arith.constant 0 : index
    %c0_161 = arith.constant 0 : index
    %372 = vector.load %arg6[%c0_160, %c0_161] : memref<8x128xbf16, #tpu.memory_space<vmem>>, vector<8x128xbf16>
    tpu.vector_store %arg6[%c0_160, %c0_161], %371 {strides = array<i32>} : memref<8x128xbf16, #tpu.memory_space<vmem>>, vector<8x128xbf16>,
    %cst_162 = arith.constant 0.000000e+00 : bf16
    %373 = vector.broadcast %cst_162 : bf16 to vector<8x128xbf16>
    %374 = arith.select %366, %361, %373 : vector<8x128xi1>, vector<8x128xbf16>
    %375 = arith.index_cast %c6_i32 : i32 to index
    %c0_163 = arith.constant 0 : index
    %c0_164 = arith.constant 0 : index
    %376 = vector.load %arg5[%375, %c0_163, %c0_164] : memref<8x8x128xbf16, #tpu.memory_space<vmem>>, vector<1x8x128xbf16>
    %377 = vector.shape_cast %376 : vector<1x8x128xbf16> to vector<8x128xbf16>
    %378 = vector.shape_cast %374 : vector<8x128xbf16> to vector<1x8x128xbf16>
    tpu.vector_store %arg5[%375, %c0_163, %c0_164], %378 {strides = array<i32>} : memref<8x8x128xbf16, #tpu.memory_space<vmem>>, vector<1x8x128xbf16>,
    %c7_i32 = arith.constant 7 : i32
    %379 = arith.index_cast %c7_i32 : i32 to index
    %c0_165 = arith.constant 0 : index
    %c0_166 = arith.constant 0 : index
    %380 = vector.load %arg1[%379, %c0_165, %c0_166] : memref<8x8x512xbf16, #tpu.memory_space<vmem>>, vector<1x8x512xbf16>
    %381 = vector.shape_cast %380 : vector<1x8x512xbf16> to vector<8x512xbf16>
    %382 = arith.extf %381 : vector<8x512xbf16> to vector<8x512xf32>
    %383 = arith.addf %382, %7 : vector<8x512xf32>
    %c0_167 = arith.constant 0 : index
    %c0_168 = arith.constant 0 : index
    %384 = vector.load %arg6[%c0_167, %c0_168] : memref<8x128xbf16, #tpu.memory_space<vmem>>, vector<8x128xbf16>
    %c0_169 = arith.constant 0 : index
    %c0_170 = arith.constant 0 : index
    %385 = vector.load %arg4[%c0_169, %c0_170] : memref<128x512xbf16, #tpu.memory_space<vmem>>, vector<128x512xbf16>
    %cst_171 = arith.constant dense<0.000000e+00> : vector<8x512xf32>
    %386 = tpu.matmul %384, %385, %cst_171 {dimension_numbers = #tpu.dot_dimension_numbers<[1], [0], [0], [1], [0, 0, 1, 1], [], []>} : vector<8x128xbf16>, vector<128x512xbf16>, vector<8x512xf32> -> vector<8x512xf32>
    %387 = arith.addf %383, %386 : vector<8x512xf32>
    %388 = vector.extract_strided_slice %387 {offsets = [0, 0], sizes = [8, 128], strides = [1, 1]} : vector<8x512xf32> to vector<8x128xf32>
    %389 = arith.negf %388 : vector<8x128xf32>
    %390 = math.exp %389 : vector<8x128xf32>
    %cst_172 = arith.constant 1.000000e+00 : f32
    %391 = vector.broadcast %cst_172 : f32 to vector<8x128xf32>
    %392 = arith.addf %391, %390 : vector<8x128xf32>
    %393 = arith.divf %391, %392 : vector<8x128xf32>
    %394 = vector.extract_strided_slice %387 {offsets = [0, 128], sizes = [8, 128], strides = [1, 1]} : vector<8x512xf32> to vector<8x128xf32>
    %395 = arith.negf %394 : vector<8x128xf32>
    %396 = math.exp %395 : vector<8x128xf32>
    %cst_173 = arith.constant 1.000000e+00 : f32
    %397 = vector.broadcast %cst_173 : f32 to vector<8x128xf32>
    %398 = arith.addf %397, %396 : vector<8x128xf32>
    %399 = arith.divf %397, %398 : vector<8x128xf32>
    %400 = vector.extract_strided_slice %387 {offsets = [0, 256], sizes = [8, 128], strides = [1, 1]} : vector<8x512xf32> to vector<8x128xf32>
    %401 = math.tanh %400 : vector<8x128xf32>
    %402 = vector.extract_strided_slice %387 {offsets = [0, 384], sizes = [8, 128], strides = [1, 1]} : vector<8x512xf32> to vector<8x128xf32>
    %403 = arith.negf %402 : vector<8x128xf32>
    %404 = math.exp %403 : vector<8x128xf32>
    %cst_174 = arith.constant 1.000000e+00 : f32
    %405 = vector.broadcast %cst_174 : f32 to vector<8x128xf32>
    %406 = arith.addf %405, %404 : vector<8x128xf32>
    %407 = arith.divf %405, %406 : vector<8x128xf32>
    %c0_175 = arith.constant 0 : index
    %c0_176 = arith.constant 0 : index
    %408 = vector.load %arg7[%c0_175, %c0_176] : memref<8x128xf32, #tpu.memory_space<vmem>>, vector<8x128xf32>
    %409 = arith.mulf %399, %408 : vector<8x128xf32>
    %410 = arith.mulf %393, %401 : vector<8x128xf32>
    %411 = arith.addf %409, %410 : vector<8x128xf32>
    %412 = math.tanh %411 : vector<8x128xf32>
    %413 = arith.mulf %407, %412 : vector<8x128xf32>
    %414 = arith.truncf %413 : vector<8x128xf32> to vector<8x128xbf16>
    %415 = arith.addi %3, %c7_i32 : i32
    %416 = vector.broadcast %415 : i32 to vector<8x1xi32>
    %417 = arith.cmpi slt, %416, %4 : vector<8x1xi32>
    %418 = vector.shape_cast %417 : vector<8x1xi1> to vector<8x1xi1>
    %419 = vector.broadcast %418 : vector<8x1xi1> to vector<8x128xi1>
    %c0_177 = arith.constant 0 : index
    %c0_178 = arith.constant 0 : index
    %420 = vector.load %arg7[%c0_177, %c0_178] : memref<8x128xf32, #tpu.memory_space<vmem>>, vector<8x128xf32>
    %421 = arith.select %419, %411, %420 : vector<8x128xi1>, vector<8x128xf32>
    %c0_179 = arith.constant 0 : index
    %c0_180 = arith.constant 0 : index
    %422 = vector.load %arg7[%c0_179, %c0_180] : memref<8x128xf32, #tpu.memory_space<vmem>>, vector<8x128xf32>
    tpu.vector_store %arg7[%c0_179, %c0_180], %421 {strides = array<i32>} : memref<8x128xf32, #tpu.memory_space<vmem>>, vector<8x128xf32>,
    %c0_181 = arith.constant 0 : index
    %c0_182 = arith.constant 0 : index
    %423 = vector.load %arg6[%c0_181, %c0_182] : memref<8x128xbf16, #tpu.memory_space<vmem>>, vector<8x128xbf16>
    %424 = arith.select %419, %414, %423 : vector<8x128xi1>, vector<8x128xbf16>
    %c0_183 = arith.constant 0 : index
    %c0_184 = arith.constant 0 : index
    %425 = vector.load %arg6[%c0_183, %c0_184] : memref<8x128xbf16, #tpu.memory_space<vmem>>, vector<8x128xbf16>
    tpu.vector_store %arg6[%c0_183, %c0_184], %424 {strides = array<i32>} : memref<8x128xbf16, #tpu.memory_space<vmem>>, vector<8x128xbf16>,
    %cst_185 = arith.constant 0.000000e+00 : bf16
    %426 = vector.broadcast %cst_185 : bf16 to vector<8x128xbf16>
    %427 = arith.select %419, %414, %426 : vector<8x128xi1>, vector<8x128xbf16>
    %428 = arith.index_cast %c7_i32 : i32 to index
    %c0_186 = arith.constant 0 : index
    %c0_187 = arith.constant 0 : index
    %429 = vector.load %arg5[%428, %c0_186, %c0_187] : memref<8x8x128xbf16, #tpu.memory_space<vmem>>, vector<1x8x128xbf16>
    %430 = vector.shape_cast %429 : vector<1x8x128xbf16> to vector<8x128xbf16>
    %431 = vector.shape_cast %427 : vector<8x128xbf16> to vector<1x8x128xbf16>
    tpu.vector_store %arg5[%428, %c0_186, %c0_187], %431 {strides = array<i32>} : memref<8x8x128xbf16, #tpu.memory_space<vmem>>, vector<1x8x128xbf16>,
    %c8_i32_188 = arith.constant 8 : i32
    return
  }
  func.func @transform_0(%arg0: i32) -> (i32, i32, i32) {
    %c0_i32 = arith.constant 0 : i32
    %c0_i32_0 = arith.constant 0 : i32
    %c0_i32_1 = arith.constant 0 : i32
    return %arg0, %c0_i32, %c0_i32_0 : i32, i32, i32
  }
  func.func @transform_1(%arg0: i32) -> (i32, i32) {
    %c0_i32 = arith.constant 0 : i32
    %c0_i32_0 = arith.constant 0 : i32
    %c0_i32_1 = arith.constant 0 : i32
    return %c0_i32, %c0_i32_0 : i32, i32
  }
  func.func @transform_2(%arg0: i32) -> (i32, i32) {
    %c0_i32 = arith.constant 0 : i32
    %c0_i32_0 = arith.constant 0 : i32
    %c0_i32_1 = arith.constant 0 : i32
    return %c0_i32, %c0_i32_0 : i32, i32
  }
  func.func @transform_3(%arg0: i32) -> (i32, i32) {
    %c0_i32 = arith.constant 0 : i32
    %c0_i32_0 = arith.constant 0 : i32
    %c0_i32_1 = arith.constant 0 : i32
    return %c0_i32, %c0_i32_0 : i32, i32
  }
  func.func @transform_4(%arg0: i32) -> (i32, i32, i32) {
    %c0_i32 = arith.constant 0 : i32
    %c0_i32_0 = arith.constant 0 : i32
    %c0_i32_1 = arith.constant 0 : i32
    return %arg0, %c0_i32, %c0_i32_0 : i32, i32, i32
  }
}

</mosaic_0001>

<llo_original>
// kernel: tpu_custom_call.1
$region0: #{tpu_custom_call.1}
  #allocation0 [shape = 'u32[]', space=smem, size = 0x4, offset = 0x4, fixed_abs, tag = 'smem constant byte address 0x4 - core index']
  #allocation1 [shape = 'u32[144,128]{1,0:T(1,128)}', space=vmem, size = 0x12000, scoped, tag = 'internal scratch']
  #allocation2 [shape = 'bf16[8,128]{1,0:T(8,128)(2,1)}', space=vmem, size = 0x800, scoped, tag = 'scratch operand']
  #allocation3 [shape = 'f32[8,128]{1,0:T(8,128)}', space=vmem, size = 0x1000, scoped, tag = 'scratch operand']
  %s0 = inlined_call_operand.hbm [shape: bf16[8,8,512], index: 0, kind: input, shape index: {}]
  %s1 = inlined_call_operand.vmem [shape: s32[8,1], index: 1, kind: input, shape index: {}]
  %s2 = inlined_call_operand.vmem [shape: f32[1,512], index: 2, kind: input, shape index: {}]
  %s3 = inlined_call_operand.hbm [shape: bf16[128,512], index: 3, kind: input, shape index: {}]
  %s4 = inlined_call_operand.hbm [shape: bf16[8,8,128], index: 4, kind: output, shape index: {}]
  %s5 = sld [smem:[#allocation0]]
  $region38: #{tpu_custom_call.1} parent=0
    _
  %s7 = ssub.s32 1, %s5
  %s8 = scalar_select 0, %s7, %s5
  $region1: #{tpu_custom_call.1} parent=0
    #allocation4 [shape = 'u8[65536]{0}', space=vmem, size = 0x10000, scoped, tag = 'input window, operand 0, single buffered']
    #allocation5 [shape = 's32[1]{0}', space=sflag, size = 0x4, scoped, tag = 'scoped memory for tpu_custom_call.1']
    #allocation6 [shape = 's32[1]{0}', space=sflag, size = 0x4, scoped, tag = 'scoped memory for tpu_custom_call.1']
    #allocation7 [shape = 'u8[131072]{0}', space=vmem, size = 0x20000, scoped, tag = 'input window, operand 3, single buffered']
    #allocation8 [shape = 's32[1]{0}', space=sflag, size = 0x4, scoped, tag = 'scoped memory for tpu_custom_call.1']
    #allocation9 [shape = 'u8[16384]{0}', space=vmem, size = 0x4000, scoped, tag = 'output window, operand 0, single buffered']
    %9 = vsyncpa [#allocation5], 0
    %10 = vsyncpa [#allocation8], 0
    %11 = vsyncpa [#allocation6], 0
    // Predicated region
    $region2: #{tpu_custom_call.1} parent=1 // pred_check
      _
    $region3: #{tpu_custom_call.1} parent=1 // pred_check_branch
      %13 = sbr.rel (0) target = $region5
    $region4: #{tpu_custom_call.1} parent=1 // pred_region
      %s15 = ssub.s32 2048, 2048
      %16 = vsyncadd [#allocation5], %s15
      %s17 = sshll.u32 [#allocation4], 4
      %s18 = int_to_ptr.vmem [resolvable:$true] %s17
      %23 = dma.hbm_to_vmem [thread:$0]  %s0, 2048, %s18, [#allocation5], 256, 256, 16
    $region5: #{tpu_custom_call.1} parent=1 // pred_fallthru
      _
    // Predicated region
    $region6: #{tpu_custom_call.1} parent=1 // pred_check
      _
    $region7: #{tpu_custom_call.1} parent=1 // pred_check_branch
      %25 = sbr.rel (0) target = $region9
    $region8: #{tpu_custom_call.1} parent=1 // pred_region
      _
    $region9: #{tpu_custom_call.1} parent=1 // pred_fallthru
      _
    // Predicated region
    $region10: #{tpu_custom_call.1} parent=1 // pred_check
      _
    $region11: #{tpu_custom_call.1} parent=1 // pred_check_branch
      %27 = sbr.rel (0) target = $region13
    $region12: #{tpu_custom_call.1} parent=1 // pred_region
      _
    $region13: #{tpu_custom_call.1} parent=1 // pred_fallthru
      _
    // Predicated region
    $region14: #{tpu_custom_call.1} parent=1 // pred_check
      _
    $region15: #{tpu_custom_call.1} parent=1 // pred_check_branch
      %29 = sbr.rel (0) target = $region17
    $region16: #{tpu_custom_call.1} parent=1 // pred_region
      %s31 = ssub.s32 4096, 4096
      %32 = vsyncadd [#allocation8], %s31
      %s33 = sshll.u32 [#allocation7], 4
      %s34 = int_to_ptr.vmem [resolvable:$true] %s33
      %39 = dma.hbm_to_vmem [thread:$0]  %s3, 4096, %s34, [#allocation8], 256, 256, 16
    $region17: #{tpu_custom_call.1} parent=1 // pred_fallthru
      _
    // Predicated region
    $region18: #{tpu_custom_call.1} parent=1 // pred_check
      _
    $region19: #{tpu_custom_call.1} parent=1 // pred_check_branch
      %41 = sbr.rel (0) target = $region21
    $region20: #{tpu_custom_call.1} parent=1 // pred_region
      %42 = dma.done [#allocation5], 2048
    $region21: #{tpu_custom_call.1} parent=1 // pred_fallthru
      _
    // Predicated region
    $region22: #{tpu_custom_call.1} parent=1 // pred_check
      _
    $region23: #{tpu_custom_call.1} parent=1 // pred_check_branch
      %44 = sbr.rel (0) target = $region25
    $region24: #{tpu_custom_call.1} parent=1 // pred_region
      %45 = dma.done [#allocation8], 4096
    $region25: #{tpu_custom_call.1} parent=1 // pred_fallthru
      _
    %p47 = scmp.eq.s32.totalorder 0, 0
    // Predicated region
    $region26: #{tpu_custom_call.1} parent=1 // pred_check
      %p48 = pneg %p47
    $region27: #{tpu_custom_call.1} parent=1 // pred_check_branch
      %50 = sbr.rel (%p48) target = $region29
    $region28: #{tpu_custom_call.1} parent=1 // pred_region
      %51 = vst [vmem:[#allocation2] sm:$0xf] 0
      %52 = vst [vmem:[#allocation3] sm:$0xff] 0.0
    $region29: #{tpu_custom_call.1} parent=1 // pred_fallthru
      _
    %s53 = smul.u32 0, 8
    %v54 = vld [vmem:[%s1] sm:$0xff]
    %v55 = vld [vmem:[%s2] sm:$0xf]
    %v57 = vlaneseq
    %v58 = vshrl.u32 %v57, 7
    %v59 = vsub.s32 0, %v58
    %v60 = vrot.slane %v55, %v59
    %v61 = vlaneseq
    %v62 = vshrl.u32 %v61, 7
    %v63 = vsub.s32 1, %v62
    %v64 = vrot.slane %v55, %v63
    %v65 = vlaneseq
    %v66 = vshrl.u32 %v65, 7
    %v67 = vsub.s32 2, %v66
    %v68 = vrot.slane %v55, %v67
    %v69 = vlaneseq
    %v70 = vshrl.u32 %v69, 7
    %v71 = vsub.s32 3, %v70
    %v72 = vrot.slane %v55, %v71
    %v77 = vld [vmem:[#allocation4] sm:$0xff]
    %v78 = vld [vmem:[#allocation4 + $0x8] sm:$0xff]
    %v79 = vunpack.c.l.bf16 %v77
    %v80 = vunpack.c.h.bf16 %v77
    %v81 = vunpack.c.l.bf16 %v78
    %v82 = vunpack.c.h.bf16 %v78
    %v83 = vadd.f32 %v79, %v60
    %v84 = vadd.f32 %v80, %v64
    %v85 = vadd.f32 %v81, %v68
    %v86 = vadd.f32 %v82, %v72
    %v87 = vld [vmem:[#allocation2] sm:$0xf]
    %v88 = vld [vmem:[#allocation7] sm:$0xff]
    %v89 = vld [vmem:[#allocation7 + $0x8] sm:$0xff]
    %v90 = vld [vmem:[#allocation7 + $0x10] sm:$0xff]
    %v91 = vld [vmem:[#allocation7 + $0x18] sm:$0xff]
    %v92 = vld [vmem:[#allocation7 + $0x20] sm:$0xff]
    %v93 = vld [vmem:[#allocation7 + $0x28] sm:$0xff]
    %v94 = vld [vmem:[#allocation7 + $0x30] sm:$0xff]
    %v95 = vld [vmem:[#allocation7 + $0x38] sm:$0xff]
    %v96 = vld [vmem:[#allocation7 + $0x40] sm:$0xff]
    %v97 = vld [vmem:[#allocation7 + $0x48] sm:$0xff]
    %v98 = vld [vmem:[#allocation7 + $0x50] sm:$0xff]
    %v99 = vld [vmem:[#allocation7 + $0x58] sm:$0xff]
    %v100 = vld [vmem:[#allocation7 + $0x60] sm:$0xff]
    %v101 = vld [vmem:[#allocation7 + $0x68] sm:$0xff]
    %v102 = vld [vmem:[#allocation7 + $0x70] sm:$0xff]
    %v103 = vld [vmem:[#allocation7 + $0x78] sm:$0xff]
    %v104 = vld [vmem:[#allocation7 + $0x80] sm:$0xff]
    %v105 = vld [vmem:[#allocation7 + $0x88] sm:$0xff]
    %v106 = vld [vmem:[#allocation7 + $0x90] sm:$0xff]
    %v107 = vld [vmem:[#allocation7 + $0x98] sm:$0xff]
    %v108 = vld [vmem:[#allocation7 + $0xa0] sm:$0xff]
    %v109 = vld [vmem:[#allocation7 + $0xa8] sm:$0xff]
    %v110 = vld [vmem:[#allocation7 + $0xb0] sm:$0xff]
    %v111 = vld [vmem:[#allocation7 + $0xb8] sm:$0xff]
    %v112 = vld [vmem:[#allocation7 + $0xc0] sm:$0xff]
    %v113 = vld [vmem:[#allocation7 + $0xc8] sm:$0xff]
    %v114 = vld [vmem:[#allocation7 + $0xd0] sm:$0xff]
    %v115 = vld [vmem:[#allocation7 + $0xd8] sm:$0xff]
    %v116 = vld [vmem:[#allocation7 + $0xe0] sm:$0xff]
    %v117 = vld [vmem:[#allocation7 + $0xe8] sm:$0xff]
    %v118 = vld [vmem:[#allocation7 + $0xf0] sm:$0xff]
    %v119 = vld [vmem:[#allocation7 + $0xf8] sm:$0xff]
    %v152 = vunpack.c.l.b16 %v88
    %v153 = vunpack.c.h.b16 %v88
    %v154 = vunpack.c.l.b16 %v89
    %v155 = vunpack.c.h.b16 %v89
    %v156 = vunpack.c.l.b16 %v90
    %v157 = vunpack.c.h.b16 %v90
    %v158 = vunpack.c.l.b16 %v91
    %v159 = vunpack.c.h.b16 %v91
    %v160 = vunpack.c.l.b16 %v92
    %v161 = vunpack.c.h.b16 %v92
    %v162 = vunpack.c.l.b16 %v93
    %v163 = vunpack.c.h.b16 %v93
    %v164 = vunpack.c.l.b16 %v94
    %v165 = vunpack.c.h.b16 %v94
    %v166 = vunpack.c.l.b16 %v95
    %v167 = vunpack.c.h.b16 %v95
    %v168 = vunpack.c.l.b16 %v96
    %v169 = vunpack.c.h.b16 %v96
    %v170 = vunpack.c.l.b16 %v97
    %v171 = vunpack.c.h.b16 %v97
    %v172 = vunpack.c.l.b16 %v98
    %v173 = vunpack.c.h.b16 %v98
    %v174 = vunpack.c.l.b16 %v99
    %v175 = vunpack.c.h.b16 %v99
    %v176 = vunpack.c.l.b16 %v100
    %v177 = vunpack.c.h.b16 %v100
    %v178 = vunpack.c.l.b16 %v101
    %v179 = vunpack.c.h.b16 %v101
    %v180 = vunpack.c.l.b16 %v102
    %v181 = vunpack.c.h.b16 %v102
    %v182 = vunpack.c.l.b16 %v103
    %v183 = vunpack.c.h.b16 %v103
    %v184 = vunpack.c.l.b16 %v104
    %v185 = vunpack.c.h.b16 %v104
    %v186 = vunpack.c.l.b16 %v105
    %v187 = vunpack.c.h.b16 %v105
    %v188 = vunpack.c.l.b16 %v106
    %v189 = vunpack.c.h.b16 %v106
    %v190 = vunpack.c.l.b16 %v107
    %v191 = vunpack.c.h.b16 %v107
    %v192 = vunpack.c.l.b16 %v108
    %v193 = vunpack.c.h.b16 %v108
    %v194 = vunpack.c.l.b16 %v109
    %v195 = vunpack.c.h.b16 %v109
    %v196 = vunpack.c.l.b16 %v110
    %v197 = vunpack.c.h.b16 %v110
    %v198 = vunpack.c.l.b16 %v111
    %v199 = vunpack.c.h.b16 %v111
    %v200 = vunpack.c.l.b16 %v112
    %v201 = vunpack.c.h.b16 %v112
    %v202 = vunpack.c.l.b16 %v113
    %v203 = vunpack.c.h.b16 %v113
    %v204 = vunpack.c.l.b16 %v114
    %v205 = vunpack.c.h.b16 %v114
    %v206 = vunpack.c.l.b16 %v115
    %v207 = vunpack.c.h.b16 %v115
    %v208 = vunpack.c.l.b16 %v116
    %v209 = vunpack.c.h.b16 %v116
    %v210 = vunpack.c.l.b16 %v117
    %v211 = vunpack.c.h.b16 %v117
    %v212 = vunpack.c.l.b16 %v118
    %v213 = vunpack.c.h.b16 %v118
    %v214 = vunpack.c.l.b16 %v119
    %v215 = vunpack.c.h.b16 %v119
    %v216 = vpack.c.b16 %v156, %v152
    %v217 = vpack.c.b16 %v157, %v153
    %v218 = vpack.c.b16 %v158, %v154
    %v219 = vpack.c.b16 %v159, %v155
    %v220 = vpack.c.b16 %v164, %v160
    %v221 = vpack.c.b16 %v165, %v161
    %v222 = vpack.c.b16 %v166, %v162
    %v223 = vpack.c.b16 %v167, %v163
    %v224 = vpack.c.b16 %v172, %v168
    %v225 = vpack.c.b16 %v173, %v169
    %v226 = vpack.c.b16 %v174, %v170
    %v227 = vpack.c.b16 %v175, %v171
    %v228 = vpack.c.b16 %v180, %v176
    %v229 = vpack.c.b16 %v181, %v177
    %v230 = vpack.c.b16 %v182, %v178
    %v231 = vpack.c.b16 %v183, %v179
    %v232 = vpack.c.b16 %v188, %v184
    %v233 = vpack.c.b16 %v189, %v185
    %v234 = vpack.c.b16 %v190, %v186
    %v235 = vpack.c.b16 %v191, %v187
    %v236 = vpack.c.b16 %v196, %v192
    %v237 = vpack.c.b16 %v197, %v193
    %v238 = vpack.c.b16 %v198, %v194
    %v239 = vpack.c.b16 %v199, %v195
    %v240 = vpack.c.b16 %v204, %v200
    %v241 = vpack.c.b16 %v205, %v201
    %v242 = vpack.c.b16 %v206, %v202
    %v243 = vpack.c.b16 %v207, %v203
    %v244 = vpack.c.b16 %v212, %v208
    %v245 = vpack.c.b16 %v213, %v209
    %v246 = vpack.c.b16 %v214, %v210
    %v247 = vpack.c.b16 %v215, %v211
    %280 = vmatprep.subr.bf16.mxu0 %v245
    %281 = vmatpush1.bf16.msra.mxu0 %v244
    %282 = vmatprep.subr.bf16.mxu0 %v241
    %283 = vmatpush1.bf16.msra.mxu0 %v240
    %284 = vmatprep.subr.bf16.mxu0 %v237
    %285 = vmatpush1.bf16.msra.mxu0 %v236
    %286 = vmatprep.subr.bf16.mxu0 %v233
    %287 = vmatpush1.bf16.msra.mxu0 %v232
    %288 = vmatprep.subr.bf16.mxu0 %v229
    %289 = vmatpush1.bf16.msra.mxu0 %v228
    %290 = vmatprep.subr.bf16.mxu0 %v225
    %291 = vmatpush1.bf16.msra.mxu0 %v224
    %292 = vmatprep.subr.bf16.mxu0 %v221
    %293 = vmatpush1.bf16.msra.mxu0 %v220
    %294 = vmatprep.subr.bf16.mxu0 %v217
    %295 = vmatpush1.bf16.msra.mxu0 %v216
    %296 = vmatprep.subr.bf16.mxu0 0
    %297 = vmatpush2.bf16.msra.mxu0 0
    %298 = vmatprep.subr.bf16.mxu0 0
    %299 = vmatpush2.bf16.msra.mxu0 0
    %300 = vmatprep.subr.bf16.mxu0 0
    %301 = vmatpush2.bf16.msra.mxu0 0
    %302 = vmatprep.subr.bf16.mxu0 0
    %303 = vmatpush2.bf16.msra.mxu0 0
    %304 = vmatprep.subr.bf16.mxu0 0
    %305 = vmatpush2.bf16.msra.mxu0 0
    %306 = vmatprep.subr.bf16.mxu0 0
    %307 = vmatpush2.bf16.msra.mxu0 0
    %308 = vmatprep.subr.bf16.mxu0 0
    %309 = vmatpush2.bf16.msra.mxu0 0
    %310 = vmatprep.subr.bf16.mxu0 0
    %311 = vmatpush2.bf16.msra.mxu0 0
    %312 = vmatprep.mubr.bf16.mxu0 0
    %313 = vmatmul.mubr.bf16.gmra.mxu0 %v87
    %v314 = vpop.f32.mrf.mxu0
    %v315 = vadd.f32 0.0, %v314
    %v316 = vpop.f32.mrf.mxu0
    %v317 = vadd.f32 0.0, %v316
    %v318 = vpop.f32.mrf.mxu0
    %v319 = vpop.f32.mrf.mxu0
    %320 = vdwg.mxu0
    %321 = vmatprep.subr.bf16.mxu0 %v247
    %322 = vmatpush1.bf16.msra.mxu0 %v246
    %323 = vmatprep.subr.bf16.mxu0 %v243
    %324 = vmatpush1.bf16.msra.mxu0 %v242
    %325 = vmatprep.subr.bf16.mxu0 %v239
    %326 = vmatpush1.bf16.msra.mxu0 %v238
    %327 = vmatprep.subr.bf16.mxu0 %v235
    %328 = vmatpush1.bf16.msra.mxu0 %v234
    %329 = vmatprep.subr.bf16.mxu0 %v231
    %330 = vmatpush1.bf16.msra.mxu0 %v230
    %331 = vmatprep.subr.bf16.mxu0 %v227
    %332 = vmatpush1.bf16.msra.mxu0 %v226
    %333 = vmatprep.subr.bf16.mxu0 %v223
    %334 = vmatpush1.bf16.msra.mxu0 %v222
    %335 = vmatprep.subr.bf16.mxu0 %v219
    %336 = vmatpush1.bf16.msra.mxu0 %v218
    %337 = vmatprep.subr.bf16.mxu0 0
    %338 = vmatpush2.bf16.msra.mxu0 0
    %339 = vmatprep.subr.bf16.mxu0 0
    %340 = vmatpush2.bf16.msra.mxu0 0
    %341 = vmatprep.subr.bf16.mxu0 0
    %342 = vmatpush2.bf16.msra.mxu0 0
    %343 = vmatprep.subr.bf16.mxu0 0
    %344 = vmatpush2.bf16.msra.mxu0 0
    %345 = vmatprep.subr.bf16.mxu0 0
    %346 = vmatpush2.bf16.msra.mxu0 0
    %347 = vmatprep.subr.bf16.mxu0 0
    %348 = vmatpush2.bf16.msra.mxu0 0
    %349 = vmatprep.subr.bf16.mxu0 0
    %350 = vmatpush2.bf16.msra.mxu0 0
    %351 = vmatprep.subr.bf16.mxu0 0
    %352 = vmatpush2.bf16.msra.mxu0 0
    %353 = vmatprep.mubr.bf16.mxu0 0
    %354 = vmatmul.mubr.bf16.gmra.mxu0 %v87
    %v355 = vpop.f32.mrf.mxu0
    %v356 = vadd.f32 0.0, %v355
    %v357 = vpop.f32.mrf.mxu0
    %v358 = vadd.f32 0.0, %v357
    %v359 = vpop.f32.mrf.mxu0
    %v360 = vpop.f32.mrf.mxu0
    %361 = vdwg.mxu0
    %v362 = vadd.f32 %v83, %v315
    %v363 = vadd.f32 %v84, %v317
    %v364 = vadd.f32 %v85, %v356
    %v365 = vadd.f32 %v86, %v358
    %v366 = vxor.u32 %v362, 2147483648
    %v367 = vmul.f32 %v366, 1.442695
    %v368 = vpow.pop %v367
    %v369 = vadd.f32 %v368, 1.0
    %v370 = vrcp.pop %v369
    %v371 = vmul.f32 1.0, %v370
    %v372 = vxor.u32 %v363, 2147483648
    %v373 = vmul.f32 %v372, 1.442695
    %v374 = vpow.pop %v373
    %v375 = vadd.f32 %v374, 1.0
    %v376 = vrcp.pop %v375
    %v377 = vmul.f32 1.0, %v376
    %v378 = vtanh.pop %v364
    %v379 = vxor.u32 %v365, 2147483648
    %v380 = vmul.f32 %v379, 1.442695
    %v381 = vpow.pop %v380
    %v382 = vadd.f32 %v381, 1.0
    %v383 = vrcp.pop %v382
    %v384 = vmul.f32 1.0, %v383
    %v385 = vld [vmem:[#allocation3] sm:$0xff]
    %v386 = vmul.f32 %v377, %v385
    %v387 = vmul.f32 %v371, %v378
    %v388 = vadd.f32 %v386, %v387
    %v389 = vtanh.pop %v388
    %v390 = vmul.f32 %v384, %v389
    %v391 = vpack.c.bf16 %v390, %v390
    %v392 = vstv %s53
    %vm393 = vcmp.lt.s32.totalorder %v392, %v54
    %v394 = vsel %vm393, 1, 0
    %395 = vset.pattern.permute.xlu0 0
    %396 = vperm.xlu0 %395, %v394
    %v397 = vpop.permute.xlu0 %396
    %vm398 = vcmp.eq.s32.totalorder %v397, 1
    %v399 = vsel %vm398, %v388, %v385
    %400 = vst [vmem:[#allocation3] sm:$0xff] %v399
    %v401 = vld [vmem:[#allocation2] sm:$0xf]
    %vm402 = vmpackc.low %vm398, %vm398
    %v403 = vsel %vm402, %v391, %v401
    %404 = vst [vmem:[#allocation2] sm:$0xf] %v403
    %v405 = vsel %vm402, %v391, 0
    %406 = vst [vmem:[#allocation9] sm:$0xf] %v405
    %s407 = scalar_lea.vmem [#allocation4], 16
    %v408 = vld [vmem:[%s407] sm:$0xff]
    %v409 = vld [vmem:[%s407 + $0x8] sm:$0xff]
    %v410 = vunpack.c.l.bf16 %v408
    %v411 = vunpack.c.h.bf16 %v408
    %v412 = vunpack.c.l.bf16 %v409
    %v413 = vunpack.c.h.bf16 %v409
    %v414 = vadd.f32 %v410, %v60
    %v415 = vadd.f32 %v411, %v64
    %v416 = vadd.f32 %v412, %v68
    %v417 = vadd.f32 %v413, %v72
    %v418 = vld [vmem:[#allocation2] sm:$0xf]
    %v419 = vld [vmem:[#allocation7] sm:$0xff]
    %v420 = vld [vmem:[#allocation7 + $0x8] sm:$0xff]
    %v421 = vld [vmem:[#allocation7 + $0x10] sm:$0xff]
    %v422 = vld [vmem:[#allocation7 + $0x18] sm:$0xff]
    %v423 = vld [vmem:[#allocation7 + $0x20] sm:$0xff]
    %v424 = vld [vmem:[#allocation7 + $0x28] sm:$0xff]
    %v425 = vld [vmem:[#allocation7 + $0x30] sm:$0xff]
    %v426 = vld [vmem:[#allocation7 + $0x38] sm:$0xff]
    %v427 = vld [vmem:[#allocation7 + $0x40] sm:$0xff]
    %v428 = vld [vmem:[#allocation7 + $0x48] sm:$0xff]
    %v429 = vld [vmem:[#allocation7 + $0x50] sm:$0xff]
    %v430 = vld [vmem:[#allocation7 + $0x58] sm:$0xff]
    %v431 = vld [vmem:[#allocation7 + $0x60] sm:$0xff]
    %v432 = vld [vmem:[#allocation7 + $0x68] sm:$0xff]
    %v433 = vld [vmem:[#allocation7 + $0x70] sm:$0xff]
    %v434 = vld [vmem:[#allocation7 + $0x78] sm:$0xff]
    %v435 = vld [vmem:[#allocation7 + $0x80] sm:$0xff]
    %v436 = vld [vmem:[#allocation7 + $0x88] sm:$0xff]
    %v437 = vld [vmem:[#allocation7 + $0x90] sm:$0xff]
    %v438 = vld [vmem:[#allocation7 + $0x98] sm:$0xff]
    %v439 = vld [vmem:[#allocation7 + $0xa0] sm:$0xff]
    %v440 = vld [vmem:[#allocation7 + $0xa8] sm:$0xff]
    %v441 = vld [vmem:[#allocation7 + $0xb0] sm:$0xff]
    %v442 = vld [vmem:[#allocation7 + $0xb8] sm:$0xff]
    %v443 = vld [vmem:[#allocation7 + $0xc0] sm:$0xff]
    %v444 = vld [vmem:[#allocation7 + $0xc8] sm:$0xff]
    %v445 = vld [vmem:[#allocation7 + $0xd0] sm:$0xff]
    %v446 = vld [vmem:[#allocation7 + $0xd8] sm:$0xff]
    %v447 = vld [vmem:[#allocation7 + $0xe0] sm:$0xff]
    %v448 = vld [vmem:[#allocation7 + $0xe8] sm:$0xff]
    %v449 = vld [vmem:[#allocation7 + $0xf0] sm:$0xff]
    %v450 = vld [vmem:[#allocation7 + $0xf8] sm:$0xff]
    %v483 = vunpack.c.l.b16 %v419
    %v484 = vunpack.c.h.b16 %v419
    %v485 = vunpack.c.l.b16 %v420
    %v486 = vunpack.c.h.b16 %v420
    %v487 = vunpack.c.l.b16 %v421
    %v488 = vunpack.c.h.b16 %v421
    %v489 = vunpack.c.l.b16 %v422
    %v490 = vunpack.c.h.b16 %v422
    %v491 = vunpack.c.l.b16 %v423
    %v492 = vunpack.c.h.b16 %v423
    %v493 = vunpack.c.l.b16 %v424
    %v494 = vunpack.c.h.b16 %v424
    %v495 = vunpack.c.l.b16 %v425
    %v496 = vunpack.c.h.b16 %v425
    %v497 = vunpack.c.l.b16 %v426
    %v498 = vunpack.c.h.b16 %v426
    %v499 = vunpack.c.l.b16 %v427
    %v500 = vunpack.c.h.b16 %v427
    %v501 = vunpack.c.l.b16 %v428
    %v502 = vunpack.c.h.b16 %v428
    %v503 = vunpack.c.l.b16 %v429
    %v504 = vunpack.c.h.b16 %v429
    %v505 = vunpack.c.l.b16 %v430
    %v506 = vunpack.c.h.b16 %v430
    %v507 = vunpack.c.l.b16 %v431
    %v508 = vunpack.c.h.b16 %v431
    %v509 = vunpack.c.l.b16 %v432
    %v510 = vunpack.c.h.b16 %v432
    %v511 = vunpack.c.l.b16 %v433
    %v512 = vunpack.c.h.b16 %v433
    %v513 = vunpack.c.l.b16 %v434
    %v514 = vunpack.c.h.b16 %v434
    %v515 = vunpack.c.l.b16 %v435
    %v516 = vunpack.c.h.b16 %v435
    %v517 = vunpack.c.l.b16 %v436
    %v518 = vunpack.c.h.b16 %v436
    %v519 = vunpack.c.l.b16 %v437
    %v520 = vunpack.c.h.b16 %v437
    %v521 = vunpack.c.l.b16 %v438
    %v522 = vunpack.c.h.b16 %v438
    %v523 = vunpack.c.l.b16 %v439
    %v524 = vunpack.c.h.b16 %v439
    %v525 = vunpack.c.l.b16 %v440
    %v526 = vunpack.c.h.b16 %v440
    %v527 = vunpack.c.l.b16 %v441
    %v528 = vunpack.c.h.b16 %v441
    %v529 = vunpack.c.l.b16 %v442
    %v530 = vunpack.c.h.b16 %v442
    %v531 = vunpack.c.l.b16 %v443
    %v532 = vunpack.c.h.b16 %v443
    %v533 = vunpack.c.l.b16 %v444
    %v534 = vunpack.c.h.b16 %v444
    %v535 = vunpack.c.l.b16 %v445
    %v536 = vunpack.c.h.b16 %v445
    %v537 = vunpack.c.l.b16 %v446
    %v538 = vunpack.c.h.b16 %v446
    %v539 = vunpack.c.l.b16 %v447
    %v540 = vunpack.c.h.b16 %v447
    %v541 = vunpack.c.l.b16 %v448
    %v542 = vunpack.c.h.b16 %v448
    %v543 = vunpack.c.l.b16 %v449
    %v544 = vunpack.c.h.b16 %v449
    %v545 = vunpack.c.l.b16 %v450
    %v546 = vunpack.c.h.b16 %v450
    %v547 = vpack.c.b16 %v487, %v483
    %v548 = vpack.c.b16 %v488, %v484
    %v549 = vpack.c.b16 %v489, %v485
    %v550 = vpack.c.b16 %v490, %v486
    %v551 = vpack.c.b16 %v495, %v491
    %v552 = vpack.c.b16 %v496, %v492
    %v553 = vpack.c.b16 %v497, %v493
    %v554 = vpack.c.b16 %v498, %v494
    %v555 = vpack.c.b16 %v503, %v499
    %v556 = vpack.c.b16 %v504, %v500
    %v557 = vpack.c.b16 %v505, %v501
    %v558 = vpack.c.b16 %v506, %v502
    %v559 = vpack.c.b16 %v511, %v507
    %v560 = vpack.c.b16 %v512, %v508
    %v561 = vpack.c.b16 %v513, %v509
    %v562 = vpack.c.b16 %v514, %v510
    %v563 = vpack.c.b16 %v519, %v515
    %v564 = vpack.c.b16 %v520, %v516
    %v565 = vpack.c.b16 %v521, %v517
    %v566 = vpack.c.b16 %v522, %v518
    %v567 = vpack.c.b16 %v527, %v523
    %v568 = vpack.c.b16 %v528, %v524
    %v569 = vpack.c.b16 %v529, %v525
    %v570 = vpack.c.b16 %v530, %v526
    %v571 = vpack.c.b16 %v535, %v531
    %v572 = vpack.c.b16 %v536, %v532
    %v573 = vpack.c.b16 %v537, %v533
    %v574 = vpack.c.b16 %v538, %v534
    %v575 = vpack.c.b16 %v543, %v539
    %v576 = vpack.c.b16 %v544, %v540
    %v577 = vpack.c.b16 %v545, %v541
    %v578 = vpack.c.b16 %v546, %v542
    %611 = vmatprep.subr.bf16.mxu0 %v576
    %612 = vmatpush1.bf16.msra.mxu0 %v575
    %613 = vmatprep.subr.bf16.mxu0 %v572
    %614 = vmatpush1.bf16.msra.mxu0 %v571
    %615 = vmatprep.subr.bf16.mxu0 %v568
    %616 = vmatpush1.bf16.msra.mxu0 %v567
    %617 = vmatprep.subr.bf16.mxu0 %v564
    %618 = vmatpush1.bf16.msra.mxu0 %v563
    %619 = vmatprep.subr.bf16.mxu0 %v560
    %620 = vmatpush1.bf16.msra.mxu0 %v559
    %621 = vmatprep.subr.bf16.mxu0 %v556
    %622 = vmatpush1.bf16.msra.mxu0 %v555
    %623 = vmatprep.subr.bf16.mxu0 %v552
    %624 = vmatpush1.bf16.msra.mxu0 %v551
    %625 = vmatprep.subr.bf16.mxu0 %v548
    %626 = vmatpush1.bf16.msra.mxu0 %v547
    %627 = vmatprep.subr.bf16.mxu0 0
    %628 = vmatpush2.bf16.msra.mxu0 0
    %629 = vmatprep.subr.bf16.mxu0 0
    %630 = vmatpush2.bf16.msra.mxu0 0
    %631 = vmatprep.subr.bf16.mxu0 0
    %632 = vmatpush2.bf16.msra.mxu0 0
    %633 = vmatprep.subr.bf16.mxu0 0
    %634 = vmatpush2.bf16.msra.mxu0 0
    %635 = vmatprep.subr.bf16.mxu0 0
    %636 = vmatpush2.bf16.msra.mxu0 0
    %637 = vmatprep.subr.bf16.mxu0 0
    %638 = vmatpush2.bf16.msra.mxu0 0
    %639 = vmatprep.subr.bf16.mxu0 0
    %640 = vmatpush2.bf16.msra.mxu0 0
    %641 = vmatprep.subr.bf16.mxu0 0
    %642 = vmatpush2.bf16.msra.mxu0 0
    %643 = vmatprep.mubr.bf16.mxu0 0
    %644 = vmatmul.mubr.bf16.gmra.mxu0 %v418
    %v645 = vpop.f32.mrf.mxu0
    %v646 = vadd.f32 0.0, %v645
    %v647 = vpop.f32.mrf.mxu0
    %v648 = vadd.f32 0.0, %v647
    %v649 = vpop.f32.mrf.mxu0
    %v650 = vpop.f32.mrf.mxu0
    %651 = vdwg.mxu0
    %652 = vmatprep.subr.bf16.mxu0 %v578
    %653 = vmatpush1.bf16.msra.mxu0 %v577
    %654 = vmatprep.subr.bf16.mxu0 %v574
    %655 = vmatpush1.bf16.msra.mxu0 %v573
    %656 = vmatprep.subr.bf16.mxu0 %v570
    %657 = vmatpush1.bf16.msra.mxu0 %v569
    %658 = vmatprep.subr.bf16.mxu0 %v566
    %659 = vmatpush1.bf16.msra.mxu0 %v565
    %660 = vmatprep.subr.bf16.mxu0 %v562
    %661 = vmatpush1.bf16.msra.mxu0 %v561
    %662 = vmatprep.subr.bf16.mxu0 %v558
    %663 = vmatpush1.bf16.msra.mxu0 %v557
    %664 = vmatprep.subr.bf16.mxu0 %v554
    %665 = vmatpush1.bf16.msra.mxu0 %v553
    %666 = vmatprep.subr.bf16.mxu0 %v550
    %667 = vmatpush1.bf16.msra.mxu0 %v549
    %668 = vmatprep.subr.bf16.mxu0 0
    %669 = vmatpush2.bf16.msra.mxu0 0
    %670 = vmatprep.subr.bf16.mxu0 0
    %671 = vmatpush2.bf16.msra.mxu0 0
    %672 = vmatprep.subr.bf16.mxu0 0
    %673 = vmatpush2.bf16.msra.mxu0 0
    %674 = vmatprep.subr.bf16.mxu0 0
    %675 = vmatpush2.bf16.msra.mxu0 0
    %676 = vmatprep.subr.bf16.mxu0 0
    %677 = vmatpush2.bf16.msra.mxu0 0
    %678 = vmatprep.subr.bf16.mxu0 0
    %679 = vmatpush2.bf16.msra.mxu0 0
    %680 = vmatprep.subr.bf16.mxu0 0
    %681 = vmatpush2.bf16.msra.mxu0 0
    %682 = vmatprep.subr.bf16.mxu0 0
    %683 = vmatpush2.bf16.msra.mxu0 0
    %684 = vmatprep.mubr.bf16.mxu0 0
    %685 = vmatmul.mubr.bf16.gmra.mxu0 %v418
    %v686 = vpop.f32.mrf.mxu0
    %v687 = vadd.f32 0.0, %v686
    %v688 = vpop.f32.mrf.mxu0
    %v689 = vadd.f32 0.0, %v688
    %v690 = vpop.f32.mrf.mxu0
    %v691 = vpop.f32.mrf.mxu0
    %692 = vdwg.mxu0
    %v693 = vadd.f32 %v414, %v646
    %v694 = vadd.f32 %v415, %v648
    %v695 = vadd.f32 %v416, %v687
    %v696 = vadd.f32 %v417, %v689
    %v697 = vxor.u32 %v693, 2147483648
    %v698 = vmul.f32 %v697, 1.442695
    %v699 = vpow.pop %v698
    %v700 = vadd.f32 %v699, 1.0
    %v701 = vrcp.pop %v700
    %v702 = vmul.f32 1.0, %v701
    %v703 = vxor.u32 %v694, 2147483648
    %v704 = vmul.f32 %v703, 1.442695
    %v705 = vpow.pop %v704
    %v706 = vadd.f32 %v705, 1.0
    %v707 = vrcp.pop %v706
    %v708 = vmul.f32 1.0, %v707
    %v709 = vtanh.pop %v695
    %v710 = vxor.u32 %v696, 2147483648
    %v711 = vmul.f32 %v710, 1.442695
    %v712 = vpow.pop %v711
    %v713 = vadd.f32 %v712, 1.0
    %v714 = vrcp.pop %v713
    %v715 = vmul.f32 1.0, %v714
    %v716 = vld [vmem:[#allocation3] sm:$0xff]
    %v717 = vmul.f32 %v708, %v716
    %v718 = vmul.f32 %v702, %v709
    %v719 = vadd.f32 %v717, %v718
    %v720 = vtanh.pop %v719
    %v721 = vmul.f32 %v715, %v720
    %v722 = vpack.c.bf16 %v721, %v721
    %s723 = sadd.s32 %s53, 1
    %v724 = vstv %s723
    %vm725 = vcmp.lt.s32.totalorder %v724, %v54
    %v726 = vsel %vm725, 1, 0
    %727 = vset.pattern.permute.xlu0 0
    %728 = vperm.xlu0 %727, %v726
    %v729 = vpop.permute.xlu0 %728
    %vm730 = vcmp.eq.s32.totalorder %v729, 1
    %v731 = vsel %vm730, %v719, %v716
    %732 = vst [vmem:[#allocation3] sm:$0xff] %v731
    %v733 = vld [vmem:[#allocation2] sm:$0xf]
    %vm734 = vmpackc.low %vm730, %vm730
    %v735 = vsel %vm734, %v722, %v733
    %736 = vst [vmem:[#allocation2] sm:$0xf] %v735
    %v737 = vsel %vm734, %v722, 0
    %s738 = scalar_lea.vmem [#allocation9], 4
    %739 = vst [vmem:[%s738] sm:$0xf] %v737
    %s740 = scalar_lea.vmem [#allocation4], 32
    %v741 = vld [vmem:[%s740] sm:$0xff]
    %v742 = vld [vmem:[%s740 + $0x8] sm:$0xff]
    %v743 = vunpack.c.l.bf16 %v741
    %v744 = vunpack.c.h.bf16 %v741
    %v745 = vunpack.c.l.bf16 %v742
    %v746 = vunpack.c.h.bf16 %v742
    %v747 = vadd.f32 %v743, %v60
    %v748 = vadd.f32 %v744, %v64
    %v749 = vadd.f32 %v745, %v68
    %v750 = vadd.f32 %v746, %v72
    %v751 = vld [vmem:[#allocation2] sm:$0xf]
    %v752 = vld [vmem:[#allocation7] sm:$0xff]
    %v753 = vld [vmem:[#allocation7 + $0x8] sm:$0xff]
    %v754 = vld [vmem:[#allocation7 + $0x10] sm:$0xff]
    %v755 = vld [vmem:[#allocation7 + $0x18] sm:$0xff]
    %v756 = vld [vmem:[#allocation7 + $0x20] sm:$0xff]
    %v757 = vld [vmem:[#allocation7 + $0x28] sm:$0xff]
    %v758 = vld [vmem:[#allocation7 + $0x30] sm:$0xff]
    %v759 = vld [vmem:[#allocation7 + $0x38] sm:$0xff]
    %v760 = vld [vmem:[#allocation7 + $0x40] sm:$0xff]
    %v761 = vld [vmem:[#allocation7 + $0x48] sm:$0xff]
    %v762 = vld [vmem:[#allocation7 + $0x50] sm:$0xff]
    %v763 = vld [vmem:[#allocation7 + $0x58] sm:$0xff]
    %v764 = vld [vmem:[#allocation7 + $0x60] sm:$0xff]
    %v765 = vld [vmem:[#allocation7 + $0x68] sm:$0xff]
    %v766 = vld [vmem:[#allocation7 + $0x70] sm:$0xff]
    %v767 = vld [vmem:[#allocation7 + $0x78] sm:$0xff]
    %v768 = vld [vmem:[#allocation7 + $0x80] sm:$0xff]
    %v769 = vld [vmem:[#allocation7 + $0x88] sm:$0xff]
    %v770 = vld [vmem:[#allocation7 + $0x90] sm:$0xff]
    %v771 = vld [vmem:[#allocation7 + $0x98] sm:$0xff]
    %v772 = vld [vmem:[#allocation7 + $0xa0] sm:$0xff]
    %v773 = vld [vmem:[#allocation7 + $0xa8] sm:$0xff]
    %v774 = vld [vmem:[#allocation7 + $0xb0] sm:$0xff]
    %v775 = vld [vmem:[#allocation7 + $0xb8] sm:$0xff]
    %v776 = vld [vmem:[#allocation7 + $0xc0] sm:$0xff]
    %v777 = vld [vmem:[#allocation7 + $0xc8] sm:$0xff]
    %v778 = vld [vmem:[#allocation7 + $0xd0] sm:$0xff]
    %v779 = vld [vmem:[#allocation7 + $0xd8] sm:$0xff]
    %v780 = vld [vmem:[#allocation7 + $0xe0] sm:$0xff]
    %v781 = vld [vmem:[#allocation7 + $0xe8] sm:$0xff]
    %v782 = vld [vmem:[#allocation7 + $0xf0] sm:$0xff]
    %v783 = vld [vmem:[#allocation7 + $0xf8] sm:$0xff]
    %v816 = vunpack.c.l.b16 %v752
    %v817 = vunpack.c.h.b16 %v752
    %v818 = vunpack.c.l.b16 %v753
    %v819 = vunpack.c.h.b16 %v753
    %v820 = vunpack.c.l.b16 %v754
    %v821 = vunpack.c.h.b16 %v754
    %v822 = vunpack.c.l.b16 %v755
    %v823 = vunpack.c.h.b16 %v755
    %v824 = vunpack.c.l.b16 %v756
    %v825 = vunpack.c.h.b16 %v756
    %v826 = vunpack.c.l.b16 %v757
    %v827 = vunpack.c.h.b16 %v757
    %v828 = vunpack.c.l.b16 %v758
    %v829 = vunpack.c.h.b16 %v758
    %v830 = vunpack.c.l.b16 %v759
    %v831 = vunpack.c.h.b16 %v759
    %v832 = vunpack.c.l.b16 %v760
    %v833 = vunpack.c.h.b16 %v760
    %v834 = vunpack.c.l.b16 %v761
    %v835 = vunpack.c.h.b16 %v761
    %v836 = vunpack.c.l.b16 %v762
    %v837 = vunpack.c.h.b16 %v762
    %v838 = vunpack.c.l.b16 %v763
    %v839 = vunpack.c.h.b16 %v763
    %v840 = vunpack.c.l.b16 %v764
    %v841 = vunpack.c.h.b16 %v764
    %v842 = vunpack.c.l.b16 %v765
    %v843 = vunpack.c.h.b16 %v765
    %v844 = vunpack.c.l.b16 %v766
    %v845 = vunpack.c.h.b16 %v766
    %v846 = vunpack.c.l.b16 %v767
    %v847 = vunpack.c.h.b16 %v767
    %v848 = vunpack.c.l.b16 %v768
    %v849 = vunpack.c.h.b16 %v768
    %v850 = vunpack.c.l.b16 %v769
    %v851 = vunpack.c.h.b16 %v769
    %v852 = vunpack.c.l.b16 %v770
    %v853 = vunpack.c.h.b16 %v770
    %v854 = vunpack.c.l.b16 %v771
    %v855 = vunpack.c.h.b16 %v771
    %v856 = vunpack.c.l.b16 %v772
    %v857 = vunpack.c.h.b16 %v772
    %v858 = vunpack.c.l.b16 %v773
    %v859 = vunpack.c.h.b16 %v773
    %v860 = vunpack.c.l.b16 %v774
    %v861 = vunpack.c.h.b16 %v774
    %v862 = vunpack.c.l.b16 %v775
    %v863 = vunpack.c.h.b16 %v775
    %v864 = vunpack.c.l.b16 %v776
    %v865 = vunpack.c.h.b16 %v776
    %v866 = vunpack.c.l.b16 %v777
    %v867 = vunpack.c.h.b16 %v777
    %v868 = vunpack.c.l.b16 %v778
    %v869 = vunpack.c.h.b16 %v778
    %v870 = vunpack.c.l.b16 %v779
    %v871 = vunpack.c.h.b16 %v779
    %v872 = vunpack.c.l.b16 %v780
    %v873 = vunpack.c.h.b16 %v780
    %v874 = vunpack.c.l.b16 %v781
    %v875 = vunpack.c.h.b16 %v781
    %v876 = vunpack.c.l.b16 %v782
    %v877 = vunpack.c.h.b16 %v782
    %v878 = vunpack.c.l.b16 %v783
    %v879 = vunpack.c.h.b16 %v783
    %v880 = vpack.c.b16 %v820, %v816
    %v881 = vpack.c.b16 %v821, %v817
    %v882 = vpack.c.b16 %v822, %v818
    %v883 = vpack.c.b16 %v823, %v819
    %v884 = vpack.c.b16 %v828, %v824
    %v885 = vpack.c.b16 %v829, %v825
    %v886 = vpack.c.b16 %v830, %v826
    %v887 = vpack.c.b16 %v831, %v827
    %v888 = vpack.c.b16 %v836, %v832
    %v889 = vpack.c.b16 %v837, %v833
    %v890 = vpack.c.b16 %v838, %v834
    %v891 = vpack.c.b16 %v839, %v835
    %v892 = vpack.c.b16 %v844, %v840
    %v893 = vpack.c.b16 %v845, %v841
    %v894 = vpack.c.b16 %v846, %v842
    %v895 = vpack.c.b16 %v847, %v843
    %v896 = vpack.c.b16 %v852, %v848
    %v897 = vpack.c.b16 %v853, %v849
    %v898 = vpack.c.b16 %v854, %v850
    %v899 = vpack.c.b16 %v855, %v851
    %v900 = vpack.c.b16 %v860, %v856
    %v901 = vpack.c.b16 %v861, %v857
    %v902 = vpack.c.b16 %v862, %v858
    %v903 = vpack.c.b16 %v863, %v859
    %v904 = vpack.c.b16 %v868, %v864
    %v905 = vpack.c.b16 %v869, %v865
    %v906 = vpack.c.b16 %v870, %v866
    %v907 = vpack.c.b16 %v871, %v867
    %v908 = vpack.c.b16 %v876, %v872
    %v909 = vpack.c.b16 %v877, %v873
    %v910 = vpack.c.b16 %v878, %v874
    %v911 = vpack.c.b16 %v879, %v875
    %944 = vmatprep.subr.bf16.mxu0 %v909
    %945 = vmatpush1.bf16.msra.mxu0 %v908
    %946 = vmatprep.subr.bf16.mxu0 %v905
    %947 = vmatpush1.bf16.msra.mxu0 %v904
    %948 = vmatprep.subr.bf16.mxu0 %v901
    %949 = vmatpush1.bf16.msra.mxu0 %v900
    %950 = vmatprep.subr.bf16.mxu0 %v897
    %951 = vmatpush1.bf16.msra.mxu0 %v896
    %952 = vmatprep.subr.bf16.mxu0 %v893
    %953 = vmatpush1.bf16.msra.mxu0 %v892
    %954 = vmatprep.subr.bf16.mxu0 %v889
    %955 = vmatpush1.bf16.msra.mxu0 %v888
    %956 = vmatprep.subr.bf16.mxu0 %v885
    %957 = vmatpush1.bf16.msra.mxu0 %v884
    %958 = vmatprep.subr.bf16.mxu0 %v881
    %959 = vmatpush1.bf16.msra.mxu0 %v880
    %960 = vmatprep.subr.bf16.mxu0 0
    %961 = vmatpush2.bf16.msra.mxu0 0
    %962 = vmatprep.subr.bf16.mxu0 0
    %963 = vmatpush2.bf16.msra.mxu0 0
    %964 = vmatprep.subr.bf16.mxu0 0
    %965 = vmatpush2.bf16.msra.mxu0 0
    %966 = vmatprep.subr.bf16.mxu0 0
    %967 = vmatpush2.bf16.msra.mxu0 0
    %968 = vmatprep.subr.bf16.mxu0 0
    %969 = vmatpush2.bf16.msra.mxu0 0
    %970 = vmatprep.subr.bf16.mxu0 0
    %971 = vmatpush2.bf16.msra.mxu0 0
    %972 = vmatprep.subr.bf16.mxu0 0
    %973 = vmatpush2.bf16.msra.mxu0 0
    %974 = vmatprep.subr.bf16.mxu0 0
    %975 = vmatpush2.bf16.msra.mxu0 0
    %976 = vmatprep.mubr.bf16.mxu0 0
    %977 = vmatmul.mubr.bf16.gmra.mxu0 %v751
    %v978 = vpop.f32.mrf.mxu0
    %v979 = vadd.f32 0.0, %v978
    %v980 = vpop.f32.mrf.mxu0
    %v981 = vadd.f32 0.0, %v980
    %v982 = vpop.f32.mrf.mxu0
    %v983 = vpop.f32.mrf.mxu0
    %984 = vdwg.mxu0
    %985 = vmatprep.subr.bf16.mxu0 %v911
    %986 = vmatpush1.bf16.msra.mxu0 %v910
    %987 = vmatprep.subr.bf16.mxu0 %v907
    %988 = vmatpush1.bf16.msra.mxu0 %v906
    %989 = vmatprep.subr.bf16.mxu0 %v903
    %990 = vmatpush1.bf16.msra.mxu0 %v902
    %991 = vmatprep.subr.bf16.mxu0 %v899
    %992 = vmatpush1.bf16.msra.mxu0 %v898
    %993 = vmatprep.subr.bf16.mxu0 %v895
    %994 = vmatpush1.bf16.msra.mxu0 %v894
    %995 = vmatprep.subr.bf16.mxu0 %v891
    %996 = vmatpush1.bf16.msra.mxu0 %v890
    %997 = vmatprep.subr.bf16.mxu0 %v887
    %998 = vmatpush1.bf16.msra.mxu0 %v886
    %999 = vmatprep.subr.bf16.mxu0 %v883
    %1000 = vmatpush1.bf16.msra.mxu0 %v882
    %1001 = vmatprep.subr.bf16.mxu0 0
    %1002 = vmatpush2.bf16.msra.mxu0 0
    %1003 = vmatprep.subr.bf16.mxu0 0
    %1004 = vmatpush2.bf16.msra.mxu0 0
    %1005 = vmatprep.subr.bf16.mxu0 0
    %1006 = vmatpush2.bf16.msra.mxu0 0
    %1007 = vmatprep.subr.bf16.mxu0 0
    %1008 = vmatpush2.bf16.msra.mxu0 0
    %1009 = vmatprep.subr.bf16.mxu0 0
    %1010 = vmatpush2.bf16.msra.mxu0 0
    %1011 = vmatprep.subr.bf16.mxu0 0
    %1012 = vmatpush2.bf16.msra.mxu0 0
    %1013 = vmatprep.subr.bf16.mxu0 0
    %1014 = vmatpush2.bf16.msra.mxu0 0
    %1015 = vmatprep.subr.bf16.mxu0 0
    %1016 = vmatpush2.bf16.msra.mxu0 0
    %1017 = vmatprep.mubr.bf16.mxu0 0
    %1018 = vmatmul.mubr.bf16.gmra.mxu0 %v751
    %v1019 = vpop.f32.mrf.mxu0
    %v1020 = vadd.f32 0.0, %v1019
    %v1021 = vpop.f32.mrf.mxu0
    %v1022 = vadd.f32 0.0, %v1021
    %v1023 = vpop.f32.mrf.mxu0
    %v1024 = vpop.f32.mrf.mxu0
    %1025 = vdwg.mxu0
    %v1026 = vadd.f32 %v747, %v979
    %v1027 = vadd.f32 %v748, %v981
    %v1028 = vadd.f32 %v749, %v1020
    %v1029 = vadd.f32 %v750, %v1022
    %v1030 = vxor.u32 %v1026, 2147483648
    %v1031 = vmul.f32 %v1030, 1.442695
    %v1032 = vpow.pop %v1031
    %v1033 = vadd.f32 %v1032, 1.0
    %v1034 = vrcp.pop %v1033
    %v1035 = vmul.f32 1.0, %v1034
    %v1036 = vxor.u32 %v1027, 2147483648
    %v1037 = vmul.f32 %v1036, 1.442695
    %v1038 = vpow.pop %v1037
    %v1039 = vadd.f32 %v1038, 1.0
    %v1040 = vrcp.pop %v1039
    %v1041 = vmul.f32 1.0, %v1040
    %v1042 = vtanh.pop %v1028
    %v1043 = vxor.u32 %v1029, 2147483648
    %v1044 = vmul.f32 %v1043, 1.442695
    %v1045 = vpow.pop %v1044
    %v1046 = vadd.f32 %v1045, 1.0
    %v1047 = vrcp.pop %v1046
    %v1048 = vmul.f32 1.0, %v1047
    %v1049 = vld [vmem:[#allocation3] sm:$0xff]
    %v1050 = vmul.f32 %v1041, %v1049
    %v1051 = vmul.f32 %v1035, %v1042
    %v1052 = vadd.f32 %v1050, %v1051
    %v1053 = vtanh.pop %v1052
    %v1054 = vmul.f32 %v1048, %v1053
    %v1055 = vpack.c.bf16 %v1054, %v1054
    %s1056 = sadd.s32 %s53, 2
    %v1057 = vstv %s1056
    %vm1058 = vcmp.lt.s32.totalorder %v1057, %v54
    %v1059 = vsel %vm1058, 1, 0
    %1060 = vset.pattern.permute.xlu0 0
    %1061 = vperm.xlu0 %1060, %v1059
    %v1062 = vpop.permute.xlu0 %1061
    %vm1063 = vcmp.eq.s32.totalorder %v1062, 1
    %v1064 = vsel %vm1063, %v1052, %v1049
    %1065 = vst [vmem:[#allocation3] sm:$0xff] %v1064
    %v1066 = vld [vmem:[#allocation2] sm:$0xf]
    %vm1067 = vmpackc.low %vm1063, %vm1063
    %v1068 = vsel %vm1067, %v1055, %v1066
    %1069 = vst [vmem:[#allocation2] sm:$0xf] %v1068
    %v1070 = vsel %vm1067, %v1055, 0
    %s1071 = scalar_lea.vmem [#allocation9], 8
    %1072 = vst [vmem:[%s1071] sm:$0xf] %v1070
    %s1073 = scalar_lea.vmem [#allocation4], 48
    %v1074 = vld [vmem:[%s1073] sm:$0xff]
    %v1075 = vld [vmem:[%s1073 + $0x8] sm:$0xff]
    %v1076 = vunpack.c.l.bf16 %v1074
    %v1077 = vunpack.c.h.bf16 %v1074
    %v1078 = vunpack.c.l.bf16 %v1075
    %v1079 = vunpack.c.h.bf16 %v1075
    %v1080 = vadd.f32 %v1076, %v60
    %v1081 = vadd.f32 %v1077, %v64
    %v1082 = vadd.f32 %v1078, %v68
    %v1083 = vadd.f32 %v1079, %v72
    %v1084 = vld [vmem:[#allocation2] sm:$0xf]
    %v1085 = vld [vmem:[#allocation7] sm:$0xff]
    %v1086 = vld [vmem:[#allocation7 + $0x8] sm:$0xff]
    %v1087 = vld [vmem:[#allocation7 + $0x10] sm:$0xff]
    %v1088 = vld [vmem:[#allocation7 + $0x18] sm:$0xff]
    %v1089 = vld [vmem:[#allocation7 + $0x20] sm:$0xff]
    %v1090 = vld [vmem:[#allocation7 + $0x28] sm:$0xff]
    %v1091 = vld [vmem:[#allocation7 + $0x30] sm:$0xff]
    %v1092 = vld [vmem:[#allocation7 + $0x38] sm:$0xff]
    %v1093 = vld [vmem:[#allocation7 + $0x40] sm:$0xff]
    %v1094 = vld [vmem:[#allocation7 + $0x48] sm:$0xff]
    %v1095 = vld [vmem:[#allocation7 + $0x50] sm:$0xff]
    %v1096 = vld [vmem:[#allocation7 + $0x58] sm:$0xff]
    %v1097 = vld [vmem:[#allocation7 + $0x60] sm:$0xff]
    %v1098 = vld [vmem:[#allocation7 + $0x68] sm:$0xff]
    %v1099 = vld [vmem:[#allocation7 + $0x70] sm:$0xff]
    %v1100 = vld [vmem:[#allocation7 + $0x78] sm:$0xff]
    %v1101 = vld [vmem:[#allocation7 + $0x80] sm:$0xff]
    %v1102 = vld [vmem:[#allocation7 + $0x88] sm:$0xff]
    %v1103 = vld [vmem:[#allocation7 + $0x90] sm:$0xff]
    %v1104 = vld [vmem:[#allocation7 + $0x98] sm:$0xff]
    %v1105 = vld [vmem:[#allocation7 + $0xa0] sm:$0xff]
    %v1106 = vld [vmem:[#allocation7 + $0xa8] sm:$0xff]
    %v1107 = vld [vmem:[#allocation7 + $0xb0] sm:$0xff]
    %v1108 = vld [vmem:[#allocation7 + $0xb8] sm:$0xff]
    %v1109 = vld [vmem:[#allocation7 + $0xc0] sm:$0xff]
    %v1110 = vld [vmem:[#allocation7 + $0xc8] sm:$0xff]
    %v1111 = vld [vmem:[#allocation7 + $0xd0] sm:$0xff]
    %v1112 = vld [vmem:[#allocation7 + $0xd8] sm:$0xff]
    %v1113 = vld [vmem:[#allocation7 + $0xe0] sm:$0xff]
    %v1114 = vld [vmem:[#allocation7 + $0xe8] sm:$0xff]
    %v1115 = vld [vmem:[#allocation7 + $0xf0] sm:$0xff]
    %v1116 = vld [vmem:[#allocation7 + $0xf8] sm:$0xff]
    %v1149 = vunpack.c.l.b16 %v1085
    %v1150 = vunpack.c.h.b16 %v1085
    %v1151 = vunpack.c.l.b16 %v1086
    %v1152 = vunpack.c.h.b16 %v1086
    %v1153 = vunpack.c.l.b16 %v1087
    %v1154 = vunpack.c.h.b16 %v1087
    %v1155 = vunpack.c.l.b16 %v1088
    %v1156 = vunpack.c.h.b16 %v1088
    %v1157 = vunpack.c.l.b16 %v1089
    %v1158 = vunpack.c.h.b16 %v1089
    %v1159 = vunpack.c.l.b16 %v1090
    %v1160 = vunpack.c.h.b16 %v1090
    %v1161 = vunpack.c.l.b16 %v1091
    %v1162 = vunpack.c.h.b16 %v1091
    %v1163 = vunpack.c.l.b16 %v1092
    %v1164 = vunpack.c.h.b16 %v1092
    %v1165 = vunpack.c.l.b16 %v1093
    %v1166 = vunpack.c.h.b16 %v1093
    %v1167 = vunpack.c.l.b16 %v1094
    %v1168 = vunpack.c.h.b16 %v1094
    %v1169 = vunpack.c.l.b16 %v1095
    %v1170 = vunpack.c.h.b16 %v1095
    %v1171 = vunpack.c.l.b16 %v1096
    %v1172 = vunpack.c.h.b16 %v1096
    %v1173 = vunpack.c.l.b16 %v1097
    %v1174 = vunpack.c.h.b16 %v1097
    %v1175 = vunpack.c.l.b16 %v1098
    %v1176 = vunpack.c.h.b16 %v1098
    %v1177 = vunpack.c.l.b16 %v1099
    %v1178 = vunpack.c.h.b16 %v1099
    %v1179 = vunpack.c.l.b16 %v1100
    %v1180 = vunpack.c.h.b16 %v1100
    %v1181 = vunpack.c.l.b16 %v1101
    %v1182 = vunpack.c.h.b16 %v1101
    %v1183 = vunpack.c.l.b16 %v1102
    %v1184 = vunpack.c.h.b16 %v1102
    %v1185 = vunpack.c.l.b16 %v1103
    %v1186 = vunpack.c.h.b16 %v1103
    %v1187 = vunpack.c.l.b16 %v1104
    %v1188 = vunpack.c.h.b16 %v1104
    %v1189 = vunpack.c.l.b16 %v1105
    %v1190 = vunpack.c.h.b16 %v1105
    %v1191 = vunpack.c.l.b16 %v1106
    %v1192 = vunpack.c.h.b16 %v1106
    %v1193 = vunpack.c.l.b16 %v1107
    %v1194 = vunpack.c.h.b16 %v1107
    %v1195 = vunpack.c.l.b16 %v1108
    %v1196 = vunpack.c.h.b16 %v1108
    %v1197 = vunpack.c.l.b16 %v1109
    %v1198 = vunpack.c.h.b16 %v1109
    %v1199 = vunpack.c.l.b16 %v1110
    %v1200 = vunpack.c.h.b16 %v1110
    %v1201 = vunpack.c.l.b16 %v1111
    %v1202 = vunpack.c.h.b16 %v1111
    %v1203 = vunpack.c.l.b16 %v1112
    %v1204 = vunpack.c.h.b16 %v1112
    %v1205 = vunpack.c.l.b16 %v1113
    %v1206 = vunpack.c.h.b16 %v1113
    %v1207 = vunpack.c.l.b16 %v1114
    %v1208 = vunpack.c.h.b16 %v1114
    %v1209 = vunpack.c.l.b16 %v1115
    %v1210 = vunpack.c.h.b16 %v1115
    %v1211 = vunpack.c.l.b16 %v1116
    %v1212 = vunpack.c.h.b16 %v1116
    %v1213 = vpack.c.b16 %v1153, %v1149
    %v1214 = vpack.c.b16 %v1154, %v1150
    %v1215 = vpack.c.b16 %v1155, %v1151
    %v1216 = vpack.c.b16 %v1156, %v1152
    %v1217 = vpack.c.b16 %v1161, %v1157
    %v1218 = vpack.c.b16 %v1162, %v1158
    %v1219 = vpack.c.b16 %v1163, %v1159
    %v1220 = vpack.c.b16 %v1164, %v1160
    %v1221 = vpack.c.b16 %v1169, %v1165
    %v1222 = vpack.c.b16 %v1170, %v1166
    %v1223 = vpack.c.b16 %v1171, %v1167
    %v1224 = vpack.c.b16 %v1172, %v1168
    %v1225 = vpack.c.b16 %v1177, %v1173
    %v1226 = vpack.c.b16 %v1178, %v1174
    %v1227 = vpack.c.b16 %v1179, %v1175
    %v1228 = vpack.c.b16 %v1180, %v1176
    %v1229 = vpack.c.b16 %v1185, %v1181
    %v1230 = vpack.c.b16 %v1186, %v1182
    %v1231 = vpack.c.b16 %v1187, %v1183
    %v1232 = vpack.c.b16 %v1188, %v1184
    %v1233 = vpack.c.b16 %v1193, %v1189
    %v1234 = vpack.c.b16 %v1194, %v1190
    %v1235 = vpack.c.b16 %v1195, %v1191
    %v1236 = vpack.c.b16 %v1196, %v1192
    %v1237 = vpack.c.b16 %v1201, %v1197
    %v1238 = vpack.c.b16 %v1202, %v1198
    %v1239 = vpack.c.b16 %v1203, %v1199
    %v1240 = vpack.c.b16 %v1204, %v1200
    %v1241 = vpack.c.b16 %v1209, %v1205
    %v1242 = vpack.c.b16 %v1210, %v1206
    %v1243 = vpack.c.b16 %v1211, %v1207
    %v1244 = vpack.c.b16 %v1212, %v1208
    %1277 = vmatprep.subr.bf16.mxu0 %v1242
    %1278 = vmatpush1.bf16.msra.mxu0 %v1241
    %1279 = vmatprep.subr.bf16.mxu0 %v1238
    %1280 = vmatpush1.bf16.msra.mxu0 %v1237
    %1281 = vmatprep.subr.bf16.mxu0 %v1234
    %1282 = vmatpush1.bf16.msra.mxu0 %v1233
    %1283 = vmatprep.subr.bf16.mxu0 %v1230
    %1284 = vmatpush1.bf16.msra.mxu0 %v1229
    %1285 = vmatprep.subr.bf16.mxu0 %v1226
    %1286 = vmatpush1.bf16.msra.mxu0 %v1225
    %1287 = vmatprep.subr.bf16.mxu0 %v1222
    %1288 = vmatpush1.bf16.msra.mxu0 %v1221
    %1289 = vmatprep.subr.bf16.mxu0 %v1218
    %1290 = vmatpush1.bf16.msra.mxu0 %v1217
    %1291 = vmatprep.subr.bf16.mxu0 %v1214
    %1292 = vmatpush1.bf16.msra.mxu0 %v1213
    %1293 = vmatprep.subr.bf16.mxu0 0
    %1294 = vmatpush2.bf16.msra.mxu0 0
    %1295 = vmatprep.subr.bf16.mxu0 0
    %1296 = vmatpush2.bf16.msra.mxu0 0
    %1297 = vmatprep.subr.bf16.mxu0 0
    %1298 = vmatpush2.bf16.msra.mxu0 0
    %1299 = vmatprep.subr.bf16.mxu0 0
    %1300 = vmatpush2.bf16.msra.mxu0 0
    %1301 = vmatprep.subr.bf16.mxu0 0
    %1302 = vmatpush2.bf16.msra.mxu0 0
    %1303 = vmatprep.subr.bf16.mxu0 0
    %1304 = vmatpush2.bf16.msra.mxu0 0
    %1305 = vmatprep.subr.bf16.mxu0 0
    %1306 = vmatpush2.bf16.msra.mxu0 0
    %1307 = vmatprep.subr.bf16.mxu0 0
    %1308 = vmatpush2.bf16.msra.mxu0 0
    %1309 = vmatprep.mubr.bf16.mxu0 0
    %1310 = vmatmul.mubr.bf16.gmra.mxu0 %v1084
    %v1311 = vpop.f32.mrf.mxu0
    %v1312 = vadd.f32 0.0, %v1311
    %v1313 = vpop.f32.mrf.mxu0
    %v1314 = vadd.f32 0.0, %v1313
    %v1315 = vpop.f32.mrf.mxu0
    %v1316 = vpop.f32.mrf.mxu0
    %1317 = vdwg.mxu0
    %1318 = vmatprep.subr.bf16.mxu0 %v1244
    %1319 = vmatpush1.bf16.msra.mxu0 %v1243
    %1320 = vmatprep.subr.bf16.mxu0 %v1240
    %1321 = vmatpush1.bf16.msra.mxu0 %v1239
    %1322 = vmatprep.subr.bf16.mxu0 %v1236
    %1323 = vmatpush1.bf16.msra.mxu0 %v1235
    %1324 = vmatprep.subr.bf16.mxu0 %v1232
    %1325 = vmatpush1.bf16.msra.mxu0 %v1231
    %1326 = vmatprep.subr.bf16.mxu0 %v1228
    %1327 = vmatpush1.bf16.msra.mxu0 %v1227
    %1328 = vmatprep.subr.bf16.mxu0 %v1224
    %1329 = vmatpush1.bf16.msra.mxu0 %v1223
    %1330 = vmatprep.subr.bf16.mxu0 %v1220
    %1331 = vmatpush1.bf16.msra.mxu0 %v1219
    %1332 = vmatprep.subr.bf16.mxu0 %v1216
    %1333 = vmatpush1.bf16.msra.mxu0 %v1215
    %1334 = vmatprep.subr.bf16.mxu0 0
    %1335 = vmatpush2.bf16.msra.mxu0 0
    %1336 = vmatprep.subr.bf16.mxu0 0
    %1337 = vmatpush2.bf16.msra.mxu0 0
    %1338 = vmatprep.subr.bf16.mxu0 0
    %1339 = vmatpush2.bf16.msra.mxu0 0
    %1340 = vmatprep.subr.bf16.mxu0 0
    %1341 = vmatpush2.bf16.msra.mxu0 0
    %1342 = vmatprep.subr.bf16.mxu0 0
    %1343 = vmatpush2.bf16.msra.mxu0 0
    %1344 = vmatprep.subr.bf16.mxu0 0
    %1345 = vmatpush2.bf16.msra.mxu0 0
    %1346 = vmatprep.subr.bf16.mxu0 0
    %1347 = vmatpush2.bf16.msra.mxu0 0
    %1348 = vmatprep.subr.bf16.mxu0 0
    %1349 = vmatpush2.bf16.msra.mxu0 0
    %1350 = vmatprep.mubr.bf16.mxu0 0
    %1351 = vmatmul.mubr.bf16.gmra.mxu0 %v1084
    %v1352 = vpop.f32.mrf.mxu0
    %v1353 = vadd.f32 0.0, %v1352
    %v1354 = vpop.f32.mrf.mxu0
    %v1355 = vadd.f32 0.0, %v1354
    %v1356 = vpop.f32.mrf.mxu0
    %v1357 = vpop.f32.mrf.mxu0
    %1358 = vdwg.mxu0
    %v1359 = vadd.f32 %v1080, %v1312
    %v1360 = vadd.f32 %v1081, %v1314
    %v1361 = vadd.f32 %v1082, %v1353
    %v1362 = vadd.f32 %v1083, %v1355
    %v1363 = vxor.u32 %v1359, 2147483648
    %v1364 = vmul.f32 %v1363, 1.442695
    %v1365 = vpow.pop %v1364
    %v1366 = vadd.f32 %v1365, 1.0
    %v1367 = vrcp.pop %v1366
    %v1368 = vmul.f32 1.0, %v1367
    %v1369 = vxor.u32 %v1360, 2147483648
    %v1370 = vmul.f32 %v1369, 1.442695
    %v1371 = vpow.pop %v1370
    %v1372 = vadd.f32 %v1371, 1.0
    %v1373 = vrcp.pop %v1372
    %v1374 = vmul.f32 1.0, %v1373
    %v1375 = vtanh.pop %v1361
    %v1376 = vxor.u32 %v1362, 2147483648
    %v1377 = vmul.f32 %v1376, 1.442695
    %v1378 = vpow.pop %v1377
    %v1379 = vadd.f32 %v1378, 1.0
    %v1380 = vrcp.pop %v1379
    %v1381 = vmul.f32 1.0, %v1380
    %v1382 = vld [vmem:[#allocation3] sm:$0xff]
    %v1383 = vmul.f32 %v1374, %v1382
    %v1384 = vmul.f32 %v1368, %v1375
    %v1385 = vadd.f32 %v1383, %v1384
    %v1386 = vtanh.pop %v1385
    %v1387 = vmul.f32 %v1381, %v1386
    %v1388 = vpack.c.bf16 %v1387, %v1387
    %s1389 = sadd.s32 %s53, 3
    %v1390 = vstv %s1389
    %vm1391 = vcmp.lt.s32.totalorder %v1390, %v54
    %v1392 = vsel %vm1391, 1, 0
    %1393 = vset.pattern.permute.xlu0 0
    %1394 = vperm.xlu0 %1393, %v1392
    %v1395 = vpop.permute.xlu0 %1394
    %vm1396 = vcmp.eq.s32.totalorder %v1395, 1
    %v1397 = vsel %vm1396, %v1385, %v1382
    %1398 = vst [vmem:[#allocation3] sm:$0xff] %v1397
    %v1399 = vld [vmem:[#allocation2] sm:$0xf]
    %vm1400 = vmpackc.low %vm1396, %vm1396
    %v1401 = vsel %vm1400, %v1388, %v1399
    %1402 = vst [vmem:[#allocation2] sm:$0xf] %v1401
    %v1403 = vsel %vm1400, %v1388, 0
    %s1404 = scalar_lea.vmem [#allocation9], 12
    %1405 = vst [vmem:[%s1404] sm:$0xf] %v1403
    %s1406 = scalar_lea.vmem [#allocation4], 64
    %v1407 = vld [vmem:[%s1406] sm:$0xff]
    %v1408 = vld [vmem:[%s1406 + $0x8] sm:$0xff]
    %v1409 = vunpack.c.l.bf16 %v1407
    %v1410 = vunpack.c.h.bf16 %v1407
    %v1411 = vunpack.c.l.bf16 %v1408
    %v1412 = vunpack.c.h.bf16 %v1408
    %v1413 = vadd.f32 %v1409, %v60
    %v1414 = vadd.f32 %v1410, %v64
    %v1415 = vadd.f32 %v1411, %v68
    %v1416 = vadd.f32 %v1412, %v72
    %v1417 = vld [vmem:[#allocation2] sm:$0xf]
    %v1418 = vld [vmem:[#allocation7] sm:$0xff]
    %v1419 = vld [vmem:[#allocation7 + $0x8] sm:$0xff]
    %v1420 = vld [vmem:[#allocation7 + $0x10] sm:$0xff]
    %v1421 = vld [vmem:[#allocation7 + $0x18] sm:$0xff]
    %v1422 = vld [vmem:[#allocation7 + $0x20] sm:$0xff]
    %v1423 = vld [vmem:[#allocation7 + $0x28] sm:$0xff]
    %v1424 = vld [vmem:[#allocation7 + $0x30] sm:$0xff]
    %v1425 = vld [vmem:[#allocation7 + $0x38] sm:$0xff]
    %v1426 = vld [vmem:[#allocation7 + $0x40] sm:$0xff]
    %v1427 = vld [vmem:[#allocation7 + $0x48] sm:$0xff]
    %v1428 = vld [vmem:[#allocation7 + $0x50] sm:$0xff]
    %v1429 = vld [vmem:[#allocation7 + $0x58] sm:$0xff]
    %v1430 = vld [vmem:[#allocation7 + $0x60] sm:$0xff]
    %v1431 = vld [vmem:[#allocation7 + $0x68] sm:$0xff]
    %v1432 = vld [vmem:[#allocation7 + $0x70] sm:$0xff]
    %v1433 = vld [vmem:[#allocation7 + $0x78] sm:$0xff]
    %v1434 = vld [vmem:[#allocation7 + $0x80] sm:$0xff]
    %v1435 = vld [vmem:[#allocation7 + $0x88] sm:$0xff]
    %v1436 = vld [vmem:[#allocation7 + $0x90] sm:$0xff]
    %v1437 = vld [vmem:[#allocation7 + $0x98] sm:$0xff]
    %v1438 = vld [vmem:[#allocation7 + $0xa0] sm:$0xff]
    %v1439 = vld [vmem:[#allocation7 + $0xa8] sm:$0xff]
    %v1440 = vld [vmem:[#allocation7 + $0xb0] sm:$0xff]
    %v1441 = vld [vmem:[#allocation7 + $0xb8] sm:$0xff]
    %v1442 = vld [vmem:[#allocation7 + $0xc0] sm:$0xff]
    %v1443 = vld [vmem:[#allocation7 + $0xc8] sm:$0xff]
    %v1444 = vld [vmem:[#allocation7 + $0xd0] sm:$0xff]
    %v1445 = vld [vmem:[#allocation7 + $0xd8] sm:$0xff]
    %v1446 = vld [vmem:[#allocation7 + $0xe0] sm:$0xff]
    %v1447 = vld [vmem:[#allocation7 + $0xe8] sm:$0xff]
    %v1448 = vld [vmem:[#allocation7 + $0xf0] sm:$0xff]
    %v1449 = vld [vmem:[#allocation7 + $0xf8] sm:$0xff]
    %v1482 = vunpack.c.l.b16 %v1418
    %v1483 = vunpack.c.h.b16 %v1418
    %v1484 = vunpack.c.l.b16 %v1419
    %v1485 = vunpack.c.h.b16 %v1419
    %v1486 = vunpack.c.l.b16 %v1420
    %v1487 = vunpack.c.h.b16 %v1420
    %v1488 = vunpack.c.l.b16 %v1421
    %v1489 = vunpack.c.h.b16 %v1421
    %v1490 = vunpack.c.l.b16 %v1422
    %v1491 = vunpack.c.h.b16 %v1422
    %v1492 = vunpack.c.l.b16 %v1423
    %v1493 = vunpack.c.h.b16 %v1423
    %v1494 = vunpack.c.l.b16 %v1424
    %v1495 = vunpack.c.h.b16 %v1424
    %v1496 = vunpack.c.l.b16 %v1425
    %v1497 = vunpack.c.h.b16 %v1425
    %v1498 = vunpack.c.l.b16 %v1426
    %v1499 = vunpack.c.h.b16 %v1426
    %v1500 = vunpack.c.l.b16 %v1427
    %v1501 = vunpack.c.h.b16 %v1427
    %v1502 = vunpack.c.l.b16 %v1428
    %v1503 = vunpack.c.h.b16 %v1428
    %v1504 = vunpack.c.l.b16 %v1429
    %v1505 = vunpack.c.h.b16 %v1429
    %v1506 = vunpack.c.l.b16 %v1430
    %v1507 = vunpack.c.h.b16 %v1430
    %v1508 = vunpack.c.l.b16 %v1431
    %v1509 = vunpack.c.h.b16 %v1431
    %v1510 = vunpack.c.l.b16 %v1432
    %v1511 = vunpack.c.h.b16 %v1432
    %v1512 = vunpack.c.l.b16 %v1433
    %v1513 = vunpack.c.h.b16 %v1433
    %v1514 = vunpack.c.l.b16 %v1434
    %v1515 = vunpack.c.h.b16 %v1434
    %v1516 = vunpack.c.l.b16 %v1435
    %v1517 = vunpack.c.h.b16 %v1435
    %v1518 = vunpack.c.l.b16 %v1436
    %v1519 = vunpack.c.h.b16 %v1436
    %v1520 = vunpack.c.l.b16 %v1437
    %v1521 = vunpack.c.h.b16 %v1437
    %v1522 = vunpack.c.l.b16 %v1438
    %v1523 = vunpack.c.h.b16 %v1438
    %v1524 = vunpack.c.l.b16 %v1439
    %v1525 = vunpack.c.h.b16 %v1439
    %v1526 = vunpack.c.l.b16 %v1440
    %v1527 = vunpack.c.h.b16 %v1440
    %v1528 = vunpack.c.l.b16 %v1441
    %v1529 = vunpack.c.h.b16 %v1441
    %v1530 = vunpack.c.l.b16 %v1442
    %v1531 = vunpack.c.h.b16 %v1442
    %v1532 = vunpack.c.l.b16 %v1443
    %v1533 = vunpack.c.h.b16 %v1443
    %v1534 = vunpack.c.l.b16 %v1444
    %v1535 = vunpack.c.h.b16 %v1444
    %v1536 = vunpack.c.l.b16 %v1445
    %v1537 = vunpack.c.h.b16 %v1445
    %v1538 = vunpack.c.l.b16 %v1446
    %v1539 = vunpack.c.h.b16 %v1446
    %v1540 = vunpack.c.l.b16 %v1447
    %v1541 = vunpack.c.h.b16 %v1447
    %v1542 = vunpack.c.l.b16 %v1448
    %v1543 = vunpack.c.h.b16 %v1448
    %v1544 = vunpack.c.l.b16 %v1449
    %v1545 = vunpack.c.h.b16 %v1449
    %v1546 = vpack.c.b16 %v1486, %v1482
    %v1547 = vpack.c.b16 %v1487, %v1483
    %v1548 = vpack.c.b16 %v1488, %v1484
    %v1549 = vpack.c.b16 %v1489, %v1485
    %v1550 = vpack.c.b16 %v1494, %v1490
    %v1551 = vpack.c.b16 %v1495, %v1491
    %v1552 = vpack.c.b16 %v1496, %v1492
    %v1553 = vpack.c.b16 %v1497, %v1493
    %v1554 = vpack.c.b16 %v1502, %v1498
    %v1555 = vpack.c.b16 %v1503, %v1499
    %v1556 = vpack.c.b16 %v1504, %v1500
    %v1557 = vpack.c.b16 %v1505, %v1501
    %v1558 = vpack.c.b16 %v1510, %v1506
    %v1559 = vpack.c.b16 %v1511, %v1507
    %v1560 = vpack.c.b16 %v1512, %v1508
    %v1561 = vpack.c.b16 %v1513, %v1509
    %v1562 = vpack.c.b16 %v1518, %v1514
    %v1563 = vpack.c.b16 %v1519, %v1515
    %v1564 = vpack.c.b16 %v1520, %v1516
    %v1565 = vpack.c.b16 %v1521, %v1517
    %v1566 = vpack.c.b16 %v1526, %v1522
    %v1567 = vpack.c.b16 %v1527, %v1523
    %v1568 = vpack.c.b16 %v1528, %v1524
    %v1569 = vpack.c.b16 %v1529, %v1525
    %v1570 = vpack.c.b16 %v1534, %v1530
    %v1571 = vpack.c.b16 %v1535, %v1531
    %v1572 = vpack.c.b16 %v1536, %v1532
    %v1573 = vpack.c.b16 %v1537, %v1533
    %v1574 = vpack.c.b16 %v1542, %v1538
    %v1575 = vpack.c.b16 %v1543, %v1539
    %v1576 = vpack.c.b16 %v1544, %v1540
    %v1577 = vpack.c.b16 %v1545, %v1541
    %1610 = vmatprep.subr.bf16.mxu0 %v1575
    %1611 = vmatpush1.bf16.msra.mxu0 %v1574
    %1612 = vmatprep.subr.bf16.mxu0 %v1571
    %1613 = vmatpush1.bf16.msra.mxu0 %v1570
    %1614 = vmatprep.subr.bf16.mxu0 %v1567
    %1615 = vmatpush1.bf16.msra.mxu0 %v1566
    %1616 = vmatprep.subr.bf16.mxu0 %v1563
    %1617 = vmatpush1.bf16.msra.mxu0 %v1562
    %1618 = vmatprep.subr.bf16.mxu0 %v1559
    %1619 = vmatpush1.bf16.msra.mxu0 %v1558
    %1620 = vmatprep.subr.bf16.mxu0 %v1555
    %1621 = vmatpush1.bf16.msra.mxu0 %v1554
    %1622 = vmatprep.subr.bf16.mxu0 %v1551
    %1623 = vmatpush1.bf16.msra.mxu0 %v1550
    %1624 = vmatprep.subr.bf16.mxu0 %v1547
    %1625 = vmatpush1.bf16.msra.mxu0 %v1546
    %1626 = vmatprep.subr.bf16.mxu0 0
    %1627 = vmatpush2.bf16.msra.mxu0 0
    %1628 = vmatprep.subr.bf16.mxu0 0
    %1629 = vmatpush2.bf16.msra.mxu0 0
    %1630 = vmatprep.subr.bf16.mxu0 0
    %1631 = vmatpush2.bf16.msra.mxu0 0
    %1632 = vmatprep.subr.bf16.mxu0 0
    %1633 = vmatpush2.bf16.msra.mxu0 0
    %1634 = vmatprep.subr.bf16.mxu0 0
    %1635 = vmatpush2.bf16.msra.mxu0 0
    %1636 = vmatprep.subr.bf16.mxu0 0
    %1637 = vmatpush2.bf16.msra.mxu0 0
    %1638 = vmatprep.subr.bf16.mxu0 0
    %1639 = vmatpush2.bf16.msra.mxu0 0
    %1640 = vmatprep.subr.bf16.mxu0 0
    %1641 = vmatpush2.bf16.msra.mxu0 0
    %1642 = vmatprep.mubr.bf16.mxu0 0
    %1643 = vmatmul.mubr.bf16.gmra.mxu0 %v1417
    %v1644 = vpop.f32.mrf.mxu0
    %v1645 = vadd.f32 0.0, %v1644
    %v1646 = vpop.f32.mrf.mxu0
    %v1647 = vadd.f32 0.0, %v1646
    %v1648 = vpop.f32.mrf.mxu0
    %v1649 = vpop.f32.mrf.mxu0
    %1650 = vdwg.mxu0
    %1651 = vmatprep.subr.bf16.mxu0 %v1577
    %1652 = vmatpush1.bf16.msra.mxu0 %v1576
    %1653 = vmatprep.subr.bf16.mxu0 %v1573
    %1654 = vmatpush1.bf16.msra.mxu0 %v1572
    %1655 = vmatprep.subr.bf16.mxu0 %v1569
    %1656 = vmatpush1.bf16.msra.mxu0 %v1568
    %1657 = vmatprep.subr.bf16.mxu0 %v1565
    %1658 = vmatpush1.bf16.msra.mxu0 %v1564
    %1659 = vmatprep.subr.bf16.mxu0 %v1561
    %1660 = vmatpush1.bf16.msra.mxu0 %v1560
    %1661 = vmatprep.subr.bf16.mxu0 %v1557
    %1662 = vmatpush1.bf16.msra.mxu0 %v1556
    %1663 = vmatprep.subr.bf16.mxu0 %v1553
    %1664 = vmatpush1.bf16.msra.mxu0 %v1552
    %1665 = vmatprep.subr.bf16.mxu0 %v1549
    %1666 = vmatpush1.bf16.msra.mxu0 %v1548
    %1667 = vmatprep.subr.bf16.mxu0 0
    %1668 = vmatpush2.bf16.msra.mxu0 0
    %1669 = vmatprep.subr.bf16.mxu0 0
    %1670 = vmatpush2.bf16.msra.mxu0 0
    %1671 = vmatprep.subr.bf16.mxu0 0
    %1672 = vmatpush2.bf16.msra.mxu0 0
    %1673 = vmatprep.subr.bf16.mxu0 0
    %1674 = vmatpush2.bf16.msra.mxu0 0
    %1675 = vmatprep.subr.bf16.mxu0 0
    %1676 = vmatpush2.bf16.msra.mxu0 0
    %1677 = vmatprep.subr.bf16.mxu0 0
    %1678 = vmatpush2.bf16.msra.mxu0 0
    %1679 = vmatprep.subr.bf16.mxu0 0
    %1680 = vmatpush2.bf16.msra.mxu0 0
    %1681 = vmatprep.subr.bf16.mxu0 0
    %1682 = vmatpush2.bf16.msra.mxu0 0
    %1683 = vmatprep.mubr.bf16.mxu0 0
    %1684 = vmatmul.mubr.bf16.gmra.mxu0 %v1417
    %v1685 = vpop.f32.mrf.mxu0
    %v1686 = vadd.f32 0.0, %v1685
    %v1687 = vpop.f32.mrf.mxu0
    %v1688 = vadd.f32 0.0, %v1687
    %v1689 = vpop.f32.mrf.mxu0
    %v1690 = vpop.f32.mrf.mxu0
    %1691 = vdwg.mxu0
    %v1692 = vadd.f32 %v1413, %v1645
    %v1693 = vadd.f32 %v1414, %v1647
    %v1694 = vadd.f32 %v1415, %v1686
    %v1695 = vadd.f32 %v1416, %v1688
    %v1696 = vxor.u32 %v1692, 2147483648
    %v1697 = vmul.f32 %v1696, 1.442695
    %v1698 = vpow.pop %v1697
    %v1699 = vadd.f32 %v1698, 1.0
    %v1700 = vrcp.pop %v1699
    %v1701 = vmul.f32 1.0, %v1700
    %v1702 = vxor.u32 %v1693, 2147483648
    %v1703 = vmul.f32 %v1702, 1.442695
    %v1704 = vpow.pop %v1703
    %v1705 = vadd.f32 %v1704, 1.0
    %v1706 = vrcp.pop %v1705
    %v1707 = vmul.f32 1.0, %v1706
    %v1708 = vtanh.pop %v1694
    %v1709 = vxor.u32 %v1695, 2147483648
    %v1710 = vmul.f32 %v1709, 1.442695
    %v1711 = vpow.pop %v1710
    %v1712 = vadd.f32 %v1711, 1.0
    %v1713 = vrcp.pop %v1712
    %v1714 = vmul.f32 1.0, %v1713
    %v1715 = vld [vmem:[#allocation3] sm:$0xff]
    %v1716 = vmul.f32 %v1707, %v1715
    %v1717 = vmul.f32 %v1701, %v1708
    %v1718 = vadd.f32 %v1716, %v1717
    %v1719 = vtanh.pop %v1718
    %v1720 = vmul.f32 %v1714, %v1719
    %v1721 = vpack.c.bf16 %v1720, %v1720
    %s1722 = sadd.s32 %s53, 4
    %v1723 = vstv %s1722
    %vm1724 = vcmp.lt.s32.totalorder %v1723, %v54
    %v1725 = vsel %vm1724, 1, 0
    %1726 = vset.pattern.permute.xlu0 0
    %1727 = vperm.xlu0 %1726, %v1725
    %v1728 = vpop.permute.xlu0 %1727
    %vm1729 = vcmp.eq.s32.totalorder %v1728, 1
    %v1730 = vsel %vm1729, %v1718, %v1715
    %1731 = vst [vmem:[#allocation3] sm:$0xff] %v1730
    %v1732 = vld [vmem:[#allocation2] sm:$0xf]
    %vm1733 = vmpackc.low %vm1729, %vm1729
    %v1734 = vsel %vm1733, %v1721, %v1732
    %1735 = vst [vmem:[#allocation2] sm:$0xf] %v1734
    %v1736 = vsel %vm1733, %v1721, 0
    %s1737 = scalar_lea.vmem [#allocation9], 16
    %1738 = vst [vmem:[%s1737] sm:$0xf] %v1736
    %s1739 = scalar_lea.vmem [#allocation4], 80
    %v1740 = vld [vmem:[%s1739] sm:$0xff]
    %v1741 = vld [vmem:[%s1739 + $0x8] sm:$0xff]
    %v1742 = vunpack.c.l.bf16 %v1740
    %v1743 = vunpack.c.h.bf16 %v1740
    %v1744 = vunpack.c.l.bf16 %v1741
    %v1745 = vunpack.c.h.bf16 %v1741
    %v1746 = vadd.f32 %v1742, %v60
    %v1747 = vadd.f32 %v1743, %v64
    %v1748 = vadd.f32 %v1744, %v68
    %v1749 = vadd.f32 %v1745, %v72
    %v1750 = vld [vmem:[#allocation2] sm:$0xf]
    %v1751 = vld [vmem:[#allocation7] sm:$0xff]
    %v1752 = vld [vmem:[#allocation7 + $0x8] sm:$0xff]
    %v1753 = vld [vmem:[#allocation7 + $0x10] sm:$0xff]
    %v1754 = vld [vmem:[#allocation7 + $0x18] sm:$0xff]
    %v1755 = vld [vmem:[#allocation7 + $0x20] sm:$0xff]
    %v1756 = vld [vmem:[#allocation7 + $0x28] sm:$0xff]
    %v1757 = vld [vmem:[#allocation7 + $0x30] sm:$0xff]
    %v1758 = vld [vmem:[#allocation7 + $0x38] sm:$0xff]
    %v1759 = vld [vmem:[#allocation7 + $0x40] sm:$0xff]
    %v1760 = vld [vmem:[#allocation7 + $0x48] sm:$0xff]
    %v1761 = vld [vmem:[#allocation7 + $0x50] sm:$0xff]
    %v1762 = vld [vmem:[#allocation7 + $0x58] sm:$0xff]
    %v1763 = vld [vmem:[#allocation7 + $0x60] sm:$0xff]
    %v1764 = vld [vmem:[#allocation7 + $0x68] sm:$0xff]
    %v1765 = vld [vmem:[#allocation7 + $0x70] sm:$0xff]
    %v1766 = vld [vmem:[#allocation7 + $0x78] sm:$0xff]
    %v1767 = vld [vmem:[#allocation7 + $0x80] sm:$0xff]
    %v1768 = vld [vmem:[#allocation7 + $0x88] sm:$0xff]
    %v1769 = vld [vmem:[#allocation7 + $0x90] sm:$0xff]
    %v1770 = vld [vmem:[#allocation7 + $0x98] sm:$0xff]
    %v1771 = vld [vmem:[#allocation7 + $0xa0] sm:$0xff]
    %v1772 = vld [vmem:[#allocation7 + $0xa8] sm:$0xff]
    %v1773 = vld [vmem:[#allocation7 + $0xb0] sm:$0xff]
    %v1774 = vld [vmem:[#allocation7 + $0xb8] sm:$0xff]
    %v1775 = vld [vmem:[#allocation7 + $0xc0] sm:$0xff]
    %v1776 = vld [vmem:[#allocation7 + $0xc8] sm:$0xff]
    %v1777 = vld [vmem:[#allocation7 + $0xd0] sm:$0xff]
    %v1778 = vld [vmem:[#allocation7 + $0xd8] sm:$0xff]
    %v1779 = vld [vmem:[#allocation7 + $0xe0] sm:$0xff]
    %v1780 = vld [vmem:[#allocation7 + $0xe8] sm:$0xff]
    %v1781 = vld [vmem:[#allocation7 + $0xf0] sm:$0xff]
    %v1782 = vld [vmem:[#allocation7 + $0xf8] sm:$0xff]
    %v1815 = vunpack.c.l.b16 %v1751
    %v1816 = vunpack.c.h.b16 %v1751
    %v1817 = vunpack.c.l.b16 %v1752
    %v1818 = vunpack.c.h.b16 %v1752
    %v1819 = vunpack.c.l.b16 %v1753
    %v1820 = vunpack.c.h.b16 %v1753
    %v1821 = vunpack.c.l.b16 %v1754
    %v1822 = vunpack.c.h.b16 %v1754
    %v1823 = vunpack.c.l.b16 %v1755
    %v1824 = vunpack.c.h.b16 %v1755
    %v1825 = vunpack.c.l.b16 %v1756
    %v1826 = vunpack.c.h.b16 %v1756
    %v1827 = vunpack.c.l.b16 %v1757
    %v1828 = vunpack.c.h.b16 %v1757
    %v1829 = vunpack.c.l.b16 %v1758
    %v1830 = vunpack.c.h.b16 %v1758
    %v1831 = vunpack.c.l.b16 %v1759
    %v1832 = vunpack.c.h.b16 %v1759
    %v1833 = vunpack.c.l.b16 %v1760
    %v1834 = vunpack.c.h.b16 %v1760
    %v1835 = vunpack.c.l.b16 %v1761
    %v1836 = vunpack.c.h.b16 %v1761
    %v1837 = vunpack.c.l.b16 %v1762
    %v1838 = vunpack.c.h.b16 %v1762
    %v1839 = vunpack.c.l.b16 %v1763
    %v1840 = vunpack.c.h.b16 %v1763
    %v1841 = vunpack.c.l.b16 %v1764
    %v1842 = vunpack.c.h.b16 %v1764
    %v1843 = vunpack.c.l.b16 %v1765
    %v1844 = vunpack.c.h.b16 %v1765
    %v1845 = vunpack.c.l.b16 %v1766
    %v1846 = vunpack.c.h.b16 %v1766
    %v1847 = vunpack.c.l.b16 %v1767
    %v1848 = vunpack.c.h.b16 %v1767
    %v1849 = vunpack.c.l.b16 %v1768
    %v1850 = vunpack.c.h.b16 %v1768
    %v1851 = vunpack.c.l.b16 %v1769
    %v1852 = vunpack.c.h.b16 %v1769
    %v1853 = vunpack.c.l.b16 %v1770
    %v1854 = vunpack.c.h.b16 %v1770
    %v1855 = vunpack.c.l.b16 %v1771
    %v1856 = vunpack.c.h.b16 %v1771
    %v1857 = vunpack.c.l.b16 %v1772
    %v1858 = vunpack.c.h.b16 %v1772
    %v1859 = vunpack.c.l.b16 %v1773
    %v1860 = vunpack.c.h.b16 %v1773
    %v1861 = vunpack.c.l.b16 %v1774
    %v1862 = vunpack.c.h.b16 %v1774
    %v1863 = vunpack.c.l.b16 %v1775
    %v1864 = vunpack.c.h.b16 %v1775
    %v1865 = vunpack.c.l.b16 %v1776
    %v1866 = vunpack.c.h.b16 %v1776
    %v1867 = vunpack.c.l.b16 %v1777
    %v1868 = vunpack.c.h.b16 %v1777
    %v1869 = vunpack.c.l.b16 %v1778
    %v1870 = vunpack.c.h.b16 %v1778
    %v1871 = vunpack.c.l.b16 %v1779
    %v1872 = vunpack.c.h.b16 %v1779
    %v1873 = vunpack.c.l.b16 %v1780
    %v1874 = vunpack.c.h.b16 %v1780
    %v1875 = vunpack.c.l.b16 %v1781
    %v1876 = vunpack.c.h.b16 %v1781
    %v1877 = vunpack.c.l.b16 %v1782
    %v1878 = vunpack.c.h.b16 %v1782
    %v1879 = vpack.c.b16 %v1819, %v1815
    %v1880 = vpack.c.b16 %v1820, %v1816
    %v1881 = vpack.c.b16 %v1821, %v1817
    %v1882 = vpack.c.b16 %v1822, %v1818
    %v1883 = vpack.c.b16 %v1827, %v1823
    %v1884 = vpack.c.b16 %v1828, %v1824
    %v1885 = vpack.c.b16 %v1829, %v1825
    %v1886 = vpack.c.b16 %v1830, %v1826
    %v1887 = vpack.c.b16 %v1835, %v1831
    %v1888 = vpack.c.b16 %v1836, %v1832
    %v1889 = vpack.c.b16 %v1837, %v1833
    %v1890 = vpack.c.b16 %v1838, %v1834
    %v1891 = vpack.c.b16 %v1843, %v1839
    %v1892 = vpack.c.b16 %v1844, %v1840
    %v1893 = vpack.c.b16 %v1845, %v1841
    %v1894 = vpack.c.b16 %v1846, %v1842
    %v1895 = vpack.c.b16 %v1851, %v1847
    %v1896 = vpack.c.b16 %v1852, %v1848
    %v1897 = vpack.c.b16 %v1853, %v1849
    %v1898 = vpack.c.b16 %v1854, %v1850
    %v1899 = vpack.c.b16 %v1859, %v1855
    %v1900 = vpack.c.b16 %v1860, %v1856
    %v1901 = vpack.c.b16 %v1861, %v1857
    %v1902 = vpack.c.b16 %v1862, %v1858
    %v1903 = vpack.c.b16 %v1867, %v1863
    %v1904 = vpack.c.b16 %v1868, %v1864
    %v1905 = vpack.c.b16 %v1869, %v1865
    %v1906 = vpack.c.b16 %v1870, %v1866
    %v1907 = vpack.c.b16 %v1875, %v1871
    %v1908 = vpack.c.b16 %v1876, %v1872
    %v1909 = vpack.c.b16 %v1877, %v1873
    %v1910 = vpack.c.b16 %v1878, %v1874
    %1943 = vmatprep.subr.bf16.mxu0 %v1908
    %1944 = vmatpush1.bf16.msra.mxu0 %v1907
    %1945 = vmatprep.subr.bf16.mxu0 %v1904
    %1946 = vmatpush1.bf16.msra.mxu0 %v1903
    %1947 = vmatprep.subr.bf16.mxu0 %v1900
    %1948 = vmatpush1.bf16.msra.mxu0 %v1899
    %1949 = vmatprep.subr.bf16.mxu0 %v1896
    %1950 = vmatpush1.bf16.msra.mxu0 %v1895
    %1951 = vmatprep.subr.bf16.mxu0 %v1892
    %1952 = vmatpush1.bf16.msra.mxu0 %v1891
    %1953 = vmatprep.subr.bf16.mxu0 %v1888
    %1954 = vmatpush1.bf16.msra.mxu0 %v1887
    %1955 = vmatprep.subr.bf16.mxu0 %v1884
    %1956 = vmatpush1.bf16.msra.mxu0 %v1883
    %1957 = vmatprep.subr.bf16.mxu0 %v1880
    %1958 = vmatpush1.bf16.msra.mxu0 %v1879
    %1959 = vmatprep.subr.bf16.mxu0 0
    %1960 = vmatpush2.bf16.msra.mxu0 0
    %1961 = vmatprep.subr.bf16.mxu0 0
    %1962 = vmatpush2.bf16.msra.mxu0 0
    %1963 = vmatprep.subr.bf16.mxu0 0
    %1964 = vmatpush2.bf16.msra.mxu0 0
    %1965 = vmatprep.subr.bf16.mxu0 0
    %1966 = vmatpush2.bf16.msra.mxu0 0
    %1967 = vmatprep.subr.bf16.mxu0 0
    %1968 = vmatpush2.bf16.msra.mxu0 0
    %1969 = vmatprep.subr.bf16.mxu0 0
    %1970 = vmatpush2.bf16.msra.mxu0 0
    %1971 = vmatprep.subr.bf16.mxu0 0
    %1972 = vmatpush2.bf16.msra.mxu0 0
    %1973 = vmatprep.subr.bf16.mxu0 0
    %1974 = vmatpush2.bf16.msra.mxu0 0
    %1975 = vmatprep.mubr.bf16.mxu0 0
    %1976 = vmatmul.mubr.bf16.gmra.mxu0 %v1750
    %v1977 = vpop.f32.mrf.mxu0
    %v1978 = vadd.f32 0.0, %v1977
    %v1979 = vpop.f32.mrf.mxu0
    %v1980 = vadd.f32 0.0, %v1979
    %v1981 = vpop.f32.mrf.mxu0
    %v1982 = vpop.f32.mrf.mxu0
    %1983 = vdwg.mxu0
    %1984 = vmatprep.subr.bf16.mxu0 %v1910
    %1985 = vmatpush1.bf16.msra.mxu0 %v1909
    %1986 = vmatprep.subr.bf16.mxu0 %v1906
    %1987 = vmatpush1.bf16.msra.mxu0 %v1905
    %1988 = vmatprep.subr.bf16.mxu0 %v1902
    %1989 = vmatpush1.bf16.msra.mxu0 %v1901
    %1990 = vmatprep.subr.bf16.mxu0 %v1898
    %1991 = vmatpush1.bf16.msra.mxu0 %v1897
    %1992 = vmatprep.subr.bf16.mxu0 %v1894
    %1993 = vmatpush1.bf16.msra.mxu0 %v1893
    %1994 = vmatprep.subr.bf16.mxu0 %v1890
    %1995 = vmatpush1.bf16.msra.mxu0 %v1889
    %1996 = vmatprep.subr.bf16.mxu0 %v1886
    %1997 = vmatpush1.bf16.msra.mxu0 %v1885
    %1998 = vmatprep.subr.bf16.mxu0 %v1882
    %1999 = vmatpush1.bf16.msra.mxu0 %v1881
    %2000 = vmatprep.subr.bf16.mxu0 0
    %2001 = vmatpush2.bf16.msra.mxu0 0
    %2002 = vmatprep.subr.bf16.mxu0 0
    %2003 = vmatpush2.bf16.msra.mxu0 0
    %2004 = vmatprep.subr.bf16.mxu0 0
    %2005 = vmatpush2.bf16.msra.mxu0 0
    %2006 = vmatprep.subr.bf16.mxu0 0
    %2007 = vmatpush2.bf16.msra.mxu0 0
    %2008 = vmatprep.subr.bf16.mxu0 0
    %2009 = vmatpush2.bf16.msra.mxu0 0
    %2010 = vmatprep.subr.bf16.mxu0 0
    %2011 = vmatpush2.bf16.msra.mxu0 0
    %2012 = vmatprep.subr.bf16.mxu0 0
    %2013 = vmatpush2.bf16.msra.mxu0 0
    %2014 = vmatprep.subr.bf16.mxu0 0
    %2015 = vmatpush2.bf16.msra.mxu0 0
    %2016 = vmatprep.mubr.bf16.mxu0 0
    %2017 = vmatmul.mubr.bf16.gmra.mxu0 %v1750
    %v2018 = vpop.f32.mrf.mxu0
    %v2019 = vadd.f32 0.0, %v2018
    %v2020 = vpop.f32.mrf.mxu0
    %v2021 = vadd.f32 0.0, %v2020
    %v2022 = vpop.f32.mrf.mxu0
    %v2023 = vpop.f32.mrf.mxu0
    %2024 = vdwg.mxu0
    %v2025 = vadd.f32 %v1746, %v1978
    %v2026 = vadd.f32 %v1747, %v1980
    %v2027 = vadd.f32 %v1748, %v2019
    %v2028 = vadd.f32 %v1749, %v2021
    %v2029 = vxor.u32 %v2025, 2147483648
    %v2030 = vmul.f32 %v2029, 1.442695
    %v2031 = vpow.pop %v2030
    %v2032 = vadd.f32 %v2031, 1.0
    %v2033 = vrcp.pop %v2032
    %v2034 = vmul.f32 1.0, %v2033
    %v2035 = vxor.u32 %v2026, 2147483648
    %v2036 = vmul.f32 %v2035, 1.442695
    %v2037 = vpow.pop %v2036
    %v2038 = vadd.f32 %v2037, 1.0
    %v2039 = vrcp.pop %v2038
    %v2040 = vmul.f32 1.0, %v2039
    %v2041 = vtanh.pop %v2027
    %v2042 = vxor.u32 %v2028, 2147483648
    %v2043 = vmul.f32 %v2042, 1.442695
    %v2044 = vpow.pop %v2043
    %v2045 = vadd.f32 %v2044, 1.0
    %v2046 = vrcp.pop %v2045
    %v2047 = vmul.f32 1.0, %v2046
    %v2048 = vld [vmem:[#allocation3] sm:$0xff]
    %v2049 = vmul.f32 %v2040, %v2048
    %v2050 = vmul.f32 %v2034, %v2041
    %v2051 = vadd.f32 %v2049, %v2050
    %v2052 = vtanh.pop %v2051
    %v2053 = vmul.f32 %v2047, %v2052
    %v2054 = vpack.c.bf16 %v2053, %v2053
    %s2055 = sadd.s32 %s53, 5
    %v2056 = vstv %s2055
    %vm2057 = vcmp.lt.s32.totalorder %v2056, %v54
    %v2058 = vsel %vm2057, 1, 0
    %2059 = vset.pattern.permute.xlu0 0
    %2060 = vperm.xlu0 %2059, %v2058
    %v2061 = vpop.permute.xlu0 %2060
    %vm2062 = vcmp.eq.s32.totalorder %v2061, 1
    %v2063 = vsel %vm2062, %v2051, %v2048
    %2064 = vst [vmem:[#allocation3] sm:$0xff] %v2063
    %v2065 = vld [vmem:[#allocation2] sm:$0xf]
    %vm2066 = vmpackc.low %vm2062, %vm2062
    %v2067 = vsel %vm2066, %v2054, %v2065
    %2068 = vst [vmem:[#allocation2] sm:$0xf] %v2067
    %v2069 = vsel %vm2066, %v2054, 0
    %s2070 = scalar_lea.vmem [#allocation9], 20
    %2071 = vst [vmem:[%s2070] sm:$0xf] %v2069
    %s2072 = scalar_lea.vmem [#allocation4], 96
    %v2073 = vld [vmem:[%s2072] sm:$0xff]
    %v2074 = vld [vmem:[%s2072 + $0x8] sm:$0xff]
    %v2075 = vunpack.c.l.bf16 %v2073
    %v2076 = vunpack.c.h.bf16 %v2073
    %v2077 = vunpack.c.l.bf16 %v2074
    %v2078 = vunpack.c.h.bf16 %v2074
    %v2079 = vadd.f32 %v2075, %v60
    %v2080 = vadd.f32 %v2076, %v64
    %v2081 = vadd.f32 %v2077, %v68
    %v2082 = vadd.f32 %v2078, %v72
    %v2083 = vld [vmem:[#allocation2] sm:$0xf]
    %v2084 = vld [vmem:[#allocation7] sm:$0xff]
    %v2085 = vld [vmem:[#allocation7 + $0x8] sm:$0xff]
    %v2086 = vld [vmem:[#allocation7 + $0x10] sm:$0xff]
    %v2087 = vld [vmem:[#allocation7 + $0x18] sm:$0xff]
    %v2088 = vld [vmem:[#allocation7 + $0x20] sm:$0xff]
    %v2089 = vld [vmem:[#allocation7 + $0x28] sm:$0xff]
    %v2090 = vld [vmem:[#allocation7 + $0x30] sm:$0xff]
    %v2091 = vld [vmem:[#allocation7 + $0x38] sm:$0xff]
    %v2092 = vld [vmem:[#allocation7 + $0x40] sm:$0xff]
    %v2093 = vld [vmem:[#allocation7 + $0x48] sm:$0xff]
    %v2094 = vld [vmem:[#allocation7 + $0x50] sm:$0xff]
    %v2095 = vld [vmem:[#allocation7 + $0x58] sm:$0xff]
    %v2096 = vld [vmem:[#allocation7 + $0x60] sm:$0xff]
    %v2097 = vld [vmem:[#allocation7 + $0x68] sm:$0xff]
    %v2098 = vld [vmem:[#allocation7 + $0x70] sm:$0xff]
    %v2099 = vld [vmem:[#allocation7 + $0x78] sm:$0xff]
    %v2100 = vld [vmem:[#allocation7 + $0x80] sm:$0xff]
    %v2101 = vld [vmem:[#allocation7 + $0x88] sm:$0xff]
    %v2102 = vld [vmem:[#allocation7 + $0x90] sm:$0xff]
    %v2103 = vld [vmem:[#allocation7 + $0x98] sm:$0xff]
    %v2104 = vld [vmem:[#allocation7 + $0xa0] sm:$0xff]
    %v2105 = vld [vmem:[#allocation7 + $0xa8] sm:$0xff]
    %v2106 = vld [vmem:[#allocation7 + $0xb0] sm:$0xff]
    %v2107 = vld [vmem:[#allocation7 + $0xb8] sm:$0xff]
    %v2108 = vld [vmem:[#allocation7 + $0xc0] sm:$0xff]
    %v2109 = vld [vmem:[#allocation7 + $0xc8] sm:$0xff]
    %v2110 = vld [vmem:[#allocation7 + $0xd0] sm:$0xff]
    %v2111 = vld [vmem:[#allocation7 + $0xd8] sm:$0xff]
    %v2112 = vld [vmem:[#allocation7 + $0xe0] sm:$0xff]
    %v2113 = vld [vmem:[#allocation7 + $0xe8] sm:$0xff]
    %v2114 = vld [vmem:[#allocation7 + $0xf0] sm:$0xff]
    %v2115 = vld [vmem:[#allocation7 + $0xf8] sm:$0xff]
    %v2148 = vunpack.c.l.b16 %v2084
    %v2149 = vunpack.c.h.b16 %v2084
    %v2150 = vunpack.c.l.b16 %v2085
    %v2151 = vunpack.c.h.b16 %v2085
    %v2152 = vunpack.c.l.b16 %v2086
    %v2153 = vunpack.c.h.b16 %v2086
    %v2154 = vunpack.c.l.b16 %v2087
    %v2155 = vunpack.c.h.b16 %v2087
    %v2156 = vunpack.c.l.b16 %v2088
    %v2157 = vunpack.c.h.b16 %v2088
    %v2158 = vunpack.c.l.b16 %v2089
    %v2159 = vunpack.c.h.b16 %v2089
    %v2160 = vunpack.c.l.b16 %v2090
    %v2161 = vunpack.c.h.b16 %v2090
    %v2162 = vunpack.c.l.b16 %v2091
    %v2163 = vunpack.c.h.b16 %v2091
    %v2164 = vunpack.c.l.b16 %v2092
    %v2165 = vunpack.c.h.b16 %v2092
    %v2166 = vunpack.c.l.b16 %v2093
    %v2167 = vunpack.c.h.b16 %v2093
    %v2168 = vunpack.c.l.b16 %v2094
    %v2169 = vunpack.c.h.b16 %v2094
    %v2170 = vunpack.c.l.b16 %v2095
    %v2171 = vunpack.c.h.b16 %v2095
    %v2172 = vunpack.c.l.b16 %v2096
    %v2173 = vunpack.c.h.b16 %v2096
    %v2174 = vunpack.c.l.b16 %v2097
    %v2175 = vunpack.c.h.b16 %v2097
    %v2176 = vunpack.c.l.b16 %v2098
    %v2177 = vunpack.c.h.b16 %v2098
    %v2178 = vunpack.c.l.b16 %v2099
    %v2179 = vunpack.c.h.b16 %v2099
    %v2180 = vunpack.c.l.b16 %v2100
    %v2181 = vunpack.c.h.b16 %v2100
    %v2182 = vunpack.c.l.b16 %v2101
    %v2183 = vunpack.c.h.b16 %v2101
    %v2184 = vunpack.c.l.b16 %v2102
    %v2185 = vunpack.c.h.b16 %v2102
    %v2186 = vunpack.c.l.b16 %v2103
    %v2187 = vunpack.c.h.b16 %v2103
    %v2188 = vunpack.c.l.b16 %v2104
    %v2189 = vunpack.c.h.b16 %v2104
    %v2190 = vunpack.c.l.b16 %v2105
    %v2191 = vunpack.c.h.b16 %v2105
    %v2192 = vunpack.c.l.b16 %v2106
    %v2193 = vunpack.c.h.b16 %v2106
    %v2194 = vunpack.c.l.b16 %v2107
    %v2195 = vunpack.c.h.b16 %v2107
    %v2196 = vunpack.c.l.b16 %v2108
    %v2197 = vunpack.c.h.b16 %v2108
    %v2198 = vunpack.c.l.b16 %v2109
    %v2199 = vunpack.c.h.b16 %v2109
    %v2200 = vunpack.c.l.b16 %v2110
    %v2201 = vunpack.c.h.b16 %v2110
    %v2202 = vunpack.c.l.b16 %v2111
    %v2203 = vunpack.c.h.b16 %v2111
    %v2204 = vunpack.c.l.b16 %v2112
    %v2205 = vunpack.c.h.b16 %v2112
    %v2206 = vunpack.c.l.b16 %v2113
    %v2207 = vunpack.c.h.b16 %v2113
    %v2208 = vunpack.c.l.b16 %v2114
    %v2209 = vunpack.c.h.b16 %v2114
    %v2210 = vunpack.c.l.b16 %v2115
    %v2211 = vunpack.c.h.b16 %v2115
    %v2212 = vpack.c.b16 %v2152, %v2148
    %v2213 = vpack.c.b16 %v2153, %v2149
    %v2214 = vpack.c.b16 %v2154, %v2150
    %v2215 = vpack.c.b16 %v2155, %v2151
    %v2216 = vpack.c.b16 %v2160, %v2156
    %v2217 = vpack.c.b16 %v2161, %v2157
    %v2218 = vpack.c.b16 %v2162, %v2158
    %v2219 = vpack.c.b16 %v2163, %v2159
    %v2220 = vpack.c.b16 %v2168, %v2164
    %v2221 = vpack.c.b16 %v2169, %v2165
    %v2222 = vpack.c.b16 %v2170, %v2166
    %v2223 = vpack.c.b16 %v2171, %v2167
    %v2224 = vpack.c.b16 %v2176, %v2172
    %v2225 = vpack.c.b16 %v2177, %v2173
    %v2226 = vpack.c.b16 %v2178, %v2174
    %v2227 = vpack.c.b16 %v2179, %v2175
    %v2228 = vpack.c.b16 %v2184, %v2180
    %v2229 = vpack.c.b16 %v2185, %v2181
    %v2230 = vpack.c.b16 %v2186, %v2182
    %v2231 = vpack.c.b16 %v2187, %v2183
    %v2232 = vpack.c.b16 %v2192, %v2188
    %v2233 = vpack.c.b16 %v2193, %v2189
    %v2234 = vpack.c.b16 %v2194, %v2190
    %v2235 = vpack.c.b16 %v2195, %v2191
    %v2236 = vpack.c.b16 %v2200, %v2196
    %v2237 = vpack.c.b16 %v2201, %v2197
    %v2238 = vpack.c.b16 %v2202, %v2198
    %v2239 = vpack.c.b16 %v2203, %v2199
    %v2240 = vpack.c.b16 %v2208, %v2204
    %v2241 = vpack.c.b16 %v2209, %v2205
    %v2242 = vpack.c.b16 %v2210, %v2206
    %v2243 = vpack.c.b16 %v2211, %v2207
    %2276 = vmatprep.subr.bf16.mxu0 %v2241
    %2277 = vmatpush1.bf16.msra.mxu0 %v2240
    %2278 = vmatprep.subr.bf16.mxu0 %v2237
    %2279 = vmatpush1.bf16.msra.mxu0 %v2236
    %2280 = vmatprep.subr.bf16.mxu0 %v2233
    %2281 = vmatpush1.bf16.msra.mxu0 %v2232
    %2282 = vmatprep.subr.bf16.mxu0 %v2229
    %2283 = vmatpush1.bf16.msra.mxu0 %v2228
    %2284 = vmatprep.subr.bf16.mxu0 %v2225
    %2285 = vmatpush1.bf16.msra.mxu0 %v2224
    %2286 = vmatprep.subr.bf16.mxu0 %v2221
    %2287 = vmatpush1.bf16.msra.mxu0 %v2220
    %2288 = vmatprep.subr.bf16.mxu0 %v2217
    %2289 = vmatpush1.bf16.msra.mxu0 %v2216
    %2290 = vmatprep.subr.bf16.mxu0 %v2213
    %2291 = vmatpush1.bf16.msra.mxu0 %v2212
    %2292 = vmatprep.subr.bf16.mxu0 0
    %2293 = vmatpush2.bf16.msra.mxu0 0
    %2294 = vmatprep.subr.bf16.mxu0 0
    %2295 = vmatpush2.bf16.msra.mxu0 0
    %2296 = vmatprep.subr.bf16.mxu0 0
    %2297 = vmatpush2.bf16.msra.mxu0 0
    %2298 = vmatprep.subr.bf16.mxu0 0
    %2299 = vmatpush2.bf16.msra.mxu0 0
    %2300 = vmatprep.subr.bf16.mxu0 0
    %2301 = vmatpush2.bf16.msra.mxu0 0
    %2302 = vmatprep.subr.bf16.mxu0 0
    %2303 = vmatpush2.bf16.msra.mxu0 0
    %2304 = vmatprep.subr.bf16.mxu0 0
    %2305 = vmatpush2.bf16.msra.mxu0 0
    %2306 = vmatprep.subr.bf16.mxu0 0
    %2307 = vmatpush2.bf16.msra.mxu0 0
    %2308 = vmatprep.mubr.bf16.mxu0 0
    %2309 = vmatmul.mubr.bf16.gmra.mxu0 %v2083
    %v2310 = vpop.f32.mrf.mxu0
    %v2311 = vadd.f32 0.0, %v2310
    %v2312 = vpop.f32.mrf.mxu0
    %v2313 = vadd.f32 0.0, %v2312
    %v2314 = vpop.f32.mrf.mxu0
    %v2315 = vpop.f32.mrf.mxu0
    %2316 = vdwg.mxu0
    %2317 = vmatprep.subr.bf16.mxu0 %v2243
    %2318 = vmatpush1.bf16.msra.mxu0 %v2242
    %2319 = vmatprep.subr.bf16.mxu0 %v2239
    %2320 = vmatpush1.bf16.msra.mxu0 %v2238
    %2321 = vmatprep.subr.bf16.mxu0 %v2235
    %2322 = vmatpush1.bf16.msra.mxu0 %v2234
    %2323 = vmatprep.subr.bf16.mxu0 %v2231
    %2324 = vmatpush1.bf16.msra.mxu0 %v2230
    %2325 = vmatprep.subr.bf16.mxu0 %v2227
    %2326 = vmatpush1.bf16.msra.mxu0 %v2226
    %2327 = vmatprep.subr.bf16.mxu0 %v2223
    %2328 = vmatpush1.bf16.msra.mxu0 %v2222
    %2329 = vmatprep.subr.bf16.mxu0 %v2219
    %2330 = vmatpush1.bf16.msra.mxu0 %v2218
    %2331 = vmatprep.subr.bf16.mxu0 %v2215
    %2332 = vmatpush1.bf16.msra.mxu0 %v2214
    %2333 = vmatprep.subr.bf16.mxu0 0
    %2334 = vmatpush2.bf16.msra.mxu0 0
    %2335 = vmatprep.subr.bf16.mxu0 0
    %2336 = vmatpush2.bf16.msra.mxu0 0
    %2337 = vmatprep.subr.bf16.mxu0 0
    %2338 = vmatpush2.bf16.msra.mxu0 0
    %2339 = vmatprep.subr.bf16.mxu0 0
    %2340 = vmatpush2.bf16.msra.mxu0 0
    %2341 = vmatprep.subr.bf16.mxu0 0
    %2342 = vmatpush2.bf16.msra.mxu0 0
    %2343 = vmatprep.subr.bf16.mxu0 0
    %2344 = vmatpush2.bf16.msra.mxu0 0
    %2345 = vmatprep.subr.bf16.mxu0 0
    %2346 = vmatpush2.bf16.msra.mxu0 0
    %2347 = vmatprep.subr.bf16.mxu0 0
    %2348 = vmatpush2.bf16.msra.mxu0 0
    %2349 = vmatprep.mubr.bf16.mxu0 0
    %2350 = vmatmul.mubr.bf16.gmra.mxu0 %v2083
    %v2351 = vpop.f32.mrf.mxu0
    %v2352 = vadd.f32 0.0, %v2351
    %v2353 = vpop.f32.mrf.mxu0
    %v2354 = vadd.f32 0.0, %v2353
    %v2355 = vpop.f32.mrf.mxu0
    %v2356 = vpop.f32.mrf.mxu0
    %2357 = vdwg.mxu0
    %v2358 = vadd.f32 %v2079, %v2311
    %v2359 = vadd.f32 %v2080, %v2313
    %v2360 = vadd.f32 %v2081, %v2352
    %v2361 = vadd.f32 %v2082, %v2354
    %v2362 = vxor.u32 %v2358, 2147483648
    %v2363 = vmul.f32 %v2362, 1.442695
    %v2364 = vpow.pop %v2363
    %v2365 = vadd.f32 %v2364, 1.0
    %v2366 = vrcp.pop %v2365
    %v2367 = vmul.f32 1.0, %v2366
    %v2368 = vxor.u32 %v2359, 2147483648
    %v2369 = vmul.f32 %v2368, 1.442695
    %v2370 = vpow.pop %v2369
    %v2371 = vadd.f32 %v2370, 1.0
    %v2372 = vrcp.pop %v2371
    %v2373 = vmul.f32 1.0, %v2372
    %v2374 = vtanh.pop %v2360
    %v2375 = vxor.u32 %v2361, 2147483648
    %v2376 = vmul.f32 %v2375, 1.442695
    %v2377 = vpow.pop %v2376
    %v2378 = vadd.f32 %v2377, 1.0
    %v2379 = vrcp.pop %v2378
    %v2380 = vmul.f32 1.0, %v2379
    %v2381 = vld [vmem:[#allocation3] sm:$0xff]
    %v2382 = vmul.f32 %v2373, %v2381
    %v2383 = vmul.f32 %v2367, %v2374
    %v2384 = vadd.f32 %v2382, %v2383
    %v2385 = vtanh.pop %v2384
    %v2386 = vmul.f32 %v2380, %v2385
    %v2387 = vpack.c.bf16 %v2386, %v2386
    %s2388 = sadd.s32 %s53, 6
    %v2389 = vstv %s2388
    %vm2390 = vcmp.lt.s32.totalorder %v2389, %v54
    %v2391 = vsel %vm2390, 1, 0
    %2392 = vset.pattern.permute.xlu0 0
    %2393 = vperm.xlu0 %2392, %v2391
    %v2394 = vpop.permute.xlu0 %2393
    %vm2395 = vcmp.eq.s32.totalorder %v2394, 1
    %v2396 = vsel %vm2395, %v2384, %v2381
    %2397 = vst [vmem:[#allocation3] sm:$0xff] %v2396
    %v2398 = vld [vmem:[#allocation2] sm:$0xf]
    %vm2399 = vmpackc.low %vm2395, %vm2395
    %v2400 = vsel %vm2399, %v2387, %v2398
    %2401 = vst [vmem:[#allocation2] sm:$0xf] %v2400
    %v2402 = vsel %vm2399, %v2387, 0
    %s2403 = scalar_lea.vmem [#allocation9], 24
    %2404 = vst [vmem:[%s2403] sm:$0xf] %v2402
    %s2405 = scalar_lea.vmem [#allocation4], 112
    %v2406 = vld [vmem:[%s2405] sm:$0xff]
    %v2407 = vld [vmem:[%s2405 + $0x8] sm:$0xff]
    %v2408 = vunpack.c.l.bf16 %v2406
    %v2409 = vunpack.c.h.bf16 %v2406
    %v2410 = vunpack.c.l.bf16 %v2407
    %v2411 = vunpack.c.h.bf16 %v2407
    %v2412 = vadd.f32 %v2408, %v60
    %v2413 = vadd.f32 %v2409, %v64
    %v2414 = vadd.f32 %v2410, %v68
    %v2415 = vadd.f32 %v2411, %v72
    %v2416 = vld [vmem:[#allocation2] sm:$0xf]
    %v2417 = vld [vmem:[#allocation7] sm:$0xff]
    %v2418 = vld [vmem:[#allocation7 + $0x8] sm:$0xff]
    %v2419 = vld [vmem:[#allocation7 + $0x10] sm:$0xff]
    %v2420 = vld [vmem:[#allocation7 + $0x18] sm:$0xff]
    %v2421 = vld [vmem:[#allocation7 + $0x20] sm:$0xff]
    %v2422 = vld [vmem:[#allocation7 + $0x28] sm:$0xff]
    %v2423 = vld [vmem:[#allocation7 + $0x30] sm:$0xff]
    %v2424 = vld [vmem:[#allocation7 + $0x38] sm:$0xff]
    %v2425 = vld [vmem:[#allocation7 + $0x40] sm:$0xff]
    %v2426 = vld [vmem:[#allocation7 + $0x48] sm:$0xff]
    %v2427 = vld [vmem:[#allocation7 + $0x50] sm:$0xff]
    %v2428 = vld [vmem:[#allocation7 + $0x58] sm:$0xff]
    %v2429 = vld [vmem:[#allocation7 + $0x60] sm:$0xff]
    %v2430 = vld [vmem:[#allocation7 + $0x68] sm:$0xff]
    %v2431 = vld [vmem:[#allocation7 + $0x70] sm:$0xff]
    %v2432 = vld [vmem:[#allocation7 + $0x78] sm:$0xff]
    %v2433 = vld [vmem:[#allocation7 + $0x80] sm:$0xff]
    %v2434 = vld [vmem:[#allocation7 + $0x88] sm:$0xff]
    %v2435 = vld [vmem:[#allocation7 + $0x90] sm:$0xff]
    %v2436 = vld [vmem:[#allocation7 + $0x98] sm:$0xff]
    %v2437 = vld [vmem:[#allocation7 + $0xa0] sm:$0xff]
    %v2438 = vld [vmem:[#allocation7 + $0xa8] sm:$0xff]
    %v2439 = vld [vmem:[#allocation7 + $0xb0] sm:$0xff]
    %v2440 = vld [vmem:[#allocation7 + $0xb8] sm:$0xff]
    %v2441 = vld [vmem:[#allocation7 + $0xc0] sm:$0xff]
    %v2442 = vld [vmem:[#allocation7 + $0xc8] sm:$0xff]
    %v2443 = vld [vmem:[#allocation7 + $0xd0] sm:$0xff]
    %v2444 = vld [vmem:[#allocation7 + $0xd8] sm:$0xff]
    %v2445 = vld [vmem:[#allocation7 + $0xe0] sm:$0xff]
    %v2446 = vld [vmem:[#allocation7 + $0xe8] sm:$0xff]
    %v2447 = vld [vmem:[#allocation7 + $0xf0] sm:$0xff]
    %v2448 = vld [vmem:[#allocation7 + $0xf8] sm:$0xff]
    %v2481 = vunpack.c.l.b16 %v2417
    %v2482 = vunpack.c.h.b16 %v2417
    %v2483 = vunpack.c.l.b16 %v2418
    %v2484 = vunpack.c.h.b16 %v2418
    %v2485 = vunpack.c.l.b16 %v2419
    %v2486 = vunpack.c.h.b16 %v2419
    %v2487 = vunpack.c.l.b16 %v2420
    %v2488 = vunpack.c.h.b16 %v2420
    %v2489 = vunpack.c.l.b16 %v2421
    %v2490 = vunpack.c.h.b16 %v2421
    %v2491 = vunpack.c.l.b16 %v2422
    %v2492 = vunpack.c.h.b16 %v2422
    %v2493 = vunpack.c.l.b16 %v2423
    %v2494 = vunpack.c.h.b16 %v2423
    %v2495 = vunpack.c.l.b16 %v2424
    %v2496 = vunpack.c.h.b16 %v2424
    %v2497 = vunpack.c.l.b16 %v2425
    %v2498 = vunpack.c.h.b16 %v2425
    %v2499 = vunpack.c.l.b16 %v2426
    %v2500 = vunpack.c.h.b16 %v2426
    %v2501 = vunpack.c.l.b16 %v2427
    %v2502 = vunpack.c.h.b16 %v2427
    %v2503 = vunpack.c.l.b16 %v2428
    %v2504 = vunpack.c.h.b16 %v2428
    %v2505 = vunpack.c.l.b16 %v2429
    %v2506 = vunpack.c.h.b16 %v2429
    %v2507 = vunpack.c.l.b16 %v2430
    %v2508 = vunpack.c.h.b16 %v2430
    %v2509 = vunpack.c.l.b16 %v2431
    %v2510 = vunpack.c.h.b16 %v2431
    %v2511 = vunpack.c.l.b16 %v2432
    %v2512 = vunpack.c.h.b16 %v2432
    %v2513 = vunpack.c.l.b16 %v2433
    %v2514 = vunpack.c.h.b16 %v2433
    %v2515 = vunpack.c.l.b16 %v2434
    %v2516 = vunpack.c.h.b16 %v2434
    %v2517 = vunpack.c.l.b16 %v2435
    %v2518 = vunpack.c.h.b16 %v2435
    %v2519 = vunpack.c.l.b16 %v2436
    %v2520 = vunpack.c.h.b16 %v2436
    %v2521 = vunpack.c.l.b16 %v2437
    %v2522 = vunpack.c.h.b16 %v2437
    %v2523 = vunpack.c.l.b16 %v2438
    %v2524 = vunpack.c.h.b16 %v2438
    %v2525 = vunpack.c.l.b16 %v2439
    %v2526 = vunpack.c.h.b16 %v2439
    %v2527 = vunpack.c.l.b16 %v2440
    %v2528 = vunpack.c.h.b16 %v2440
    %v2529 = vunpack.c.l.b16 %v2441
    %v2530 = vunpack.c.h.b16 %v2441
    %v2531 = vunpack.c.l.b16 %v2442
    %v2532 = vunpack.c.h.b16 %v2442
    %v2533 = vunpack.c.l.b16 %v2443
    %v2534 = vunpack.c.h.b16 %v2443
    %v2535 = vunpack.c.l.b16 %v2444
    %v2536 = vunpack.c.h.b16 %v2444
    %v2537 = vunpack.c.l.b16 %v2445
    %v2538 = vunpack.c.h.b16 %v2445
    %v2539 = vunpack.c.l.b16 %v2446
    %v2540 = vunpack.c.h.b16 %v2446
    %v2541 = vunpack.c.l.b16 %v2447
    %v2542 = vunpack.c.h.b16 %v2447
    %v2543 = vunpack.c.l.b16 %v2448
    %v2544 = vunpack.c.h.b16 %v2448
    %v2545 = vpack.c.b16 %v2485, %v2481
    %v2546 = vpack.c.b16 %v2486, %v2482
    %v2547 = vpack.c.b16 %v2487, %v2483
    %v2548 = vpack.c.b16 %v2488, %v2484
    %v2549 = vpack.c.b16 %v2493, %v2489
    %v2550 = vpack.c.b16 %v2494, %v2490
    %v2551 = vpack.c.b16 %v2495, %v2491
    %v2552 = vpack.c.b16 %v2496, %v2492
    %v2553 = vpack.c.b16 %v2501, %v2497
    %v2554 = vpack.c.b16 %v2502, %v2498
    %v2555 = vpack.c.b16 %v2503, %v2499
    %v2556 = vpack.c.b16 %v2504, %v2500
    %v2557 = vpack.c.b16 %v2509, %v2505
    %v2558 = vpack.c.b16 %v2510, %v2506
    %v2559 = vpack.c.b16 %v2511, %v2507
    %v2560 = vpack.c.b16 %v2512, %v2508
    %v2561 = vpack.c.b16 %v2517, %v2513
    %v2562 = vpack.c.b16 %v2518, %v2514
    %v2563 = vpack.c.b16 %v2519, %v2515
    %v2564 = vpack.c.b16 %v2520, %v2516
    %v2565 = vpack.c.b16 %v2525, %v2521
    %v2566 = vpack.c.b16 %v2526, %v2522
    %v2567 = vpack.c.b16 %v2527, %v2523
    %v2568 = vpack.c.b16 %v2528, %v2524
    %v2569 = vpack.c.b16 %v2533, %v2529
    %v2570 = vpack.c.b16 %v2534, %v2530
    %v2571 = vpack.c.b16 %v2535, %v2531
    %v2572 = vpack.c.b16 %v2536, %v2532
    %v2573 = vpack.c.b16 %v2541, %v2537
    %v2574 = vpack.c.b16 %v2542, %v2538
    %v2575 = vpack.c.b16 %v2543, %v2539
    %v2576 = vpack.c.b16 %v2544, %v2540
    %2609 = vmatprep.subr.bf16.mxu0 %v2574
    %2610 = vmatpush1.bf16.msra.mxu0 %v2573
    %2611 = vmatprep.subr.bf16.mxu0 %v2570
    %2612 = vmatpush1.bf16.msra.mxu0 %v2569
    %2613 = vmatprep.subr.bf16.mxu0 %v2566
    %2614 = vmatpush1.bf16.msra.mxu0 %v2565
    %2615 = vmatprep.subr.bf16.mxu0 %v2562
    %2616 = vmatpush1.bf16.msra.mxu0 %v2561
    %2617 = vmatprep.subr.bf16.mxu0 %v2558
    %2618 = vmatpush1.bf16.msra.mxu0 %v2557
    %2619 = vmatprep.subr.bf16.mxu0 %v2554
    %2620 = vmatpush1.bf16.msra.mxu0 %v2553
    %2621 = vmatprep.subr.bf16.mxu0 %v2550
    %2622 = vmatpush1.bf16.msra.mxu0 %v2549
    %2623 = vmatprep.subr.bf16.mxu0 %v2546
    %2624 = vmatpush1.bf16.msra.mxu0 %v2545
    %2625 = vmatprep.subr.bf16.mxu0 0
    %2626 = vmatpush2.bf16.msra.mxu0 0
    %2627 = vmatprep.subr.bf16.mxu0 0
    %2628 = vmatpush2.bf16.msra.mxu0 0
    %2629 = vmatprep.subr.bf16.mxu0 0
    %2630 = vmatpush2.bf16.msra.mxu0 0
    %2631 = vmatprep.subr.bf16.mxu0 0
    %2632 = vmatpush2.bf16.msra.mxu0 0
    %2633 = vmatprep.subr.bf16.mxu0 0
    %2634 = vmatpush2.bf16.msra.mxu0 0
    %2635 = vmatprep.subr.bf16.mxu0 0
    %2636 = vmatpush2.bf16.msra.mxu0 0
    %2637 = vmatprep.subr.bf16.mxu0 0
    %2638 = vmatpush2.bf16.msra.mxu0 0
    %2639 = vmatprep.subr.bf16.mxu0 0
    %2640 = vmatpush2.bf16.msra.mxu0 0
    %2641 = vmatprep.mubr.bf16.mxu0 0
    %2642 = vmatmul.mubr.bf16.gmra.mxu0 %v2416
    %v2643 = vpop.f32.mrf.mxu0
    %v2644 = vadd.f32 0.0, %v2643
    %v2645 = vpop.f32.mrf.mxu0
    %v2646 = vadd.f32 0.0, %v2645
    %v2647 = vpop.f32.mrf.mxu0
    %v2648 = vpop.f32.mrf.mxu0
    %2649 = vdwg.mxu0
    %2650 = vmatprep.subr.bf16.mxu0 %v2576
    %2651 = vmatpush1.bf16.msra.mxu0 %v2575
    %2652 = vmatprep.subr.bf16.mxu0 %v2572
    %2653 = vmatpush1.bf16.msra.mxu0 %v2571
    %2654 = vmatprep.subr.bf16.mxu0 %v2568
    %2655 = vmatpush1.bf16.msra.mxu0 %v2567
    %2656 = vmatprep.subr.bf16.mxu0 %v2564
    %2657 = vmatpush1.bf16.msra.mxu0 %v2563
    %2658 = vmatprep.subr.bf16.mxu0 %v2560
    %2659 = vmatpush1.bf16.msra.mxu0 %v2559
    %2660 = vmatprep.subr.bf16.mxu0 %v2556
    %2661 = vmatpush1.bf16.msra.mxu0 %v2555
    %2662 = vmatprep.subr.bf16.mxu0 %v2552
    %2663 = vmatpush1.bf16.msra.mxu0 %v2551
    %2664 = vmatprep.subr.bf16.mxu0 %v2548
    %2665 = vmatpush1.bf16.msra.mxu0 %v2547
    %2666 = vmatprep.subr.bf16.mxu0 0
    %2667 = vmatpush2.bf16.msra.mxu0 0
    %2668 = vmatprep.subr.bf16.mxu0 0
    %2669 = vmatpush2.bf16.msra.mxu0 0
    %2670 = vmatprep.subr.bf16.mxu0 0
    %2671 = vmatpush2.bf16.msra.mxu0 0
    %2672 = vmatprep.subr.bf16.mxu0 0
    %2673 = vmatpush2.bf16.msra.mxu0 0
    %2674 = vmatprep.subr.bf16.mxu0 0
    %2675 = vmatpush2.bf16.msra.mxu0 0
    %2676 = vmatprep.subr.bf16.mxu0 0
    %2677 = vmatpush2.bf16.msra.mxu0 0
    %2678 = vmatprep.subr.bf16.mxu0 0
    %2679 = vmatpush2.bf16.msra.mxu0 0
    %2680 = vmatprep.subr.bf16.mxu0 0
    %2681 = vmatpush2.bf16.msra.mxu0 0
    %2682 = vmatprep.mubr.bf16.mxu0 0
    %2683 = vmatmul.mubr.bf16.gmra.mxu0 %v2416
    %v2684 = vpop.f32.mrf.mxu0
    %v2685 = vadd.f32 0.0, %v2684
    %v2686 = vpop.f32.mrf.mxu0
    %v2687 = vadd.f32 0.0, %v2686
    %v2688 = vpop.f32.mrf.mxu0
    %v2689 = vpop.f32.mrf.mxu0
    %2690 = vdwg.mxu0
    %v2691 = vadd.f32 %v2412, %v2644
    %v2692 = vadd.f32 %v2413, %v2646
    %v2693 = vadd.f32 %v2414, %v2685
    %v2694 = vadd.f32 %v2415, %v2687
    %v2695 = vxor.u32 %v2691, 2147483648
    %v2696 = vmul.f32 %v2695, 1.442695
    %v2697 = vpow.pop %v2696
    %v2698 = vadd.f32 %v2697, 1.0
    %v2699 = vrcp.pop %v2698
    %v2700 = vmul.f32 1.0, %v2699
    %v2701 = vxor.u32 %v2692, 2147483648
    %v2702 = vmul.f32 %v2701, 1.442695
    %v2703 = vpow.pop %v2702
    %v2704 = vadd.f32 %v2703, 1.0
    %v2705 = vrcp.pop %v2704
    %v2706 = vmul.f32 1.0, %v2705
    %v2707 = vtanh.pop %v2693
    %v2708 = vxor.u32 %v2694, 2147483648
    %v2709 = vmul.f32 %v2708, 1.442695
    %v2710 = vpow.pop %v2709
    %v2711 = vadd.f32 %v2710, 1.0
    %v2712 = vrcp.pop %v2711
    %v2713 = vmul.f32 1.0, %v2712
    %v2714 = vld [vmem:[#allocation3] sm:$0xff]
    %v2715 = vmul.f32 %v2706, %v2714
    %v2716 = vmul.f32 %v2700, %v2707
    %v2717 = vadd.f32 %v2715, %v2716
    %v2718 = vtanh.pop %v2717
    %v2719 = vmul.f32 %v2713, %v2718
    %v2720 = vpack.c.bf16 %v2719, %v2719
    %s2721 = sadd.s32 %s53, 7
    %v2722 = vstv %s2721
    %vm2723 = vcmp.lt.s32.totalorder %v2722, %v54
    %v2724 = vsel %vm2723, 1, 0
    %2725 = vset.pattern.permute.xlu0 0
    %2726 = vperm.xlu0 %2725, %v2724
    %v2727 = vpop.permute.xlu0 %2726
    %vm2728 = vcmp.eq.s32.totalorder %v2727, 1
    %v2729 = vsel %vm2728, %v2717, %v2714
    %2730 = vst [vmem:[#allocation3] sm:$0xff] %v2729
    %v2731 = vld [vmem:[#allocation2] sm:$0xf]
    %vm2732 = vmpackc.low %vm2728, %vm2728
    %v2733 = vsel %vm2732, %v2720, %v2731
    %2734 = vst [vmem:[#allocation2] sm:$0xf] %v2733
    %v2735 = vsel %vm2732, %v2720, 0
    %s2736 = scalar_lea.vmem [#allocation9], 28
    %2737 = vst [vmem:[%s2736] sm:$0xf] %v2735
    // Predicated region
    $region30: #{tpu_custom_call.1} parent=1 // pred_check
      _
    $region31: #{tpu_custom_call.1} parent=1 // pred_check_branch
      %2739 = sbr.rel (0) target = $region33
    $region32: #{tpu_custom_call.1} parent=1 // pred_region
      %s2741 = ssub.s32 512, 512
      %2742 = vsyncadd [#allocation6], %s2741
      %s2743 = sshll.u32 [#allocation9], 4
      %s2744 = int_to_ptr.vmem [resolvable:$true] %s2743
      %2749 = dma.vmem_to_hbm [thread:$0]  %s2744, 512, %s4, [#allocation6], 64, 64, 4
    $region33: #{tpu_custom_call.1} parent=1 // pred_fallthru
      _
    // Predicated region
    $region34: #{tpu_custom_call.1} parent=1 // pred_check
      _
    $region35: #{tpu_custom_call.1} parent=1 // pred_check_branch
      %2751 = sbr.rel (0) target = $region37
    $region36: #{tpu_custom_call.1} parent=1 // pred_region
      %2752 = dma.done [#allocation6], 512
    $region37: #{tpu_custom_call.1} parent=1 // pred_fallthru
      _
    %2753 = vsyncpa [#allocation5], 1
    %2754 = vsyncpa [#allocation8], 1
    %2755 = vsyncpa [#allocation6], 1

// kernel: tpu_custom_call.1
$region0: #{tpu_custom_call.1}
  #allocation0 [shape = 'u32[]', space=smem, size = 0x4, offset = 0x4, fixed_abs, tag = 'smem constant byte address 0x4 - core index']
  #allocation1 [shape = 'u32[144,128]{1,0:T(1,128)}', space=vmem, size = 0x12000, scoped, tag = 'internal scratch']
  #allocation2 [shape = 'bf16[8,128]{1,0:T(8,128)(2,1)}', space=vmem, size = 0x800, scoped, tag = 'scratch operand']
  #allocation3 [shape = 'f32[8,128]{1,0:T(8,128)}', space=vmem, size = 0x1000, scoped, tag = 'scratch operand']
  %s0 = inlined_call_operand.hbm [shape: bf16[8,8,512], index: 0, kind: input, shape index: {}]
  %s1 = inlined_call_operand.vmem [shape: s32[8,1], index: 1, kind: input, shape index: {}]
  %s2 = inlined_call_operand.vmem [shape: f32[1,512], index: 2, kind: input, shape index: {}]
  %s3 = inlined_call_operand.hbm [shape: bf16[128,512], index: 3, kind: input, shape index: {}]
  %s4 = inlined_call_operand.hbm [shape: bf16[8,8,128], index: 4, kind: output, shape index: {}]
  %s5 = sld [smem:[#allocation0]]
  $region38: #{tpu_custom_call.1} parent=0
    _
  %s7 = ssub.s32 1, %s5
  %s8 = scalar_select 0, %s7, %s5
  $region1: #{tpu_custom_call.1} parent=0
    #allocation4 [shape = 'u8[65536]{0}', space=vmem, size = 0x10000, scoped, tag = 'input window, operand 0, single buffered']
    #allocation5 [shape = 's32[1]{0}', space=sflag, size = 0x4, scoped, tag = 'scoped memory for tpu_custom_call.1']
    #allocation6 [shape = 's32[1]{0}', space=sflag, size = 0x4, scoped, tag = 'scoped memory for tpu_custom_call.1']
    #allocation7 [shape = 'u8[131072]{0}', space=vmem, size = 0x20000, scoped, tag = 'input window, operand 3, single buffered']
    #allocation8 [shape = 's32[1]{0}', space=sflag, size = 0x4, scoped, tag = 'scoped memory for tpu_custom_call.1']
    #allocation9 [shape = 'u8[16384]{0}', space=vmem, size = 0x4000, scoped, tag = 'output window, operand 0, single buffered']
    %9 = vsyncpa [#allocation5], 0
    %10 = vsyncpa [#allocation8], 0
    %11 = vsyncpa [#allocation6], 0
    // Predicated region
    $region2: #{tpu_custom_call.1} parent=1 // pred_check
      _
    $region3: #{tpu_custom_call.1} parent=1 // pred_check_branch
      %13 = sbr.rel (0) target = $region5
    $region4: #{tpu_custom_call.1} parent=1 // pred_region
      %s15 = ssub.s32 2048, 2048
      %16 = vsyncadd [#allocation5], %s15
      %s17 = sshll.u32 [#allocation4], 4
      %s18 = int_to_ptr.vmem [resolvable:$true] %s17
      %23 = dma.hbm_to_vmem [thread:$0]  %s0, 2048, %s18, [#allocation5], 256, 256, 16
    $region5: #{tpu_custom_call.1} parent=1 // pred_fallthru
      _
    // Predicated region
    $region6: #{tpu_custom_call.1} parent=1 // pred_check
      _
    $region7: #{tpu_custom_call.1} parent=1 // pred_check_branch
      %25 = sbr.rel (0) target = $region9
    $region8: #{tpu_custom_call.1} parent=1 // pred_region
      _
    $region9: #{tpu_custom_call.1} parent=1 // pred_fallthru
      _
    // Predicated region
    $region10: #{tpu_custom_call.1} parent=1 // pred_check
      _
    $region11: #{tpu_custom_call.1} parent=1 // pred_check_branch
      %27 = sbr.rel (0) target = $region13
    $region12: #{tpu_custom_call.1} parent=1 // pred_region
      _
    $region13: #{tpu_custom_call.1} parent=1 // pred_fallthru
      _
    // Predicated region
    $region14: #{tpu_custom_call.1} parent=1 // pred_check
      _
    $region15: #{tpu_custom_call.1} parent=1 // pred_check_branch
      %29 = sbr.rel (0) target = $region17
    $region16: #{tpu_custom_call.1} parent=1 // pred_region
      %s31 = ssub.s32 4096, 4096
      %32 = vsyncadd [#allocation8], %s31
      %s33 = sshll.u32 [#allocation7], 4
      %s34 = int_to_ptr.vmem [resolvable:$true] %s33
      %39 = dma.hbm_to_vmem [thread:$0]  %s3, 4096, %s34, [#allocation8], 256, 256, 16
    $region17: #{tpu_custom_call.1} parent=1 // pred_fallthru
      _
    // Predicated region
    $region18: #{tpu_custom_call.1} parent=1 // pred_check
      _
    $region19: #{tpu_custom_call.1} parent=1 // pred_check_branch
      %41 = sbr.rel (0) target = $region21
    $region20: #{tpu_custom_call.1} parent=1 // pred_region
      %42 = dma.done [#allocation5], 2048
    $region21: #{tpu_custom_call.1} parent=1 // pred_fallthru
      _
    // Predicated region
    $region22: #{tpu_custom_call.1} parent=1 // pred_check
      _
    $region23: #{tpu_custom_call.1} parent=1 // pred_check_branch
      %44 = sbr.rel (0) target = $region25
    $region24: #{tpu_custom_call.1} parent=1 // pred_region
      %45 = dma.done [#allocation8], 4096
    $region25: #{tpu_custom_call.1} parent=1 // pred_fallthru
      _
    %p47 = scmp.eq.s32.totalorder 0, 0
    // Predicated region
    $region26: #{tpu_custom_call.1} parent=1 // pred_check
      %p48 = pneg %p47
    $region27: #{tpu_custom_call.1} parent=1 // pred_check_branch
      %50 = sbr.rel (%p48) target = $region29
    $region28: #{tpu_custom_call.1} parent=1 // pred_region
      %51 = vst [vmem:[#allocation2] sm:$0xf] 0
      %52 = vst [vmem:[#allocation3] sm:$0xff] 0.0
    $region29: #{tpu_custom_call.1} parent=1 // pred_fallthru
      _
    %s53 = smul.u32 0, 8
    %v54 = vld [vmem:[%s1] sm:$0xff]
    %v55 = vld [vmem:[%s2] sm:$0xf]
    %v57 = vlaneseq
    %v58 = vshrl.u32 %v57, 7
    %v59 = vsub.s32 0, %v58
    %v60 = vrot.slane %v55, %v59
    %v61 = vlaneseq
    %v62 = vshrl.u32 %v61, 7
    %v63 = vsub.s32 1, %v62
    %v64 = vrot.slane %v55, %v63
    %v65 = vlaneseq
    %v66 = vshrl.u32 %v65, 7
    %v67 = vsub.s32 2, %v66
    %v68 = vrot.slane %v55, %v67
    %v69 = vlaneseq
    %v70 = vshrl.u32 %v69, 7
    %v71 = vsub.s32 3, %v70
    %v72 = vrot.slane %v55, %v71
    %v77 = vld [vmem:[#allocation4] sm:$0xff]
    %v78 = vld [vmem:[#allocation4 + $0x8] sm:$0xff]
    %v79 = vunpack.c.l.bf16 %v77
    %v80 = vunpack.c.h.bf16 %v77
    %v81 = vunpack.c.l.bf16 %v78
    %v82 = vunpack.c.h.bf16 %v78
    %v83 = vadd.f32 %v79, %v60
    %v84 = vadd.f32 %v80, %v64
    %v85 = vadd.f32 %v81, %v68
    %v86 = vadd.f32 %v82, %v72
    %v87 = vld [vmem:[#allocation2] sm:$0xf]
    %v88 = vld [vmem:[#allocation7] sm:$0xff]
    %v89 = vld [vmem:[#allocation7 + $0x8] sm:$0xff]
    %v90 = vld [vmem:[#allocation7 + $0x10] sm:$0xff]
    %v91 = vld [vmem:[#allocation7 + $0x18] sm:$0xff]
    %v92 = vld [vmem:[#allocation7 + $0x20] sm:$0xff]
    %v93 = vld [vmem:[#allocation7 + $0x28] sm:$0xff]
    %v94 = vld [vmem:[#allocation7 + $0x30] sm:$0xff]
    %v95 = vld [vmem:[#allocation7 + $0x38] sm:$0xff]
    %v96 = vld [vmem:[#allocation7 + $0x40] sm:$0xff]
    %v97 = vld [vmem:[#allocation7 + $0x48] sm:$0xff]
    %v98 = vld [vmem:[#allocation7 + $0x50] sm:$0xff]
    %v99 = vld [vmem:[#allocation7 + $0x58] sm:$0xff]
    %v100 = vld [vmem:[#allocation7 + $0x60] sm:$0xff]
    %v101 = vld [vmem:[#allocation7 + $0x68] sm:$0xff]
    %v102 = vld [vmem:[#allocation7 + $0x70] sm:$0xff]
    %v103 = vld [vmem:[#allocation7 + $0x78] sm:$0xff]
    %v104 = vld [vmem:[#allocation7 + $0x80] sm:$0xff]
    %v105 = vld [vmem:[#allocation7 + $0x88] sm:$0xff]
    %v106 = vld [vmem:[#allocation7 + $0x90] sm:$0xff]
    %v107 = vld [vmem:[#allocation7 + $0x98] sm:$0xff]
    %v108 = vld [vmem:[#allocation7 + $0xa0] sm:$0xff]
    %v109 = vld [vmem:[#allocation7 + $0xa8] sm:$0xff]
    %v110 = vld [vmem:[#allocation7 + $0xb0] sm:$0xff]
    %v111 = vld [vmem:[#allocation7 + $0xb8] sm:$0xff]
    %v112 = vld [vmem:[#allocation7 + $0xc0] sm:$0xff]
    %v113 = vld [vmem:[#allocation7 + $0xc8] sm:$0xff]
    %v114 = vld [vmem:[#allocation7 + $0xd0] sm:$0xff]
    %v115 = vld [vmem:[#allocation7 + $0xd8] sm:$0xff]
    %v116 = vld [vmem:[#allocation7 + $0xe0] sm:$0xff]
    %v117 = vld [vmem:[#allocation7 + $0xe8] sm:$0xff]
    %v118 = vld [vmem:[#allocation7 + $0xf0] sm:$0xff]
    %v119 = vld [vmem:[#allocation7 + $0xf8] sm:$0xff]
    %v152 = vunpack.c.l.b16 %v88
    %v153 = vunpack.c.h.b16 %v88
    %v154 = vunpack.c.l.b16 %v89
    %v155 = vunpack.c.h.b16 %v89
    %v156 = vunpack.c.l.b16 %v90
    %v157 = vunpack.c.h.b16 %v90
    %v158 = vunpack.c.l.b16 %v91
    %v159 = vunpack.c.h.b16 %v91
    %v160 = vunpack.c.l.b16 %v92
    %v161 = vunpack.c.h.b16 %v92
    %v162 = vunpack.c.l.b16 %v93
    %v163 = vunpack.c.h.b16 %v93
    %v164 = vunpack.c.l.b16 %v94
    %v165 = vunpack.c.h.b16 %v94
    %v166 = vunpack.c.l.b16 %v95
    %v167 = vunpack.c.h.b16 %v95
    %v168 = vunpack.c.l.b16 %v96
    %v169 = vunpack.c.h.b16 %v96
    %v170 = vunpack.c.l.b16 %v97
    %v171 = vunpack.c.h.b16 %v97
    %v172 = vunpack.c.l.b16 %v98
    %v173 = vunpack.c.h.b16 %v98
    %v174 = vunpack.c.l.b16 %v99
    %v175 = vunpack.c.h.b16 %v99
    %v176 = vunpack.c.l.b16 %v100
    %v177 = vunpack.c.h.b16 %v100
    %v178 = vunpack.c.l.b16 %v101
    %v179 = vunpack.c.h.b16 %v101
    %v180 = vunpack.c.l.b16 %v102
    %v181 = vunpack.c.h.b16 %v102
    %v182 = vunpack.c.l.b16 %v103
    %v183 = vunpack.c.h.b16 %v103
    %v184 = vunpack.c.l.b16 %v104
    %v185 = vunpack.c.h.b16 %v104
    %v186 = vunpack.c.l.b16 %v105
    %v187 = vunpack.c.h.b16 %v105
    %v188 = vunpack.c.l.b16 %v106
    %v189 = vunpack.c.h.b16 %v106
    %v190 = vunpack.c.l.b16 %v107
    %v191 = vunpack.c.h.b16 %v107
    %v192 = vunpack.c.l.b16 %v108
    %v193 = vunpack.c.h.b16 %v108
    %v194 = vunpack.c.l.b16 %v109
    %v195 = vunpack.c.h.b16 %v109
    %v196 = vunpack.c.l.b16 %v110
    %v197 = vunpack.c.h.b16 %v110
    %v198 = vunpack.c.l.b16 %v111
    %v199 = vunpack.c.h.b16 %v111
    %v200 = vunpack.c.l.b16 %v112
    %v201 = vunpack.c.h.b16 %v112
    %v202 = vunpack.c.l.b16 %v113
    %v203 = vunpack.c.h.b16 %v113
    %v204 = vunpack.c.l.b16 %v114
    %v205 = vunpack.c.h.b16 %v114
    %v206 = vunpack.c.l.b16 %v115
    %v207 = vunpack.c.h.b16 %v115
    %v208 = vunpack.c.l.b16 %v116
    %v209 = vunpack.c.h.b16 %v116
    %v210 = vunpack.c.l.b16 %v117
    %v211 = vunpack.c.h.b16 %v117
    %v212 = vunpack.c.l.b16 %v118
    %v213 = vunpack.c.h.b16 %v118
    %v214 = vunpack.c.l.b16 %v119
    %v215 = vunpack.c.h.b16 %v119
    %v216 = vpack.c.b16 %v156, %v152
    %v217 = vpack.c.b16 %v157, %v153
    %v218 = vpack.c.b16 %v158, %v154
    %v219 = vpack.c.b16 %v159, %v155
    %v220 = vpack.c.b16 %v164, %v160
    %v221 = vpack.c.b16 %v165, %v161
    %v222 = vpack.c.b16 %v166, %v162
    %v223 = vpack.c.b16 %v167, %v163
    %v224 = vpack.c.b16 %v172, %v168
    %v225 = vpack.c.b16 %v173, %v169
    %v226 = vpack.c.b16 %v174, %v170
    %v227 = vpack.c.b16 %v175, %v171
    %v228 = vpack.c.b16 %v180, %v176
    %v229 = vpack.c.b16 %v181, %v177
    %v230 = vpack.c.b16 %v182, %v178
    %v231 = vpack.c.b16 %v183, %v179
    %v232 = vpack.c.b16 %v188, %v184
    %v233 = vpack.c.b16 %v189, %v185
    %v234 = vpack.c.b16 %v190, %v186
    %v235 = vpack.c.b16 %v191, %v187
    %v236 = vpack.c.b16 %v196, %v192
    %v237 = vpack.c.b16 %v197, %v193
    %v238 = vpack.c.b16 %v198, %v194
    %v239 = vpack.c.b16 %v199, %v195
    %v240 = vpack.c.b16 %v204, %v200
    %v241 = vpack.c.b16 %v205, %v201
    %v242 = vpack.c.b16 %v206, %v202
    %v243 = vpack.c.b16 %v207, %v203
    %v244 = vpack.c.b16 %v212, %v208
    %v245 = vpack.c.b16 %v213, %v209
    %v246 = vpack.c.b16 %v214, %v210
    %v247 = vpack.c.b16 %v215, %v211
    %280 = vmatprep.subr.bf16.mxu0 %v245
    %281 = vmatpush1.bf16.msra.mxu0 %v244
    %282 = vmatprep.subr.bf16.mxu0 %v241
    %283 = vmatpush1.bf16.msra.mxu0 %v240
    %284 = vmatprep.subr.bf16.mxu0 %v237
    %285 = vmatpush1.bf16.msra.mxu0 %v236
    %286 = vmatprep.subr.bf16.mxu0 %v233
    %287 = vmatpush1.bf16.msra.mxu0 %v232
    %288 = vmatprep.subr.bf16.mxu0 %v229
    %289 = vmatpush1.bf16.msra.mxu0 %v228
    %290 = vmatprep.subr.bf16.mxu0 %v225
    %291 = vmatpush1.bf16.msra.mxu0 %v224
    %292 = vmatprep.subr.bf16.mxu0 %v221
    %293 = vmatpush1.bf16.msra.mxu0 %v220
    %294 = vmatprep.subr.bf16.mxu0 %v217
    %295 = vmatpush1.bf16.msra.mxu0 %v216
    %296 = vmatprep.subr.bf16.mxu0 0
    %297 = vmatpush2.bf16.msra.mxu0 0
    %298 = vmatprep.subr.bf16.mxu0 0
    %299 = vmatpush2.bf16.msra.mxu0 0
    %300 = vmatprep.subr.bf16.mxu0 0
    %301 = vmatpush2.bf16.msra.mxu0 0
    %302 = vmatprep.subr.bf16.mxu0 0
    %303 = vmatpush2.bf16.msra.mxu0 0
    %304 = vmatprep.subr.bf16.mxu0 0
    %305 = vmatpush2.bf16.msra.mxu0 0
    %306 = vmatprep.subr.bf16.mxu0 0
    %307 = vmatpush2.bf16.msra.mxu0 0
    %308 = vmatprep.subr.bf16.mxu0 0
    %309 = vmatpush2.bf16.msra.mxu0 0
    %310 = vmatprep.subr.bf16.mxu0 0
    %311 = vmatpush2.bf16.msra.mxu0 0
    %312 = vmatprep.mubr.bf16.mxu0 0
    %313 = vmatmul.mubr.bf16.gmra.mxu0 %v87
    %v314 = vpop.f32.mrf.mxu0
    %v315 = vadd.f32 0.0, %v314
    %v316 = vpop.f32.mrf.mxu0
    %v317 = vadd.f32 0.0, %v316
    %v318 = vpop.f32.mrf.mxu0
    %v319 = vpop.f32.mrf.mxu0
    %320 = vdwg.mxu0
    %321 = vmatprep.subr.bf16.mxu0 %v247
    %322 = vmatpush1.bf16.msra.mxu0 %v246
    %323 = vmatprep.subr.bf16.mxu0 %v243
    %324 = vmatpush1.bf16.msra.mxu0 %v242
    %325 = vmatprep.subr.bf16.mxu0 %v239
    %326 = vmatpush1.bf16.msra.mxu0 %v238
    %327 = vmatprep.subr.bf16.mxu0 %v235
    %328 = vmatpush1.bf16.msra.mxu0 %v234
    %329 = vmatprep.subr.bf16.mxu0 %v231
    %330 = vmatpush1.bf16.msra.mxu0 %v230
    %331 = vmatprep.subr.bf16.mxu0 %v227
    %332 = vmatpush1.bf16.msra.mxu0 %v226
    %333 = vmatprep.subr.bf16.mxu0 %v223
    %334 = vmatpush1.bf16.msra.mxu0 %v222
    %335 = vmatprep.subr.bf16.mxu0 %v219
    %336 = vmatpush1.bf16.msra.mxu0 %v218
    %337 = vmatprep.subr.bf16.mxu0 0
    %338 = vmatpush2.bf16.msra.mxu0 0
    %339 = vmatprep.subr.bf16.mxu0 0
    %340 = vmatpush2.bf16.msra.mxu0 0
    %341 = vmatprep.subr.bf16.mxu0 0
    %342 = vmatpush2.bf16.msra.mxu0 0
    %343 = vmatprep.subr.bf16.mxu0 0
    %344 = vmatpush2.bf16.msra.mxu0 0
    %345 = vmatprep.subr.bf16.mxu0 0
    %346 = vmatpush2.bf16.msra.mxu0 0
    %347 = vmatprep.subr.bf16.mxu0 0
    %348 = vmatpush2.bf16.msra.mxu0 0
    %349 = vmatprep.subr.bf16.mxu0 0
    %350 = vmatpush2.bf16.msra.mxu0 0
    %351 = vmatprep.subr.bf16.mxu0 0
    %352 = vmatpush2.bf16.msra.mxu0 0
    %353 = vmatprep.mubr.bf16.mxu0 0
    %354 = vmatmul.mubr.bf16.gmra.mxu0 %v87
    %v355 = vpop.f32.mrf.mxu0
    %v356 = vadd.f32 0.0, %v355
    %v357 = vpop.f32.mrf.mxu0
    %v358 = vadd.f32 0.0, %v357
    %v359 = vpop.f32.mrf.mxu0
    %v360 = vpop.f32.mrf.mxu0
    %361 = vdwg.mxu0
    %v362 = vadd.f32 %v83, %v315
    %v363 = vadd.f32 %v84, %v317
    %v364 = vadd.f32 %v85, %v356
    %v365 = vadd.f32 %v86, %v358
    %v366 = vxor.u32 %v362, 2147483648
    %v367 = vmul.f32 %v366, 1.442695
    %v368 = vpow.pop %v367
    %v369 = vadd.f32 %v368, 1.0
    %v370 = vrcp.pop %v369
    %v371 = vmul.f32 1.0, %v370
    %v372 = vxor.u32 %v363, 2147483648
    %v373 = vmul.f32 %v372, 1.442695
    %v374 = vpow.pop %v373
    %v375 = vadd.f32 %v374, 1.0
    %v376 = vrcp.pop %v375
    %v377 = vmul.f32 1.0, %v376
    %v378 = vtanh.pop %v364
    %v379 = vxor.u32 %v365, 2147483648
    %v380 = vmul.f32 %v379, 1.442695
    %v381 = vpow.pop %v380
    %v382 = vadd.f32 %v381, 1.0
    %v383 = vrcp.pop %v382
    %v384 = vmul.f32 1.0, %v383
    %v385 = vld [vmem:[#allocation3] sm:$0xff]
    %v386 = vmul.f32 %v377, %v385
    %v387 = vmul.f32 %v371, %v378
    %v388 = vadd.f32 %v386, %v387
    %v389 = vtanh.pop %v388
    %v390 = vmul.f32 %v384, %v389
    %v391 = vpack.c.bf16 %v390, %v390
    %v392 = vstv %s53
    %vm393 = vcmp.lt.s32.totalorder %v392, %v54
    %v394 = vsel %vm393, 1, 0
    %395 = vset.pattern.permute.xlu0 0
    %396 = vperm.xlu0 %395, %v394
    %v397 = vpop.permute.xlu0 %396
    %vm398 = vcmp.eq.s32.totalorder %v397, 1
    %v399 = vsel %vm398, %v388, %v385
    %400 = vst [vmem:[#allocation3] sm:$0xff] %v399
    %v401 = vld [vmem:[#allocation2] sm:$0xf]
    %vm402 = vmpackc.low %vm398, %vm398
    %v403 = vsel %vm402, %v391, %v401
    %404 = vst [vmem:[#allocation2] sm:$0xf] %v403
    %v405 = vsel %vm402, %v391, 0
    %406 = vst [vmem:[#allocation9] sm:$0xf] %v405
    %s407 = scalar_lea.vmem [#allocation4], 16
    %v408 = vld [vmem:[%s407] sm:$0xff]
    %v409 = vld [vmem:[%s407 + $0x8] sm:$0xff]
    %v410 = vunpack.c.l.bf16 %v408
    %v411 = vunpack.c.h.bf16 %v408
    %v412 = vunpack.c.l.bf16 %v409
    %v413 = vunpack.c.h.bf16 %v409
    %v414 = vadd.f32 %v410, %v60
    %v415 = vadd.f32 %v411, %v64
    %v416 = vadd.f32 %v412, %v68
    %v417 = vadd.f32 %v413, %v72
    %v418 = vld [vmem:[#allocation2] sm:$0xf]
    %v419 = vld [vmem:[#allocation7] sm:$0xff]
    %v420 = vld [vmem:[#allocation7 + $0x8] sm:$0xff]
    %v421 = vld [vmem:[#allocation7 + $0x10] sm:$0xff]
    %v422 = vld [vmem:[#allocation7 + $0x18] sm:$0xff]
    %v423 = vld [vmem:[#allocation7 + $0x20] sm:$0xff]
    %v424 = vld [vmem:[#allocation7 + $0x28] sm:$0xff]
    %v425 = vld [vmem:[#allocation7 + $0x30] sm:$0xff]
    %v426 = vld [vmem:[#allocation7 + $0x38] sm:$0xff]
    %v427 = vld [vmem:[#allocation7 + $0x40] sm:$0xff]
    %v428 = vld [vmem:[#allocation7 + $0x48] sm:$0xff]
    %v429 = vld [vmem:[#allocation7 + $0x50] sm:$0xff]
    %v430 = vld [vmem:[#allocation7 + $0x58] sm:$0xff]
    %v431 = vld [vmem:[#allocation7 + $0x60] sm:$0xff]
    %v432 = vld [vmem:[#allocation7 + $0x68] sm:$0xff]
    %v433 = vld [vmem:[#allocation7 + $0x70] sm:$0xff]
    %v434 = vld [vmem:[#allocation7 + $0x78] sm:$0xff]
    %v435 = vld [vmem:[#allocation7 + $0x80] sm:$0xff]
    %v436 = vld [vmem:[#allocation7 + $0x88] sm:$0xff]
    %v437 = vld [vmem:[#allocation7 + $0x90] sm:$0xff]
    %v438 = vld [vmem:[#allocation7 + $0x98] sm:$0xff]
    %v439 = vld [vmem:[#allocation7 + $0xa0] sm:$0xff]
    %v440 = vld [vmem:[#allocation7 + $0xa8] sm:$0xff]
    %v441 = vld [vmem:[#allocation7 + $0xb0] sm:$0xff]
    %v442 = vld [vmem:[#allocation7 + $0xb8] sm:$0xff]
    %v443 = vld [vmem:[#allocation7 + $0xc0] sm:$0xff]
    %v444 = vld [vmem:[#allocation7 + $0xc8] sm:$0xff]
    %v445 = vld [vmem:[#allocation7 + $0xd0] sm:$0xff]
    %v446 = vld [vmem:[#allocation7 + $0xd8] sm:$0xff]
    %v447 = vld [vmem:[#allocation7 + $0xe0] sm:$0xff]
    %v448 = vld [vmem:[#allocation7 + $0xe8] sm:$0xff]
    %v449 = vld [vmem:[#allocation7 + $0xf0] sm:$0xff]
    %v450 = vld [vmem:[#allocation7 + $0xf8] sm:$0xff]
    %v483 = vunpack.c.l.b16 %v419
    %v484 = vunpack.c.h.b16 %v419
    %v485 = vunpack.c.l.b16 %v420
    %v486 = vunpack.c.h.b16 %v420
    %v487 = vunpack.c.l.b16 %v421
    %v488 = vunpack.c.h.b16 %v421
    %v489 = vunpack.c.l.b16 %v422
    %v490 = vunpack.c.h.b16 %v422
    %v491 = vunpack.c.l.b16 %v423
    %v492 = vunpack.c.h.b16 %v423
    %v493 = vunpack.c.l.b16 %v424
    %v494 = vunpack.c.h.b16 %v424
    %v495 = vunpack.c.l.b16 %v425
    %v496 = vunpack.c.h.b16 %v425
    %v497 = vunpack.c.l.b16 %v426
    %v498 = vunpack.c.h.b16 %v426
    %v499 = vunpack.c.l.b16 %v427
    %v500 = vunpack.c.h.b16 %v427
    %v501 = vunpack.c.l.b16 %v428
    %v502 = vunpack.c.h.b16 %v428
    %v503 = vunpack.c.l.b16 %v429
    %v504 = vunpack.c.h.b16 %v429
    %v505 = vunpack.c.l.b16 %v430
    %v506 = vunpack.c.h.b16 %v430
    %v507 = vunpack.c.l.b16 %v431
    %v508 = vunpack.c.h.b16 %v431
    %v509 = vunpack.c.l.b16 %v432
    %v510 = vunpack.c.h.b16 %v432
    %v511 = vunpack.c.l.b16 %v433
    %v512 = vunpack.c.h.b16 %v433
    %v513 = vunpack.c.l.b16 %v434
    %v514 = vunpack.c.h.b16 %v434
    %v515 = vunpack.c.l.b16 %v435
    %v516 = vunpack.c.h.b16 %v435
    %v517 = vunpack.c.l.b16 %v436
    %v518 = vunpack.c.h.b16 %v436
    %v519 = vunpack.c.l.b16 %v437
    %v520 = vunpack.c.h.b16 %v437
    %v521 = vunpack.c.l.b16 %v438
    %v522 = vunpack.c.h.b16 %v438
    %v523 = vunpack.c.l.b16 %v439
    %v524 = vunpack.c.h.b16 %v439
    %v525 = vunpack.c.l.b16 %v440
    %v526 = vunpack.c.h.b16 %v440
    %v527 = vunpack.c.l.b16 %v441
    %v528 = vunpack.c.h.b16 %v441
    %v529 = vunpack.c.l.b16 %v442
    %v530 = vunpack.c.h.b16 %v442
    %v531 = vunpack.c.l.b16 %v443
    %v532 = vunpack.c.h.b16 %v443
    %v533 = vunpack.c.l.b16 %v444
    %v534 = vunpack.c.h.b16 %v444
    %v535 = vunpack.c.l.b16 %v445
    %v536 = vunpack.c.h.b16 %v445
    %v537 = vunpack.c.l.b16 %v446
    %v538 = vunpack.c.h.b16 %v446
    %v539 = vunpack.c.l.b16 %v447
    %v540 = vunpack.c.h.b16 %v447
    %v541 = vunpack.c.l.b16 %v448
    %v542 = vunpack.c.h.b16 %v448
    %v543 = vunpack.c.l.b16 %v449
    %v544 = vunpack.c.h.b16 %v449
    %v545 = vunpack.c.l.b16 %v450
    %v546 = vunpack.c.h.b16 %v450
    %v547 = vpack.c.b16 %v487, %v483
    %v548 = vpack.c.b16 %v488, %v484
    %v549 = vpack.c.b16 %v489, %v485
    %v550 = vpack.c.b16 %v490, %v486
    %v551 = vpack.c.b16 %v495, %v491
    %v552 = vpack.c.b16 %v496, %v492
    %v553 = vpack.c.b16 %v497, %v493
    %v554 = vpack.c.b16 %v498, %v494
    %v555 = vpack.c.b16 %v503, %v499
    %v556 = vpack.c.b16 %v504, %v500
    %v557 = vpack.c.b16 %v505, %v501
    %v558 = vpack.c.b16 %v506, %v502
    %v559 = vpack.c.b16 %v511, %v507
    %v560 = vpack.c.b16 %v512, %v508
    %v561 = vpack.c.b16 %v513, %v509
    %v562 = vpack.c.b16 %v514, %v510
    %v563 = vpack.c.b16 %v519, %v515
    %v564 = vpack.c.b16 %v520, %v516
    %v565 = vpack.c.b16 %v521, %v517
    %v566 = vpack.c.b16 %v522, %v518
    %v567 = vpack.c.b16 %v527, %v523
    %v568 = vpack.c.b16 %v528, %v524
    %v569 = vpack.c.b16 %v529, %v525
    %v570 = vpack.c.b16 %v530, %v526
    %v571 = vpack.c.b16 %v535, %v531
    %v572 = vpack.c.b16 %v536, %v532
    %v573 = vpack.c.b16 %v537, %v533
    %v574 = vpack.c.b16 %v538, %v534
    %v575 = vpack.c.b16 %v543, %v539
    %v576 = vpack.c.b16 %v544, %v540
    %v577 = vpack.c.b16 %v545, %v541
    %v578 = vpack.c.b16 %v546, %v542
    %611 = vmatprep.subr.bf16.mxu0 %v576
    %612 = vmatpush1.bf16.msra.mxu0 %v575
    %613 = vmatprep.subr.bf16.mxu0 %v572
    %614 = vmatpush1.bf16.msra.mxu0 %v571
    %615 = vmatprep.subr.bf16.mxu0 %v568
    %616 = vmatpush1.bf16.msra.mxu0 %v567
    %617 = vmatprep.subr.bf16.mxu0 %v564
    %618 = vmatpush1.bf16.msra.mxu0 %v563
    %619 = vmatprep.subr.bf16.mxu0 %v560
    %620 = vmatpush1.bf16.msra.mxu0 %v559
    %621 = vmatprep.subr.bf16.mxu0 %v556
    %622 = vmatpush1.bf16.msra.mxu0 %v555
    %623 = vmatprep.subr.bf16.mxu0 %v552
    %624 = vmatpush1.bf16.msra.mxu0 %v551
    %625 = vmatprep.subr.bf16.mxu0 %v548
    %626 = vmatpush1.bf16.msra.mxu0 %v547
    %627 = vmatprep.subr.bf16.mxu0 0
    %628 = vmatpush2.bf16.msra.mxu0 0
    %629 = vmatprep.subr.bf16.mxu0 0
    %630 = vmatpush2.bf16.msra.mxu0 0
    %631 = vmatprep.subr.bf16.mxu0 0
    %632 = vmatpush2.bf16.msra.mxu0 0
    %633 = vmatprep.subr.bf16.mxu0 0
    %634 = vmatpush2.bf16.msra.mxu0 0
    %635 = vmatprep.subr.bf16.mxu0 0
    %636 = vmatpush2.bf16.msra.mxu0 0
    %637 = vmatprep.subr.bf16.mxu0 0
    %638 = vmatpush2.bf16.msra.mxu0 0
    %639 = vmatprep.subr.bf16.mxu0 0
    %640 = vmatpush2.bf16.msra.mxu0 0
    %641 = vmatprep.subr.bf16.mxu0 0
    %642 = vmatpush2.bf16.msra.mxu0 0
    %643 = vmatprep.mubr.bf16.mxu0 0
    %644 = vmatmul.mubr.bf16.gmra.mxu0 %v418
    %v645 = vpop.f32.mrf.mxu0
    %v646 = vadd.f32 0.0, %v645
    %v647 = vpop.f32.mrf.mxu0
    %v648 = vadd.f32 0.0, %v647
    %v649 = vpop.f32.mrf.mxu0
    %v650 = vpop.f32.mrf.mxu0
    %651 = vdwg.mxu0
    %652 = vmatprep.subr.bf16.mxu0 %v578
    %653 = vmatpush1.bf16.msra.mxu0 %v577
    %654 = vmatprep.subr.bf16.mxu0 %v574
    %655 = vmatpush1.bf16.msra.mxu0 %v573
    %656 = vmatprep.subr.bf16.mxu0 %v570
    %657 = vmatpush1.bf16.msra.mxu0 %v569
    %658 = vmatprep.subr.bf16.mxu0 %v566
    %659 = vmatpush1.bf16.msra.mxu0 %v565
    %660 = vmatprep.subr.bf16.mxu0 %v562
    %661 = vmatpush1.bf16.msra.mxu0 %v561
    %662 = vmatprep.subr.bf16.mxu0 %v558
    %663 = vmatpush1.bf16.msra.mxu0 %v557
    %664 = vmatprep.subr.bf16.mxu0 %v554
    %665 = vmatpush1.bf16.msra.mxu0 %v553
    %666 = vmatprep.subr.bf16.mxu0 %v550
    %667 = vmatpush1.bf16.msra.mxu0 %v549
    %668 = vmatprep.subr.bf16.mxu0 0
    %669 = vmatpush2.bf16.msra.mxu0 0
    %670 = vmatprep.subr.bf16.mxu0 0
    %671 = vmatpush2.bf16.msra.mxu0 0
    %672 = vmatprep.subr.bf16.mxu0 0
    %673 = vmatpush2.bf16.msra.mxu0 0
    %674 = vmatprep.subr.bf16.mxu0 0
    %675 = vmatpush2.bf16.msra.mxu0 0
    %676 = vmatprep.subr.bf16.mxu0 0
    %677 = vmatpush2.bf16.msra.mxu0 0
    %678 = vmatprep.subr.bf16.mxu0 0
    %679 = vmatpush2.bf16.msra.mxu0 0
    %680 = vmatprep.subr.bf16.mxu0 0
    %681 = vmatpush2.bf16.msra.mxu0 0
    %682 = vmatprep.subr.bf16.mxu0 0
    %683 = vmatpush2.bf16.msra.mxu0 0
    %684 = vmatprep.mubr.bf16.mxu0 0
    %685 = vmatmul.mubr.bf16.gmra.mxu0 %v418
    %v686 = vpop.f32.mrf.mxu0
    %v687 = vadd.f32 0.0, %v686
    %v688 = vpop.f32.mrf.mxu0
    %v689 = vadd.f32 0.0, %v688
    %v690 = vpop.f32.mrf.mxu0
    %v691 = vpop.f32.mrf.mxu0
    %692 = vdwg.mxu0
    %v693 = vadd.f32 %v414, %v646
    %v694 = vadd.f32 %v415, %v648
    %v695 = vadd.f32 %v416, %v687
    %v696 = vadd.f32 %v417, %v689
    %v697 = vxor.u32 %v693, 2147483648
    %v698 = vmul.f32 %v697, 1.442695
    %v699 = vpow.pop %v698
    %v700 = vadd.f32 %v699, 1.0
    %v701 = vrcp.pop %v700
    %v702 = vmul.f32 1.0, %v701
    %v703 = vxor.u32 %v694, 2147483648
    %v704 = vmul.f32 %v703, 1.442695
    %v705 = vpow.pop %v704
    %v706 = vadd.f32 %v705, 1.0
    %v707 = vrcp.pop %v706
    %v708 = vmul.f32 1.0, %v707
    %v709 = vtanh.pop %v695
    %v710 = vxor.u32 %v696, 2147483648
    %v711 = vmul.f32 %v710, 1.442695
    %v712 = vpow.pop %v711
    %v713 = vadd.f32 %v712, 1.0
    %v714 = vrcp.pop %v713
    %v715 = vmul.f32 1.0, %v714
    %v716 = vld [vmem:[#allocation3] sm:$0xff]
    %v717 = vmul.f32 %v708, %v716
    %v718 = vmul.f32 %v702, %v709
    %v719 = vadd.f32 %v717, %v718
    %v720 = vtanh.pop %v719
    %v721 = vmul.f32 %v715, %v720
    %v722 = vpack.c.bf16 %v721, %v721
    %s723 = sadd.s32 %s53, 1
    %v724 = vstv %s723
    %vm725 = vcmp.lt.s32.totalorder %v724, %v54
    %v726 = vsel %vm725, 1, 0
    %727 = vset.pattern.permute.xlu0 0
    %728 = vperm.xlu0 %727, %v726
    %v729 = vpop.permute.xlu0 %728
    %vm730 = vcmp.eq.s32.totalorder %v729, 1
    %v731 = vsel %vm730, %v719, %v716
    %732 = vst [vmem:[#allocation3] sm:$0xff] %v731
    %v733 = vld [vmem:[#allocation2] sm:$0xf]
    %vm734 = vmpackc.low %vm730, %vm730
    %v735 = vsel %vm734, %v722, %v733
    %736 = vst [vmem:[#allocation2] sm:$0xf] %v735
    %v737 = vsel %vm734, %v722, 0
    %s738 = scalar_lea.vmem [#allocation9], 4
    %739 = vst [vmem:[%s738] sm:$0xf] %v737
    %s740 = scalar_lea.vmem [#allocation4], 32
    %v741 = vld [vmem:[%s740] sm:$0xff]
    %v742 = vld [vmem:[%s740 + $0x8] sm:$0xff]
    %v743 = vunpack.c.l.bf16 %v741
    %v744 = vunpack.c.h.bf16 %v741
    %v745 = vunpack.c.l.bf16 %v742
    %v746 = vunpack.c.h.bf16 %v742
    %v747 = vadd.f32 %v743, %v60
    %v748 = vadd.f32 %v744, %v64
    %v749 = vadd.f32 %v745, %v68
    %v750 = vadd.f32 %v746, %v72
    %v751 = vld [vmem:[#allocation2] sm:$0xf]
    %v752 = vld [vmem:[#allocation7] sm:$0xff]
    %v753 = vld [vmem:[#allocation7 + $0x8] sm:$0xff]
    %v754 = vld [vmem:[#allocation7 + $0x10] sm:$0xff]
    %v755 = vld [vmem:[#allocation7 + $0x18] sm:$0xff]
    %v756 = vld [vmem:[#allocation7 + $0x20] sm:$0xff]
    %v757 = vld [vmem:[#allocation7 + $0x28] sm:$0xff]
    %v758 = vld [vmem:[#allocation7 + $0x30] sm:$0xff]
    %v759 = vld [vmem:[#allocation7 + $0x38] sm:$0xff]
    %v760 = vld [vmem:[#allocation7 + $0x40] sm:$0xff]
    %v761 = vld [vmem:[#allocation7 + $0x48] sm:$0xff]
    %v762 = vld [vmem:[#allocation7 + $0x50] sm:$0xff]
    %v763 = vld [vmem:[#allocation7 + $0x58] sm:$0xff]
    %v764 = vld [vmem:[#allocation7 + $0x60] sm:$0xff]
    %v765 = vld [vmem:[#allocation7 + $0x68] sm:$0xff]
    %v766 = vld [vmem:[#allocation7 + $0x70] sm:$0xff]
    %v767 = vld [vmem:[#allocation7 + $0x78] sm:$0xff]
    %v768 = vld [vmem:[#allocation7 + $0x80] sm:$0xff]
    %v769 = vld [vmem:[#allocation7 + $0x88] sm:$0xff]
    %v770 = vld [vmem:[#allocation7 + $0x90] sm:$0xff]
    %v771 = vld [vmem:[#allocation7 + $0x98] sm:$0xff]
    %v772 = vld [vmem:[#allocation7 + $0xa0] sm:$0xff]
    %v773 = vld [vmem:[#allocation7 + $0xa8] sm:$0xff]
    %v774 = vld [vmem:[#allocation7 + $0xb0] sm:$0xff]
    %v775 = vld [vmem:[#allocation7 + $0xb8] sm:$0xff]
    %v776 = vld [vmem:[#allocation7 + $0xc0] sm:$0xff]
    %v777 = vld [vmem:[#allocation7 + $0xc8] sm:$0xff]
    %v778 = vld [vmem:[#allocation7 + $0xd0] sm:$0xff]
    %v779 = vld [vmem:[#allocation7 + $0xd8] sm:$0xff]
    %v780 = vld [vmem:[#allocation7 + $0xe0] sm:$0xff]
    %v781 = vld [vmem:[#allocation7 + $0xe8] sm:$0xff]
    %v782 = vld [vmem:[#allocation7 + $0xf0] sm:$0xff]
    %v783 = vld [vmem:[#allocation7 + $0xf8] sm:$0xff]
    %v816 = vunpack.c.l.b16 %v752
    %v817 = vunpack.c.h.b16 %v752
    %v818 = vunpack.c.l.b16 %v753
    %v819 = vunpack.c.h.b16 %v753
    %v820 = vunpack.c.l.b16 %v754
    %v821 = vunpack.c.h.b16 %v754
    %v822 = vunpack.c.l.b16 %v755
    %v823 = vunpack.c.h.b16 %v755
    %v824 = vunpack.c.l.b16 %v756
    %v825 = vunpack.c.h.b16 %v756
    %v826 = vunpack.c.l.b16 %v757
    %v827 = vunpack.c.h.b16 %v757
    %v828 = vunpack.c.l.b16 %v758
    %v829 = vunpack.c.h.b16 %v758
    %v830 = vunpack.c.l.b16 %v759
    %v831 = vunpack.c.h.b16 %v759
    %v832 = vunpack.c.l.b16 %v760
    %v833 = vunpack.c.h.b16 %v760
    %v834 = vunpack.c.l.b16 %v761
    %v835 = vunpack.c.h.b16 %v761
    %v836 = vunpack.c.l.b16 %v762
    %v837 = vunpack.c.h.b16 %v762
    %v838 = vunpack.c.l.b16 %v763
    %v839 = vunpack.c.h.b16 %v763
    %v840 = vunpack.c.l.b16 %v764
    %v841 = vunpack.c.h.b16 %v764
    %v842 = vunpack.c.l.b16 %v765
    %v843 = vunpack.c.h.b16 %v765
    %v844 = vunpack.c.l.b16 %v766
    %v845 = vunpack.c.h.b16 %v766
    %v846 = vunpack.c.l.b16 %v767
    %v847 = vunpack.c.h.b16 %v767
    %v848 = vunpack.c.l.b16 %v768
    %v849 = vunpack.c.h.b16 %v768
    %v850 = vunpack.c.l.b16 %v769
    %v851 = vunpack.c.h.b16 %v769
    %v852 = vunpack.c.l.b16 %v770
    %v853 = vunpack.c.h.b16 %v770
    %v854 = vunpack.c.l.b16 %v771
    %v855 = vunpack.c.h.b16 %v771
    %v856 = vunpack.c.l.b16 %v772
    %v857 = vunpack.c.h.b16 %v772
    %v858 = vunpack.c.l.b16 %v773
    %v859 = vunpack.c.h.b16 %v773
    %v860 = vunpack.c.l.b16 %v774
    %v861 = vunpack.c.h.b16 %v774
    %v862 = vunpack.c.l.b16 %v775
    %v863 = vunpack.c.h.b16 %v775
    %v864 = vunpack.c.l.b16 %v776
    %v865 = vunpack.c.h.b16 %v776
    %v866 = vunpack.c.l.b16 %v777
    %v867 = vunpack.c.h.b16 %v777
    %v868 = vunpack.c.l.b16 %v778
    %v869 = vunpack.c.h.b16 %v778
    %v870 = vunpack.c.l.b16 %v779
    %v871 = vunpack.c.h.b16 %v779
    %v872 = vunpack.c.l.b16 %v780
    %v873 = vunpack.c.h.b16 %v780
    %v874 = vunpack.c.l.b16 %v781
    %v875 = vunpack.c.h.b16 %v781
    %v876 = vunpack.c.l.b16 %v782
    %v877 = vunpack.c.h.b16 %v782
    %v878 = vunpack.c.l.b16 %v783
    %v879 = vunpack.c.h.b16 %v783
    %v880 = vpack.c.b16 %v820, %v816
    %v881 = vpack.c.b16 %v821, %v817
    %v882 = vpack.c.b16 %v822, %v818
    %v883 = vpack.c.b16 %v823, %v819
    %v884 = vpack.c.b16 %v828, %v824
    %v885 = vpack.c.b16 %v829, %v825
    %v886 = vpack.c.b16 %v830, %v826
    %v887 = vpack.c.b16 %v831, %v827
    %v888 = vpack.c.b16 %v836, %v832
    %v889 = vpack.c.b16 %v837, %v833
    %v890 = vpack.c.b16 %v838, %v834
    %v891 = vpack.c.b16 %v839, %v835
    %v892 = vpack.c.b16 %v844, %v840
    %v893 = vpack.c.b16 %v845, %v841
    %v894 = vpack.c.b16 %v846, %v842
    %v895 = vpack.c.b16 %v847, %v843
    %v896 = vpack.c.b16 %v852, %v848
    %v897 = vpack.c.b16 %v853, %v849
    %v898 = vpack.c.b16 %v854, %v850
    %v899 = vpack.c.b16 %v855, %v851
    %v900 = vpack.c.b16 %v860, %v856
    %v901 = vpack.c.b16 %v861, %v857
    %v902 = vpack.c.b16 %v862, %v858
    %v903 = vpack.c.b16 %v863, %v859
    %v904 = vpack.c.b16 %v868, %v864
    %v905 = vpack.c.b16 %v869, %v865
    %v906 = vpack.c.b16 %v870, %v866
    %v907 = vpack.c.b16 %v871, %v867
    %v908 = vpack.c.b16 %v876, %v872
    %v909 = vpack.c.b16 %v877, %v873
    %v910 = vpack.c.b16 %v878, %v874
    %v911 = vpack.c.b16 %v879, %v875
    %944 = vmatprep.subr.bf16.mxu0 %v909
    %945 = vmatpush1.bf16.msra.mxu0 %v908
    %946 = vmatprep.subr.bf16.mxu0 %v905
    %947 = vmatpush1.bf16.msra.mxu0 %v904
    %948 = vmatprep.subr.bf16.mxu0 %v901
    %949 = vmatpush1.bf16.msra.mxu0 %v900
    %950 = vmatprep.subr.bf16.mxu0 %v897
    %951 = vmatpush1.bf16.msra.mxu0 %v896
    %952 = vmatprep.subr.bf16.mxu0 %v893
    %953 = vmatpush1.bf16.msra.mxu0 %v892
    %954 = vmatprep.subr.bf16.mxu0 %v889
    %955 = vmatpush1.bf16.msra.mxu0 %v888
    %956 = vmatprep.subr.bf16.mxu0 %v885
    %957 = vmatpush1.bf16.msra.mxu0 %v884
    %958 = vmatprep.subr.bf16.mxu0 %v881
    %959 = vmatpush1.bf16.msra.mxu0 %v880
    %960 = vmatprep.subr.bf16.mxu0 0
    %961 = vmatpush2.bf16.msra.mxu0 0
    %962 = vmatprep.subr.bf16.mxu0 0
    %963 = vmatpush2.bf16.msra.mxu0 0
    %964 = vmatprep.subr.bf16.mxu0 0
    %965 = vmatpush2.bf16.msra.mxu0 0
    %966 = vmatprep.subr.bf16.mxu0 0
    %967 = vmatpush2.bf16.msra.mxu0 0
    %968 = vmatprep.subr.bf16.mxu0 0
    %969 = vmatpush2.bf16.msra.mxu0 0
    %970 = vmatprep.subr.bf16.mxu0 0
    %971 = vmatpush2.bf16.msra.mxu0 0
    %972 = vmatprep.subr.bf16.mxu0 0
    %973 = vmatpush2.bf16.msra.mxu0 0
    %974 = vmatprep.subr.bf16.mxu0 0
    %975 = vmatpush2.bf16.msra.mxu0 0
    %976 = vmatprep.mubr.bf16.mxu0 0
    %977 = vmatmul.mubr.bf16.gmra.mxu0 %v751
    %v978 = vpop.f32.mrf.mxu0
    %v979 = vadd.f32 0.0, %v978
    %v980 = vpop.f32.mrf.mxu0
    %v981 = vadd.f32 0.0, %v980
    %v982 = vpop.f32.mrf.mxu0
    %v983 = vpop.f32.mrf.mxu0
    %984 = vdwg.mxu0
    %985 = vmatprep.subr.bf16.mxu0 %v911
    %986 = vmatpush1.bf16.msra.mxu0 %v910
    %987 = vmatprep.subr.bf16.mxu0 %v907
    %988 = vmatpush1.bf16.msra.mxu0 %v906
    %989 = vmatprep.subr.bf16.mxu0 %v903
    %990 = vmatpush1.bf16.msra.mxu0 %v902
    %991 = vmatprep.subr.bf16.mxu0 %v899
    %992 = vmatpush1.bf16.msra.mxu0 %v898
    %993 = vmatprep.subr.bf16.mxu0 %v895
    %994 = vmatpush1.bf16.msra.mxu0 %v894
    %995 = vmatprep.subr.bf16.mxu0 %v891
    %996 = vmatpush1.bf16.msra.mxu0 %v890
    %997 = vmatprep.subr.bf16.mxu0 %v887
    %998 = vmatpush1.bf16.msra.mxu0 %v886
    %999 = vmatprep.subr.bf16.mxu0 %v883
    %1000 = vmatpush1.bf16.msra.mxu0 %v882
    %1001 = vmatprep.subr.bf16.mxu0 0
    %1002 = vmatpush2.bf16.msra.mxu0 0
    %1003 = vmatprep.subr.bf16.mxu0 0
    %1004 = vmatpush2.bf16.msra.mxu0 0
    %1005 = vmatprep.subr.bf16.mxu0 0
    %1006 = vmatpush2.bf16.msra.mxu0 0
    %1007 = vmatprep.subr.bf16.mxu0 0
    %1008 = vmatpush2.bf16.msra.mxu0 0
    %1009 = vmatprep.subr.bf16.mxu0 0
    %1010 = vmatpush2.bf16.msra.mxu0 0
    %1011 = vmatprep.subr.bf16.mxu0 0
    %1012 = vmatpush2.bf16.msra.mxu0 0
    %1013 = vmatprep.subr.bf16.mxu0 0
    %1014 = vmatpush2.bf16.msra.mxu0 0
    %1015 = vmatprep.subr.bf16.mxu0 0
    %1016 = vmatpush2.bf16.msra.mxu0 0
    %1017 = vmatprep.mubr.bf16.mxu0 0
    %1018 = vmatmul.mubr.bf16.gmra.mxu0 %v751
    %v1019 = vpop.f32.mrf.mxu0
    %v1020 = vadd.f32 0.0, %v1019
    %v1021 = vpop.f32.mrf.mxu0
    %v1022 = vadd.f32 0.0, %v1021
    %v1023 = vpop.f32.mrf.mxu0
    %v1024 = vpop.f32.mrf.mxu0
    %1025 = vdwg.mxu0
    %v1026 = vadd.f32 %v747, %v979
    %v1027 = vadd.f32 %v748, %v981
    %v1028 = vadd.f32 %v749, %v1020
    %v1029 = vadd.f32 %v750, %v1022
    %v1030 = vxor.u32 %v1026, 2147483648
    %v1031 = vmul.f32 %v1030, 1.442695
    %v1032 = vpow.pop %v1031
    %v1033 = vadd.f32 %v1032, 1.0
    %v1034 = vrcp.pop %v1033
    %v1035 = vmul.f32 1.0, %v1034
    %v1036 = vxor.u32 %v1027, 2147483648
    %v1037 = vmul.f32 %v1036, 1.442695
    %v1038 = vpow.pop %v1037
    %v1039 = vadd.f32 %v1038, 1.0
    %v1040 = vrcp.pop %v1039
    %v1041 = vmul.f32 1.0, %v1040
    %v1042 = vtanh.pop %v1028
    %v1043 = vxor.u32 %v1029, 2147483648
    %v1044 = vmul.f32 %v1043, 1.442695
    %v1045 = vpow.pop %v1044
    %v1046 = vadd.f32 %v1045, 1.0
    %v1047 = vrcp.pop %v1046
    %v1048 = vmul.f32 1.0, %v1047
    %v1049 = vld [vmem:[#allocation3] sm:$0xff]
    %v1050 = vmul.f32 %v1041, %v1049
    %v1051 = vmul.f32 %v1035, %v1042
    %v1052 = vadd.f32 %v1050, %v1051
    %v1053 = vtanh.pop %v1052
    %v1054 = vmul.f32 %v1048, %v1053
    %v1055 = vpack.c.bf16 %v1054, %v1054
    %s1056 = sadd.s32 %s53, 2
    %v1057 = vstv %s1056
    %vm1058 = vcmp.lt.s32.totalorder %v1057, %v54
    %v1059 = vsel %vm1058, 1, 0
    %1060 = vset.pattern.permute.xlu0 0
    %1061 = vperm.xlu0 %1060, %v1059
    %v1062 = vpop.permute.xlu0 %1061
    %vm1063 = vcmp.eq.s32.totalorder %v1062, 1
    %v1064 = vsel %vm1063, %v1052, %v1049
    %1065 = vst [vmem:[#allocation3] sm:$0xff] %v1064
    %v1066 = vld [vmem:[#allocation2] sm:$0xf]
    %vm1067 = vmpackc.low %vm1063, %vm1063
    %v1068 = vsel %vm1067, %v1055, %v1066
    %1069 = vst [vmem:[#allocation2] sm:$0xf] %v1068
    %v1070 = vsel %vm1067, %v1055, 0
    %s1071 = scalar_lea.vmem [#allocation9], 8
    %1072 = vst [vmem:[%s1071] sm:$0xf] %v1070
    %s1073 = scalar_lea.vmem [#allocation4], 48
    %v1074 = vld [vmem:[%s1073] sm:$0xff]
    %v1075 = vld [vmem:[%s1073 + $0x8] sm:$0xff]
    %v1076 = vunpack.c.l.bf16 %v1074
    %v1077 = vunpack.c.h.bf16 %v1074
    %v1078 = vunpack.c.l.bf16 %v1075
    %v1079 = vunpack.c.h.bf16 %v1075
    %v1080 = vadd.f32 %v1076, %v60
    %v1081 = vadd.f32 %v1077, %v64
    %v1082 = vadd.f32 %v1078, %v68
    %v1083 = vadd.f32 %v1079, %v72
    %v1084 = vld [vmem:[#allocation2] sm:$0xf]
    %v1085 = vld [vmem:[#allocation7] sm:$0xff]
    %v1086 = vld [vmem:[#allocation7 + $0x8] sm:$0xff]
    %v1087 = vld [vmem:[#allocation7 + $0x10] sm:$0xff]
    %v1088 = vld [vmem:[#allocation7 + $0x18] sm:$0xff]
    %v1089 = vld [vmem:[#allocation7 + $0x20] sm:$0xff]
    %v1090 = vld [vmem:[#allocation7 + $0x28] sm:$0xff]
    %v1091 = vld [vmem:[#allocation7 + $0x30] sm:$0xff]
    %v1092 = vld [vmem:[#allocation7 + $0x38] sm:$0xff]
    %v1093 = vld [vmem:[#allocation7 + $0x40] sm:$0xff]
    %v1094 = vld [vmem:[#allocation7 + $0x48] sm:$0xff]
    %v1095 = vld [vmem:[#allocation7 + $0x50] sm:$0xff]
    %v1096 = vld [vmem:[#allocation7 + $0x58] sm:$0xff]
    %v1097 = vld [vmem:[#allocation7 + $0x60] sm:$0xff]
    %v1098 = vld [vmem:[#allocation7 + $0x68] sm:$0xff]
    %v1099 = vld [vmem:[#allocation7 + $0x70] sm:$0xff]
    %v1100 = vld [vmem:[#allocation7 + $0x78] sm:$0xff]
    %v1101 = vld [vmem:[#allocation7 + $0x80] sm:$0xff]
    %v1102 = vld [vmem:[#allocation7 + $0x88] sm:$0xff]
    %v1103 = vld [vmem:[#allocation7 + $0x90] sm:$0xff]
    %v1104 = vld [vmem:[#allocation7 + $0x98] sm:$0xff]
    %v1105 = vld [vmem:[#allocation7 + $0xa0] sm:$0xff]
    %v1106 = vld [vmem:[#allocation7 + $0xa8] sm:$0xff]
    %v1107 = vld [vmem:[#allocation7 + $0xb0] sm:$0xff]
    %v1108 = vld [vmem:[#allocation7 + $0xb8] sm:$0xff]
    %v1109 = vld [vmem:[#allocation7 + $0xc0] sm:$0xff]
    %v1110 = vld [vmem:[#allocation7 + $0xc8] sm:$0xff]
    %v1111 = vld [vmem:[#allocation7 + $0xd0] sm:$0xff]
    %v1112 = vld [vmem:[#allocation7 + $0xd8] sm:$0xff]
    %v1113 = vld [vmem:[#allocation7 + $0xe0] sm:$0xff]
    %v1114 = vld [vmem:[#allocation7 + $0xe8] sm:$0xff]
    %v1115 = vld [vmem:[#allocation7 + $0xf0] sm:$0xff]
    %v1116 = vld [vmem:[#allocation7 + $0xf8] sm:$0xff]
    %v1149 = vunpack.c.l.b16 %v1085
    %v1150 = vunpack.c.h.b16 %v1085
    %v1151 = vunpack.c.l.b16 %v1086
    %v1152 = vunpack.c.h.b16 %v1086
    %v1153 = vunpack.c.l.b16 %v1087
    %v1154 = vunpack.c.h.b16 %v1087
    %v1155 = vunpack.c.l.b16 %v1088
    %v1156 = vunpack.c.h.b16 %v1088
    %v1157 = vunpack.c.l.b16 %v1089
    %v1158 = vunpack.c.h.b16 %v1089
    %v1159 = vunpack.c.l.b16 %v1090
    %v1160 = vunpack.c.h.b16 %v1090
    %v1161 = vunpack.c.l.b16 %v1091
    %v1162 = vunpack.c.h.b16 %v1091
    %v1163 = vunpack.c.l.b16 %v1092
    %v1164 = vunpack.c.h.b16 %v1092
    %v1165 = vunpack.c.l.b16 %v1093
    %v1166 = vunpack.c.h.b16 %v1093
    %v1167 = vunpack.c.l.b16 %v1094
    %v1168 = vunpack.c.h.b16 %v1094
    %v1169 = vunpack.c.l.b16 %v1095
    %v1170 = vunpack.c.h.b16 %v1095
    %v1171 = vunpack.c.l.b16 %v1096
    %v1172 = vunpack.c.h.b16 %v1096
    %v1173 = vunpack.c.l.b16 %v1097
    %v1174 = vunpack.c.h.b16 %v1097
    %v1175 = vunpack.c.l.b16 %v1098
    %v1176 = vunpack.c.h.b16 %v1098
    %v1177 = vunpack.c.l.b16 %v1099
    %v1178 = vunpack.c.h.b16 %v1099
    %v1179 = vunpack.c.l.b16 %v1100
    %v1180 = vunpack.c.h.b16 %v1100
    %v1181 = vunpack.c.l.b16 %v1101
    %v1182 = vunpack.c.h.b16 %v1101
    %v1183 = vunpack.c.l.b16 %v1102
    %v1184 = vunpack.c.h.b16 %v1102
    %v1185 = vunpack.c.l.b16 %v1103
    %v1186 = vunpack.c.h.b16 %v1103
    %v1187 = vunpack.c.l.b16 %v1104
    %v1188 = vunpack.c.h.b16 %v1104
    %v1189 = vunpack.c.l.b16 %v1105
    %v1190 = vunpack.c.h.b16 %v1105
    %v1191 = vunpack.c.l.b16 %v1106
    %v1192 = vunpack.c.h.b16 %v1106
    %v1193 = vunpack.c.l.b16 %v1107
    %v1194 = vunpack.c.h.b16 %v1107
    %v1195 = vunpack.c.l.b16 %v1108
    %v1196 = vunpack.c.h.b16 %v1108
    %v1197 = vunpack.c.l.b16 %v1109
    %v1198 = vunpack.c.h.b16 %v1109
    %v1199 = vunpack.c.l.b16 %v1110
    %v1200 = vunpack.c.h.b16 %v1110
    %v1201 = vunpack.c.l.b16 %v1111
    %v1202 = vunpack.c.h.b16 %v1111
    %v1203 = vunpack.c.l.b16 %v1112
    %v1204 = vunpack.c.h.b16 %v1112
    %v1205 = vunpack.c.l.b16 %v1113
    %v1206 = vunpack.c.h.b16 %v1113
    %v1207 = vunpack.c.l.b16 %v1114
    %v1208 = vunpack.c.h.b16 %v1114
    %v1209 = vunpack.c.l.b16 %v1115
    %v1210 = vunpack.c.h.b16 %v1115
    %v1211 = vunpack.c.l.b16 %v1116
    %v1212 = vunpack.c.h.b16 %v1116
    %v1213 = vpack.c.b16 %v1153, %v1149
    %v1214 = vpack.c.b16 %v1154, %v1150
    %v1215 = vpack.c.b16 %v1155, %v1151
    %v1216 = vpack.c.b16 %v1156, %v1152
    %v1217 = vpack.c.b16 %v1161, %v1157
    %v1218 = vpack.c.b16 %v1162, %v1158
    %v1219 = vpack.c.b16 %v1163, %v1159
    %v1220 = vpack.c.b16 %v1164, %v1160
    %v1221 = vpack.c.b16 %v1169, %v1165
    %v1222 = vpack.c.b16 %v1170, %v1166
    %v1223 = vpack.c.b16 %v1171, %v1167
    %v1224 = vpack.c.b16 %v1172, %v1168
    %v1225 = vpack.c.b16 %v1177, %v1173
    %v1226 = vpack.c.b16 %v1178, %v1174
    %v1227 = vpack.c.b16 %v1179, %v1175
    %v1228 = vpack.c.b16 %v1180, %v1176
    %v1229 = vpack.c.b16 %v1185, %v1181
    %v1230 = vpack.c.b16 %v1186, %v1182
    %v1231 = vpack.c.b16 %v1187, %v1183
    %v1232 = vpack.c.b16 %v1188, %v1184
    %v1233 = vpack.c.b16 %v1193, %v1189
    %v1234 = vpack.c.b16 %v1194, %v1190
    %v1235 = vpack.c.b16 %v1195, %v1191
    %v1236 = vpack.c.b16 %v1196, %v1192
    %v1237 = vpack.c.b16 %v1201, %v1197
    %v1238 = vpack.c.b16 %v1202, %v1198
    %v1239 = vpack.c.b16 %v1203, %v1199
    %v1240 = vpack.c.b16 %v1204, %v1200
    %v1241 = vpack.c.b16 %v1209, %v1205
    %v1242 = vpack.c.b16 %v1210, %v1206
    %v1243 = vpack.c.b16 %v1211, %v1207
    %v1244 = vpack.c.b16 %v1212, %v1208
    %1277 = vmatprep.subr.bf16.mxu0 %v1242
    %1278 = vmatpush1.bf16.msra.mxu0 %v1241
    %1279 = vmatprep.subr.bf16.mxu0 %v1238
    %1280 = vmatpush1.bf16.msra.mxu0 %v1237
    %1281 = vmatprep.subr.bf16.mxu0 %v1234
    %1282 = vmatpush1.bf16.msra.mxu0 %v1233
    %1283 = vmatprep.subr.bf16.mxu0 %v1230
    %1284 = vmatpush1.bf16.msra.mxu0 %v1229
    %1285 = vmatprep.subr.bf16.mxu0 %v1226
    %1286 = vmatpush1.bf16.msra.mxu0 %v1225
    %1287 = vmatprep.subr.bf16.mxu0 %v1222
    %1288 = vmatpush1.bf16.msra.mxu0 %v1221
    %1289 = vmatprep.subr.bf16.mxu0 %v1218
    %1290 = vmatpush1.bf16.msra.mxu0 %v1217
    %1291 = vmatprep.subr.bf16.mxu0 %v1214
    %1292 = vmatpush1.bf16.msra.mxu0 %v1213
    %1293 = vmatprep.subr.bf16.mxu0 0
    %1294 = vmatpush2.bf16.msra.mxu0 0
    %1295 = vmatprep.subr.bf16.mxu0 0
    %1296 = vmatpush2.bf16.msra.mxu0 0
    %1297 = vmatprep.subr.bf16.mxu0 0
    %1298 = vmatpush2.bf16.msra.mxu0 0
    %1299 = vmatprep.subr.bf16.mxu0 0
    %1300 = vmatpush2.bf16.msra.mxu0 0
    %1301 = vmatprep.subr.bf16.mxu0 0
    %1302 = vmatpush2.bf16.msra.mxu0 0
    %1303 = vmatprep.subr.bf16.mxu0 0
    %1304 = vmatpush2.bf16.msra.mxu0 0
    %1305 = vmatprep.subr.bf16.mxu0 0
    %1306 = vmatpush2.bf16.msra.mxu0 0
    %1307 = vmatprep.subr.bf16.mxu0 0
    %1308 = vmatpush2.bf16.msra.mxu0 0
    %1309 = vmatprep.mubr.bf16.mxu0 0
    %1310 = vmatmul.mubr.bf16.gmra.mxu0 %v1084
    %v1311 = vpop.f32.mrf.mxu0
    %v1312 = vadd.f32 0.0, %v1311
    %v1313 = vpop.f32.mrf.mxu0
    %v1314 = vadd.f32 0.0, %v1313
    %v1315 = vpop.f32.mrf.mxu0
    %v1316 = vpop.f32.mrf.mxu0
    %1317 = vdwg.mxu0
    %1318 = vmatprep.subr.bf16.mxu0 %v1244
    %1319 = vmatpush1.bf16.msra.mxu0 %v1243
    %1320 = vmatprep.subr.bf16.mxu0 %v1240
    %1321 = vmatpush1.bf16.msra.mxu0 %v1239
    %1322 = vmatprep.subr.bf16.mxu0 %v1236
    %1323 = vmatpush1.bf16.msra.mxu0 %v1235
    %1324 = vmatprep.subr.bf16.mxu0 %v1232
    %1325 = vmatpush1.bf16.msra.mxu0 %v1231
    %1326 = vmatprep.subr.bf16.mxu0 %v1228
    %1327 = vmatpush1.bf16.msra.mxu0 %v1227
    %1328 = vmatprep.subr.bf16.mxu0 %v1224
    %1329 = vmatpush1.bf16.msra.mxu0 %v1223
    %1330 = vmatprep.subr.bf16.mxu0 %v1220
    %1331 = vmatpush1.bf16.msra.mxu0 %v1219
    %1332 = vmatprep.subr.bf16.mxu0 %v1216
    %1333 = vmatpush1.bf16.msra.mxu0 %v1215
    %1334 = vmatprep.subr.bf16.mxu0 0
    %1335 = vmatpush2.bf16.msra.mxu0 0
    %1336 = vmatprep.subr.bf16.mxu0 0
    %1337 = vmatpush2.bf16.msra.mxu0 0
    %1338 = vmatprep.subr.bf16.mxu0 0
    %1339 = vmatpush2.bf16.msra.mxu0 0
    %1340 = vmatprep.subr.bf16.mxu0 0
    %1341 = vmatpush2.bf16.msra.mxu0 0
    %1342 = vmatprep.subr.bf16.mxu0 0
    %1343 = vmatpush2.bf16.msra.mxu0 0
    %1344 = vmatprep.subr.bf16.mxu0 0
    %1345 = vmatpush2.bf16.msra.mxu0 0
    %1346 = vmatprep.subr.bf16.mxu0 0
    %1347 = vmatpush2.bf16.msra.mxu0 0
    %1348 = vmatprep.subr.bf16.mxu0 0
    %1349 = vmatpush2.bf16.msra.mxu0 0
    %1350 = vmatprep.mubr.bf16.mxu0 0
    %1351 = vmatmul.mubr.bf16.gmra.mxu0 %v1084
    %v1352 = vpop.f32.mrf.mxu0
    %v1353 = vadd.f32 0.0, %v1352
    %v1354 = vpop.f32.mrf.mxu0
    %v1355 = vadd.f32 0.0, %v1354
    %v1356 = vpop.f32.mrf.mxu0
    %v1357 = vpop.f32.mrf.mxu0
    %1358 = vdwg.mxu0
    %v1359 = vadd.f32 %v1080, %v1312
    %v1360 = vadd.f32 %v1081, %v1314
    %v1361 = vadd.f32 %v1082, %v1353
    %v1362 = vadd.f32 %v1083, %v1355
    %v1363 = vxor.u32 %v1359, 2147483648
    %v1364 = vmul.f32 %v1363, 1.442695
    %v1365 = vpow.pop %v1364
    %v1366 = vadd.f32 %v1365, 1.0
    %v1367 = vrcp.pop %v1366
    %v1368 = vmul.f32 1.0, %v1367
    %v1369 = vxor.u32 %v1360, 2147483648
    %v1370 = vmul.f32 %v1369, 1.442695
    %v1371 = vpow.pop %v1370
    %v1372 = vadd.f32 %v1371, 1.0
    %v1373 = vrcp.pop %v1372
    %v1374 = vmul.f32 1.0, %v1373
    %v1375 = vtanh.pop %v1361
    %v1376 = vxor.u32 %v1362, 2147483648
    %v1377 = vmul.f32 %v1376, 1.442695
    %v1378 = vpow.pop %v1377
    %v1379 = vadd.f32 %v1378, 1.0
    %v1380 = vrcp.pop %v1379
    %v1381 = vmul.f32 1.0, %v1380
    %v1382 = vld [vmem:[#allocation3] sm:$0xff]
    %v1383 = vmul.f32 %v1374, %v1382
    %v1384 = vmul.f32 %v1368, %v1375
    %v1385 = vadd.f32 %v1383, %v1384
    %v1386 = vtanh.pop %v1385
    %v1387 = vmul.f32 %v1381, %v1386
    %v1388 = vpack.c.bf16 %v1387, %v1387
    %s1389 = sadd.s32 %s53, 3
    %v1390 = vstv %s1389
    %vm1391 = vcmp.lt.s32.totalorder %v1390, %v54
    %v1392 = vsel %vm1391, 1, 0
    %1393 = vset.pattern.permute.xlu0 0
    %1394 = vperm.xlu0 %1393, %v1392
    %v1395 = vpop.permute.xlu0 %1394
    %vm1396 = vcmp.eq.s32.totalorder %v1395, 1
    %v1397 = vsel %vm1396, %v1385, %v1382
    %1398 = vst [vmem:[#allocation3] sm:$0xff] %v1397
    %v1399 = vld [vmem:[#allocation2] sm:$0xf]
    %vm1400 = vmpackc.low %vm1396, %vm1396
    %v1401 = vsel %vm1400, %v1388, %v1399
    %1402 = vst [vmem:[#allocation2] sm:$0xf] %v1401
    %v1403 = vsel %vm1400, %v1388, 0
    %s1404 = scalar_lea.vmem [#allocation9], 12
    %1405 = vst [vmem:[%s1404] sm:$0xf] %v1403
    %s1406 = scalar_lea.vmem [#allocation4], 64
    %v1407 = vld [vmem:[%s1406] sm:$0xff]
    %v1408 = vld [vmem:[%s1406 + $0x8] sm:$0xff]
    %v1409 = vunpack.c.l.bf16 %v1407
    %v1410 = vunpack.c.h.bf16 %v1407
    %v1411 = vunpack.c.l.bf16 %v1408
    %v1412 = vunpack.c.h.bf16 %v1408
    %v1413 = vadd.f32 %v1409, %v60
    %v1414 = vadd.f32 %v1410, %v64
    %v1415 = vadd.f32 %v1411, %v68
    %v1416 = vadd.f32 %v1412, %v72
    %v1417 = vld [vmem:[#allocation2] sm:$0xf]
    %v1418 = vld [vmem:[#allocation7] sm:$0xff]
    %v1419 = vld [vmem:[#allocation7 + $0x8] sm:$0xff]
    %v1420 = vld [vmem:[#allocation7 + $0x10] sm:$0xff]
    %v1421 = vld [vmem:[#allocation7 + $0x18] sm:$0xff]
    %v1422 = vld [vmem:[#allocation7 + $0x20] sm:$0xff]
    %v1423 = vld [vmem:[#allocation7 + $0x28] sm:$0xff]
    %v1424 = vld [vmem:[#allocation7 + $0x30] sm:$0xff]
    %v1425 = vld [vmem:[#allocation7 + $0x38] sm:$0xff]
    %v1426 = vld [vmem:[#allocation7 + $0x40] sm:$0xff]
    %v1427 = vld [vmem:[#allocation7 + $0x48] sm:$0xff]
    %v1428 = vld [vmem:[#allocation7 + $0x50] sm:$0xff]
    %v1429 = vld [vmem:[#allocation7 + $0x58] sm:$0xff]
    %v1430 = vld [vmem:[#allocation7 + $0x60] sm:$0xff]
    %v1431 = vld [vmem:[#allocation7 + $0x68] sm:$0xff]
    %v1432 = vld [vmem:[#allocation7 + $0x70] sm:$0xff]
    %v1433 = vld [vmem:[#allocation7 + $0x78] sm:$0xff]
    %v1434 = vld [vmem:[#allocation7 + $0x80] sm:$0xff]
    %v1435 = vld [vmem:[#allocation7 + $0x88] sm:$0xff]
    %v1436 = vld [vmem:[#allocation7 + $0x90] sm:$0xff]
    %v1437 = vld [vmem:[#allocation7 + $0x98] sm:$0xff]
    %v1438 = vld [vmem:[#allocation7 + $0xa0] sm:$0xff]
    %v1439 = vld [vmem:[#allocation7 + $0xa8] sm:$0xff]
    %v1440 = vld [vmem:[#allocation7 + $0xb0] sm:$0xff]
    %v1441 = vld [vmem:[#allocation7 + $0xb8] sm:$0xff]
    %v1442 = vld [vmem:[#allocation7 + $0xc0] sm:$0xff]
    %v1443 = vld [vmem:[#allocation7 + $0xc8] sm:$0xff]
    %v1444 = vld [vmem:[#allocation7 + $0xd0] sm:$0xff]
    %v1445 = vld [vmem:[#allocation7 + $0xd8] sm:$0xff]
    %v1446 = vld [vmem:[#allocation7 + $0xe0] sm:$0xff]
    %v1447 = vld [vmem:[#allocation7 + $0xe8] sm:$0xff]
    %v1448 = vld [vmem:[#allocation7 + $0xf0] sm:$0xff]
    %v1449 = vld [vmem:[#allocation7 + $0xf8] sm:$0xff]
    %v1482 = vunpack.c.l.b16 %v1418
    %v1483 = vunpack.c.h.b16 %v1418
    %v1484 = vunpack.c.l.b16 %v1419
    %v1485 = vunpack.c.h.b16 %v1419
    %v1486 = vunpack.c.l.b16 %v1420
    %v1487 = vunpack.c.h.b16 %v1420
    %v1488 = vunpack.c.l.b16 %v1421
    %v1489 = vunpack.c.h.b16 %v1421
    %v1490 = vunpack.c.l.b16 %v1422
    %v1491 = vunpack.c.h.b16 %v1422
    %v1492 = vunpack.c.l.b16 %v1423
    %v1493 = vunpack.c.h.b16 %v1423
    %v1494 = vunpack.c.l.b16 %v1424
    %v1495 = vunpack.c.h.b16 %v1424
    %v1496 = vunpack.c.l.b16 %v1425
    %v1497 = vunpack.c.h.b16 %v1425
    %v1498 = vunpack.c.l.b16 %v1426
    %v1499 = vunpack.c.h.b16 %v1426
    %v1500 = vunpack.c.l.b16 %v1427
    %v1501 = vunpack.c.h.b16 %v1427
    %v1502 = vunpack.c.l.b16 %v1428
    %v1503 = vunpack.c.h.b16 %v1428
    %v1504 = vunpack.c.l.b16 %v1429
    %v1505 = vunpack.c.h.b16 %v1429
    %v1506 = vunpack.c.l.b16 %v1430
    %v1507 = vunpack.c.h.b16 %v1430
    %v1508 = vunpack.c.l.b16 %v1431
    %v1509 = vunpack.c.h.b16 %v1431
    %v1510 = vunpack.c.l.b16 %v1432
    %v1511 = vunpack.c.h.b16 %v1432
    %v1512 = vunpack.c.l.b16 %v1433
    %v1513 = vunpack.c.h.b16 %v1433
    %v1514 = vunpack.c.l.b16 %v1434
    %v1515 = vunpack.c.h.b16 %v1434
    %v1516 = vunpack.c.l.b16 %v1435
    %v1517 = vunpack.c.h.b16 %v1435
    %v1518 = vunpack.c.l.b16 %v1436
    %v1519 = vunpack.c.h.b16 %v1436
    %v1520 = vunpack.c.l.b16 %v1437
    %v1521 = vunpack.c.h.b16 %v1437
    %v1522 = vunpack.c.l.b16 %v1438
    %v1523 = vunpack.c.h.b16 %v1438
    %v1524 = vunpack.c.l.b16 %v1439
    %v1525 = vunpack.c.h.b16 %v1439
    %v1526 = vunpack.c.l.b16 %v1440
    %v1527 = vunpack.c.h.b16 %v1440
    %v1528 = vunpack.c.l.b16 %v1441
    %v1529 = vunpack.c.h.b16 %v1441
    %v1530 = vunpack.c.l.b16 %v1442
    %v1531 = vunpack.c.h.b16 %v1442
    %v1532 = vunpack.c.l.b16 %v1443
    %v1533 = vunpack.c.h.b16 %v1443
    %v1534 = vunpack.c.l.b16 %v1444
    %v1535 = vunpack.c.h.b16 %v1444
    %v1536 = vunpack.c.l.b16 %v1445
    %v1537 = vunpack.c.h.b16 %v1445
    %v1538 = vunpack.c.l.b16 %v1446
    %v1539 = vunpack.c.h.b16 %v1446
    %v1540 = vunpack.c.l.b16 %v1447
    %v1541 = vunpack.c.h.b16 %v1447
    %v1542 = vunpack.c.l.b16 %v1448
    %v1543 = vunpack.c.h.b16 %v1448
    %v1544 = vunpack.c.l.b16 %v1449
    %v1545 = vunpack.c.h.b16 %v1449
    %v1546 = vpack.c.b16 %v1486, %v1482
    %v1547 = vpack.c.b16 %v1487, %v1483
    %v1548 = vpack.c.b16 %v1488, %v1484
    %v1549 = vpack.c.b16 %v1489, %v1485
    %v1550 = vpack.c.b16 %v1494, %v1490
    %v1551 = vpack.c.b16 %v1495, %v1491
    %v1552 = vpack.c.b16 %v1496, %v1492
    %v1553 = vpack.c.b16 %v1497, %v1493
    %v1554 = vpack.c.b16 %v1502, %v1498
    %v1555 = vpack.c.b16 %v1503, %v1499
    %v1556 = vpack.c.b16 %v1504, %v1500
    %v1557 = vpack.c.b16 %v1505, %v1501
    %v1558 = vpack.c.b16 %v1510, %v1506
    %v1559 = vpack.c.b16 %v1511, %v1507
    %v1560 = vpack.c.b16 %v1512, %v1508
    %v1561 = vpack.c.b16 %v1513, %v1509
    %v1562 = vpack.c.b16 %v1518, %v1514
    %v1563 = vpack.c.b16 %v1519, %v1515
    %v1564 = vpack.c.b16 %v1520, %v1516
    %v1565 = vpack.c.b16 %v1521, %v1517
    %v1566 = vpack.c.b16 %v1526, %v1522
    %v1567 = vpack.c.b16 %v1527, %v1523
    %v1568 = vpack.c.b16 %v1528, %v1524
    %v1569 = vpack.c.b16 %v1529, %v1525
    %v1570 = vpack.c.b16 %v1534, %v1530
    %v1571 = vpack.c.b16 %v1535, %v1531
    %v1572 = vpack.c.b16 %v1536, %v1532
    %v1573 = vpack.c.b16 %v1537, %v1533
    %v1574 = vpack.c.b16 %v1542, %v1538
    %v1575 = vpack.c.b16 %v1543, %v1539
    %v1576 = vpack.c.b16 %v1544, %v1540
    %v1577 = vpack.c.b16 %v1545, %v1541
    %1610 = vmatprep.subr.bf16.mxu0 %v1575
    %1611 = vmatpush1.bf16.msra.mxu0 %v1574
    %1612 = vmatprep.subr.bf16.mxu0 %v1571
    %1613 = vmatpush1.bf16.msra.mxu0 %v1570
    %1614 = vmatprep.subr.bf16.mxu0 %v1567
    %1615 = vmatpush1.bf16.msra.mxu0 %v1566
    %1616 = vmatprep.subr.bf16.mxu0 %v1563
    %1617 = vmatpush1.bf16.msra.mxu0 %v1562
    %1618 = vmatprep.subr.bf16.mxu0 %v1559
    %1619 = vmatpush1.bf16.msra.mxu0 %v1558
    %1620 = vmatprep.subr.bf16.mxu0 %v1555
    %1621 = vmatpush1.bf16.msra.mxu0 %v1554
    %1622 = vmatprep.subr.bf16.mxu0 %v1551
    %1623 = vmatpush1.bf16.msra.mxu0 %v1550
    %1624 = vmatprep.subr.bf16.mxu0 %v1547
    %1625 = vmatpush1.bf16.msra.mxu0 %v1546
    %1626 = vmatprep.subr.bf16.mxu0 0
    %1627 = vmatpush2.bf16.msra.mxu0 0
    %1628 = vmatprep.subr.bf16.mxu0 0
    %1629 = vmatpush2.bf16.msra.mxu0 0
    %1630 = vmatprep.subr.bf16.mxu0 0
    %1631 = vmatpush2.bf16.msra.mxu0 0
    %1632 = vmatprep.subr.bf16.mxu0 0
    %1633 = vmatpush2.bf16.msra.mxu0 0
    %1634 = vmatprep.subr.bf16.mxu0 0
    %1635 = vmatpush2.bf16.msra.mxu0 0
    %1636 = vmatprep.subr.bf16.mxu0 0
    %1637 = vmatpush2.bf16.msra.mxu0 0
    %1638 = vmatprep.subr.bf16.mxu0 0
    %1639 = vmatpush2.bf16.msra.mxu0 0
    %1640 = vmatprep.subr.bf16.mxu0 0
    %1641 = vmatpush2.bf16.msra.mxu0 0
    %1642 = vmatprep.mubr.bf16.mxu0 0
    %1643 = vmatmul.mubr.bf16.gmra.mxu0 %v1417
    %v1644 = vpop.f32.mrf.mxu0
    %v1645 = vadd.f32 0.0, %v1644
    %v1646 = vpop.f32.mrf.mxu0
    %v1647 = vadd.f32 0.0, %v1646
    %v1648 = vpop.f32.mrf.mxu0
    %v1649 = vpop.f32.mrf.mxu0
    %1650 = vdwg.mxu0
    %1651 = vmatprep.subr.bf16.mxu0 %v1577
    %1652 = vmatpush1.bf16.msra.mxu0 %v1576
    %1653 = vmatprep.subr.bf16.mxu0 %v1573
    %1654 = vmatpush1.bf16.msra.mxu0 %v1572
    %1655 = vmatprep.subr.bf16.mxu0 %v1569
    %1656 = vmatpush1.bf16.msra.mxu0 %v1568
    %1657 = vmatprep.subr.bf16.mxu0 %v1565
    %1658 = vmatpush1.bf16.msra.mxu0 %v1564
    %1659 = vmatprep.subr.bf16.mxu0 %v1561
    %1660 = vmatpush1.bf16.msra.mxu0 %v1560
    %1661 = vmatprep.subr.bf16.mxu0 %v1557
    %1662 = vmatpush1.bf16.msra.mxu0 %v1556
    %1663 = vmatprep.subr.bf16.mxu0 %v1553
    %1664 = vmatpush1.bf16.msra.mxu0 %v1552
    %1665 = vmatprep.subr.bf16.mxu0 %v1549
    %1666 = vmatpush1.bf16.msra.mxu0 %v1548
    %1667 = vmatprep.subr.bf16.mxu0 0
    %1668 = vmatpush2.bf16.msra.mxu0 0
    %1669 = vmatprep.subr.bf16.mxu0 0
    %1670 = vmatpush2.bf16.msra.mxu0 0
    %1671 = vmatprep.subr.bf16.mxu0 0
    %1672 = vmatpush2.bf16.msra.mxu0 0
    %1673 = vmatprep.subr.bf16.mxu0 0
    %1674 = vmatpush2.bf16.msra.mxu0 0
    %1675 = vmatprep.subr.bf16.mxu0 0
    %1676 = vmatpush2.bf16.msra.mxu0 0
    %1677 = vmatprep.subr.bf16.mxu0 0
    %1678 = vmatpush2.bf16.msra.mxu0 0
    %1679 = vmatprep.subr.bf16.mxu0 0
    %1680 = vmatpush2.bf16.msra.mxu0 0
    %1681 = vmatprep.subr.bf16.mxu0 0
    %1682 = vmatpush2.bf16.msra.mxu0 0
    %1683 = vmatprep.mubr.bf16.mxu0 0
    %1684 = vmatmul.mubr.bf16.gmra.mxu0 %v1417
    %v1685 = vpop.f32.mrf.mxu0
    %v1686 = vadd.f32 0.0, %v1685
    %v1687 = vpop.f32.mrf.mxu0
    %v1688 = vadd.f32 0.0, %v1687
    %v1689 = vpop.f32.mrf.mxu0
    %v1690 = vpop.f32.mrf.mxu0
    %1691 = vdwg.mxu0
    %v1692 = vadd.f32 %v1413, %v1645
    %v1693 = vadd.f32 %v1414, %v1647
    %v1694 = vadd.f32 %v1415, %v1686
    %v1695 = vadd.f32 %v1416, %v1688
    %v1696 = vxor.u32 %v1692, 2147483648
    %v1697 = vmul.f32 %v1696, 1.442695
    %v1698 = vpow.pop %v1697
    %v1699 = vadd.f32 %v1698, 1.0
    %v1700 = vrcp.pop %v1699
    %v1701 = vmul.f32 1.0, %v1700
    %v1702 = vxor.u32 %v1693, 2147483648
    %v1703 = vmul.f32 %v1702, 1.442695
    %v1704 = vpow.pop %v1703
    %v1705 = vadd.f32 %v1704, 1.0
    %v1706 = vrcp.pop %v1705
    %v1707 = vmul.f32 1.0, %v1706
    %v1708 = vtanh.pop %v1694
    %v1709 = vxor.u32 %v1695, 2147483648
    %v1710 = vmul.f32 %v1709, 1.442695
    %v1711 = vpow.pop %v1710
    %v1712 = vadd.f32 %v1711, 1.0
    %v1713 = vrcp.pop %v1712
    %v1714 = vmul.f32 1.0, %v1713
    %v1715 = vld [vmem:[#allocation3] sm:$0xff]
    %v1716 = vmul.f32 %v1707, %v1715
    %v1717 = vmul.f32 %v1701, %v1708
    %v1718 = vadd.f32 %v1716, %v1717
    %v1719 = vtanh.pop %v1718
    %v1720 = vmul.f32 %v1714, %v1719
    %v1721 = vpack.c.bf16 %v1720, %v1720
    %s1722 = sadd.s32 %s53, 4
    %v1723 = vstv %s1722
    %vm1724 = vcmp.lt.s32.totalorder %v1723, %v54
    %v1725 = vsel %vm1724, 1, 0
    %1726 = vset.pattern.permute.xlu0 0
    %1727 = vperm.xlu0 %1726, %v1725
    %v1728 = vpop.permute.xlu0 %1727
    %vm1729 = vcmp.eq.s32.totalorder %v1728, 1
    %v1730 = vsel %vm1729, %v1718, %v1715
    %1731 = vst [vmem:[#allocation3] sm:$0xff] %v1730
    %v1732 = vld [vmem:[#allocation2] sm:$0xf]
    %vm1733 = vmpackc.low %vm1729, %vm1729
    %v1734 = vsel %vm1733, %v1721, %v1732
    %1735 = vst [vmem:[#allocation2] sm:$0xf] %v1734
    %v1736 = vsel %vm1733, %v1721, 0
    %s1737 = scalar_lea.vmem [#allocation9], 16
    %1738 = vst [vmem:[%s1737] sm:$0xf] %v1736
    %s1739 = scalar_lea.vmem [#allocation4], 80
    %v1740 = vld [vmem:[%s1739] sm:$0xff]
    %v1741 = vld [vmem:[%s1739 + $0x8] sm:$0xff]
    %v1742 = vunpack.c.l.bf16 %v1740
    %v1743 = vunpack.c.h.bf16 %v1740
    %v1744 = vunpack.c.l.bf16 %v1741
    %v1745 = vunpack.c.h.bf16 %v1741
    %v1746 = vadd.f32 %v1742, %v60
    %v1747 = vadd.f32 %v1743, %v64
    %v1748 = vadd.f32 %v1744, %v68
    %v1749 = vadd.f32 %v1745, %v72
    %v1750 = vld [vmem:[#allocation2] sm:$0xf]
    %v1751 = vld [vmem:[#allocation7] sm:$0xff]
    %v1752 = vld [vmem:[#allocation7 + $0x8] sm:$0xff]
    %v1753 = vld [vmem:[#allocation7 + $0x10] sm:$0xff]
    %v1754 = vld [vmem:[#allocation7 + $0x18] sm:$0xff]
    %v1755 = vld [vmem:[#allocation7 + $0x20] sm:$0xff]
    %v1756 = vld [vmem:[#allocation7 + $0x28] sm:$0xff]
    %v1757 = vld [vmem:[#allocation7 + $0x30] sm:$0xff]
    %v1758 = vld [vmem:[#allocation7 + $0x38] sm:$0xff]
    %v1759 = vld [vmem:[#allocation7 + $0x40] sm:$0xff]
    %v1760 = vld [vmem:[#allocation7 + $0x48] sm:$0xff]
    %v1761 = vld [vmem:[#allocation7 + $0x50] sm:$0xff]
    %v1762 = vld [vmem:[#allocation7 + $0x58] sm:$0xff]
    %v1763 = vld [vmem:[#allocation7 + $0x60] sm:$0xff]
    %v1764 = vld [vmem:[#allocation7 + $0x68] sm:$0xff]
    %v1765 = vld [vmem:[#allocation7 + $0x70] sm:$0xff]
    %v1766 = vld [vmem:[#allocation7 + $0x78] sm:$0xff]
    %v1767 = vld [vmem:[#allocation7 + $0x80] sm:$0xff]
    %v1768 = vld [vmem:[#allocation7 + $0x88] sm:$0xff]
    %v1769 = vld [vmem:[#allocation7 + $0x90] sm:$0xff]
    %v1770 = vld [vmem:[#allocation7 + $0x98] sm:$0xff]
    %v1771 = vld [vmem:[#allocation7 + $0xa0] sm:$0xff]
    %v1772 = vld [vmem:[#allocation7 + $0xa8] sm:$0xff]
    %v1773 = vld [vmem:[#allocation7 + $0xb0] sm:$0xff]
    %v1774 = vld [vmem:[#allocation7 + $0xb8] sm:$0xff]
    %v1775 = vld [vmem:[#allocation7 + $0xc0] sm:$0xff]
    %v1776 = vld [vmem:[#allocation7 + $0xc8] sm:$0xff]
    %v1777 = vld [vmem:[#allocation7 + $0xd0] sm:$0xff]
    %v1778 = vld [vmem:[#allocation7 + $0xd8] sm:$0xff]
    %v1779 = vld [vmem:[#allocation7 + $0xe0] sm:$0xff]
    %v1780 = vld [vmem:[#allocation7 + $0xe8] sm:$0xff]
    %v1781 = vld [vmem:[#allocation7 + $0xf0] sm:$0xff]
    %v1782 = vld [vmem:[#allocation7 + $0xf8] sm:$0xff]
    %v1815 = vunpack.c.l.b16 %v1751
    %v1816 = vunpack.c.h.b16 %v1751
    %v1817 = vunpack.c.l.b16 %v1752
    %v1818 = vunpack.c.h.b16 %v1752
    %v1819 = vunpack.c.l.b16 %v1753
    %v1820 = vunpack.c.h.b16 %v1753
    %v1821 = vunpack.c.l.b16 %v1754
    %v1822 = vunpack.c.h.b16 %v1754
    %v1823 = vunpack.c.l.b16 %v1755
    %v1824 = vunpack.c.h.b16 %v1755
    %v1825 = vunpack.c.l.b16 %v1756
    %v1826 = vunpack.c.h.b16 %v1756
    %v1827 = vunpack.c.l.b16 %v1757
    %v1828 = vunpack.c.h.b16 %v1757
    %v1829 = vunpack.c.l.b16 %v1758
    %v1830 = vunpack.c.h.b16 %v1758
    %v1831 = vunpack.c.l.b16 %v1759
    %v1832 = vunpack.c.h.b16 %v1759
    %v1833 = vunpack.c.l.b16 %v1760
    %v1834 = vunpack.c.h.b16 %v1760
    %v1835 = vunpack.c.l.b16 %v1761
    %v1836 = vunpack.c.h.b16 %v1761
    %v1837 = vunpack.c.l.b16 %v1762
    %v1838 = vunpack.c.h.b16 %v1762
    %v1839 = vunpack.c.l.b16 %v1763
    %v1840 = vunpack.c.h.b16 %v1763
    %v1841 = vunpack.c.l.b16 %v1764
    %v1842 = vunpack.c.h.b16 %v1764
    %v1843 = vunpack.c.l.b16 %v1765
    %v1844 = vunpack.c.h.b16 %v1765
    %v1845 = vunpack.c.l.b16 %v1766
    %v1846 = vunpack.c.h.b16 %v1766
    %v1847 = vunpack.c.l.b16 %v1767
    %v1848 = vunpack.c.h.b16 %v1767
    %v1849 = vunpack.c.l.b16 %v1768
    %v1850 = vunpack.c.h.b16 %v1768
    %v1851 = vunpack.c.l.b16 %v1769
    %v1852 = vunpack.c.h.b16 %v1769
    %v1853 = vunpack.c.l.b16 %v1770
    %v1854 = vunpack.c.h.b16 %v1770
    %v1855 = vunpack.c.l.b16 %v1771
    %v1856 = vunpack.c.h.b16 %v1771
    %v1857 = vunpack.c.l.b16 %v1772
    %v1858 = vunpack.c.h.b16 %v1772
    %v1859 = vunpack.c.l.b16 %v1773
    %v1860 = vunpack.c.h.b16 %v1773
    %v1861 = vunpack.c.l.b16 %v1774
    %v1862 = vunpack.c.h.b16 %v1774
    %v1863 = vunpack.c.l.b16 %v1775
    %v1864 = vunpack.c.h.b16 %v1775
    %v1865 = vunpack.c.l.b16 %v1776
    %v1866 = vunpack.c.h.b16 %v1776
    %v1867 = vunpack.c.l.b16 %v1777
    %v1868 = vunpack.c.h.b16 %v1777
    %v1869 = vunpack.c.l.b16 %v1778
    %v1870 = vunpack.c.h.b16 %v1778
    %v1871 = vunpack.c.l.b16 %v1779
    %v1872 = vunpack.c.h.b16 %v1779
    %v1873 = vunpack.c.l.b16 %v1780
    %v1874 = vunpack.c.h.b16 %v1780
    %v1875 = vunpack.c.l.b16 %v1781
    %v1876 = vunpack.c.h.b16 %v1781
    %v1877 = vunpack.c.l.b16 %v1782
    %v1878 = vunpack.c.h.b16 %v1782
    %v1879 = vpack.c.b16 %v1819, %v1815
    %v1880 = vpack.c.b16 %v1820, %v1816
    %v1881 = vpack.c.b16 %v1821, %v1817
    %v1882 = vpack.c.b16 %v1822, %v1818
    %v1883 = vpack.c.b16 %v1827, %v1823
    %v1884 = vpack.c.b16 %v1828, %v1824
    %v1885 = vpack.c.b16 %v1829, %v1825
    %v1886 = vpack.c.b16 %v1830, %v1826
    %v1887 = vpack.c.b16 %v1835, %v1831
    %v1888 = vpack.c.b16 %v1836, %v1832
    %v1889 = vpack.c.b16 %v1837, %v1833
    %v1890 = vpack.c.b16 %v1838, %v1834
    %v1891 = vpack.c.b16 %v1843, %v1839
    %v1892 = vpack.c.b16 %v1844, %v1840
    %v1893 = vpack.c.b16 %v1845, %v1841
    %v1894 = vpack.c.b16 %v1846, %v1842
    %v1895 = vpack.c.b16 %v1851, %v1847
    %v1896 = vpack.c.b16 %v1852, %v1848
    %v1897 = vpack.c.b16 %v1853, %v1849
    %v1898 = vpack.c.b16 %v1854, %v1850
    %v1899 = vpack.c.b16 %v1859, %v1855
    %v1900 = vpack.c.b16 %v1860, %v1856
    %v1901 = vpack.c.b16 %v1861, %v1857
    %v1902 = vpack.c.b16 %v1862, %v1858
    %v1903 = vpack.c.b16 %v1867, %v1863
    %v1904 = vpack.c.b16 %v1868, %v1864
    %v1905 = vpack.c.b16 %v1869, %v1865
    %v1906 = vpack.c.b16 %v1870, %v1866
    %v1907 = vpack.c.b16 %v1875, %v1871
    %v1908 = vpack.c.b16 %v1876, %v1872
    %v1909 = vpack.c.b16 %v1877, %v1873
    %v1910 = vpack.c.b16 %v1878, %v1874
    %1943 = vmatprep.subr.bf16.mxu0 %v1908
    %1944 = vmatpush1.bf16.msra.mxu0 %v1907
    %1945 = vmatprep.subr.bf16.mxu0 %v1904
    %1946 = vmatpush1.bf16.msra.mxu0 %v1903
    %1947 = vmatprep.subr.bf16.mxu0 %v1900
    %1948 = vmatpush1.bf16.msra.mxu0 %v1899
    %1949 = vmatprep.subr.bf16.mxu0 %v1896
    %1950 = vmatpush1.bf16.msra.mxu0 %v1895
    %1951 = vmatprep.subr.bf16.mxu0 %v1892
    %1952 = vmatpush1.bf16.msra.mxu0 %v1891
    %1953 = vmatprep.subr.bf16.mxu0 %v1888
    %1954 = vmatpush1.bf16.msra.mxu0 %v1887
    %1955 = vmatprep.subr.bf16.mxu0 %v1884
    %1956 = vmatpush1.bf16.msra.mxu0 %v1883
    %1957 = vmatprep.subr.bf16.mxu0 %v1880
    %1958 = vmatpush1.bf16.msra.mxu0 %v1879
    %1959 = vmatprep.subr.bf16.mxu0 0
    %1960 = vmatpush2.bf16.msra.mxu0 0
    %1961 = vmatprep.subr.bf16.mxu0 0
    %1962 = vmatpush2.bf16.msra.mxu0 0
    %1963 = vmatprep.subr.bf16.mxu0 0
    %1964 = vmatpush2.bf16.msra.mxu0 0
    %1965 = vmatprep.subr.bf16.mxu0 0
    %1966 = vmatpush2.bf16.msra.mxu0 0
    %1967 = vmatprep.subr.bf16.mxu0 0
    %1968 = vmatpush2.bf16.msra.mxu0 0
    %1969 = vmatprep.subr.bf16.mxu0 0
    %1970 = vmatpush2.bf16.msra.mxu0 0
    %1971 = vmatprep.subr.bf16.mxu0 0
    %1972 = vmatpush2.bf16.msra.mxu0 0
    %1973 = vmatprep.subr.bf16.mxu0 0
    %1974 = vmatpush2.bf16.msra.mxu0 0
    %1975 = vmatprep.mubr.bf16.mxu0 0
    %1976 = vmatmul.mubr.bf16.gmra.mxu0 %v1750
    %v1977 = vpop.f32.mrf.mxu0
    %v1978 = vadd.f32 0.0, %v1977
    %v1979 = vpop.f32.mrf.mxu0
    %v1980 = vadd.f32 0.0, %v1979
    %v1981 = vpop.f32.mrf.mxu0
    %v1982 = vpop.f32.mrf.mxu0
    %1983 = vdwg.mxu0
    %1984 = vmatprep.subr.bf16.mxu0 %v1910
    %1985 = vmatpush1.bf16.msra.mxu0 %v1909
    %1986 = vmatprep.subr.bf16.mxu0 %v1906
    %1987 = vmatpush1.bf16.msra.mxu0 %v1905
    %1988 = vmatprep.subr.bf16.mxu0 %v1902
    %1989 = vmatpush1.bf16.msra.mxu0 %v1901
    %1990 = vmatprep.subr.bf16.mxu0 %v1898
    %1991 = vmatpush1.bf16.msra.mxu0 %v1897
    %1992 = vmatprep.subr.bf16.mxu0 %v1894
    %1993 = vmatpush1.bf16.msra.mxu0 %v1893
    %1994 = vmatprep.subr.bf16.mxu0 %v1890
    %1995 = vmatpush1.bf16.msra.mxu0 %v1889
    %1996 = vmatprep.subr.bf16.mxu0 %v1886
    %1997 = vmatpush1.bf16.msra.mxu0 %v1885
    %1998 = vmatprep.subr.bf16.mxu0 %v1882
    %1999 = vmatpush1.bf16.msra.mxu0 %v1881
    %2000 = vmatprep.subr.bf16.mxu0 0
    %2001 = vmatpush2.bf16.msra.mxu0 0
    %2002 = vmatprep.subr.bf16.mxu0 0
    %2003 = vmatpush2.bf16.msra.mxu0 0
    %2004 = vmatprep.subr.bf16.mxu0 0
    %2005 = vmatpush2.bf16.msra.mxu0 0
    %2006 = vmatprep.subr.bf16.mxu0 0
    %2007 = vmatpush2.bf16.msra.mxu0 0
    %2008 = vmatprep.subr.bf16.mxu0 0
    %2009 = vmatpush2.bf16.msra.mxu0 0
    %2010 = vmatprep.subr.bf16.mxu0 0
    %2011 = vmatpush2.bf16.msra.mxu0 0
    %2012 = vmatprep.subr.bf16.mxu0 0
    %2013 = vmatpush2.bf16.msra.mxu0 0
    %2014 = vmatprep.subr.bf16.mxu0 0
    %2015 = vmatpush2.bf16.msra.mxu0 0
    %2016 = vmatprep.mubr.bf16.mxu0 0
    %2017 = vmatmul.mubr.bf16.gmra.mxu0 %v1750
    %v2018 = vpop.f32.mrf.mxu0
    %v2019 = vadd.f32 0.0, %v2018
    %v2020 = vpop.f32.mrf.mxu0
    %v2021 = vadd.f32 0.0, %v2020
    %v2022 = vpop.f32.mrf.mxu0
    %v2023 = vpop.f32.mrf.mxu0
    %2024 = vdwg.mxu0
    %v2025 = vadd.f32 %v1746, %v1978
    %v2026 = vadd.f32 %v1747, %v1980
    %v2027 = vadd.f32 %v1748, %v2019
    %v2028 = vadd.f32 %v1749, %v2021
    %v2029 = vxor.u32 %v2025, 2147483648
    %v2030 = vmul.f32 %v2029, 1.442695
    %v2031 = vpow.pop %v2030
    %v2032 = vadd.f32 %v2031, 1.0
    %v2033 = vrcp.pop %v2032
    %v2034 = vmul.f32 1.0, %v2033
    %v2035 = vxor.u32 %v2026, 2147483648
    %v2036 = vmul.f32 %v2035, 1.442695
    %v2037 = vpow.pop %v2036
    %v2038 = vadd.f32 %v2037, 1.0
    %v2039 = vrcp.pop %v2038
    %v2040 = vmul.f32 1.0, %v2039
    %v2041 = vtanh.pop %v2027
    %v2042 = vxor.u32 %v2028, 2147483648
    %v2043 = vmul.f32 %v2042, 1.442695
    %v2044 = vpow.pop %v2043
    %v2045 = vadd.f32 %v2044, 1.0
    %v2046 = vrcp.pop %v2045
    %v2047 = vmul.f32 1.0, %v2046
    %v2048 = vld [vmem:[#allocation3] sm:$0xff]
    %v2049 = vmul.f32 %v2040, %v2048
    %v2050 = vmul.f32 %v2034, %v2041
    %v2051 = vadd.f32 %v2049, %v2050
    %v2052 = vtanh.pop %v2051
    %v2053 = vmul.f32 %v2047, %v2052
    %v2054 = vpack.c.bf16 %v2053, %v2053
    %s2055 = sadd.s32 %s53, 5
    %v2056 = vstv %s2055
    %vm2057 = vcmp.lt.s32.totalorder %v2056, %v54
    %v2058 = vsel %vm2057, 1, 0
    %2059 = vset.pattern.permute.xlu0 0
    %2060 = vperm.xlu0 %2059, %v2058
    %v2061 = vpop.permute.xlu0 %2060
    %vm2062 = vcmp.eq.s32.totalorder %v2061, 1
    %v2063 = vsel %vm2062, %v2051, %v2048
    %2064 = vst [vmem:[#allocation3] sm:$0xff] %v2063
    %v2065 = vld [vmem:[#allocation2] sm:$0xf]
    %vm2066 = vmpackc.low %vm2062, %vm2062
    %v2067 = vsel %vm2066, %v2054, %v2065
    %2068 = vst [vmem:[#allocation2] sm:$0xf] %v2067
    %v2069 = vsel %vm2066, %v2054, 0
    %s2070 = scalar_lea.vmem [#allocation9], 20
    %2071 = vst [vmem:[%s2070] sm:$0xf] %v2069
    %s2072 = scalar_lea.vmem [#allocation4], 96
    %v2073 = vld [vmem:[%s2072] sm:$0xff]
    %v2074 = vld [vmem:[%s2072 + $0x8] sm:$0xff]
    %v2075 = vunpack.c.l.bf16 %v2073
    %v2076 = vunpack.c.h.bf16 %v2073
    %v2077 = vunpack.c.l.bf16 %v2074
    %v2078 = vunpack.c.h.bf16 %v2074
    %v2079 = vadd.f32 %v2075, %v60
    %v2080 = vadd.f32 %v2076, %v64
    %v2081 = vadd.f32 %v2077, %v68
    %v2082 = vadd.f32 %v2078, %v72
    %v2083 = vld [vmem:[#allocation2] sm:$0xf]
    %v2084 = vld [vmem:[#allocation7] sm:$0xff]
    %v2085 = vld [vmem:[#allocation7 + $0x8] sm:$0xff]
    %v2086 = vld [vmem:[#allocation7 + $0x10] sm:$0xff]
    %v2087 = vld [vmem:[#allocation7 + $0x18] sm:$0xff]
    %v2088 = vld [vmem:[#allocation7 + $0x20] sm:$0xff]
    %v2089 = vld [vmem:[#allocation7 + $0x28] sm:$0xff]
    %v2090 = vld [vmem:[#allocation7 + $0x30] sm:$0xff]
    %v2091 = vld [vmem:[#allocation7 + $0x38] sm:$0xff]
    %v2092 = vld [vmem:[#allocation7 + $0x40] sm:$0xff]
    %v2093 = vld [vmem:[#allocation7 + $0x48] sm:$0xff]
    %v2094 = vld [vmem:[#allocation7 + $0x50] sm:$0xff]
    %v2095 = vld [vmem:[#allocation7 + $0x58] sm:$0xff]
    %v2096 = vld [vmem:[#allocation7 + $0x60] sm:$0xff]
    %v2097 = vld [vmem:[#allocation7 + $0x68] sm:$0xff]
    %v2098 = vld [vmem:[#allocation7 + $0x70] sm:$0xff]
    %v2099 = vld [vmem:[#allocation7 + $0x78] sm:$0xff]
    %v2100 = vld [vmem:[#allocation7 + $0x80] sm:$0xff]
    %v2101 = vld [vmem:[#allocation7 + $0x88] sm:$0xff]
    %v2102 = vld [vmem:[#allocation7 + $0x90] sm:$0xff]
    %v2103 = vld [vmem:[#allocation7 + $0x98] sm:$0xff]
    %v2104 = vld [vmem:[#allocation7 + $0xa0] sm:$0xff]
    %v2105 = vld [vmem:[#allocation7 + $0xa8] sm:$0xff]
    %v2106 = vld [vmem:[#allocation7 + $0xb0] sm:$0xff]
    %v2107 = vld [vmem:[#allocation7 + $0xb8] sm:$0xff]
    %v2108 = vld [vmem:[#allocation7 + $0xc0] sm:$0xff]
    %v2109 = vld [vmem:[#allocation7 + $0xc8] sm:$0xff]
    %v2110 = vld [vmem:[#allocation7 + $0xd0] sm:$0xff]
    %v2111 = vld [vmem:[#allocation7 + $0xd8] sm:$0xff]
    %v2112 = vld [vmem:[#allocation7 + $0xe0] sm:$0xff]
    %v2113 = vld [vmem:[#allocation7 + $0xe8] sm:$0xff]
    %v2114 = vld [vmem:[#allocation7 + $0xf0] sm:$0xff]
    %v2115 = vld [vmem:[#allocation7 + $0xf8] sm:$0xff]
    %v2148 = vunpack.c.l.b16 %v2084
    %v2149 = vunpack.c.h.b16 %v2084
    %v2150 = vunpack.c.l.b16 %v2085
    %v2151 = vunpack.c.h.b16 %v2085
    %v2152 = vunpack.c.l.b16 %v2086
    %v2153 = vunpack.c.h.b16 %v2086
    %v2154 = vunpack.c.l.b16 %v2087
    %v2155 = vunpack.c.h.b16 %v2087
    %v2156 = vunpack.c.l.b16 %v2088
    %v2157 = vunpack.c.h.b16 %v2088
    %v2158 = vunpack.c.l.b16 %v2089
    %v2159 = vunpack.c.h.b16 %v2089
    %v2160 = vunpack.c.l.b16 %v2090
    %v2161 = vunpack.c.h.b16 %v2090
    %v2162 = vunpack.c.l.b16 %v2091
    %v2163 = vunpack.c.h.b16 %v2091
    %v2164 = vunpack.c.l.b16 %v2092
    %v2165 = vunpack.c.h.b16 %v2092
    %v2166 = vunpack.c.l.b16 %v2093
    %v2167 = vunpack.c.h.b16 %v2093
    %v2168 = vunpack.c.l.b16 %v2094
    %v2169 = vunpack.c.h.b16 %v2094
    %v2170 = vunpack.c.l.b16 %v2095
    %v2171 = vunpack.c.h.b16 %v2095
    %v2172 = vunpack.c.l.b16 %v2096
    %v2173 = vunpack.c.h.b16 %v2096
    %v2174 = vunpack.c.l.b16 %v2097
    %v2175 = vunpack.c.h.b16 %v2097
    %v2176 = vunpack.c.l.b16 %v2098
    %v2177 = vunpack.c.h.b16 %v2098
    %v2178 = vunpack.c.l.b16 %v2099
    %v2179 = vunpack.c.h.b16 %v2099
    %v2180 = vunpack.c.l.b16 %v2100
    %v2181 = vunpack.c.h.b16 %v2100
    %v2182 = vunpack.c.l.b16 %v2101
    %v2183 = vunpack.c.h.b16 %v2101
    %v2184 = vunpack.c.l.b16 %v2102
    %v2185 = vunpack.c.h.b16 %v2102
    %v2186 = vunpack.c.l.b16 %v2103
    %v2187 = vunpack.c.h.b16 %v2103
    %v2188 = vunpack.c.l.b16 %v2104
    %v2189 = vunpack.c.h.b16 %v2104
    %v2190 = vunpack.c.l.b16 %v2105
    %v2191 = vunpack.c.h.b16 %v2105
    %v2192 = vunpack.c.l.b16 %v2106
    %v2193 = vunpack.c.h.b16 %v2106
    %v2194 = vunpack.c.l.b16 %v2107
    %v2195 = vunpack.c.h.b16 %v2107
    %v2196 = vunpack.c.l.b16 %v2108
    %v2197 = vunpack.c.h.b16 %v2108
    %v2198 = vunpack.c.l.b16 %v2109
    %v2199 = vunpack.c.h.b16 %v2109
    %v2200 = vunpack.c.l.b16 %v2110
    %v2201 = vunpack.c.h.b16 %v2110
    %v2202 = vunpack.c.l.b16 %v2111
    %v2203 = vunpack.c.h.b16 %v2111
    %v2204 = vunpack.c.l.b16 %v2112
    %v2205 = vunpack.c.h.b16 %v2112
    %v2206 = vunpack.c.l.b16 %v2113
    %v2207 = vunpack.c.h.b16 %v2113
    %v2208 = vunpack.c.l.b16 %v2114
    %v2209 = vunpack.c.h.b16 %v2114
    %v2210 = vunpack.c.l.b16 %v2115
    %v2211 = vunpack.c.h.b16 %v2115
    %v2212 = vpack.c.b16 %v2152, %v2148
    %v2213 = vpack.c.b16 %v2153, %v2149
    %v2214 = vpack.c.b16 %v2154, %v2150
    %v2215 = vpack.c.b16 %v2155, %v2151
    %v2216 = vpack.c.b16 %v2160, %v2156
    %v2217 = vpack.c.b16 %v2161, %v2157
    %v2218 = vpack.c.b16 %v2162, %v2158
    %v2219 = vpack.c.b16 %v2163, %v2159
    %v2220 = vpack.c.b16 %v2168, %v2164
    %v2221 = vpack.c.b16 %v2169, %v2165
    %v2222 = vpack.c.b16 %v2170, %v2166
    %v2223 = vpack.c.b16 %v2171, %v2167
    %v2224 = vpack.c.b16 %v2176, %v2172
    %v2225 = vpack.c.b16 %v2177, %v2173
    %v2226 = vpack.c.b16 %v2178, %v2174
    %v2227 = vpack.c.b16 %v2179, %v2175
    %v2228 = vpack.c.b16 %v2184, %v2180
    %v2229 = vpack.c.b16 %v2185, %v2181
    %v2230 = vpack.c.b16 %v2186, %v2182
    %v2231 = vpack.c.b16 %v2187, %v2183
    %v2232 = vpack.c.b16 %v2192, %v2188
    %v2233 = vpack.c.b16 %v2193, %v2189
    %v2234 = vpack.c.b16 %v2194, %v2190
    %v2235 = vpack.c.b16 %v2195, %v2191
    %v2236 = vpack.c.b16 %v2200, %v2196
    %v2237 = vpack.c.b16 %v2201, %v2197
    %v2238 = vpack.c.b16 %v2202, %v2198
    %v2239 = vpack.c.b16 %v2203, %v2199
    %v2240 = vpack.c.b16 %v2208, %v2204
    %v2241 = vpack.c.b16 %v2209, %v2205
    %v2242 = vpack.c.b16 %v2210, %v2206
    %v2243 = vpack.c.b16 %v2211, %v2207
    %2276 = vmatprep.subr.bf16.mxu0 %v2241
    %2277 = vmatpush1.bf16.msra.mxu0 %v2240
    %2278 = vmatprep.subr.bf16.mxu0 %v2237
    %2279 = vmatpush1.bf16.msra.mxu0 %v2236
    %2280 = vmatprep.subr.bf16.mxu0 %v2233
    %2281 = vmatpush1.bf16.msra.mxu0 %v2232
    %2282 = vmatprep.subr.bf16.mxu0 %v2229
    %2283 = vmatpush1.bf16.msra.mxu0 %v2228
    %2284 = vmatprep.subr.bf16.mxu0 %v2225
    %2285 = vmatpush1.bf16.msra.mxu0 %v2224
    %2286 = vmatprep.subr.bf16.mxu0 %v2221
    %2287 = vmatpush1.bf16.msra.mxu0 %v2220
    %2288 = vmatprep.subr.bf16.mxu0 %v2217
    %2289 = vmatpush1.bf16.msra.mxu0 %v2216
    %2290 = vmatprep.subr.bf16.mxu0 %v2213
    %2291 = vmatpush1.bf16.msra.mxu0 %v2212
    %2292 = vmatprep.subr.bf16.mxu0 0
    %2293 = vmatpush2.bf16.msra.mxu0 0
    %2294 = vmatprep.subr.bf16.mxu0 0
    %2295 = vmatpush2.bf16.msra.mxu0 0
    %2296 = vmatprep.subr.bf16.mxu0 0
    %2297 = vmatpush2.bf16.msra.mxu0 0
    %2298 = vmatprep.subr.bf16.mxu0 0
    %2299 = vmatpush2.bf16.msra.mxu0 0
    %2300 = vmatprep.subr.bf16.mxu0 0
    %2301 = vmatpush2.bf16.msra.mxu0 0
    %2302 = vmatprep.subr.bf16.mxu0 0
    %2303 = vmatpush2.bf16.msra.mxu0 0
    %2304 = vmatprep.subr.bf16.mxu0 0
    %2305 = vmatpush2.bf16.msra.mxu0 0
    %2306 = vmatprep.subr.bf16.mxu0 0
    %2307 = vmatpush2.bf16.msra.mxu0 0
    %2308 = vmatprep.mubr.bf16.mxu0 0
    %2309 = vmatmul.mubr.bf16.gmra.mxu0 %v2083
    %v2310 = vpop.f32.mrf.mxu0
    %v2311 = vadd.f32 0.0, %v2310
    %v2312 = vpop.f32.mrf.mxu0
    %v2313 = vadd.f32 0.0, %v2312
    %v2314 = vpop.f32.mrf.mxu0
    %v2315 = vpop.f32.mrf.mxu0
    %2316 = vdwg.mxu0
    %2317 = vmatprep.subr.bf16.mxu0 %v2243
    %2318 = vmatpush1.bf16.msra.mxu0 %v2242
    %2319 = vmatprep.subr.bf16.mxu0 %v2239
    %2320 = vmatpush1.bf16.msra.mxu0 %v2238
    %2321 = vmatprep.subr.bf16.mxu0 %v2235
    %2322 = vmatpush1.bf16.msra.mxu0 %v2234
    %2323 = vmatprep.subr.bf16.mxu0 %v2231
    %2324 = vmatpush1.bf16.msra.mxu0 %v2230
    %2325 = vmatprep.subr.bf16.mxu0 %v2227
    %2326 = vmatpush1.bf16.msra.mxu0 %v2226
    %2327 = vmatprep.subr.bf16.mxu0 %v2223
    %2328 = vmatpush1.bf16.msra.mxu0 %v2222
    %2329 = vmatprep.subr.bf16.mxu0 %v2219
    %2330 = vmatpush1.bf16.msra.mxu0 %v2218
    %2331 = vmatprep.subr.bf16.mxu0 %v2215
    %2332 = vmatpush1.bf16.msra.mxu0 %v2214
    %2333 = vmatprep.subr.bf16.mxu0 0
    %2334 = vmatpush2.bf16.msra.mxu0 0
    %2335 = vmatprep.subr.bf16.mxu0 0
    %2336 = vmatpush2.bf16.msra.mxu0 0
    %2337 = vmatprep.subr.bf16.mxu0 0
    %2338 = vmatpush2.bf16.msra.mxu0 0
    %2339 = vmatprep.subr.bf16.mxu0 0
    %2340 = vmatpush2.bf16.msra.mxu0 0
    %2341 = vmatprep.subr.bf16.mxu0 0
    %2342 = vmatpush2.bf16.msra.mxu0 0
    %2343 = vmatprep.subr.bf16.mxu0 0
    %2344 = vmatpush2.bf16.msra.mxu0 0
    %2345 = vmatprep.subr.bf16.mxu0 0
    %2346 = vmatpush2.bf16.msra.mxu0 0
    %2347 = vmatprep.subr.bf16.mxu0 0
    %2348 = vmatpush2.bf16.msra.mxu0 0
    %2349 = vmatprep.mubr.bf16.mxu0 0
    %2350 = vmatmul.mubr.bf16.gmra.mxu0 %v2083
    %v2351 = vpop.f32.mrf.mxu0
    %v2352 = vadd.f32 0.0, %v2351
    %v2353 = vpop.f32.mrf.mxu0
    %v2354 = vadd.f32 0.0, %v2353
    %v2355 = vpop.f32.mrf.mxu0
    %v2356 = vpop.f32.mrf.mxu0
    %2357 = vdwg.mxu0
    %v2358 = vadd.f32 %v2079, %v2311
    %v2359 = vadd.f32 %v2080, %v2313
    %v2360 = vadd.f32 %v2081, %v2352
    %v2361 = vadd.f32 %v2082, %v2354
    %v2362 = vxor.u32 %v2358, 2147483648
    %v2363 = vmul.f32 %v2362, 1.442695
    %v2364 = vpow.pop %v2363
    %v2365 = vadd.f32 %v2364, 1.0
    %v2366 = vrcp.pop %v2365
    %v2367 = vmul.f32 1.0, %v2366
    %v2368 = vxor.u32 %v2359, 2147483648
    %v2369 = vmul.f32 %v2368, 1.442695
    %v2370 = vpow.pop %v2369
    %v2371 = vadd.f32 %v2370, 1.0
    %v2372 = vrcp.pop %v2371
    %v2373 = vmul.f32 1.0, %v2372
    %v2374 = vtanh.pop %v2360
    %v2375 = vxor.u32 %v2361, 2147483648
    %v2376 = vmul.f32 %v2375, 1.442695
    %v2377 = vpow.pop %v2376
    %v2378 = vadd.f32 %v2377, 1.0
    %v2379 = vrcp.pop %v2378
    %v2380 = vmul.f32 1.0, %v2379
    %v2381 = vld [vmem:[#allocation3] sm:$0xff]
    %v2382 = vmul.f32 %v2373, %v2381
    %v2383 = vmul.f32 %v2367, %v2374
    %v2384 = vadd.f32 %v2382, %v2383
    %v2385 = vtanh.pop %v2384
    %v2386 = vmul.f32 %v2380, %v2385
    %v2387 = vpack.c.bf16 %v2386, %v2386
    %s2388 = sadd.s32 %s53, 6
    %v2389 = vstv %s2388
    %vm2390 = vcmp.lt.s32.totalorder %v2389, %v54
    %v2391 = vsel %vm2390, 1, 0
    %2392 = vset.pattern.permute.xlu0 0
    %2393 = vperm.xlu0 %2392, %v2391
    %v2394 = vpop.permute.xlu0 %2393
    %vm2395 = vcmp.eq.s32.totalorder %v2394, 1
    %v2396 = vsel %vm2395, %v2384, %v2381
    %2397 = vst [vmem:[#allocation3] sm:$0xff] %v2396
    %v2398 = vld [vmem:[#allocation2] sm:$0xf]
    %vm2399 = vmpackc.low %vm2395, %vm2395
    %v2400 = vsel %vm2399, %v2387, %v2398
    %2401 = vst [vmem:[#allocation2] sm:$0xf] %v2400
    %v2402 = vsel %vm2399, %v2387, 0
    %s2403 = scalar_lea.vmem [#allocation9], 24
    %2404 = vst [vmem:[%s2403] sm:$0xf] %v2402
    %s2405 = scalar_lea.vmem [#allocation4], 112
    %v2406 = vld [vmem:[%s2405] sm:$0xff]
    %v2407 = vld [vmem:[%s2405 + $0x8] sm:$0xff]
    %v2408 = vunpack.c.l.bf16 %v2406
    %v2409 = vunpack.c.h.bf16 %v2406
    %v2410 = vunpack.c.l.bf16 %v2407
    %v2411 = vunpack.c.h.bf16 %v2407
    %v2412 = vadd.f32 %v2408, %v60
    %v2413 = vadd.f32 %v2409, %v64
    %v2414 = vadd.f32 %v2410, %v68
    %v2415 = vadd.f32 %v2411, %v72
    %v2416 = vld [vmem:[#allocation2] sm:$0xf]
    %v2417 = vld [vmem:[#allocation7] sm:$0xff]
    %v2418 = vld [vmem:[#allocation7 + $0x8] sm:$0xff]
    %v2419 = vld [vmem:[#allocation7 + $0x10] sm:$0xff]
    %v2420 = vld [vmem:[#allocation7 + $0x18] sm:$0xff]
    %v2421 = vld [vmem:[#allocation7 + $0x20] sm:$0xff]
    %v2422 = vld [vmem:[#allocation7 + $0x28] sm:$0xff]
    %v2423 = vld [vmem:[#allocation7 + $0x30] sm:$0xff]
    %v2424 = vld [vmem:[#allocation7 + $0x38] sm:$0xff]
    %v2425 = vld [vmem:[#allocation7 + $0x40] sm:$0xff]
    %v2426 = vld [vmem:[#allocation7 + $0x48] sm:$0xff]
    %v2427 = vld [vmem:[#allocation7 + $0x50] sm:$0xff]
    %v2428 = vld [vmem:[#allocation7 + $0x58] sm:$0xff]
    %v2429 = vld [vmem:[#allocation7 + $0x60] sm:$0xff]
    %v2430 = vld [vmem:[#allocation7 + $0x68] sm:$0xff]
    %v2431 = vld [vmem:[#allocation7 + $0x70] sm:$0xff]
    %v2432 = vld [vmem:[#allocation7 + $0x78] sm:$0xff]
    %v2433 = vld [vmem:[#allocation7 + $0x80] sm:$0xff]
    %v2434 = vld [vmem:[#allocation7 + $0x88] sm:$0xff]
    %v2435 = vld [vmem:[#allocation7 + $0x90] sm:$0xff]
    %v2436 = vld [vmem:[#allocation7 + $0x98] sm:$0xff]
    %v2437 = vld [vmem:[#allocation7 + $0xa0] sm:$0xff]
    %v2438 = vld [vmem:[#allocation7 + $0xa8] sm:$0xff]
    %v2439 = vld [vmem:[#allocation7 + $0xb0] sm:$0xff]
    %v2440 = vld [vmem:[#allocation7 + $0xb8] sm:$0xff]
    %v2441 = vld [vmem:[#allocation7 + $0xc0] sm:$0xff]
    %v2442 = vld [vmem:[#allocation7 + $0xc8] sm:$0xff]
    %v2443 = vld [vmem:[#allocation7 + $0xd0] sm:$0xff]
    %v2444 = vld [vmem:[#allocation7 + $0xd8] sm:$0xff]
    %v2445 = vld [vmem:[#allocation7 + $0xe0] sm:$0xff]
    %v2446 = vld [vmem:[#allocation7 + $0xe8] sm:$0xff]
    %v2447 = vld [vmem:[#allocation7 + $0xf0] sm:$0xff]
    %v2448 = vld [vmem:[#allocation7 + $0xf8] sm:$0xff]
    %v2481 = vunpack.c.l.b16 %v2417
    %v2482 = vunpack.c.h.b16 %v2417
    %v2483 = vunpack.c.l.b16 %v2418
    %v2484 = vunpack.c.h.b16 %v2418
    %v2485 = vunpack.c.l.b16 %v2419
    %v2486 = vunpack.c.h.b16 %v2419
    %v2487 = vunpack.c.l.b16 %v2420
    %v2488 = vunpack.c.h.b16 %v2420
    %v2489 = vunpack.c.l.b16 %v2421
    %v2490 = vunpack.c.h.b16 %v2421
    %v2491 = vunpack.c.l.b16 %v2422
    %v2492 = vunpack.c.h.b16 %v2422
    %v2493 = vunpack.c.l.b16 %v2423
    %v2494 = vunpack.c.h.b16 %v2423
    %v2495 = vunpack.c.l.b16 %v2424
    %v2496 = vunpack.c.h.b16 %v2424
    %v2497 = vunpack.c.l.b16 %v2425
    %v2498 = vunpack.c.h.b16 %v2425
    %v2499 = vunpack.c.l.b16 %v2426
    %v2500 = vunpack.c.h.b16 %v2426
    %v2501 = vunpack.c.l.b16 %v2427
    %v2502 = vunpack.c.h.b16 %v2427
    %v2503 = vunpack.c.l.b16 %v2428
    %v2504 = vunpack.c.h.b16 %v2428
    %v2505 = vunpack.c.l.b16 %v2429
    %v2506 = vunpack.c.h.b16 %v2429
    %v2507 = vunpack.c.l.b16 %v2430
    %v2508 = vunpack.c.h.b16 %v2430
    %v2509 = vunpack.c.l.b16 %v2431
    %v2510 = vunpack.c.h.b16 %v2431
    %v2511 = vunpack.c.l.b16 %v2432
    %v2512 = vunpack.c.h.b16 %v2432
    %v2513 = vunpack.c.l.b16 %v2433
    %v2514 = vunpack.c.h.b16 %v2433
    %v2515 = vunpack.c.l.b16 %v2434
    %v2516 = vunpack.c.h.b16 %v2434
    %v2517 = vunpack.c.l.b16 %v2435
    %v2518 = vunpack.c.h.b16 %v2435
    %v2519 = vunpack.c.l.b16 %v2436
    %v2520 = vunpack.c.h.b16 %v2436
    %v2521 = vunpack.c.l.b16 %v2437
    %v2522 = vunpack.c.h.b16 %v2437
    %v2523 = vunpack.c.l.b16 %v2438
    %v2524 = vunpack.c.h.b16 %v2438
    %v2525 = vunpack.c.l.b16 %v2439
    %v2526 = vunpack.c.h.b16 %v2439
    %v2527 = vunpack.c.l.b16 %v2440
    %v2528 = vunpack.c.h.b16 %v2440
    %v2529 = vunpack.c.l.b16 %v2441
    %v2530 = vunpack.c.h.b16 %v2441
    %v2531 = vunpack.c.l.b16 %v2442
    %v2532 = vunpack.c.h.b16 %v2442
    %v2533 = vunpack.c.l.b16 %v2443
    %v2534 = vunpack.c.h.b16 %v2443
    %v2535 = vunpack.c.l.b16 %v2444
    %v2536 = vunpack.c.h.b16 %v2444
    %v2537 = vunpack.c.l.b16 %v2445
    %v2538 = vunpack.c.h.b16 %v2445
    %v2539 = vunpack.c.l.b16 %v2446
    %v2540 = vunpack.c.h.b16 %v2446
    %v2541 = vunpack.c.l.b16 %v2447
    %v2542 = vunpack.c.h.b16 %v2447
    %v2543 = vunpack.c.l.b16 %v2448
    %v2544 = vunpack.c.h.b16 %v2448
    %v2545 = vpack.c.b16 %v2485, %v2481
    %v2546 = vpack.c.b16 %v2486, %v2482
    %v2547 = vpack.c.b16 %v2487, %v2483
    %v2548 = vpack.c.b16 %v2488, %v2484
    %v2549 = vpack.c.b16 %v2493, %v2489
    %v2550 = vpack.c.b16 %v2494, %v2490
    %v2551 = vpack.c.b16 %v2495, %v2491
    %v2552 = vpack.c.b16 %v2496, %v2492
    %v2553 = vpack.c.b16 %v2501, %v2497
    %v2554 = vpack.c.b16 %v2502, %v2498
    %v2555 = vpack.c.b16 %v2503, %v2499
    %v2556 = vpack.c.b16 %v2504, %v2500
    %v2557 = vpack.c.b16 %v2509, %v2505
    %v2558 = vpack.c.b16 %v2510, %v2506
    %v2559 = vpack.c.b16 %v2511, %v2507
    %v2560 = vpack.c.b16 %v2512, %v2508
    %v2561 = vpack.c.b16 %v2517, %v2513
    %v2562 = vpack.c.b16 %v2518, %v2514
    %v2563 = vpack.c.b16 %v2519, %v2515
    %v2564 = vpack.c.b16 %v2520, %v2516
    %v2565 = vpack.c.b16 %v2525, %v2521
    %v2566 = vpack.c.b16 %v2526, %v2522
    %v2567 = vpack.c.b16 %v2527, %v2523
    %v2568 = vpack.c.b16 %v2528, %v2524
    %v2569 = vpack.c.b16 %v2533, %v2529
    %v2570 = vpack.c.b16 %v2534, %v2530
    %v2571 = vpack.c.b16 %v2535, %v2531
    %v2572 = vpack.c.b16 %v2536, %v2532
    %v2573 = vpack.c.b16 %v2541, %v2537
    %v2574 = vpack.c.b16 %v2542, %v2538
    %v2575 = vpack.c.b16 %v2543, %v2539
    %v2576 = vpack.c.b16 %v2544, %v2540
    %2609 = vmatprep.subr.bf16.mxu0 %v2574
    %2610 = vmatpush1.bf16.msra.mxu0 %v2573
    %2611 = vmatprep.subr.bf16.mxu0 %v2570
    %2612 = vmatpush1.bf16.msra.mxu0 %v2569
    %2613 = vmatprep.subr.bf16.mxu0 %v2566
    %2614 = vmatpush1.bf16.msra.mxu0 %v2565
    %2615 = vmatprep.subr.bf16.mxu0 %v2562
    %2616 = vmatpush1.bf16.msra.mxu0 %v2561
    %2617 = vmatprep.subr.bf16.mxu0 %v2558
    %2618 = vmatpush1.bf16.msra.mxu0 %v2557
    %2619 = vmatprep.subr.bf16.mxu0 %v2554
    %2620 = vmatpush1.bf16.msra.mxu0 %v2553
    %2621 = vmatprep.subr.bf16.mxu0 %v2550
    %2622 = vmatpush1.bf16.msra.mxu0 %v2549
    %2623 = vmatprep.subr.bf16.mxu0 %v2546
    %2624 = vmatpush1.bf16.msra.mxu0 %v2545
    %2625 = vmatprep.subr.bf16.mxu0 0
    %2626 = vmatpush2.bf16.msra.mxu0 0
    %2627 = vmatprep.subr.bf16.mxu0 0
    %2628 = vmatpush2.bf16.msra.mxu0 0
    %2629 = vmatprep.subr.bf16.mxu0 0
    %2630 = vmatpush2.bf16.msra.mxu0 0
    %2631 = vmatprep.subr.bf16.mxu0 0
    %2632 = vmatpush2.bf16.msra.mxu0 0
    %2633 = vmatprep.subr.bf16.mxu0 0
    %2634 = vmatpush2.bf16.msra.mxu0 0
    %2635 = vmatprep.subr.bf16.mxu0 0
    %2636 = vmatpush2.bf16.msra.mxu0 0
    %2637 = vmatprep.subr.bf16.mxu0 0
    %2638 = vmatpush2.bf16.msra.mxu0 0
    %2639 = vmatprep.subr.bf16.mxu0 0
    %2640 = vmatpush2.bf16.msra.mxu0 0
    %2641 = vmatprep.mubr.bf16.mxu0 0
    %2642 = vmatmul.mubr.bf16.gmra.mxu0 %v2416
    %v2643 = vpop.f32.mrf.mxu0
    %v2644 = vadd.f32 0.0, %v2643
    %v2645 = vpop.f32.mrf.mxu0
    %v2646 = vadd.f32 0.0, %v2645
    %v2647 = vpop.f32.mrf.mxu0
    %v2648 = vpop.f32.mrf.mxu0
    %2649 = vdwg.mxu0
    %2650 = vmatprep.subr.bf16.mxu0 %v2576
    %2651 = vmatpush1.bf16.msra.mxu0 %v2575
    %2652 = vmatprep.subr.bf16.mxu0 %v2572
    %2653 = vmatpush1.bf16.msra.mxu0 %v2571
    %2654 = vmatprep.subr.bf16.mxu0 %v2568
    %2655 = vmatpush1.bf16.msra.mxu0 %v2567
    %2656 = vmatprep.subr.bf16.mxu0 %v2564
    %2657 = vmatpush1.bf16.msra.mxu0 %v2563
    %2658 = vmatprep.subr.bf16.mxu0 %v2560
    %2659 = vmatpush1.bf16.msra.mxu0 %v2559
    %2660 = vmatprep.subr.bf16.mxu0 %v2556
    %2661 = vmatpush1.bf16.msra.mxu0 %v2555
    %2662 = vmatprep.subr.bf16.mxu0 %v2552
    %2663 = vmatpush1.bf16.msra.mxu0 %v2551
    %2664 = vmatprep.subr.bf16.mxu0 %v2548
    %2665 = vmatpush1.bf16.msra.mxu0 %v2547
    %2666 = vmatprep.subr.bf16.mxu0 0
    %2667 = vmatpush2.bf16.msra.mxu0 0
    %2668 = vmatprep.subr.bf16.mxu0 0
    %2669 = vmatpush2.bf16.msra.mxu0 0
    %2670 = vmatprep.subr.bf16.mxu0 0
    %2671 = vmatpush2.bf16.msra.mxu0 0
    %2672 = vmatprep.subr.bf16.mxu0 0
    %2673 = vmatpush2.bf16.msra.mxu0 0
    %2674 = vmatprep.subr.bf16.mxu0 0
    %2675 = vmatpush2.bf16.msra.mxu0 0
    %2676 = vmatprep.subr.bf16.mxu0 0
    %2677 = vmatpush2.bf16.msra.mxu0 0
    %2678 = vmatprep.subr.bf16.mxu0 0
    %2679 = vmatpush2.bf16.msra.mxu0 0
    %2680 = vmatprep.subr.bf16.mxu0 0
    %2681 = vmatpush2.bf16.msra.mxu0 0
    %2682 = vmatprep.mubr.bf16.mxu0 0
    %2683 = vmatmul.mubr.bf16.gmra.mxu0 %v2416
    %v2684 = vpop.f32.mrf.mxu0
    %v2685 = vadd.f32 0.0, %v2684
    %v2686 = vpop.f32.mrf.mxu0
    %v2687 = vadd.f32 0.0, %v2686
    %v2688 = vpop.f32.mrf.mxu0
    %v2689 = vpop.f32.mrf.mxu0
    %2690 = vdwg.mxu0
    %v2691 = vadd.f32 %v2412, %v2644
    %v2692 = vadd.f32 %v2413, %v2646
    %v2693 = vadd.f32 %v2414, %v2685
    %v2694 = vadd.f32 %v2415, %v2687
    %v2695 = vxor.u32 %v2691, 2147483648
    %v2696 = vmul.f32 %v2695, 1.442695
    %v2697 = vpow.pop %v2696
    %v2698 = vadd.f32 %v2697, 1.0
    %v2699 = vrcp.pop %v2698
    %v2700 = vmul.f32 1.0, %v2699
    %v2701 = vxor.u32 %v2692, 2147483648
    %v2702 = vmul.f32 %v2701, 1.442695
    %v2703 = vpow.pop %v2702
    %v2704 = vadd.f32 %v2703, 1.0
    %v2705 = vrcp.pop %v2704
    %v2706 = vmul.f32 1.0, %v2705
    %v2707 = vtanh.pop %v2693
    %v2708 = vxor.u32 %v2694, 2147483648
    %v2709 = vmul.f32 %v2708, 1.442695
    %v2710 = vpow.pop %v2709
    %v2711 = vadd.f32 %v2710, 1.0
    %v2712 = vrcp.pop %v2711
    %v2713 = vmul.f32 1.0, %v2712
    %v2714 = vld [vmem:[#allocation3] sm:$0xff]
    %v2715 = vmul.f32 %v2706, %v2714
    %v2716 = vmul.f32 %v2700, %v2707
    %v2717 = vadd.f32 %v2715, %v2716
    %v2718 = vtanh.pop %v2717
    %v2719 = vmul.f32 %v2713, %v2718
    %v2720 = vpack.c.bf16 %v2719, %v2719
    %s2721 = sadd.s32 %s53, 7
    %v2722 = vstv %s2721
    %vm2723 = vcmp.lt.s32.totalorder %v2722, %v54
    %v2724 = vsel %vm2723, 1, 0
    %2725 = vset.pattern.permute.xlu0 0
    %2726 = vperm.xlu0 %2725, %v2724
    %v2727 = vpop.permute.xlu0 %2726
    %vm2728 = vcmp.eq.s32.totalorder %v2727, 1
    %v2729 = vsel %vm2728, %v2717, %v2714
    %2730 = vst [vmem:[#allocation3] sm:$0xff] %v2729
    %v2731 = vld [vmem:[#allocation2] sm:$0xf]
    %vm2732 = vmpackc.low %vm2728, %vm2728
    %v2733 = vsel %vm2732, %v2720, %v2731
    %2734 = vst [vmem:[#allocation2] sm:$0xf] %v2733
    %v2735 = vsel %vm2732, %v2720, 0
    %s2736 = scalar_lea.vmem [#allocation9], 28
    %2737 = vst [vmem:[%s2736] sm:$0xf] %v2735
    // Predicated region
    $region30: #{tpu_custom_call.1} parent=1 // pred_check
      _
    $region31: #{tpu_custom_call.1} parent=1 // pred_check_branch
      %2739 = sbr.rel (0) target = $region33
    $region32: #{tpu_custom_call.1} parent=1 // pred_region
      %s2741 = ssub.s32 512, 512
      %2742 = vsyncadd [#allocation6], %s2741
      %s2743 = sshll.u32 [#allocation9], 4
      %s2744 = int_to_ptr.vmem [resolvable:$true] %s2743
      %2749 = dma.vmem_to_hbm [thread:$0]  %s2744, 512, %s4, [#allocation6], 64, 64, 4
    $region33: #{tpu_custom_call.1} parent=1 // pred_fallthru
      _
    // Predicated region
    $region34: #{tpu_custom_call.1} parent=1 // pred_check
      _
    $region35: #{tpu_custom_call.1} parent=1 // pred_check_branch
      %2751 = sbr.rel (0) target = $region37
    $region36: #{tpu_custom_call.1} parent=1 // pred_region
      %2752 = dma.done [#allocation6], 512
    $region37: #{tpu_custom_call.1} parent=1 // pred_fallthru
      _
    %2753 = vsyncpa [#allocation5], 1
    %2754 = vsyncpa [#allocation8], 1
    %2755 = vsyncpa [#allocation6], 1

</llo_original>
